<compile_context>
chip_gen: v7x
topology: tpu7x:2x2x1
jax: 0.10.0
libtpu: 0.0.40
codegen_flags: <defaults>
</compile_context>

<pallas_src>
import functools

import numpy as np
import jax
import jax.numpy as jnp
from jax.experimental import pallas as pl
from jax.experimental.pallas import tpu as pltpu


_SMAX = 4  # largest |row shift| needed (dilation 4 conv)


# ----------------------------------------------------------------------------
# Fused Block kernel (one grid step == one batch sample)
# ----------------------------------------------------------------------------
def _block_kernel(x_ref, s_ref, tw_ref, tw1_ref, b_ref,
                  w1_ref, c1_ref, w2_ref, c2_ref, pavg_ref, pexp_ref,
                  o_ref, *, H, W, C):
    A = x_ref[0]                                            # (H, W*C) f32 slab

    def shift(v, dy):
        # Row shift with zero fill via a tiny (H,H) 0/1 matmul (handles H halo).
        if dy == 0:
            return v
        return jnp.dot(s_ref[dy + _SMAX], v, preferred_element_type=jnp.float32)

    def conv3(v, idx, dil):
        # 3x3 dilated conv == 3 matmuls against block-Toeplitz weights.
        acc = None
        for ky in range(3):
            dy = (ky - 1) * dil
            term = jnp.dot(shift(v, dy), tw_ref[idx, ky],
                           preferred_element_type=jnp.float32)
            acc = term if acc is None else acc + term
        return acc

    relu = lambda z: jnp.maximum(z, 0.0)

    # ---- Merge_Run_dual ----
    t1 = relu(conv3(A, 0, 1) + b_ref[0])
    t1 = relu(conv3(t1, 1, 2) + b_ref[1])
    t2 = relu(conv3(A, 2, 3) + b_ref[2])
    t2 = relu(conv3(t2, 3, 4) + b_ref[3])
    # conv over concat([t1, t2], C) == conv_a(t1) + conv_b(t2) (weights split on Cin)
    r1 = relu(conv3(t1, 4, 1) + conv3(t2, 5, 1) + b_ref[4]) + A

    # ---- ResidualBlock ----
    t = relu(conv3(r1, 6, 1) + b_ref[6])
    r2 = relu(conv3(t, 7, 1) + b_ref[7] + r1)

    # ---- EResidualBlock ----
    t = relu(conv3(r2, 8, 1) + b_ref[8])
    t = relu(conv3(t, 9, 1) + b_ref[9])
    r3 = relu(jnp.dot(t, tw1_ref[...], preferred_element_type=jnp.float32)
              + b_ref[10] + r2)

    # ---- CALayer (fused epilogue, r3 stays resident) ----
    pooled = jnp.dot(jnp.sum(r3, axis=0, keepdims=True), pavg_ref[...],
                     preferred_element_type=jnp.float32) * (1.0 / (H * W))  # (1, C)
    y1 = relu(jnp.dot(pooled, w1_ref[...], preferred_element_type=jnp.float32)
              + c1_ref[...])                                                # (1, Cr)
    y2 = jax.nn.sigmoid(
        jnp.dot(y1, w2_ref[...], preferred_element_type=jnp.float32)
        + c2_ref[...])                                                      # (1, C)
    gate = jnp.dot(y2, pexp_ref[...], preferred_element_type=jnp.float32)   # (1, W*C)
    o_ref[0] = (r3 * gate).astype(o_ref.dtype)


# ----------------------------------------------------------------------------
# Weight packing (plain JAX / numpy, outside the kernel, traced once per jit)
# ----------------------------------------------------------------------------
def _toeplitz_stack(w, dil, W):
    """w: (K, K, Cin, Cout) HWIO  ->  (K, W*Cin, W*Cout) per-ky block-Toeplitz.

    For a slab row a (a[w_in*Cin+cin] = X[w_in, cin]):
      (a @ M[ky])[w_out*Cout+cout] = sum_{kx,cin} X[w_out+(kx-c)*dil, cin]*w[ky,kx,cin,cout]
    with zero outside [0, W) — i.e. the kx taps + W padding folded into one matmul.
    """
    K, _, Cin, Cout = w.shape
    c = K // 2
    sel = np.zeros((K, W, W), np.float32)          # sel[kx, w_out, w_in]
    for kx in range(K):
        for wo in range(W):
            wi = wo + (kx - c) * dil
            if 0 <= wi < W:
                sel[kx, wo, wi] = 1.0
    m = jnp.einsum('kxy,gkio->gyixo', jnp.asarray(sel), w)   # (ky, w_in, cin, w_out, cout)
    return m.reshape(K, W * Cin, W * Cout)


def pack_params(p, H, W, C):
    WC = W * C

    def tstack(name, dil):
        return _toeplitz_stack(p[name + "_w"], dil, W)

    tw = jnp.stack([
        tstack("r1_b1_0", 1), tstack("r1_b1_1", 2),
        tstack("r1_b2_0", 3), tstack("r1_b2_1", 4),
        _toeplitz_stack(p["r1_b3_w"][:, :, :C, :], 1, W),   # concat-conv, t1 half
        _toeplitz_stack(p["r1_b3_w"][:, :, C:, :], 1, W),   # concat-conv, t2 half
        tstack("r2_0", 1), tstack("r2_1", 1),
        tstack("r3_0", 1), tstack("r3_1", 1),
    ], axis=0)                                              # (10, 3, WC, WC)
    tw1 = _toeplitz_stack(p["r3_2_w"], 1, W)[0]             # (WC, WC) 1x1 conv

    def brow(b):
        return jnp.tile(b, (W,))                            # [w*Cout + cout] = b[cout]

    biases = jnp.stack([
        brow(p["r1_b1_0_b"]), brow(p["r1_b1_1_b"]),
        brow(p["r1_b2_0_b"]), brow(p["r1_b2_1_b"]),
        brow(p["r1_b3_b"]), jnp.zeros((WC,), jnp.float32),
        brow(p["r2_0_b"]), brow(p["r2_1_b"]),
        brow(p["r3_0_b"]), brow(p["r3_1_b"]), brow(p["r3_2_b"]),
    ], axis=0)[:, None, :]                                  # (11, 1, WC)

    shifts = np.zeros((2 * _SMAX + 1, H, H), np.float32)
    for dy in range(-_SMAX, _SMAX + 1):
        for i in range(H):
            j = i + dy
            if 0 <= j < H:
                shifts[dy + _SMAX, i, j] = 1.0
    shifts = jnp.asarray(shifts)

    pexp = jnp.asarray(np.tile(np.eye(C, dtype=np.float32), (1, W)))  # (C, WC)
    pavg = pexp.T                                                     # (WC, C)

    Cr = p["ca_w1"].shape[-1]
    return dict(tw=tw, tw1=tw1, biases=biases, shifts=shifts,
                pavg=pavg, pexp=pexp,
                ca_w1=p["ca_w1"], ca_b1=p["ca_b1"].reshape(1, Cr),
                ca_w2=p["ca_w2"], ca_b2=p["ca_b2"].reshape(1, C))


# ----------------------------------------------------------------------------
# Block forward: one fused pallas_call, grid over batch (parallel for v7x)
# ----------------------------------------------------------------------------
def block_forward(x, p):
    N, H, W, C = x.shape
    WC = W * C
    q = pack_params(p, H, W, C)
    Cr = q["ca_w1"].shape[-1]
    x_slab = x.reshape(N, H, WC)

    kernel = functools.partial(_block_kernel, H=H, W=W, C=C)
    c0 = lambda n: (0, 0)

    out = pl.pallas_call(
        kernel,
        out_shape=jax.ShapeDtypeStruct((N, H, WC), x.dtype),
        grid=(N,),
        in_specs=[
            pl.BlockSpec((1, H, WC), lambda n: (n, 0, 0)),            # x slab
            pl.BlockSpec((2 * _SMAX + 1, H, H), lambda n: (0, 0, 0)),  # row shifts
            pl.BlockSpec((10, 3, WC, WC), lambda n: (0, 0, 0, 0)),     # Toeplitz weights
            pl.BlockSpec((WC, WC), c0),                                # 1x1 conv
            pl.BlockSpec((11, 1, WC), lambda n: (0, 0, 0)),            # biases
            pl.BlockSpec((C, Cr), c0),                                 # CA w1
            pl.BlockSpec((1, Cr), c0),                                 # CA b1
            pl.BlockSpec((Cr, C), c0),                                 # CA w2
            pl.BlockSpec((1, C), c0),                                  # CA b2
            pl.BlockSpec((WC, C), c0),                                 # pool matrix
            pl.BlockSpec((C, WC), c0),                                 # expand matrix
        ],
        out_specs=pl.BlockSpec((1, H, WC), lambda n: (n, 0, 0)),
        compiler_params=pltpu.CompilerParams(
            dimension_semantics=("parallel",),
            vmem_limit_bytes=48 * 1024 * 1024),
    )(x_slab, q["shifts"], q["tw"], q["tw1"], q["biases"],
      q["ca_w1"], q["ca_b1"], q["ca_w2"], q["ca_b2"],
      q["pavg"], q["pexp"])
    return out.reshape(N, H, W, C)


# ----------------------------------------------------------------------------
# Deterministic parameter init (shapes follow Block.__init__)
# ----------------------------------------------------------------------------
def init_params(key, C):
    Cr = C // 16  # CALayer reduction=16
    keys = iter(jax.random.split(key, 32))
    p = {}

    def conv_p(name, k, cin, cout):
        fan_in = k * k * cin
        p[name + "_w"] = (jax.random.normal(next(keys), (k, k, cin, cout), jnp.float32)
                          / np.sqrt(fan_in)).astype(jnp.float32)
        p[name + "_b"] = (jax.random.normal(next(keys), (cout,), jnp.float32) * 0.05)

    conv_p("r1_b1_0", 3, C, C); conv_p("r1_b1_1", 3, C, C)
    conv_p("r1_b2_0", 3, C, C); conv_p("r1_b2_1", 3, C, C)
    conv_p("r1_b3", 3, 2 * C, C)
    conv_p("r2_0", 3, C, C); conv_p("r2_1", 3, C, C)
    conv_p("r3_0", 3, C, C); conv_p("r3_1", 3, C, C); conv_p("r3_2", 1, C, C)
    p["ca_w1"] = (jax.random.normal(next(keys), (C, Cr), jnp.float32) / np.sqrt(C))
    p["ca_b1"] = jax.random.normal(next(keys), (Cr,), jnp.float32) * 0.05
    p["ca_w2"] = (jax.random.normal(next(keys), (Cr, C), jnp.float32) / np.sqrt(Cr))
    p["ca_b2"] = jax.random.normal(next(keys), (C,), jnp.float32) * 0.05
    return p


# ----------------------------------------------------------------------------
# Pure-JAX reference (mirrors the PyTorch forward exactly) for validation
# ----------------------------------------------------------------------------
def _conv_ref(x, w, b, dil, pad):
    y = jax.lax.conv_general_dilated(
        x, w, window_strides=(1, 1), padding=[(pad, pad), (pad, pad)],
        rhs_dilation=(dil, dil), dimension_numbers=("NHWC", "HWIO", "NHWC"))
    return y + b


def block_reference(x, p):
    relu = jax.nn.relu
    t1 = relu(_conv_ref(x,  p["r1_b1_0_w"], p["r1_b1_0_b"], 1, 1))
    t1 = relu(_conv_ref(t1, p["r1_b1_1_w"], p["r1_b1_1_b"], 2, 2))
    t2 = relu(_conv_ref(x,  p["r1_b2_0_w"], p["r1_b2_0_b"], 3, 3))
    t2 = relu(_conv_ref(t2, p["r1_b2_1_w"], p["r1_b2_1_b"], 4, 4))
    c = jnp.concatenate([t1, t2], axis=-1)
    r1 = relu(_conv_ref(c, p["r1_b3_w"], p["r1_b3_b"], 1, 1)) + x
    t = relu(_conv_ref(r1, p["r2_0_w"], p["r2_0_b"], 1, 1))
    r2 = relu(_conv_ref(t, p["r2_1_w"], p["r2_1_b"], 1, 1) + r1)
    t = relu(_conv_ref(r2, p["r3_0_w"], p["r3_0_b"], 1, 1))
    t = relu(_conv_ref(t,  p["r3_1_w"], p["r3_1_b"], 1, 1))
    r3 = relu(_conv_ref(t, p["r3_2_w"], p["r3_2_b"], 1, 0) + r2)
    pooled = jnp.mean(r3, axis=(1, 2))
    y1 = relu(pooled @ p["ca_w1"] + p["ca_b1"])
    y2 = jax.nn.sigmoid(y1 @ p["ca_w2"] + p["ca_b2"])
    return r3 * y2[:, None, None, :]


if __name__ == "__main__":
    N, H, W, C = 2, 16, 16, 16   # C must be >=16 (CALayer reduction=16)
    key = jax.random.PRNGKey(0)
    kx, kp = jax.random.split(key)
    x = jax.random.normal(kx, (N, H, W, C), jnp.float32)
    params = init_params(kp, C)

    out = jax.jit(block_forward)(x, params)
    out = jax.block_until_ready(out)

    ref = block_reference(x, params)
    np.testing.assert_allclose(np.asarray(out), np.asarray(ref),
                               rtol=2e-2, atol=2e-2)
    print("KERNEL_OK")
</pallas_src>

<mosaic_0001>
module attributes {stable_mosaic.version = 11 : i64} {
  func.func @_block_kernel(%arg0: i32, %arg1: memref<1x16x256xf32, #tpu.memory_space<vmem>>, %arg2: memref<9x16x16xf32, #tpu.memory_space<vmem>>, %arg3: memref<10x3x256x256xf32, #tpu.memory_space<vmem>>, %arg4: memref<256x256xf32, #tpu.memory_space<vmem>>, %arg5: memref<11x1x256xf32, #tpu.memory_space<vmem>>, %arg6: memref<16x1xf32, #tpu.memory_space<vmem>>, %arg7: memref<1x1xf32, #tpu.memory_space<vmem>>, %arg8: memref<1x16xf32, #tpu.memory_space<vmem>>, %arg9: memref<1x16xf32, #tpu.memory_space<vmem>>, %arg10: memref<256x16xf32, #tpu.memory_space<vmem>>, %arg11: memref<16x256xf32, #tpu.memory_space<vmem>>, %arg12: memref<1x16x256xf32, #tpu.memory_space<vmem>>) attributes {dimension_semantics = [#tpu.dimension_semantics<parallel>], iteration_bounds = array<i64: 2>, scalar_prefetch = 0 : i64, scratch_operands = 0 : i64, tpu.core_type = #tpu.core_type<tc>, window_params = [{transform_indices = @transform_0, window_bounds = array<i64: 1, 16, 256>}, {pipeline_mode = #tpu.pipeline_mode<synchronous>, transform_indices = @transform_1, window_bounds = array<i64: 9, 16, 16>}, {pipeline_mode = #tpu.pipeline_mode<synchronous>, transform_indices = @transform_2, window_bounds = array<i64: 10, 3, 256, 256>}, {pipeline_mode = #tpu.pipeline_mode<synchronous>, transform_indices = @transform_3, window_bounds = array<i64: 256, 256>}, {pipeline_mode = #tpu.pipeline_mode<synchronous>, transform_indices = @transform_4, window_bounds = array<i64: 11, 1, 256>}, {pipeline_mode = #tpu.pipeline_mode<synchronous>, transform_indices = @transform_5, window_bounds = array<i64: 16, 1>}, {pipeline_mode = #tpu.pipeline_mode<synchronous>, transform_indices = @transform_6, window_bounds = array<i64: 1, 1>}, {pipeline_mode = #tpu.pipeline_mode<synchronous>, transform_indices = @transform_7, window_bounds = array<i64: 1, 16>}, {pipeline_mode = #tpu.pipeline_mode<synchronous>, transform_indices = @transform_8, window_bounds = array<i64: 1, 16>}, {pipeline_mode = #tpu.pipeline_mode<synchronous>, transform_indices = @transform_9, window_bounds = array<i64: 256, 16>}, {pipeline_mode = #tpu.pipeline_mode<synchronous>, transform_indices = @transform_10, window_bounds = array<i64: 16, 256>}, {transform_indices = @transform_11, window_bounds = array<i64: 1, 16, 256>}]} {
    %c0 = arith.constant 0 : index
    %c0_0 = arith.constant 0 : index
    %c0_1 = arith.constant 0 : index
    %0 = vector.load %arg1[%c0, %c0_0, %c0_1] : memref<1x16x256xf32, #tpu.memory_space<vmem>>, vector<1x16x256xf32>
    %1 = vector.shape_cast %0 : vector<1x16x256xf32> to vector<16x256xf32>
    %c3 = arith.constant 3 : index
    %c0_2 = arith.constant 0 : index
    %c0_3 = arith.constant 0 : index
    %2 = vector.load %arg2[%c3, %c0_2, %c0_3] : memref<9x16x16xf32, #tpu.memory_space<vmem>>, vector<1x16x16xf32>
    %3 = vector.shape_cast %2 : vector<1x16x16xf32> to vector<16x16xf32>
    %cst = arith.constant dense<0.000000e+00> : vector<16x256xf32>
    %4 = tpu.matmul %3, %1, %cst {dimension_numbers = #tpu.dot_dimension_numbers<[1], [0], [0], [1], [0, 0, 1, 1], [], []>} : vector<16x16xf32>, vector<16x256xf32>, vector<16x256xf32> -> vector<16x256xf32>
    %c0_4 = arith.constant 0 : index
    %c0_5 = arith.constant 0 : index
    %c0_6 = arith.constant 0 : index
    %c0_7 = arith.constant 0 : index
    %5 = vector.load %arg3[%c0_4, %c0_5, %c0_6, %c0_7] : memref<10x3x256x256xf32, #tpu.memory_space<vmem>>, vector<1x1x256x256xf32>
    %6 = vector.shape_cast %5 : vector<1x1x256x256xf32> to vector<256x256xf32>
    %cst_8 = arith.constant dense<0.000000e+00> : vector<16x256xf32>
    %7 = tpu.matmul %4, %6, %cst_8 {dimension_numbers = #tpu.dot_dimension_numbers<[1], [0], [0], [1], [0, 0, 1, 1], [], []>} : vector<16x256xf32>, vector<256x256xf32>, vector<16x256xf32> -> vector<16x256xf32>
    %c0_9 = arith.constant 0 : index
    %c1 = arith.constant 1 : index
    %c0_10 = arith.constant 0 : index
    %c0_11 = arith.constant 0 : index
    %8 = vector.load %arg3[%c0_9, %c1, %c0_10, %c0_11] : memref<10x3x256x256xf32, #tpu.memory_space<vmem>>, vector<1x1x256x256xf32>
    %9 = vector.shape_cast %8 : vector<1x1x256x256xf32> to vector<256x256xf32>
    %cst_12 = arith.constant dense<0.000000e+00> : vector<16x256xf32>
    %10 = tpu.matmul %1, %9, %cst_12 {dimension_numbers = #tpu.dot_dimension_numbers<[1], [0], [0], [1], [0, 0, 1, 1], [], []>} : vector<16x256xf32>, vector<256x256xf32>, vector<16x256xf32> -> vector<16x256xf32>
    %11 = arith.addf %7, %10 : vector<16x256xf32>
    %c5 = arith.constant 5 : index
    %c0_13 = arith.constant 0 : index
    %c0_14 = arith.constant 0 : index
    %12 = vector.load %arg2[%c5, %c0_13, %c0_14] : memref<9x16x16xf32, #tpu.memory_space<vmem>>, vector<1x16x16xf32>
    %13 = vector.shape_cast %12 : vector<1x16x16xf32> to vector<16x16xf32>
    %cst_15 = arith.constant dense<0.000000e+00> : vector<16x256xf32>
    %14 = tpu.matmul %13, %1, %cst_15 {dimension_numbers = #tpu.dot_dimension_numbers<[1], [0], [0], [1], [0, 0, 1, 1], [], []>} : vector<16x16xf32>, vector<16x256xf32>, vector<16x256xf32> -> vector<16x256xf32>
    %c0_16 = arith.constant 0 : index
    %c2 = arith.constant 2 : index
    %c0_17 = arith.constant 0 : index
    %c0_18 = arith.constant 0 : index
    %15 = vector.load %arg3[%c0_16, %c2, %c0_17, %c0_18] : memref<10x3x256x256xf32, #tpu.memory_space<vmem>>, vector<1x1x256x256xf32>
    %16 = vector.shape_cast %15 : vector<1x1x256x256xf32> to vector<256x256xf32>
    %cst_19 = arith.constant dense<0.000000e+00> : vector<16x256xf32>
    %17 = tpu.matmul %14, %16, %cst_19 {dimension_numbers = #tpu.dot_dimension_numbers<[1], [0], [0], [1], [0, 0, 1, 1], [], []>} : vector<16x256xf32>, vector<256x256xf32>, vector<16x256xf32> -> vector<16x256xf32>
    %18 = arith.addf %11, %17 : vector<16x256xf32>
    %c0_20 = arith.constant 0 : index
    %c0_21 = arith.constant 0 : index
    %c0_22 = arith.constant 0 : index
    %19 = vector.load %arg5[%c0_20, %c0_21, %c0_22] : memref<11x1x256xf32, #tpu.memory_space<vmem>>, vector<1x1x256xf32>
    %20 = vector.shape_cast %19 : vector<1x1x256xf32> to vector<1x256xf32>
    %21 = vector.broadcast %20 : vector<1x256xf32> to vector<16x256xf32>
    %22 = arith.addf %18, %21 : vector<16x256xf32>
    %cst_23 = arith.constant 0.000000e+00 : f32
    %23 = vector.broadcast %cst_23 : f32 to vector<16x256xf32>
    %24 = arith.maximumf %22, %23 : vector<16x256xf32>
    %c2_24 = arith.constant 2 : index
    %c0_25 = arith.constant 0 : index
    %c0_26 = arith.constant 0 : index
    %25 = vector.load %arg2[%c2_24, %c0_25, %c0_26] : memref<9x16x16xf32, #tpu.memory_space<vmem>>, vector<1x16x16xf32>
    %26 = vector.shape_cast %25 : vector<1x16x16xf32> to vector<16x16xf32>
    %cst_27 = arith.constant dense<0.000000e+00> : vector<16x256xf32>
    %27 = tpu.matmul %26, %24, %cst_27 {dimension_numbers = #tpu.dot_dimension_numbers<[1], [0], [0], [1], [0, 0, 1, 1], [], []>} : vector<16x16xf32>, vector<16x256xf32>, vector<16x256xf32> -> vector<16x256xf32>
    %c1_28 = arith.constant 1 : index
    %c0_29 = arith.constant 0 : index
    %c0_30 = arith.constant 0 : index
    %c0_31 = arith.constant 0 : index
    %28 = vector.load %arg3[%c1_28, %c0_29, %c0_30, %c0_31] : memref<10x3x256x256xf32, #tpu.memory_space<vmem>>, vector<1x1x256x256xf32>
    %29 = vector.shape_cast %28 : vector<1x1x256x256xf32> to vector<256x256xf32>
    %cst_32 = arith.constant dense<0.000000e+00> : vector<16x256xf32>
    %30 = tpu.matmul %27, %29, %cst_32 {dimension_numbers = #tpu.dot_dimension_numbers<[1], [0], [0], [1], [0, 0, 1, 1], [], []>} : vector<16x256xf32>, vector<256x256xf32>, vector<16x256xf32> -> vector<16x256xf32>
    %c1_33 = arith.constant 1 : index
    %c1_34 = arith.constant 1 : index
    %c0_35 = arith.constant 0 : index
    %c0_36 = arith.constant 0 : index
    %31 = vector.load %arg3[%c1_33, %c1_34, %c0_35, %c0_36] : memref<10x3x256x256xf32, #tpu.memory_space<vmem>>, vector<1x1x256x256xf32>
    %32 = vector.shape_cast %31 : vector<1x1x256x256xf32> to vector<256x256xf32>
    %cst_37 = arith.constant dense<0.000000e+00> : vector<16x256xf32>
    %33 = tpu.matmul %24, %32, %cst_37 {dimension_numbers = #tpu.dot_dimension_numbers<[1], [0], [0], [1], [0, 0, 1, 1], [], []>} : vector<16x256xf32>, vector<256x256xf32>, vector<16x256xf32> -> vector<16x256xf32>
    %34 = arith.addf %30, %33 : vector<16x256xf32>
    %c6 = arith.constant 6 : index
    %c0_38 = arith.constant 0 : index
    %c0_39 = arith.constant 0 : index
    %35 = vector.load %arg2[%c6, %c0_38, %c0_39] : memref<9x16x16xf32, #tpu.memory_space<vmem>>, vector<1x16x16xf32>
    %36 = vector.shape_cast %35 : vector<1x16x16xf32> to vector<16x16xf32>
    %cst_40 = arith.constant dense<0.000000e+00> : vector<16x256xf32>
    %37 = tpu.matmul %36, %24, %cst_40 {dimension_numbers = #tpu.dot_dimension_numbers<[1], [0], [0], [1], [0, 0, 1, 1], [], []>} : vector<16x16xf32>, vector<16x256xf32>, vector<16x256xf32> -> vector<16x256xf32>
    %c1_41 = arith.constant 1 : index
    %c2_42 = arith.constant 2 : index
    %c0_43 = arith.constant 0 : index
    %c0_44 = arith.constant 0 : index
    %38 = vector.load %arg3[%c1_41, %c2_42, %c0_43, %c0_44] : memref<10x3x256x256xf32, #tpu.memory_space<vmem>>, vector<1x1x256x256xf32>
    %39 = vector.shape_cast %38 : vector<1x1x256x256xf32> to vector<256x256xf32>
    %cst_45 = arith.constant dense<0.000000e+00> : vector<16x256xf32>
    %40 = tpu.matmul %37, %39, %cst_45 {dimension_numbers = #tpu.dot_dimension_numbers<[1], [0], [0], [1], [0, 0, 1, 1], [], []>} : vector<16x256xf32>, vector<256x256xf32>, vector<16x256xf32> -> vector<16x256xf32>
    %41 = arith.addf %34, %40 : vector<16x256xf32>
    %c1_46 = arith.constant 1 : index
    %c0_47 = arith.constant 0 : index
    %c0_48 = arith.constant 0 : index
    %42 = vector.load %arg5[%c1_46, %c0_47, %c0_48] : memref<11x1x256xf32, #tpu.memory_space<vmem>>, vector<1x1x256xf32>
    %43 = vector.shape_cast %42 : vector<1x1x256xf32> to vector<1x256xf32>
    %44 = vector.broadcast %43 : vector<1x256xf32> to vector<16x256xf32>
    %45 = arith.addf %41, %44 : vector<16x256xf32>
    %cst_49 = arith.constant 0.000000e+00 : f32
    %46 = vector.broadcast %cst_49 : f32 to vector<16x256xf32>
    %47 = arith.maximumf %45, %46 : vector<16x256xf32>
    %c1_50 = arith.constant 1 : index
    %c0_51 = arith.constant 0 : index
    %c0_52 = arith.constant 0 : index
    %48 = vector.load %arg2[%c1_50, %c0_51, %c0_52] : memref<9x16x16xf32, #tpu.memory_space<vmem>>, vector<1x16x16xf32>
    %49 = vector.shape_cast %48 : vector<1x16x16xf32> to vector<16x16xf32>
    %cst_53 = arith.constant dense<0.000000e+00> : vector<16x256xf32>
    %50 = tpu.matmul %49, %1, %cst_53 {dimension_numbers = #tpu.dot_dimension_numbers<[1], [0], [0], [1], [0, 0, 1, 1], [], []>} : vector<16x16xf32>, vector<16x256xf32>, vector<16x256xf32> -> vector<16x256xf32>
    %c2_54 = arith.constant 2 : index
    %c0_55 = arith.constant 0 : index
    %c0_56 = arith.constant 0 : index
    %c0_57 = arith.constant 0 : index
    %51 = vector.load %arg3[%c2_54, %c0_55, %c0_56, %c0_57] : memref<10x3x256x256xf32, #tpu.memory_space<vmem>>, vector<1x1x256x256xf32>
    %52 = vector.shape_cast %51 : vector<1x1x256x256xf32> to vector<256x256xf32>
    %cst_58 = arith.constant dense<0.000000e+00> : vector<16x256xf32>
    %53 = tpu.matmul %50, %52, %cst_58 {dimension_numbers = #tpu.dot_dimension_numbers<[1], [0], [0], [1], [0, 0, 1, 1], [], []>} : vector<16x256xf32>, vector<256x256xf32>, vector<16x256xf32> -> vector<16x256xf32>
    %c2_59 = arith.constant 2 : index
    %c1_60 = arith.constant 1 : index
    %c0_61 = arith.constant 0 : index
    %c0_62 = arith.constant 0 : index
    %54 = vector.load %arg3[%c2_59, %c1_60, %c0_61, %c0_62] : memref<10x3x256x256xf32, #tpu.memory_space<vmem>>, vector<1x1x256x256xf32>
    %55 = vector.shape_cast %54 : vector<1x1x256x256xf32> to vector<256x256xf32>
    %cst_63 = arith.constant dense<0.000000e+00> : vector<16x256xf32>
    %56 = tpu.matmul %1, %55, %cst_63 {dimension_numbers = #tpu.dot_dimension_numbers<[1], [0], [0], [1], [0, 0, 1, 1], [], []>} : vector<16x256xf32>, vector<256x256xf32>, vector<16x256xf32> -> vector<16x256xf32>
    %57 = arith.addf %53, %56 : vector<16x256xf32>
    %c7 = arith.constant 7 : index
    %c0_64 = arith.constant 0 : index
    %c0_65 = arith.constant 0 : index
    %58 = vector.load %arg2[%c7, %c0_64, %c0_65] : memref<9x16x16xf32, #tpu.memory_space<vmem>>, vector<1x16x16xf32>
    %59 = vector.shape_cast %58 : vector<1x16x16xf32> to vector<16x16xf32>
    %cst_66 = arith.constant dense<0.000000e+00> : vector<16x256xf32>
    %60 = tpu.matmul %59, %1, %cst_66 {dimension_numbers = #tpu.dot_dimension_numbers<[1], [0], [0], [1], [0, 0, 1, 1], [], []>} : vector<16x16xf32>, vector<16x256xf32>, vector<16x256xf32> -> vector<16x256xf32>
    %c2_67 = arith.constant 2 : index
    %c2_68 = arith.constant 2 : index
    %c0_69 = arith.constant 0 : index
    %c0_70 = arith.constant 0 : index
    %61 = vector.load %arg3[%c2_67, %c2_68, %c0_69, %c0_70] : memref<10x3x256x256xf32, #tpu.memory_space<vmem>>, vector<1x1x256x256xf32>
    %62 = vector.shape_cast %61 : vector<1x1x256x256xf32> to vector<256x256xf32>
    %cst_71 = arith.constant dense<0.000000e+00> : vector<16x256xf32>
    %63 = tpu.matmul %60, %62, %cst_71 {dimension_numbers = #tpu.dot_dimension_numbers<[1], [0], [0], [1], [0, 0, 1, 1], [], []>} : vector<16x256xf32>, vector<256x256xf32>, vector<16x256xf32> -> vector<16x256xf32>
    %64 = arith.addf %57, %63 : vector<16x256xf32>
    %c2_72 = arith.constant 2 : index
    %c0_73 = arith.constant 0 : index
    %c0_74 = arith.constant 0 : index
    %65 = vector.load %arg5[%c2_72, %c0_73, %c0_74] : memref<11x1x256xf32, #tpu.memory_space<vmem>>, vector<1x1x256xf32>
    %66 = vector.shape_cast %65 : vector<1x1x256xf32> to vector<1x256xf32>
    %67 = vector.broadcast %66 : vector<1x256xf32> to vector<16x256xf32>
    %68 = arith.addf %64, %67 : vector<16x256xf32>
    %cst_75 = arith.constant 0.000000e+00 : f32
    %69 = vector.broadcast %cst_75 : f32 to vector<16x256xf32>
    %70 = arith.maximumf %68, %69 : vector<16x256xf32>
    %c0_76 = arith.constant 0 : index
    %c0_77 = arith.constant 0 : index
    %c0_78 = arith.constant 0 : index
    %71 = vector.load %arg2[%c0_76, %c0_77, %c0_78] : memref<9x16x16xf32, #tpu.memory_space<vmem>>, vector<1x16x16xf32>
    %72 = vector.shape_cast %71 : vector<1x16x16xf32> to vector<16x16xf32>
    %cst_79 = arith.constant dense<0.000000e+00> : vector<16x256xf32>
    %73 = tpu.matmul %72, %70, %cst_79 {dimension_numbers = #tpu.dot_dimension_numbers<[1], [0], [0], [1], [0, 0, 1, 1], [], []>} : vector<16x16xf32>, vector<16x256xf32>, vector<16x256xf32> -> vector<16x256xf32>
    %c3_80 = arith.constant 3 : index
    %c0_81 = arith.constant 0 : index
    %c0_82 = arith.constant 0 : index
    %c0_83 = arith.constant 0 : index
    %74 = vector.load %arg3[%c3_80, %c0_81, %c0_82, %c0_83] : memref<10x3x256x256xf32, #tpu.memory_space<vmem>>, vector<1x1x256x256xf32>
    %75 = vector.shape_cast %74 : vector<1x1x256x256xf32> to vector<256x256xf32>
    %cst_84 = arith.constant dense<0.000000e+00> : vector<16x256xf32>
    %76 = tpu.matmul %73, %75, %cst_84 {dimension_numbers = #tpu.dot_dimension_numbers<[1], [0], [0], [1], [0, 0, 1, 1], [], []>} : vector<16x256xf32>, vector<256x256xf32>, vector<16x256xf32> -> vector<16x256xf32>
    %c3_85 = arith.constant 3 : index
    %c1_86 = arith.constant 1 : index
    %c0_87 = arith.constant 0 : index
    %c0_88 = arith.constant 0 : index
    %77 = vector.load %arg3[%c3_85, %c1_86, %c0_87, %c0_88] : memref<10x3x256x256xf32, #tpu.memory_space<vmem>>, vector<1x1x256x256xf32>
    %78 = vector.shape_cast %77 : vector<1x1x256x256xf32> to vector<256x256xf32>
    %cst_89 = arith.constant dense<0.000000e+00> : vector<16x256xf32>
    %79 = tpu.matmul %70, %78, %cst_89 {dimension_numbers = #tpu.dot_dimension_numbers<[1], [0], [0], [1], [0, 0, 1, 1], [], []>} : vector<16x256xf32>, vector<256x256xf32>, vector<16x256xf32> -> vector<16x256xf32>
    %80 = arith.addf %76, %79 : vector<16x256xf32>
    %c8 = arith.constant 8 : index
    %c0_90 = arith.constant 0 : index
    %c0_91 = arith.constant 0 : index
    %81 = vector.load %arg2[%c8, %c0_90, %c0_91] : memref<9x16x16xf32, #tpu.memory_space<vmem>>, vector<1x16x16xf32>
    %82 = vector.shape_cast %81 : vector<1x16x16xf32> to vector<16x16xf32>
    %cst_92 = arith.constant dense<0.000000e+00> : vector<16x256xf32>
    %83 = tpu.matmul %82, %70, %cst_92 {dimension_numbers = #tpu.dot_dimension_numbers<[1], [0], [0], [1], [0, 0, 1, 1], [], []>} : vector<16x16xf32>, vector<16x256xf32>, vector<16x256xf32> -> vector<16x256xf32>
    %c3_93 = arith.constant 3 : index
    %c2_94 = arith.constant 2 : index
    %c0_95 = arith.constant 0 : index
    %c0_96 = arith.constant 0 : index
    %84 = vector.load %arg3[%c3_93, %c2_94, %c0_95, %c0_96] : memref<10x3x256x256xf32, #tpu.memory_space<vmem>>, vector<1x1x256x256xf32>
    %85 = vector.shape_cast %84 : vector<1x1x256x256xf32> to vector<256x256xf32>
    %cst_97 = arith.constant dense<0.000000e+00> : vector<16x256xf32>
    %86 = tpu.matmul %83, %85, %cst_97 {dimension_numbers = #tpu.dot_dimension_numbers<[1], [0], [0], [1], [0, 0, 1, 1], [], []>} : vector<16x256xf32>, vector<256x256xf32>, vector<16x256xf32> -> vector<16x256xf32>
    %87 = arith.addf %80, %86 : vector<16x256xf32>
    %c3_98 = arith.constant 3 : index
    %c0_99 = arith.constant 0 : index
    %c0_100 = arith.constant 0 : index
    %88 = vector.load %arg5[%c3_98, %c0_99, %c0_100] : memref<11x1x256xf32, #tpu.memory_space<vmem>>, vector<1x1x256xf32>
    %89 = vector.shape_cast %88 : vector<1x1x256xf32> to vector<1x256xf32>
    %90 = vector.broadcast %89 : vector<1x256xf32> to vector<16x256xf32>
    %91 = arith.addf %87, %90 : vector<16x256xf32>
    %cst_101 = arith.constant 0.000000e+00 : f32
    %92 = vector.broadcast %cst_101 : f32 to vector<16x256xf32>
    %93 = arith.maximumf %91, %92 : vector<16x256xf32>
    %c3_102 = arith.constant 3 : index
    %c0_103 = arith.constant 0 : index
    %c0_104 = arith.constant 0 : index
    %94 = vector.load %arg2[%c3_102, %c0_103, %c0_104] : memref<9x16x16xf32, #tpu.memory_space<vmem>>, vector<1x16x16xf32>
    %95 = vector.shape_cast %94 : vector<1x16x16xf32> to vector<16x16xf32>
    %cst_105 = arith.constant dense<0.000000e+00> : vector<16x256xf32>
    %96 = tpu.matmul %95, %47, %cst_105 {dimension_numbers = #tpu.dot_dimension_numbers<[1], [0], [0], [1], [0, 0, 1, 1], [], []>} : vector<16x16xf32>, vector<16x256xf32>, vector<16x256xf32> -> vector<16x256xf32>
    %c4 = arith.constant 4 : index
    %c0_106 = arith.constant 0 : index
    %c0_107 = arith.constant 0 : index
    %c0_108 = arith.constant 0 : index
    %97 = vector.load %arg3[%c4, %c0_106, %c0_107, %c0_108] : memref<10x3x256x256xf32, #tpu.memory_space<vmem>>, vector<1x1x256x256xf32>
    %98 = vector.shape_cast %97 : vector<1x1x256x256xf32> to vector<256x256xf32>
    %cst_109 = arith.constant dense<0.000000e+00> : vector<16x256xf32>
    %99 = tpu.matmul %96, %98, %cst_109 {dimension_numbers = #tpu.dot_dimension_numbers<[1], [0], [0], [1], [0, 0, 1, 1], [], []>} : vector<16x256xf32>, vector<256x256xf32>, vector<16x256xf32> -> vector<16x256xf32>
    %c4_110 = arith.constant 4 : index
    %c1_111 = arith.constant 1 : index
    %c0_112 = arith.constant 0 : index
    %c0_113 = arith.constant 0 : index
    %100 = vector.load %arg3[%c4_110, %c1_111, %c0_112, %c0_113] : memref<10x3x256x256xf32, #tpu.memory_space<vmem>>, vector<1x1x256x256xf32>
    %101 = vector.shape_cast %100 : vector<1x1x256x256xf32> to vector<256x256xf32>
    %cst_114 = arith.constant dense<0.000000e+00> : vector<16x256xf32>
    %102 = tpu.matmul %47, %101, %cst_114 {dimension_numbers = #tpu.dot_dimension_numbers<[1], [0], [0], [1], [0, 0, 1, 1], [], []>} : vector<16x256xf32>, vector<256x256xf32>, vector<16x256xf32> -> vector<16x256xf32>
    %103 = arith.addf %99, %102 : vector<16x256xf32>
    %c5_115 = arith.constant 5 : index
    %c0_116 = arith.constant 0 : index
    %c0_117 = arith.constant 0 : index
    %104 = vector.load %arg2[%c5_115, %c0_116, %c0_117] : memref<9x16x16xf32, #tpu.memory_space<vmem>>, vector<1x16x16xf32>
    %105 = vector.shape_cast %104 : vector<1x16x16xf32> to vector<16x16xf32>
    %cst_118 = arith.constant dense<0.000000e+00> : vector<16x256xf32>
    %106 = tpu.matmul %105, %47, %cst_118 {dimension_numbers = #tpu.dot_dimension_numbers<[1], [0], [0], [1], [0, 0, 1, 1], [], []>} : vector<16x16xf32>, vector<16x256xf32>, vector<16x256xf32> -> vector<16x256xf32>
    %c4_119 = arith.constant 4 : index
    %c2_120 = arith.constant 2 : index
    %c0_121 = arith.constant 0 : index
    %c0_122 = arith.constant 0 : index
    %107 = vector.load %arg3[%c4_119, %c2_120, %c0_121, %c0_122] : memref<10x3x256x256xf32, #tpu.memory_space<vmem>>, vector<1x1x256x256xf32>
    %108 = vector.shape_cast %107 : vector<1x1x256x256xf32> to vector<256x256xf32>
    %cst_123 = arith.constant dense<0.000000e+00> : vector<16x256xf32>
    %109 = tpu.matmul %106, %108, %cst_123 {dimension_numbers = #tpu.dot_dimension_numbers<[1], [0], [0], [1], [0, 0, 1, 1], [], []>} : vector<16x256xf32>, vector<256x256xf32>, vector<16x256xf32> -> vector<16x256xf32>
    %110 = arith.addf %103, %109 : vector<16x256xf32>
    %c3_124 = arith.constant 3 : index
    %c0_125 = arith.constant 0 : index
    %c0_126 = arith.constant 0 : index
    %111 = vector.load %arg2[%c3_124, %c0_125, %c0_126] : memref<9x16x16xf32, #tpu.memory_space<vmem>>, vector<1x16x16xf32>
    %112 = vector.shape_cast %111 : vector<1x16x16xf32> to vector<16x16xf32>
    %cst_127 = arith.constant dense<0.000000e+00> : vector<16x256xf32>
    %113 = tpu.matmul %112, %93, %cst_127 {dimension_numbers = #tpu.dot_dimension_numbers<[1], [0], [0], [1], [0, 0, 1, 1], [], []>} : vector<16x16xf32>, vector<16x256xf32>, vector<16x256xf32> -> vector<16x256xf32>
    %c5_128 = arith.constant 5 : index
    %c0_129 = arith.constant 0 : index
    %c0_130 = arith.constant 0 : index
    %c0_131 = arith.constant 0 : index
    %114 = vector.load %arg3[%c5_128, %c0_129, %c0_130, %c0_131] : memref<10x3x256x256xf32, #tpu.memory_space<vmem>>, vector<1x1x256x256xf32>
    %115 = vector.shape_cast %114 : vector<1x1x256x256xf32> to vector<256x256xf32>
    %cst_132 = arith.constant dense<0.000000e+00> : vector<16x256xf32>
    %116 = tpu.matmul %113, %115, %cst_132 {dimension_numbers = #tpu.dot_dimension_numbers<[1], [0], [0], [1], [0, 0, 1, 1], [], []>} : vector<16x256xf32>, vector<256x256xf32>, vector<16x256xf32> -> vector<16x256xf32>
    %c5_133 = arith.constant 5 : index
    %c1_134 = arith.constant 1 : index
    %c0_135 = arith.constant 0 : index
    %c0_136 = arith.constant 0 : index
    %117 = vector.load %arg3[%c5_133, %c1_134, %c0_135, %c0_136] : memref<10x3x256x256xf32, #tpu.memory_space<vmem>>, vector<1x1x256x256xf32>
    %118 = vector.shape_cast %117 : vector<1x1x256x256xf32> to vector<256x256xf32>
    %cst_137 = arith.constant dense<0.000000e+00> : vector<16x256xf32>
    %119 = tpu.matmul %93, %118, %cst_137 {dimension_numbers = #tpu.dot_dimension_numbers<[1], [0], [0], [1], [0, 0, 1, 1], [], []>} : vector<16x256xf32>, vector<256x256xf32>, vector<16x256xf32> -> vector<16x256xf32>
    %120 = arith.addf %116, %119 : vector<16x256xf32>
    %c5_138 = arith.constant 5 : index
    %c0_139 = arith.constant 0 : index
    %c0_140 = arith.constant 0 : index
    %121 = vector.load %arg2[%c5_138, %c0_139, %c0_140] : memref<9x16x16xf32, #tpu.memory_space<vmem>>, vector<1x16x16xf32>
    %122 = vector.shape_cast %121 : vector<1x16x16xf32> to vector<16x16xf32>
    %cst_141 = arith.constant dense<0.000000e+00> : vector<16x256xf32>
    %123 = tpu.matmul %122, %93, %cst_141 {dimension_numbers = #tpu.dot_dimension_numbers<[1], [0], [0], [1], [0, 0, 1, 1], [], []>} : vector<16x16xf32>, vector<16x256xf32>, vector<16x256xf32> -> vector<16x256xf32>
    %c5_142 = arith.constant 5 : index
    %c2_143 = arith.constant 2 : index
    %c0_144 = arith.constant 0 : index
    %c0_145 = arith.constant 0 : index
    %124 = vector.load %arg3[%c5_142, %c2_143, %c0_144, %c0_145] : memref<10x3x256x256xf32, #tpu.memory_space<vmem>>, vector<1x1x256x256xf32>
    %125 = vector.shape_cast %124 : vector<1x1x256x256xf32> to vector<256x256xf32>
    %cst_146 = arith.constant dense<0.000000e+00> : vector<16x256xf32>
    %126 = tpu.matmul %123, %125, %cst_146 {dimension_numbers = #tpu.dot_dimension_numbers<[1], [0], [0], [1], [0, 0, 1, 1], [], []>} : vector<16x256xf32>, vector<256x256xf32>, vector<16x256xf32> -> vector<16x256xf32>
    %127 = arith.addf %120, %126 : vector<16x256xf32>
    %128 = arith.addf %110, %127 : vector<16x256xf32>
    %c4_147 = arith.constant 4 : index
    %c0_148 = arith.constant 0 : index
    %c0_149 = arith.constant 0 : index
    %129 = vector.load %arg5[%c4_147, %c0_148, %c0_149] : memref<11x1x256xf32, #tpu.memory_space<vmem>>, vector<1x1x256xf32>
    %130 = vector.shape_cast %129 : vector<1x1x256xf32> to vector<1x256xf32>
    %131 = vector.broadcast %130 : vector<1x256xf32> to vector<16x256xf32>
    %132 = arith.addf %128, %131 : vector<16x256xf32>
    %cst_150 = arith.constant 0.000000e+00 : f32
    %133 = vector.broadcast %cst_150 : f32 to vector<16x256xf32>
    %134 = arith.maximumf %132, %133 : vector<16x256xf32>
    %135 = arith.addf %134, %1 : vector<16x256xf32>
    %c3_151 = arith.constant 3 : index
    %c0_152 = arith.constant 0 : index
    %c0_153 = arith.constant 0 : index
    %136 = vector.load %arg2[%c3_151, %c0_152, %c0_153] : memref<9x16x16xf32, #tpu.memory_space<vmem>>, vector<1x16x16xf32>
    %137 = vector.shape_cast %136 : vector<1x16x16xf32> to vector<16x16xf32>
    %cst_154 = arith.constant dense<0.000000e+00> : vector<16x256xf32>
    %138 = tpu.matmul %137, %135, %cst_154 {dimension_numbers = #tpu.dot_dimension_numbers<[1], [0], [0], [1], [0, 0, 1, 1], [], []>} : vector<16x16xf32>, vector<16x256xf32>, vector<16x256xf32> -> vector<16x256xf32>
    %c6_155 = arith.constant 6 : index
    %c0_156 = arith.constant 0 : index
    %c0_157 = arith.constant 0 : index
    %c0_158 = arith.constant 0 : index
    %139 = vector.load %arg3[%c6_155, %c0_156, %c0_157, %c0_158] : memref<10x3x256x256xf32, #tpu.memory_space<vmem>>, vector<1x1x256x256xf32>
    %140 = vector.shape_cast %139 : vector<1x1x256x256xf32> to vector<256x256xf32>
    %cst_159 = arith.constant dense<0.000000e+00> : vector<16x256xf32>
    %141 = tpu.matmul %138, %140, %cst_159 {dimension_numbers = #tpu.dot_dimension_numbers<[1], [0], [0], [1], [0, 0, 1, 1], [], []>} : vector<16x256xf32>, vector<256x256xf32>, vector<16x256xf32> -> vector<16x256xf32>
    %c6_160 = arith.constant 6 : index
    %c1_161 = arith.constant 1 : index
    %c0_162 = arith.constant 0 : index
    %c0_163 = arith.constant 0 : index
    %142 = vector.load %arg3[%c6_160, %c1_161, %c0_162, %c0_163] : memref<10x3x256x256xf32, #tpu.memory_space<vmem>>, vector<1x1x256x256xf32>
    %143 = vector.shape_cast %142 : vector<1x1x256x256xf32> to vector<256x256xf32>
    %cst_164 = arith.constant dense<0.000000e+00> : vector<16x256xf32>
    %144 = tpu.matmul %135, %143, %cst_164 {dimension_numbers = #tpu.dot_dimension_numbers<[1], [0], [0], [1], [0, 0, 1, 1], [], []>} : vector<16x256xf32>, vector<256x256xf32>, vector<16x256xf32> -> vector<16x256xf32>
    %145 = arith.addf %141, %144 : vector<16x256xf32>
    %c5_165 = arith.constant 5 : index
    %c0_166 = arith.constant 0 : index
    %c0_167 = arith.constant 0 : index
    %146 = vector.load %arg2[%c5_165, %c0_166, %c0_167] : memref<9x16x16xf32, #tpu.memory_space<vmem>>, vector<1x16x16xf32>
    %147 = vector.shape_cast %146 : vector<1x16x16xf32> to vector<16x16xf32>
    %cst_168 = arith.constant dense<0.000000e+00> : vector<16x256xf32>
    %148 = tpu.matmul %147, %135, %cst_168 {dimension_numbers = #tpu.dot_dimension_numbers<[1], [0], [0], [1], [0, 0, 1, 1], [], []>} : vector<16x16xf32>, vector<16x256xf32>, vector<16x256xf32> -> vector<16x256xf32>
    %c6_169 = arith.constant 6 : index
    %c2_170 = arith.constant 2 : index
    %c0_171 = arith.constant 0 : index
    %c0_172 = arith.constant 0 : index
    %149 = vector.load %arg3[%c6_169, %c2_170, %c0_171, %c0_172] : memref<10x3x256x256xf32, #tpu.memory_space<vmem>>, vector<1x1x256x256xf32>
    %150 = vector.shape_cast %149 : vector<1x1x256x256xf32> to vector<256x256xf32>
    %cst_173 = arith.constant dense<0.000000e+00> : vector<16x256xf32>
    %151 = tpu.matmul %148, %150, %cst_173 {dimension_numbers = #tpu.dot_dimension_numbers<[1], [0], [0], [1], [0, 0, 1, 1], [], []>} : vector<16x256xf32>, vector<256x256xf32>, vector<16x256xf32> -> vector<16x256xf32>
    %152 = arith.addf %145, %151 : vector<16x256xf32>
    %c6_174 = arith.constant 6 : index
    %c0_175 = arith.constant 0 : index
    %c0_176 = arith.constant 0 : index
    %153 = vector.load %arg5[%c6_174, %c0_175, %c0_176] : memref<11x1x256xf32, #tpu.memory_space<vmem>>, vector<1x1x256xf32>
    %154 = vector.shape_cast %153 : vector<1x1x256xf32> to vector<1x256xf32>
    %155 = vector.broadcast %154 : vector<1x256xf32> to vector<16x256xf32>
    %156 = arith.addf %152, %155 : vector<16x256xf32>
    %cst_177 = arith.constant 0.000000e+00 : f32
    %157 = vector.broadcast %cst_177 : f32 to vector<16x256xf32>
    %158 = arith.maximumf %156, %157 : vector<16x256xf32>
    %c3_178 = arith.constant 3 : index
    %c0_179 = arith.constant 0 : index
    %c0_180 = arith.constant 0 : index
    %159 = vector.load %arg2[%c3_178, %c0_179, %c0_180] : memref<9x16x16xf32, #tpu.memory_space<vmem>>, vector<1x16x16xf32>
    %160 = vector.shape_cast %159 : vector<1x16x16xf32> to vector<16x16xf32>
    %cst_181 = arith.constant dense<0.000000e+00> : vector<16x256xf32>
    %161 = tpu.matmul %160, %158, %cst_181 {dimension_numbers = #tpu.dot_dimension_numbers<[1], [0], [0], [1], [0, 0, 1, 1], [], []>} : vector<16x16xf32>, vector<16x256xf32>, vector<16x256xf32> -> vector<16x256xf32>
    %c7_182 = arith.constant 7 : index
    %c0_183 = arith.constant 0 : index
    %c0_184 = arith.constant 0 : index
    %c0_185 = arith.constant 0 : index
    %162 = vector.load %arg3[%c7_182, %c0_183, %c0_184, %c0_185] : memref<10x3x256x256xf32, #tpu.memory_space<vmem>>, vector<1x1x256x256xf32>
    %163 = vector.shape_cast %162 : vector<1x1x256x256xf32> to vector<256x256xf32>
    %cst_186 = arith.constant dense<0.000000e+00> : vector<16x256xf32>
    %164 = tpu.matmul %161, %163, %cst_186 {dimension_numbers = #tpu.dot_dimension_numbers<[1], [0], [0], [1], [0, 0, 1, 1], [], []>} : vector<16x256xf32>, vector<256x256xf32>, vector<16x256xf32> -> vector<16x256xf32>
    %c7_187 = arith.constant 7 : index
    %c1_188 = arith.constant 1 : index
    %c0_189 = arith.constant 0 : index
    %c0_190 = arith.constant 0 : index
    %165 = vector.load %arg3[%c7_187, %c1_188, %c0_189, %c0_190] : memref<10x3x256x256xf32, #tpu.memory_space<vmem>>, vector<1x1x256x256xf32>
    %166 = vector.shape_cast %165 : vector<1x1x256x256xf32> to vector<256x256xf32>
    %cst_191 = arith.constant dense<0.000000e+00> : vector<16x256xf32>
    %167 = tpu.matmul %158, %166, %cst_191 {dimension_numbers = #tpu.dot_dimension_numbers<[1], [0], [0], [1], [0, 0, 1, 1], [], []>} : vector<16x256xf32>, vector<256x256xf32>, vector<16x256xf32> -> vector<16x256xf32>
    %168 = arith.addf %164, %167 : vector<16x256xf32>
    %c5_192 = arith.constant 5 : index
    %c0_193 = arith.constant 0 : index
    %c0_194 = arith.constant 0 : index
    %169 = vector.load %arg2[%c5_192, %c0_193, %c0_194] : memref<9x16x16xf32, #tpu.memory_space<vmem>>, vector<1x16x16xf32>
    %170 = vector.shape_cast %169 : vector<1x16x16xf32> to vector<16x16xf32>
    %cst_195 = arith.constant dense<0.000000e+00> : vector<16x256xf32>
    %171 = tpu.matmul %170, %158, %cst_195 {dimension_numbers = #tpu.dot_dimension_numbers<[1], [0], [0], [1], [0, 0, 1, 1], [], []>} : vector<16x16xf32>, vector<16x256xf32>, vector<16x256xf32> -> vector<16x256xf32>
    %c7_196 = arith.constant 7 : index
    %c2_197 = arith.constant 2 : index
    %c0_198 = arith.constant 0 : index
    %c0_199 = arith.constant 0 : index
    %172 = vector.load %arg3[%c7_196, %c2_197, %c0_198, %c0_199] : memref<10x3x256x256xf32, #tpu.memory_space<vmem>>, vector<1x1x256x256xf32>
    %173 = vector.shape_cast %172 : vector<1x1x256x256xf32> to vector<256x256xf32>
    %cst_200 = arith.constant dense<0.000000e+00> : vector<16x256xf32>
    %174 = tpu.matmul %171, %173, %cst_200 {dimension_numbers = #tpu.dot_dimension_numbers<[1], [0], [0], [1], [0, 0, 1, 1], [], []>} : vector<16x256xf32>, vector<256x256xf32>, vector<16x256xf32> -> vector<16x256xf32>
    %175 = arith.addf %168, %174 : vector<16x256xf32>
    %c7_201 = arith.constant 7 : index
    %c0_202 = arith.constant 0 : index
    %c0_203 = arith.constant 0 : index
    %176 = vector.load %arg5[%c7_201, %c0_202, %c0_203] : memref<11x1x256xf32, #tpu.memory_space<vmem>>, vector<1x1x256xf32>
    %177 = vector.shape_cast %176 : vector<1x1x256xf32> to vector<1x256xf32>
    %178 = vector.broadcast %177 : vector<1x256xf32> to vector<16x256xf32>
    %179 = arith.addf %175, %178 : vector<16x256xf32>
    %180 = arith.addf %179, %135 : vector<16x256xf32>
    %cst_204 = arith.constant 0.000000e+00 : f32
    %181 = vector.broadcast %cst_204 : f32 to vector<16x256xf32>
    %182 = arith.maximumf %180, %181 : vector<16x256xf32>
    %c3_205 = arith.constant 3 : index
    %c0_206 = arith.constant 0 : index
    %c0_207 = arith.constant 0 : index
    %183 = vector.load %arg2[%c3_205, %c0_206, %c0_207] : memref<9x16x16xf32, #tpu.memory_space<vmem>>, vector<1x16x16xf32>
    %184 = vector.shape_cast %183 : vector<1x16x16xf32> to vector<16x16xf32>
    %cst_208 = arith.constant dense<0.000000e+00> : vector<16x256xf32>
    %185 = tpu.matmul %184, %182, %cst_208 {dimension_numbers = #tpu.dot_dimension_numbers<[1], [0], [0], [1], [0, 0, 1, 1], [], []>} : vector<16x16xf32>, vector<16x256xf32>, vector<16x256xf32> -> vector<16x256xf32>
    %c8_209 = arith.constant 8 : index
    %c0_210 = arith.constant 0 : index
    %c0_211 = arith.constant 0 : index
    %c0_212 = arith.constant 0 : index
    %186 = vector.load %arg3[%c8_209, %c0_210, %c0_211, %c0_212] : memref<10x3x256x256xf32, #tpu.memory_space<vmem>>, vector<1x1x256x256xf32>
    %187 = vector.shape_cast %186 : vector<1x1x256x256xf32> to vector<256x256xf32>
    %cst_213 = arith.constant dense<0.000000e+00> : vector<16x256xf32>
    %188 = tpu.matmul %185, %187, %cst_213 {dimension_numbers = #tpu.dot_dimension_numbers<[1], [0], [0], [1], [0, 0, 1, 1], [], []>} : vector<16x256xf32>, vector<256x256xf32>, vector<16x256xf32> -> vector<16x256xf32>
    %c8_214 = arith.constant 8 : index
    %c1_215 = arith.constant 1 : index
    %c0_216 = arith.constant 0 : index
    %c0_217 = arith.constant 0 : index
    %189 = vector.load %arg3[%c8_214, %c1_215, %c0_216, %c0_217] : memref<10x3x256x256xf32, #tpu.memory_space<vmem>>, vector<1x1x256x256xf32>
    %190 = vector.shape_cast %189 : vector<1x1x256x256xf32> to vector<256x256xf32>
    %cst_218 = arith.constant dense<0.000000e+00> : vector<16x256xf32>
    %191 = tpu.matmul %182, %190, %cst_218 {dimension_numbers = #tpu.dot_dimension_numbers<[1], [0], [0], [1], [0, 0, 1, 1], [], []>} : vector<16x256xf32>, vector<256x256xf32>, vector<16x256xf32> -> vector<16x256xf32>
    %192 = arith.addf %188, %191 : vector<16x256xf32>
    %c5_219 = arith.constant 5 : index
    %c0_220 = arith.constant 0 : index
    %c0_221 = arith.constant 0 : index
    %193 = vector.load %arg2[%c5_219, %c0_220, %c0_221] : memref<9x16x16xf32, #tpu.memory_space<vmem>>, vector<1x16x16xf32>
    %194 = vector.shape_cast %193 : vector<1x16x16xf32> to vector<16x16xf32>
    %cst_222 = arith.constant dense<0.000000e+00> : vector<16x256xf32>
    %195 = tpu.matmul %194, %182, %cst_222 {dimension_numbers = #tpu.dot_dimension_numbers<[1], [0], [0], [1], [0, 0, 1, 1], [], []>} : vector<16x16xf32>, vector<16x256xf32>, vector<16x256xf32> -> vector<16x256xf32>
    %c8_223 = arith.constant 8 : index
    %c2_224 = arith.constant 2 : index
    %c0_225 = arith.constant 0 : index
    %c0_226 = arith.constant 0 : index
    %196 = vector.load %arg3[%c8_223, %c2_224, %c0_225, %c0_226] : memref<10x3x256x256xf32, #tpu.memory_space<vmem>>, vector<1x1x256x256xf32>
    %197 = vector.shape_cast %196 : vector<1x1x256x256xf32> to vector<256x256xf32>
    %cst_227 = arith.constant dense<0.000000e+00> : vector<16x256xf32>
    %198 = tpu.matmul %195, %197, %cst_227 {dimension_numbers = #tpu.dot_dimension_numbers<[1], [0], [0], [1], [0, 0, 1, 1], [], []>} : vector<16x256xf32>, vector<256x256xf32>, vector<16x256xf32> -> vector<16x256xf32>
    %199 = arith.addf %192, %198 : vector<16x256xf32>
    %c8_228 = arith.constant 8 : index
    %c0_229 = arith.constant 0 : index
    %c0_230 = arith.constant 0 : index
    %200 = vector.load %arg5[%c8_228, %c0_229, %c0_230] : memref<11x1x256xf32, #tpu.memory_space<vmem>>, vector<1x1x256xf32>
    %201 = vector.shape_cast %200 : vector<1x1x256xf32> to vector<1x256xf32>
    %202 = vector.broadcast %201 : vector<1x256xf32> to vector<16x256xf32>
    %203 = arith.addf %199, %202 : vector<16x256xf32>
    %cst_231 = arith.constant 0.000000e+00 : f32
    %204 = vector.broadcast %cst_231 : f32 to vector<16x256xf32>
    %205 = arith.maximumf %203, %204 : vector<16x256xf32>
    %c3_232 = arith.constant 3 : index
    %c0_233 = arith.constant 0 : index
    %c0_234 = arith.constant 0 : index
    %206 = vector.load %arg2[%c3_232, %c0_233, %c0_234] : memref<9x16x16xf32, #tpu.memory_space<vmem>>, vector<1x16x16xf32>
    %207 = vector.shape_cast %206 : vector<1x16x16xf32> to vector<16x16xf32>
    %cst_235 = arith.constant dense<0.000000e+00> : vector<16x256xf32>
    %208 = tpu.matmul %207, %205, %cst_235 {dimension_numbers = #tpu.dot_dimension_numbers<[1], [0], [0], [1], [0, 0, 1, 1], [], []>} : vector<16x16xf32>, vector<16x256xf32>, vector<16x256xf32> -> vector<16x256xf32>
    %c9 = arith.constant 9 : index
    %c0_236 = arith.constant 0 : index
    %c0_237 = arith.constant 0 : index
    %c0_238 = arith.constant 0 : index
    %209 = vector.load %arg3[%c9, %c0_236, %c0_237, %c0_238] : memref<10x3x256x256xf32, #tpu.memory_space<vmem>>, vector<1x1x256x256xf32>
    %210 = vector.shape_cast %209 : vector<1x1x256x256xf32> to vector<256x256xf32>
    %cst_239 = arith.constant dense<0.000000e+00> : vector<16x256xf32>
    %211 = tpu.matmul %208, %210, %cst_239 {dimension_numbers = #tpu.dot_dimension_numbers<[1], [0], [0], [1], [0, 0, 1, 1], [], []>} : vector<16x256xf32>, vector<256x256xf32>, vector<16x256xf32> -> vector<16x256xf32>
    %c9_240 = arith.constant 9 : index
    %c1_241 = arith.constant 1 : index
    %c0_242 = arith.constant 0 : index
    %c0_243 = arith.constant 0 : index
    %212 = vector.load %arg3[%c9_240, %c1_241, %c0_242, %c0_243] : memref<10x3x256x256xf32, #tpu.memory_space<vmem>>, vector<1x1x256x256xf32>
    %213 = vector.shape_cast %212 : vector<1x1x256x256xf32> to vector<256x256xf32>
    %cst_244 = arith.constant dense<0.000000e+00> : vector<16x256xf32>
    %214 = tpu.matmul %205, %213, %cst_244 {dimension_numbers = #tpu.dot_dimension_numbers<[1], [0], [0], [1], [0, 0, 1, 1], [], []>} : vector<16x256xf32>, vector<256x256xf32>, vector<16x256xf32> -> vector<16x256xf32>
    %215 = arith.addf %211, %214 : vector<16x256xf32>
    %c5_245 = arith.constant 5 : index
    %c0_246 = arith.constant 0 : index
    %c0_247 = arith.constant 0 : index
    %216 = vector.load %arg2[%c5_245, %c0_246, %c0_247] : memref<9x16x16xf32, #tpu.memory_space<vmem>>, vector<1x16x16xf32>
    %217 = vector.shape_cast %216 : vector<1x16x16xf32> to vector<16x16xf32>
    %cst_248 = arith.constant dense<0.000000e+00> : vector<16x256xf32>
    %218 = tpu.matmul %217, %205, %cst_248 {dimension_numbers = #tpu.dot_dimension_numbers<[1], [0], [0], [1], [0, 0, 1, 1], [], []>} : vector<16x16xf32>, vector<16x256xf32>, vector<16x256xf32> -> vector<16x256xf32>
    %c9_249 = arith.constant 9 : index
    %c2_250 = arith.constant 2 : index
    %c0_251 = arith.constant 0 : index
    %c0_252 = arith.constant 0 : index
    %219 = vector.load %arg3[%c9_249, %c2_250, %c0_251, %c0_252] : memref<10x3x256x256xf32, #tpu.memory_space<vmem>>, vector<1x1x256x256xf32>
    %220 = vector.shape_cast %219 : vector<1x1x256x256xf32> to vector<256x256xf32>
    %cst_253 = arith.constant dense<0.000000e+00> : vector<16x256xf32>
    %221 = tpu.matmul %218, %220, %cst_253 {dimension_numbers = #tpu.dot_dimension_numbers<[1], [0], [0], [1], [0, 0, 1, 1], [], []>} : vector<16x256xf32>, vector<256x256xf32>, vector<16x256xf32> -> vector<16x256xf32>
    %222 = arith.addf %215, %221 : vector<16x256xf32>
    %c9_254 = arith.constant 9 : index
    %c0_255 = arith.constant 0 : index
    %c0_256 = arith.constant 0 : index
    %223 = vector.load %arg5[%c9_254, %c0_255, %c0_256] : memref<11x1x256xf32, #tpu.memory_space<vmem>>, vector<1x1x256xf32>
    %224 = vector.shape_cast %223 : vector<1x1x256xf32> to vector<1x256xf32>
    %225 = vector.broadcast %224 : vector<1x256xf32> to vector<16x256xf32>
    %226 = arith.addf %222, %225 : vector<16x256xf32>
    %cst_257 = arith.constant 0.000000e+00 : f32
    %227 = vector.broadcast %cst_257 : f32 to vector<16x256xf32>
    %228 = arith.maximumf %226, %227 : vector<16x256xf32>
    %c0_258 = arith.constant 0 : index
    %c0_259 = arith.constant 0 : index
    %229 = vector.load %arg4[%c0_258, %c0_259] : memref<256x256xf32, #tpu.memory_space<vmem>>, vector<256x256xf32>
    %cst_260 = arith.constant dense<0.000000e+00> : vector<16x256xf32>
    %230 = tpu.matmul %228, %229, %cst_260 {dimension_numbers = #tpu.dot_dimension_numbers<[1], [0], [0], [1], [0, 0, 1, 1], [], []>} : vector<16x256xf32>, vector<256x256xf32>, vector<16x256xf32> -> vector<16x256xf32>
    %c10 = arith.constant 10 : index
    %c0_261 = arith.constant 0 : index
    %c0_262 = arith.constant 0 : index
    %231 = vector.load %arg5[%c10, %c0_261, %c0_262] : memref<11x1x256xf32, #tpu.memory_space<vmem>>, vector<1x1x256xf32>
    %232 = vector.shape_cast %231 : vector<1x1x256xf32> to vector<1x256xf32>
    %233 = vector.broadcast %232 : vector<1x256xf32> to vector<16x256xf32>
    %234 = arith.addf %230, %233 : vector<16x256xf32>
    %235 = arith.addf %234, %182 : vector<16x256xf32>
    %cst_263 = arith.constant 0.000000e+00 : f32
    %236 = vector.broadcast %cst_263 : f32 to vector<16x256xf32>
    %237 = arith.maximumf %235, %236 : vector<16x256xf32>
    %cst_264 = arith.constant dense<0.000000e+00> : vector<256xf32>
    %238 = vector.multi_reduction <add>, %237, %cst_264 [0] : vector<16x256xf32> to vector<256xf32>
    %239 = vector.shape_cast %238 : vector<256xf32> to vector<1x256xf32>
    %c0_265 = arith.constant 0 : index
    %c0_266 = arith.constant 0 : index
    %240 = vector.load %arg10[%c0_265, %c0_266] : memref<256x16xf32, #tpu.memory_space<vmem>>, vector<256x16xf32>
    %cst_267 = arith.constant dense<0.000000e+00> : vector<1x16xf32>
    %241 = tpu.matmul %239, %240, %cst_267 {dimension_numbers = #tpu.dot_dimension_numbers<[1], [0], [0], [1], [0, 0, 1, 1], [], []>} : vector<1x256xf32>, vector<256x16xf32>, vector<1x16xf32> -> vector<1x16xf32>
    %cst_268 = arith.constant 3.906250e-03 : f32
    %242 = vector.broadcast %cst_268 : f32 to vector<1x16xf32>
    %243 = arith.mulf %241, %242 : vector<1x16xf32>
    %c0_269 = arith.constant 0 : index
    %c0_270 = arith.constant 0 : index
    %244 = vector.load %arg6[%c0_269, %c0_270] : memref<16x1xf32, #tpu.memory_space<vmem>>, vector<16x1xf32>
    %cst_271 = arith.constant dense<0.000000e+00> : vector<1x1xf32>
    %245 = tpu.matmul %243, %244, %cst_271 {dimension_numbers = #tpu.dot_dimension_numbers<[1], [0], [0], [1], [0, 0, 1, 1], [], []>} : vector<1x16xf32>, vector<16x1xf32>, vector<1x1xf32> -> vector<1x1xf32>
    %c0_272 = arith.constant 0 : index
    %c0_273 = arith.constant 0 : index
    %246 = vector.load %arg7[%c0_272, %c0_273] : memref<1x1xf32, #tpu.memory_space<vmem>>, vector<1x1xf32>
    %247 = arith.addf %245, %246 : vector<1x1xf32>
    %cst_274 = arith.constant 0.000000e+00 : f32
    %248 = vector.broadcast %cst_274 : f32 to vector<1x1xf32>
    %249 = arith.maximumf %247, %248 : vector<1x1xf32>
    %c0_275 = arith.constant 0 : index
    %c0_276 = arith.constant 0 : index
    %250 = vector.load %arg8[%c0_275, %c0_276] : memref<1x16xf32, #tpu.memory_space<vmem>>, vector<1x16xf32>
    %cst_277 = arith.constant dense<0.000000e+00> : vector<1x16xf32>
    %251 = tpu.matmul %249, %250, %cst_277 {dimension_numbers = #tpu.dot_dimension_numbers<[1], [0], [0], [1], [0, 0, 1, 1], [], []>} : vector<1x1xf32>, vector<1x16xf32>, vector<1x16xf32> -> vector<1x16xf32>
    %c0_278 = arith.constant 0 : index
    %c0_279 = arith.constant 0 : index
    %252 = vector.load %arg9[%c0_278, %c0_279] : memref<1x16xf32, #tpu.memory_space<vmem>>, vector<1x16xf32>
    %253 = arith.addf %251, %252 : vector<1x16xf32>
    %254 = arith.negf %253 : vector<1x16xf32>
    %255 = math.exp %254 : vector<1x16xf32>
    %cst_280 = arith.constant 1.000000e+00 : f32
    %256 = vector.broadcast %cst_280 : f32 to vector<1x16xf32>
    %257 = arith.addf %256, %255 : vector<1x16xf32>
    %258 = arith.divf %256, %257 : vector<1x16xf32>
    %c0_281 = arith.constant 0 : index
    %c0_282 = arith.constant 0 : index
    %259 = vector.load %arg11[%c0_281, %c0_282] : memref<16x256xf32, #tpu.memory_space<vmem>>, vector<16x256xf32>
    %cst_283 = arith.constant dense<0.000000e+00> : vector<1x256xf32>
    %260 = tpu.matmul %258, %259, %cst_283 {dimension_numbers = #tpu.dot_dimension_numbers<[1], [0], [0], [1], [0, 0, 1, 1], [], []>} : vector<1x16xf32>, vector<16x256xf32>, vector<1x256xf32> -> vector<1x256xf32>
    %261 = vector.broadcast %260 : vector<1x256xf32> to vector<16x256xf32>
    %262 = arith.mulf %237, %261 : vector<16x256xf32>
    %c0_284 = arith.constant 0 : index
    %c0_285 = arith.constant 0 : index
    %c0_286 = arith.constant 0 : index
    %263 = vector.load %arg12[%c0_284, %c0_285, %c0_286] : memref<1x16x256xf32, #tpu.memory_space<vmem>>, vector<1x16x256xf32>
    %264 = vector.shape_cast %263 : vector<1x16x256xf32> to vector<16x256xf32>
    %265 = vector.shape_cast %262 : vector<16x256xf32> to vector<1x16x256xf32>
    tpu.vector_store %arg12[%c0_284, %c0_285, %c0_286], %265 {strides = array<i32>} : memref<1x16x256xf32, #tpu.memory_space<vmem>>, vector<1x16x256xf32>,
    return
  }
  func.func @transform_0(%arg0: i32) -> (i32, i32, i32) {
    %c0_i32 = arith.constant 0 : i32
    %c0_i32_0 = arith.constant 0 : i32
    %c0_i32_1 = arith.constant 0 : i32
    return %arg0, %c0_i32, %c0_i32_0 : i32, i32, i32
  }
  func.func @transform_1(%arg0: i32) -> (i32, i32, i32) {
    %c0_i32 = arith.constant 0 : i32
    %c0_i32_0 = arith.constant 0 : i32
    %c0_i32_1 = arith.constant 0 : i32
    %c0_i32_2 = arith.constant 0 : i32
    return %c0_i32, %c0_i32_0, %c0_i32_1 : i32, i32, i32
  }
  func.func @transform_2(%arg0: i32) -> (i32, i32, i32, i32) {
    %c0_i32 = arith.constant 0 : i32
    %c0_i32_0 = arith.constant 0 : i32
    %c0_i32_1 = arith.constant 0 : i32
    %c0_i32_2 = arith.constant 0 : i32
    %c0_i32_3 = arith.constant 0 : i32
    return %c0_i32, %c0_i32_0, %c0_i32_1, %c0_i32_2 : i32, i32, i32, i32
  }
  func.func @transform_3(%arg0: i32) -> (i32, i32) {
    %c0_i32 = arith.constant 0 : i32
    %c0_i32_0 = arith.constant 0 : i32
    %c0_i32_1 = arith.constant 0 : i32
    return %c0_i32, %c0_i32_0 : i32, i32
  }
  func.func @transform_4(%arg0: i32) -> (i32, i32, i32) {
    %c0_i32 = arith.constant 0 : i32
    %c0_i32_0 = arith.constant 0 : i32
    %c0_i32_1 = arith.constant 0 : i32
    %c0_i32_2 = arith.constant 0 : i32
    return %c0_i32, %c0_i32_0, %c0_i32_1 : i32, i32, i32
  }
  func.func @transform_5(%arg0: i32) -> (i32, i32) {
    %c0_i32 = arith.constant 0 : i32
    %c0_i32_0 = arith.constant 0 : i32
    %c0_i32_1 = arith.constant 0 : i32
    return %c0_i32, %c0_i32_0 : i32, i32
  }
  func.func @transform_6(%arg0: i32) -> (i32, i32) {
    %c0_i32 = arith.constant 0 : i32
    %c0_i32_0 = arith.constant 0 : i32
    %c0_i32_1 = arith.constant 0 : i32
    return %c0_i32, %c0_i32_0 : i32, i32
  }
  func.func @transform_7(%arg0: i32) -> (i32, i32) {
    %c0_i32 = arith.constant 0 : i32
    %c0_i32_0 = arith.constant 0 : i32
    %c0_i32_1 = arith.constant 0 : i32
    return %c0_i32, %c0_i32_0 : i32, i32
  }
  func.func @transform_8(%arg0: i32) -> (i32, i32) {
    %c0_i32 = arith.constant 0 : i32
    %c0_i32_0 = arith.constant 0 : i32
    %c0_i32_1 = arith.constant 0 : i32
    return %c0_i32, %c0_i32_0 : i32, i32
  }
  func.func @transform_9(%arg0: i32) -> (i32, i32) {
    %c0_i32 = arith.constant 0 : i32
    %c0_i32_0 = arith.constant 0 : i32
    %c0_i32_1 = arith.constant 0 : i32
    return %c0_i32, %c0_i32_0 : i32, i32
  }
  func.func @transform_10(%arg0: i32) -> (i32, i32) {
    %c0_i32 = arith.constant 0 : i32
    %c0_i32_0 = arith.constant 0 : i32
    %c0_i32_1 = arith.constant 0 : i32
    return %c0_i32, %c0_i32_0 : i32, i32
  }
  func.func @transform_11(%arg0: i32) -> (i32, i32, i32) {
    %c0_i32 = arith.constant 0 : i32
    %c0_i32_0 = arith.constant 0 : i32
    %c0_i32_1 = arith.constant 0 : i32
    return %arg0, %c0_i32, %c0_i32_0 : i32, i32, i32
  }
}

</mosaic_0001>

<llo_original>
// kernel: tile.53
$region0: #{tile.53}
  #allocation0 [shape = 's32[1]{0}', space=sflag, size = 0x4, scoped, tag = 'scoped memory for tile.53']
  %s0 = inlined_call_operand.vmem [shape: f32[16], index: 0, kind: input, shape index: {}]
  %s1 = inlined_call_operand.vmem [shape: f32[16,16], index: 1, kind: output, shape index: {}]
  // Predicated region
  $region2: #{tile.53} parent=0 // pred_check
    _
  $region3: #{tile.53} parent=0 // pred_check_branch
    %3 = sbr.rel (0) target = $region5
  $region4: #{tile.53} parent=0 // pred_region
    _
  $region5: #{tile.53} parent=0 // pred_fallthru
    _
  %v4 = vld [vmem:[%s0] ss:$0 sm:$0xff]
  %5 = vst [vmem:[%s1] sm:$0xff] %v4
  %s6 = scalar_lea.vmem %s1, 8
  %7 = vst [vmem:[%s6] sm:$0xff] %v4

// kernel: tile.90
$region0: #{tile.90}
  %s0 = inlined_call_operand.vmem [shape: f32[16,16], index: 0, kind: input, shape index: {}]
  %s1 = inlined_call_operand.vmem [shape: f32[1,256], index: 1, kind: output, shape index: {}]
  $region1: #{tile.90} parent=0
    #allocation0 [shape = 'u8[8192]{0}', space=vmem, size = 0x2000, scoped, tag = 'scoped mem for output reshape']
    %s2 = smov 3
    %v3 = vld [vmem:[%s0] ss:$8 sm:%s2]
    %vm4 = vcmask 130048
    %5 = vst.msk [vmem:[#allocation0] ss:$8 sm:$0x3] %vm4, %v3
    %s6 = scalar_lea.vmem %s0, 7
    %s7 = smov 3
    %v8 = vld [vmem:[%s6] ss:$8 sm:%s7]
    %9 = vrot.lane.b32.xlu0 %v8, 112
    %v10 = vpop.permute.xlu0 %9
    %vm11 = vcmask 1048448
    %12 = vst.msk [vmem:[#allocation0] ss:$8 sm:$0x3] %vm11, %v10
    %s13 = scalar_lea.vmem %s0, 6
    %s14 = smov 3
    %v15 = vld [vmem:[%s13] ss:$8 sm:%s14]
    %16 = vrot.lane.b32.xlu0 %v15, 96
    %v17 = vpop.permute.xlu0 %16
    %vm18 = vcmask 917248
    %19 = vst.msk [vmem:[#allocation0] ss:$8 sm:$0x3] %vm18, %v17
    %s20 = scalar_lea.vmem %s0, 5
    %s21 = smov 3
    %v22 = vld [vmem:[%s20] ss:$8 sm:%s21]
    %23 = vrot.lane.b32.xlu0 %v22, 80
    %v24 = vpop.permute.xlu0 %23
    %vm25 = vcmask 786048
    %26 = vst.msk [vmem:[#allocation0] ss:$8 sm:$0x3] %vm25, %v24
    %s27 = scalar_lea.vmem %s0, 4
    %s28 = smov 3
    %v29 = vld [vmem:[%s27] ss:$8 sm:%s28]
    %30 = vrot.lane.b32.xlu0 %v29, 64
    %v31 = vpop.permute.xlu0 %30
    %vm32 = vcmask 654848
    %33 = vst.msk [vmem:[#allocation0] ss:$8 sm:$0x3] %vm32, %v31
    %s34 = scalar_lea.vmem %s0, 3
    %s35 = smov 3
    %v36 = vld [vmem:[%s34] ss:$8 sm:%s35]
    %37 = vrot.lane.b32.xlu0 %v36, 48
    %v38 = vpop.permute.xlu0 %37
    %vm39 = vcmask 523648
    %40 = vst.msk [vmem:[#allocation0] ss:$8 sm:$0x3] %vm39, %v38
    %s41 = scalar_lea.vmem %s0, 2
    %s42 = smov 3
    %v43 = vld [vmem:[%s41] ss:$8 sm:%s42]
    %44 = vrot.lane.b32.xlu0 %v43, 32
    %v45 = vpop.permute.xlu0 %44
    %vm46 = vcmask 392448
    %47 = vst.msk [vmem:[#allocation0] ss:$8 sm:$0x3] %vm46, %v45
    %s48 = scalar_lea.vmem %s0, 1
    %s49 = smov 3
    %v50 = vld [vmem:[%s48] ss:$8 sm:%s49]
    %51 = vrot.lane.b32.xlu0 %v50, 16
    %v52 = vpop.permute.xlu0 %51
    %vm53 = vcmask 261248
    %54 = vst.msk [vmem:[#allocation0] ss:$8 sm:$0x3] %vm53, %v52
    %s56 = sshllo.u32 0, 1
    %v58 = vld [vmem:[#allocation0] sm:%s56]
    %s59 = sshllo.u32 0, 1
    %60 = vst [vmem:[%s1] sm:%s59] %v58
    %s61 = scalar_lea.vmem [#allocation0], 8
    %v62 = vld [vmem:[%s61] sm:%s56]
    %s63 = sshllo.u32 0, 1
    %s64 = scalar_lea.vmem %s1, 1
    %65 = vst [vmem:[%s64] sm:%s63] %v62

// kernel: block_forward.1
$region0: #{block_forward.1}
  #allocation0 [shape = 'u32[]', space=smem, size = 0x4, offset = 0x4, fixed_abs, tag = 'smem constant byte address 0x4 - core index']
  #allocation1 [shape = 'u32[144,128]{1,0:T(1,128)}', space=vmem, size = 0x12000, scoped, tag = 'internal scratch']
  #allocation2 [shape = 'f32[1,1]{1,0:T(1,128)S(1)}', space=vmem, size = 0x200, scoped, tag = 'scoped memory for block_forward.1']
  %s0 = inlined_call_operand.vmem [shape: f32[2,16,256], index: 0, kind: input, shape index: {}]
  %s1 = inlined_call_operand.vmem [shape: f32[9,16,16], index: 1, kind: input, shape index: {}]
  %s2 = inlined_call_operand.vmem [shape: f32[10,3,256,256], index: 2, kind: input, shape index: {}]
  %s3 = inlined_call_operand.vmem [shape: f32[256,256], index: 3, kind: input, shape index: {}]
  %s4 = inlined_call_operand.vmem [shape: f32[11,1,256], index: 4, kind: input, shape index: {}]
  %s5 = inlined_call_operand.vmem [shape: f32[16,1], index: 5, kind: input, shape index: {}]
  %s6 = inlined_call_operand.<no memory space> [shape: f32[1,1], index: 6, kind: input, shape index: {}]
  %s7 = inlined_call_operand.vmem [shape: f32[1,16], index: 7, kind: input, shape index: {}]
  %s8 = inlined_call_operand.vmem [shape: f32[1,16], index: 8, kind: input, shape index: {}]
  %s9 = inlined_call_operand.vmem [shape: f32[256,16], index: 9, kind: input, shape index: {}]
  %s10 = inlined_call_operand.vmem [shape: f32[16,256], index: 10, kind: input, shape index: {}]
  %s11 = inlined_call_operand.vmem [shape: f32[2,16,256], index: 11, kind: output, shape index: {}]
  %s12 = sld [smem:[#allocation0]]
  $region77: #{block_forward.1} parent=0
    _
  %s14 = ssub.s32 1, %s12
  %s15 = scalar_select 0, %s14, %s12
  %v16 = vstv %s6
  %17 = vst [vmem:[#allocation2] sm:$0x1] %v16
  loop: start=0, step=1, limit=4
  $region2: #{block_forward.1} parent=0 // loop_pre_header
    _
  $region3: #{block_forward.1} parent=0 // loop_header
    %s19 = sphi 0, %s23
    %p20 = scmp.ge.s32.totalorder %s19, 4
    %s29 = sphi 0, %s31
    %s32 = sphi 0, %s29
    %s33 = sphi 0, %s32
    %s49 = sphi 0, %s33
    %s53 = sphi 0, %s53
    %s55 = sphi 0, %s53
    %s56 = sphi 0, %s55
    %s70 = sphi 0, %s56
    %s74 = sphi 0, %s74
    %s76 = sphi 0, %s74
    %s77 = sphi 0, %s76
    %s91 = sphi 0, %s77
    %s95 = sphi 0, %s95
    %s97 = sphi 0, %s95
    %s98 = sphi 0, %s97
    %s112 = sphi 0, %s98
    %s116 = sphi 0, %s116
    %s118 = sphi 0, %s116
    %s119 = sphi 0, %s118
    %s133 = sphi 0, %s119
    %s137 = sphi 0, %s137
    %s139 = sphi 0, %s137
    %s140 = sphi 0, %s139
    %s154 = sphi 0, %s140
    %s158 = sphi 0, %s158
    %s160 = sphi 0, %s158
    %s161 = sphi 0, %s160
    %s175 = sphi 0, %s161
    %s179 = sphi 0, %s179
    %s181 = sphi 0, %s179
    %s182 = sphi 0, %s181
    %s196 = sphi 0, %s182
    %s200 = sphi 0, %s200
    %s202 = sphi 0, %s200
    %s203 = sphi 0, %s202
    %s217 = sphi 0, %s203
    %s221 = sphi 0, %s221
    %s223 = sphi 0, %s221
    %s224 = sphi 0, %s223
    %s238 = sphi 0, %s224
    %s242 = sphi 0, %s242
    %s244 = sphi 0, %s242
    %s245 = sphi 0, %s244
    %s259 = sphi 0, %s245
    %s265 = sphi 0, %s267
    %s268 = sphi 0, %s265
    %s269 = sphi 0, %s268
    %s285 = sphi 0, %s269
  $region4: #{block_forward.1} parent=0 // loop_header_branch
    %22 = sbr.rel (%p20) target = $region8
  $region5: #{block_forward.1} parent=0 // loop_body
    %s24 = ssub.s32 %s19, 1
    %s25 = ssub.s32 %s19, 2
    %s26 = sadd.s32 %s19, 1
    %s27 = ssub.s32 %s19, %s26
    %p28 = scmp.eq.s32.totalorder %s27, 0
    %s30 = sadd.s32 %s29, 1
    %s31 = scalar_select %p28, %s29, %s30
    %p34 = pneg %p28
    %p35 = scmp.eq.s32.totalorder %s19, 1
    %p36 = por %p34, %p35
    %p37 = scmp.ne.s32.totalorder %s29, %s32
    %p38 = scmp.eq.s32.totalorder %s19, 0
    %p39 = por %p37, %p38
    %p40 = scmp.ne.s32.totalorder %s29, %s32
    %p41 = scmp.eq.s32.totalorder %s24, 1
    %p42 = por %p40, %p41
    %p43 = scmp.ne.s32.totalorder %s32, %s33
    %p44 = scmp.eq.s32.totalorder %s24, 0
    %p45 = por %p43, %p44
    %p46 = scmp.ne.s32.totalorder %s32, %s33
    %p47 = scmp.eq.s32.totalorder %s25, 1
    %p48 = por %p46, %p47
    %p50 = scmp.ne.s32.totalorder %s33, %s49
    %p51 = scmp.eq.s32.totalorder %s25, 0
    %p52 = por %p50, %p51
    %s54 = sadd.s32 %s53, 1
    %p57 = scmp.eq.s32.totalorder %s19, 1
    %p58 = scmp.ne.s32.totalorder %s53, %s55
    %p59 = scmp.eq.s32.totalorder %s19, 0
    %p60 = por %p58, %p59
    %p61 = scmp.ne.s32.totalorder %s53, %s55
    %p62 = scmp.eq.s32.totalorder %s24, 1
    %p63 = por %p61, %p62
    %p64 = scmp.ne.s32.totalorder %s55, %s56
    %p65 = scmp.eq.s32.totalorder %s24, 0
    %p66 = por %p64, %p65
    %p67 = scmp.ne.s32.totalorder %s55, %s56
    %p68 = scmp.eq.s32.totalorder %s25, 1
    %p69 = por %p67, %p68
    %p71 = scmp.ne.s32.totalorder %s56, %s70
    %p72 = scmp.eq.s32.totalorder %s25, 0
    %p73 = por %p71, %p72
    %s75 = sadd.s32 %s74, 1
    %p78 = scmp.eq.s32.totalorder %s19, 1
    %p79 = scmp.ne.s32.totalorder %s74, %s76
    %p80 = scmp.eq.s32.totalorder %s19, 0
    %p81 = por %p79, %p80
    %p82 = scmp.ne.s32.totalorder %s74, %s76
    %p83 = scmp.eq.s32.totalorder %s24, 1
    %p84 = por %p82, %p83
    %p85 = scmp.ne.s32.totalorder %s76, %s77
    %p86 = scmp.eq.s32.totalorder %s24, 0
    %p87 = por %p85, %p86
    %p88 = scmp.ne.s32.totalorder %s76, %s77
    %p89 = scmp.eq.s32.totalorder %s25, 1
    %p90 = por %p88, %p89
    %p92 = scmp.ne.s32.totalorder %s77, %s91
    %p93 = scmp.eq.s32.totalorder %s25, 0
    %p94 = por %p92, %p93
    %s96 = sadd.s32 %s95, 1
    %p99 = scmp.eq.s32.totalorder %s19, 1
    %p100 = scmp.ne.s32.totalorder %s95, %s97
    %p101 = scmp.eq.s32.totalorder %s19, 0
    %p102 = por %p100, %p101
    %p103 = scmp.ne.s32.totalorder %s95, %s97
    %p104 = scmp.eq.s32.totalorder %s24, 1
    %p105 = por %p103, %p104
    %p106 = scmp.ne.s32.totalorder %s97, %s98
    %p107 = scmp.eq.s32.totalorder %s24, 0
    %p108 = por %p106, %p107
    %p109 = scmp.ne.s32.totalorder %s97, %s98
    %p110 = scmp.eq.s32.totalorder %s25, 1
    %p111 = por %p109, %p110
    %p113 = scmp.ne.s32.totalorder %s98, %s112
    %p114 = scmp.eq.s32.totalorder %s25, 0
    %p115 = por %p113, %p114
    %s117 = sadd.s32 %s116, 1
    %p120 = scmp.eq.s32.totalorder %s19, 1
    %p121 = scmp.ne.s32.totalorder %s116, %s118
    %p122 = scmp.eq.s32.totalorder %s19, 0
    %p123 = por %p121, %p122
    %p124 = scmp.ne.s32.totalorder %s116, %s118
    %p125 = scmp.eq.s32.totalorder %s24, 1
    %p126 = por %p124, %p125
    %p127 = scmp.ne.s32.totalorder %s118, %s119
    %p128 = scmp.eq.s32.totalorder %s24, 0
    %p129 = por %p127, %p128
    %p130 = scmp.ne.s32.totalorder %s118, %s119
    %p131 = scmp.eq.s32.totalorder %s25, 1
    %p132 = por %p130, %p131
    %p134 = scmp.ne.s32.totalorder %s119, %s133
    %p135 = scmp.eq.s32.totalorder %s25, 0
    %p136 = por %p134, %p135
    %s138 = sadd.s32 %s137, 1
    %p141 = scmp.eq.s32.totalorder %s19, 1
    %p142 = scmp.ne.s32.totalorder %s137, %s139
    %p143 = scmp.eq.s32.totalorder %s19, 0
    %p144 = por %p142, %p143
    %p145 = scmp.ne.s32.totalorder %s137, %s139
    %p146 = scmp.eq.s32.totalorder %s24, 1
    %p147 = por %p145, %p146
    %p148 = scmp.ne.s32.totalorder %s139, %s140
    %p149 = scmp.eq.s32.totalorder %s24, 0
    %p150 = por %p148, %p149
    %p151 = scmp.ne.s32.totalorder %s139, %s140
    %p152 = scmp.eq.s32.totalorder %s25, 1
    %p153 = por %p151, %p152
    %p155 = scmp.ne.s32.totalorder %s140, %s154
    %p156 = scmp.eq.s32.totalorder %s25, 0
    %p157 = por %p155, %p156
    %s159 = sadd.s32 %s158, 1
    %p162 = scmp.eq.s32.totalorder %s19, 1
    %p163 = scmp.ne.s32.totalorder %s158, %s160
    %p164 = scmp.eq.s32.totalorder %s19, 0
    %p165 = por %p163, %p164
    %p166 = scmp.ne.s32.totalorder %s158, %s160
    %p167 = scmp.eq.s32.totalorder %s24, 1
    %p168 = por %p166, %p167
    %p169 = scmp.ne.s32.totalorder %s160, %s161
    %p170 = scmp.eq.s32.totalorder %s24, 0
    %p171 = por %p169, %p170
    %p172 = scmp.ne.s32.totalorder %s160, %s161
    %p173 = scmp.eq.s32.totalorder %s25, 1
    %p174 = por %p172, %p173
    %p176 = scmp.ne.s32.totalorder %s161, %s175
    %p177 = scmp.eq.s32.totalorder %s25, 0
    %p178 = por %p176, %p177
    %s180 = sadd.s32 %s179, 1
    %p183 = scmp.eq.s32.totalorder %s19, 1
    %p184 = scmp.ne.s32.totalorder %s179, %s181
    %p185 = scmp.eq.s32.totalorder %s19, 0
    %p186 = por %p184, %p185
    %p187 = scmp.ne.s32.totalorder %s179, %s181
    %p188 = scmp.eq.s32.totalorder %s24, 1
    %p189 = por %p187, %p188
    %p190 = scmp.ne.s32.totalorder %s181, %s182
    %p191 = scmp.eq.s32.totalorder %s24, 0
    %p192 = por %p190, %p191
    %p193 = scmp.ne.s32.totalorder %s181, %s182
    %p194 = scmp.eq.s32.totalorder %s25, 1
    %p195 = por %p193, %p194
    %p197 = scmp.ne.s32.totalorder %s182, %s196
    %p198 = scmp.eq.s32.totalorder %s25, 0
    %p199 = por %p197, %p198
    %s201 = sadd.s32 %s200, 1
    %p204 = scmp.eq.s32.totalorder %s19, 1
    %p205 = scmp.ne.s32.totalorder %s200, %s202
    %p206 = scmp.eq.s32.totalorder %s19, 0
    %p207 = por %p205, %p206
    %p208 = scmp.ne.s32.totalorder %s200, %s202
    %p209 = scmp.eq.s32.totalorder %s24, 1
    %p210 = por %p208, %p209
    %p211 = scmp.ne.s32.totalorder %s202, %s203
    %p212 = scmp.eq.s32.totalorder %s24, 0
    %p213 = por %p211, %p212
    %p214 = scmp.ne.s32.totalorder %s202, %s203
    %p215 = scmp.eq.s32.totalorder %s25, 1
    %p216 = por %p214, %p215
    %p218 = scmp.ne.s32.totalorder %s203, %s217
    %p219 = scmp.eq.s32.totalorder %s25, 0
    %p220 = por %p218, %p219
    %s222 = sadd.s32 %s221, 1
    %p225 = scmp.eq.s32.totalorder %s19, 1
    %p226 = scmp.ne.s32.totalorder %s221, %s223
    %p227 = scmp.eq.s32.totalorder %s19, 0
    %p228 = por %p226, %p227
    %p229 = scmp.ne.s32.totalorder %s221, %s223
    %p230 = scmp.eq.s32.totalorder %s24, 1
    %p231 = por %p229, %p230
    %p232 = scmp.ne.s32.totalorder %s223, %s224
    %p233 = scmp.eq.s32.totalorder %s24, 0
    %p234 = por %p232, %p233
    %p235 = scmp.ne.s32.totalorder %s223, %s224
    %p236 = scmp.eq.s32.totalorder %s25, 1
    %p237 = por %p235, %p236
    %p239 = scmp.ne.s32.totalorder %s224, %s238
    %p240 = scmp.eq.s32.totalorder %s25, 0
    %p241 = por %p239, %p240
    %s243 = sadd.s32 %s242, 1
    %p246 = scmp.eq.s32.totalorder %s19, 1
    %p247 = scmp.ne.s32.totalorder %s242, %s244
    %p248 = scmp.eq.s32.totalorder %s19, 0
    %p249 = por %p247, %p248
    %p250 = scmp.ne.s32.totalorder %s242, %s244
    %p251 = scmp.eq.s32.totalorder %s24, 1
    %p252 = por %p250, %p251
    %p253 = scmp.ne.s32.totalorder %s244, %s245
    %p254 = scmp.eq.s32.totalorder %s24, 0
    %p255 = por %p253, %p254
    %p256 = scmp.ne.s32.totalorder %s244, %s245
    %p257 = scmp.eq.s32.totalorder %s25, 1
    %p258 = por %p256, %p257
    %p260 = scmp.ne.s32.totalorder %s245, %s259
    %p261 = scmp.eq.s32.totalorder %s25, 0
    %p262 = por %p260, %p261
    %s263 = ssub.s32 %s19, %s26
    %p264 = scmp.eq.s32.totalorder %s263, 0
    %s266 = sadd.s32 %s265, 1
    %s267 = scalar_select %p264, %s265, %s266
    %p270 = pneg %p264
    %p271 = scmp.eq.s32.totalorder %s19, 1
    %p272 = por %p270, %p271
    %p273 = scmp.ne.s32.totalorder %s265, %s268
    %p274 = scmp.eq.s32.totalorder %s19, 0
    %p275 = por %p273, %p274
    %p276 = scmp.ne.s32.totalorder %s265, %s268
    %p277 = scmp.eq.s32.totalorder %s24, 1
    %p278 = por %p276, %p277
    %p279 = scmp.ne.s32.totalorder %s268, %s269
    %p280 = scmp.eq.s32.totalorder %s24, 0
    %p281 = por %p279, %p280
    %p282 = scmp.ne.s32.totalorder %s268, %s269
    %p283 = scmp.eq.s32.totalorder %s25, 1
    %p284 = por %p282, %p283
    %p286 = scmp.ne.s32.totalorder %s269, %s285
    %p287 = scmp.eq.s32.totalorder %s25, 0
    %p288 = por %p286, %p287
    %p289 = scmp.le.s32.totalorder 1, %s19
    %p290 = scmp.lt.s32.totalorder %s19, 3
    %p291 = pnand %p289, %p290
    %p292 = pneg %p291
    // Predicated region
    $region9: #{block_forward.1} parent=5 // pred_check
      _
    $region10: #{block_forward.1} parent=5 // pred_check_branch
      %294 = sbr.rel (%p291) target = $region12
    $region11: #{block_forward.1} parent=5 // pred_region
      %s295 = ssub.s32 %s19, 1
      // Predicated region
      $region13: #{block_forward.1} parent=11 // pred_check
        %p296 = pneg %p66
      $region14: #{block_forward.1} parent=11 // pred_check_branch
        %298 = sbr.rel (%p296) target = $region16
      $region15: #{block_forward.1} parent=11 // pred_region
        _
      $region16: #{block_forward.1} parent=11 // pred_fallthru
        _
      // Predicated region
      $region17: #{block_forward.1} parent=11 // pred_check
        %p299 = pneg %p87
      $region18: #{block_forward.1} parent=11 // pred_check_branch
        %301 = sbr.rel (%p299) target = $region20
      $region19: #{block_forward.1} parent=11 // pred_region
        _
      $region20: #{block_forward.1} parent=11 // pred_fallthru
        _
      // Predicated region
      $region21: #{block_forward.1} parent=11 // pred_check
        %p302 = pneg %p108
      $region22: #{block_forward.1} parent=11 // pred_check_branch
        %304 = sbr.rel (%p302) target = $region24
      $region23: #{block_forward.1} parent=11 // pred_region
        _
      $region24: #{block_forward.1} parent=11 // pred_fallthru
        _
      // Predicated region
      $region25: #{block_forward.1} parent=11 // pred_check
        %p305 = pneg %p129
      $region26: #{block_forward.1} parent=11 // pred_check_branch
        %307 = sbr.rel (%p305) target = $region28
      $region27: #{block_forward.1} parent=11 // pred_region
        _
      $region28: #{block_forward.1} parent=11 // pred_fallthru
        _
      // Predicated region
      $region29: #{block_forward.1} parent=11 // pred_check
        %p308 = pneg %p150
      $region30: #{block_forward.1} parent=11 // pred_check_branch
        %310 = sbr.rel (%p308) target = $region32
      $region31: #{block_forward.1} parent=11 // pred_region
        _
      $region32: #{block_forward.1} parent=11 // pred_fallthru
        _
      // Predicated region
      $region33: #{block_forward.1} parent=11 // pred_check
        %p311 = pneg %p171
      $region34: #{block_forward.1} parent=11 // pred_check_branch
        %313 = sbr.rel (%p311) target = $region36
      $region35: #{block_forward.1} parent=11 // pred_region
        _
      $region36: #{block_forward.1} parent=11 // pred_fallthru
        _
      // Predicated region
      $region37: #{block_forward.1} parent=11 // pred_check
        %p314 = pneg %p192
      $region38: #{block_forward.1} parent=11 // pred_check_branch
        %316 = sbr.rel (%p314) target = $region40
      $region39: #{block_forward.1} parent=11 // pred_region
        _
      $region40: #{block_forward.1} parent=11 // pred_fallthru
        _
      // Predicated region
      $region41: #{block_forward.1} parent=11 // pred_check
        %p317 = pneg %p213
      $region42: #{block_forward.1} parent=11 // pred_check_branch
        %319 = sbr.rel (%p317) target = $region44
      $region43: #{block_forward.1} parent=11 // pred_region
        _
      $region44: #{block_forward.1} parent=11 // pred_fallthru
        _
      // Predicated region
      $region45: #{block_forward.1} parent=11 // pred_check
        %p320 = pneg %p234
      $region46: #{block_forward.1} parent=11 // pred_check_branch
        %322 = sbr.rel (%p320) target = $region48
      $region47: #{block_forward.1} parent=11 // pred_region
        _
      $region48: #{block_forward.1} parent=11 // pred_fallthru
        _
      // Predicated region
      $region49: #{block_forward.1} parent=11 // pred_check
        %p323 = pneg %p255
      $region50: #{block_forward.1} parent=11 // pred_check_branch
        %325 = sbr.rel (%p323) target = $region52
      $region51: #{block_forward.1} parent=11 // pred_region
        _
      $region52: #{block_forward.1} parent=11 // pred_fallthru
        _
    $region12: #{block_forward.1} parent=5 // pred_fallthru
      _
    %p326 = scmp.lt.s32.totalorder %s19, 2
    // Predicated region
    $region53: #{block_forward.1} parent=5 // pred_check
      %p327 = pneg %p326
    $region54: #{block_forward.1} parent=5 // pred_check_branch
      %329 = sbr.rel (%p327) target = $region56
    $region55: #{block_forward.1} parent=5 // pred_region
      // Predicated region
      $region57: #{block_forward.1} parent=55 // pred_check
        %p330 = pneg %p39
      $region58: #{block_forward.1} parent=55 // pred_check_branch
        %332 = sbr.rel (%p330) target = $region60
      $region59: #{block_forward.1} parent=55 // pred_region
        %p333 = scmp.lt.s32.totalorder %s19, 1
        %s334 = scalar_select %p333, %s19, 1
        %s335 = smul.addr %s334, 4
        %s336 = smul.addr %s335, 8
        %s337 = scalar_lea.vmem %s0, %s336
      $region60: #{block_forward.1} parent=55 // pred_fallthru
        _
    $region56: #{block_forward.1} parent=5 // pred_fallthru
      _
    %p338 = scmp.le.s32.totalorder 1, %s19
    %p339 = scmp.lt.s32.totalorder %s19, 3
    %p340 = pnand %p338, %p339
    %p341 = pneg %p340
    // Predicated region
    $region61: #{block_forward.1} parent=5 // pred_check
      _
    $region62: #{block_forward.1} parent=5 // pred_check_branch
      %343 = sbr.rel (%p340) target = $region64
    $region63: #{block_forward.1} parent=5 // pred_region
      %s344 = ssub.s32 %s19, 1
      %p345 = scmp.lt.s32.totalorder %s24, 1
      %s346 = scalar_select %p345, %s24, 1
      %s347 = smul.addr %s346, 4
      %s348 = smul.addr %s347, 8
      %s349 = scalar_lea.vmem %s0, %s348
      %p350 = pneg %p45
      %p351 = pneg %p42
      %p352 = pneg %p66
      %p353 = pneg %p63
      %p354 = pneg %p87
      %p355 = pneg %p84
      %p356 = pneg %p108
      %p357 = pneg %p105
      %p358 = pneg %p129
      %p359 = pneg %p126
      %p360 = pneg %p150
      %p361 = pneg %p147
      %p362 = pneg %p171
      %p363 = pneg %p168
      %p364 = pneg %p192
      %p365 = pneg %p189
      %p366 = pneg %p213
      %p367 = pneg %p210
      %p368 = pneg %p234
      %p369 = pneg %p231
      %p370 = pneg %p255
      %p371 = pneg %p252
      %p372 = pneg %p281
      %p373 = pneg %p278
      %p374 = scmp.lt.s32.totalorder %s24, 1
      %s375 = scalar_select %p374, %s24, 1
      %s376 = smul.addr %s375, 4
      %s377 = smul.addr %s376, 8
      %s378 = scalar_lea.vmem %s11, %s377
      %p379 = scmp.lt.s32.totalorder %s24, 1
      %s380 = scalar_select %p379, %s24, 1
      %s381 = smul.addr %s380, 4
      %s382 = smul.addr %s381, 8
      %s383 = scalar_lea.vmem %s0, %s382
      %p384 = scmp.lt.s32.totalorder %s24, 1
      %s385 = scalar_select %p384, %s24, 1
      %s386 = smul.addr %s385, 4
      %s387 = smul.addr %s386, 8
      %s388 = scalar_lea.vmem %s11, %s387
      %v389 = vld [vmem:[%s383] sm:$0xff]
      %v390 = vld [vmem:[%s383 + $0x8] sm:$0xff]
      %v391 = vld [vmem:[%s383 + $0x10] sm:$0xff]
      %v392 = vld [vmem:[%s383 + $0x18] sm:$0xff]
      %s393 = scalar_lea.vmem %s1, 48
      %v394 = vld [vmem:[%s393] sm:$0xff]
      %v395 = vld [vmem:[%s393 + $0x8] sm:$0xff]
      %vm396 = vcmask 130048
      %v398 = vsel %vm396, %v394, 0
      %v401 = vsel %vm396, %v395, 0
      %403 = vmatprep.subr.mxu0 %v390
      %404 = vmatpush1.msra.mxu0 %v389
      %405 = vmatprep.subr.mxu0 %v392
      %406 = vmatpush1.msra.mxu0 %v391
      %407 = vmatprep.subr.mxu0 0.0
      %408 = vmatpush1.msra.mxu0 0.0
      %409 = vmatprep.subr.mxu0 0.0
      %410 = vmatpush1.msra.mxu0 0.0
      %411 = vmatprep.subr.mxu0 0.0
      %412 = vmatpush1.msra.mxu0 0.0
      %413 = vmatprep.subr.mxu0 0.0
      %414 = vmatpush1.msra.mxu0 0.0
      %415 = vmatprep.subr.mxu0 0.0
      %416 = vmatpush1.msra.mxu0 0.0
      %417 = vmatprep.subr.mxu0 0.0
      %418 = vmatpush1.msra.mxu0 0.0
      %419 = vmatprep.subr.mxu0 0.0
      %420 = vmatpush1.msra.mxu0 0.0
      %421 = vmatprep.subr.mxu0 0.0
      %422 = vmatpush1.msra.mxu0 0.0
      %423 = vmatprep.subr.mxu0 0.0
      %424 = vmatpush1.msra.mxu0 0.0
      %425 = vmatprep.subr.mxu0 0.0
      %426 = vmatpush1.msra.mxu0 0.0
      %427 = vmatprep.subr.mxu0 0.0
      %428 = vmatpush1.msra.mxu0 0.0
      %429 = vmatprep.subr.mxu0 0.0
      %430 = vmatpush1.msra.mxu0 0.0
      %431 = vmatprep.subr.mxu0 0.0
      %432 = vmatpush1.msra.mxu0 0.0
      %433 = vmatprep.subr.mxu0 0.0
      %434 = vmatpush1.msra.mxu0 0.0
      %435 = vmatprep.subr.mxu0 0.0
      %436 = vmatpush1.msra.mxu0 0.0
      %437 = vmatprep.subr.mxu0 0.0
      %438 = vmatpush1.msra.mxu0 0.0
      %439 = vmatprep.subr.mxu0 0.0
      %440 = vmatpush1.msra.mxu0 0.0
      %441 = vmatprep.subr.mxu0 0.0
      %442 = vmatpush1.msra.mxu0 0.0
      %443 = vmatprep.subr.mxu0 0.0
      %444 = vmatpush1.msra.mxu0 0.0
      %445 = vmatprep.subr.mxu0 0.0
      %446 = vmatpush1.msra.mxu0 0.0
      %447 = vmatprep.subr.mxu0 0.0
      %448 = vmatpush1.msra.mxu0 0.0
      %449 = vmatprep.subr.mxu0 0.0
      %450 = vmatpush1.msra.mxu0 0.0
      %451 = vmatprep.subr.mxu0 0.0
      %452 = vmatpush1.msra.mxu0 0.0
      %453 = vmatprep.subr.mxu0 0.0
      %454 = vmatpush1.msra.mxu0 0.0
      %455 = vmatprep.subr.mxu0 0.0
      %456 = vmatpush1.msra.mxu0 0.0
      %457 = vmatprep.subr.mxu0 0.0
      %458 = vmatpush1.msra.mxu0 0.0
      %459 = vmatprep.subr.mxu0 0.0
      %460 = vmatpush1.msra.mxu0 0.0
      %461 = vmatprep.subr.mxu0 0.0
      %462 = vmatpush1.msra.mxu0 0.0
      %463 = vmatprep.subr.mxu0 0.0
      %464 = vmatpush1.msra.mxu0 0.0
      %465 = vmatprep.subr.mxu0 0.0
      %466 = vmatpush1.msra.mxu0 0.0
      %467 = vmatprep.mubr.f32.mxu0 0.0
      %468 = vmatmul.mubr.f32.gmra.mrb[0].mxu0 %v398
      %v469 = vpop.f32.mrb[0].mxu0
      %v470 = vadd.f32 0.0, %v469
      %v471 = vpop.f32.mrb[0].mxu0
      %v472 = vadd.f32 0.0, %v471
      %473 = vmatprep.mubr.f32.mxu0 0.0
      %474 = vmatmul.mubr.f32.gmra.mrb[0].mxu0 %v401
      %v475 = vpop.f32.mrb[0].mxu0
      %v476 = vadd.f32 0.0, %v475
      %v477 = vpop.f32.mrb[0].mxu0
      %v478 = vadd.f32 0.0, %v477
      %479 = vdwg.mxu0
      %v480 = vld [vmem:[%s2] sm:$0xff]
      %v481 = vld [vmem:[%s2 + $0x8] sm:$0xff]
      %v482 = vld [vmem:[%s2 + $0x10] sm:$0xff]
      %v483 = vld [vmem:[%s2 + $0x18] sm:$0xff]
      %v484 = vld [vmem:[%s2 + $0x20] sm:$0xff]
      %v485 = vld [vmem:[%s2 + $0x28] sm:$0xff]
      %v486 = vld [vmem:[%s2 + $0x30] sm:$0xff]
      %v487 = vld [vmem:[%s2 + $0x38] sm:$0xff]
      %v488 = vld [vmem:[%s2 + $0x40] sm:$0xff]
      %v489 = vld [vmem:[%s2 + $0x48] sm:$0xff]
      %v490 = vld [vmem:[%s2 + $0x50] sm:$0xff]
      %v491 = vld [vmem:[%s2 + $0x58] sm:$0xff]
      %v492 = vld [vmem:[%s2 + $0x60] sm:$0xff]
      %v493 = vld [vmem:[%s2 + $0x68] sm:$0xff]
      %v494 = vld [vmem:[%s2 + $0x70] sm:$0xff]
      %v495 = vld [vmem:[%s2 + $0x78] sm:$0xff]
      %v496 = vld [vmem:[%s2 + $0x80] sm:$0xff]
      %v497 = vld [vmem:[%s2 + $0x88] sm:$0xff]
      %v498 = vld [vmem:[%s2 + $0x90] sm:$0xff]
      %v499 = vld [vmem:[%s2 + $0x98] sm:$0xff]
      %v500 = vld [vmem:[%s2 + $0xa0] sm:$0xff]
      %v501 = vld [vmem:[%s2 + $0xa8] sm:$0xff]
      %v502 = vld [vmem:[%s2 + $0xb0] sm:$0xff]
      %v503 = vld [vmem:[%s2 + $0xb8] sm:$0xff]
      %v504 = vld [vmem:[%s2 + $0xc0] sm:$0xff]
      %v505 = vld [vmem:[%s2 + $0xc8] sm:$0xff]
      %v506 = vld [vmem:[%s2 + $0xd0] sm:$0xff]
      %v507 = vld [vmem:[%s2 + $0xd8] sm:$0xff]
      %v508 = vld [vmem:[%s2 + $0xe0] sm:$0xff]
      %v509 = vld [vmem:[%s2 + $0xe8] sm:$0xff]
      %v510 = vld [vmem:[%s2 + $0xf0] sm:$0xff]
      %v511 = vld [vmem:[%s2 + $0xf8] sm:$0xff]
      %v512 = vld [vmem:[%s2 + $0x100] sm:$0xff]
      %v513 = vld [vmem:[%s2 + $0x108] sm:$0xff]
      %v514 = vld [vmem:[%s2 + $0x110] sm:$0xff]
      %v515 = vld [vmem:[%s2 + $0x118] sm:$0xff]
      %v516 = vld [vmem:[%s2 + $0x120] sm:$0xff]
      %v517 = vld [vmem:[%s2 + $0x128] sm:$0xff]
      %v518 = vld [vmem:[%s2 + $0x130] sm:$0xff]
      %v519 = vld [vmem:[%s2 + $0x138] sm:$0xff]
      %v520 = vld [vmem:[%s2 + $0x140] sm:$0xff]
      %v521 = vld [vmem:[%s2 + $0x148] sm:$0xff]
      %v522 = vld [vmem:[%s2 + $0x150] sm:$0xff]
      %v523 = vld [vmem:[%s2 + $0x158] sm:$0xff]
      %v524 = vld [vmem:[%s2 + $0x160] sm:$0xff]
      %v525 = vld [vmem:[%s2 + $0x168] sm:$0xff]
      %v526 = vld [vmem:[%s2 + $0x170] sm:$0xff]
      %v527 = vld [vmem:[%s2 + $0x178] sm:$0xff]
      %v528 = vld [vmem:[%s2 + $0x180] sm:$0xff]
      %v529 = vld [vmem:[%s2 + $0x188] sm:$0xff]
      %v530 = vld [vmem:[%s2 + $0x190] sm:$0xff]
      %v531 = vld [vmem:[%s2 + $0x198] sm:$0xff]
      %v532 = vld [vmem:[%s2 + $0x1a0] sm:$0xff]
      %v533 = vld [vmem:[%s2 + $0x1a8] sm:$0xff]
      %v534 = vld [vmem:[%s2 + $0x1b0] sm:$0xff]
      %v535 = vld [vmem:[%s2 + $0x1b8] sm:$0xff]
      %v536 = vld [vmem:[%s2 + $0x1c0] sm:$0xff]
      %v537 = vld [vmem:[%s2 + $0x1c8] sm:$0xff]
      %v538 = vld [vmem:[%s2 + $0x1d0] sm:$0xff]
      %v539 = vld [vmem:[%s2 + $0x1d8] sm:$0xff]
      %v540 = vld [vmem:[%s2 + $0x1e0] sm:$0xff]
      %v541 = vld [vmem:[%s2 + $0x1e8] sm:$0xff]
      %v542 = vld [vmem:[%s2 + $0x1f0] sm:$0xff]
      %v543 = vld [vmem:[%s2 + $0x1f8] sm:$0xff]
      %s544 = scalar_lea.vmem %s2, 512
      %v545 = vld [vmem:[%s544] sm:$0xff]
      %v546 = vld [vmem:[%s544 + $0x8] sm:$0xff]
      %v547 = vld [vmem:[%s544 + $0x10] sm:$0xff]
      %v548 = vld [vmem:[%s544 + $0x18] sm:$0xff]
      %v549 = vld [vmem:[%s544 + $0x20] sm:$0xff]
      %v550 = vld [vmem:[%s544 + $0x28] sm:$0xff]
      %v551 = vld [vmem:[%s544 + $0x30] sm:$0xff]
      %v552 = vld [vmem:[%s544 + $0x38] sm:$0xff]
      %v553 = vld [vmem:[%s544 + $0x40] sm:$0xff]
      %v554 = vld [vmem:[%s544 + $0x48] sm:$0xff]
      %v555 = vld [vmem:[%s544 + $0x50] sm:$0xff]
      %v556 = vld [vmem:[%s544 + $0x58] sm:$0xff]
      %v557 = vld [vmem:[%s544 + $0x60] sm:$0xff]
      %v558 = vld [vmem:[%s544 + $0x68] sm:$0xff]
      %v559 = vld [vmem:[%s544 + $0x70] sm:$0xff]
      %v560 = vld [vmem:[%s544 + $0x78] sm:$0xff]
      %v561 = vld [vmem:[%s544 + $0x80] sm:$0xff]
      %v562 = vld [vmem:[%s544 + $0x88] sm:$0xff]
      %v563 = vld [vmem:[%s544 + $0x90] sm:$0xff]
      %v564 = vld [vmem:[%s544 + $0x98] sm:$0xff]
      %v565 = vld [vmem:[%s544 + $0xa0] sm:$0xff]
      %v566 = vld [vmem:[%s544 + $0xa8] sm:$0xff]
      %v567 = vld [vmem:[%s544 + $0xb0] sm:$0xff]
      %v568 = vld [vmem:[%s544 + $0xb8] sm:$0xff]
      %v569 = vld [vmem:[%s544 + $0xc0] sm:$0xff]
      %v570 = vld [vmem:[%s544 + $0xc8] sm:$0xff]
      %v571 = vld [vmem:[%s544 + $0xd0] sm:$0xff]
      %v572 = vld [vmem:[%s544 + $0xd8] sm:$0xff]
      %v573 = vld [vmem:[%s544 + $0xe0] sm:$0xff]
      %v574 = vld [vmem:[%s544 + $0xe8] sm:$0xff]
      %v575 = vld [vmem:[%s544 + $0xf0] sm:$0xff]
      %v576 = vld [vmem:[%s544 + $0xf8] sm:$0xff]
      %v577 = vld [vmem:[%s544 + $0x100] sm:$0xff]
      %v578 = vld [vmem:[%s544 + $0x108] sm:$0xff]
      %v579 = vld [vmem:[%s544 + $0x110] sm:$0xff]
      %v580 = vld [vmem:[%s544 + $0x118] sm:$0xff]
      %v581 = vld [vmem:[%s544 + $0x120] sm:$0xff]
      %v582 = vld [vmem:[%s544 + $0x128] sm:$0xff]
      %v583 = vld [vmem:[%s544 + $0x130] sm:$0xff]
      %v584 = vld [vmem:[%s544 + $0x138] sm:$0xff]
      %v585 = vld [vmem:[%s544 + $0x140] sm:$0xff]
      %v586 = vld [vmem:[%s544 + $0x148] sm:$0xff]
      %v587 = vld [vmem:[%s544 + $0x150] sm:$0xff]
      %v588 = vld [vmem:[%s544 + $0x158] sm:$0xff]
      %v589 = vld [vmem:[%s544 + $0x160] sm:$0xff]
      %v590 = vld [vmem:[%s544 + $0x168] sm:$0xff]
      %v591 = vld [vmem:[%s544 + $0x170] sm:$0xff]
      %v592 = vld [vmem:[%s544 + $0x178] sm:$0xff]
      %v593 = vld [vmem:[%s544 + $0x180] sm:$0xff]
      %v594 = vld [vmem:[%s544 + $0x188] sm:$0xff]
      %v595 = vld [vmem:[%s544 + $0x190] sm:$0xff]
      %v596 = vld [vmem:[%s544 + $0x198] sm:$0xff]
      %v597 = vld [vmem:[%s544 + $0x1a0] sm:$0xff]
      %v598 = vld [vmem:[%s544 + $0x1a8] sm:$0xff]
      %v599 = vld [vmem:[%s544 + $0x1b0] sm:$0xff]
      %v600 = vld [vmem:[%s544 + $0x1b8] sm:$0xff]
      %v601 = vld [vmem:[%s544 + $0x1c0] sm:$0xff]
      %v602 = vld [vmem:[%s544 + $0x1c8] sm:$0xff]
      %v603 = vld [vmem:[%s544 + $0x1d0] sm:$0xff]
      %v604 = vld [vmem:[%s544 + $0x1d8] sm:$0xff]
      %v605 = vld [vmem:[%s544 + $0x1e0] sm:$0xff]
      %v606 = vld [vmem:[%s544 + $0x1e8] sm:$0xff]
      %v607 = vld [vmem:[%s544 + $0x1f0] sm:$0xff]
      %v608 = vld [vmem:[%s544 + $0x1f8] sm:$0xff]
      %609 = vmatprep.subr.mxu0 %v546
      %610 = vmatpush1.msra.mxu0 %v545
      %611 = vmatprep.subr.mxu0 %v548
      %612 = vmatpush1.msra.mxu0 %v547
      %613 = vmatprep.subr.mxu0 %v550
      %614 = vmatpush1.msra.mxu0 %v549
      %615 = vmatprep.subr.mxu0 %v552
      %616 = vmatpush1.msra.mxu0 %v551
      %617 = vmatprep.subr.mxu0 %v554
      %618 = vmatpush1.msra.mxu0 %v553
      %619 = vmatprep.subr.mxu0 %v556
      %620 = vmatpush1.msra.mxu0 %v555
      %621 = vmatprep.subr.mxu0 %v558
      %622 = vmatpush1.msra.mxu0 %v557
      %623 = vmatprep.subr.mxu0 %v560
      %624 = vmatpush1.msra.mxu0 %v559
      %625 = vmatprep.subr.mxu0 %v562
      %626 = vmatpush1.msra.mxu0 %v561
      %627 = vmatprep.subr.mxu0 %v564
      %628 = vmatpush1.msra.mxu0 %v563
      %629 = vmatprep.subr.mxu0 %v566
      %630 = vmatpush1.msra.mxu0 %v565
      %631 = vmatprep.subr.mxu0 %v568
      %632 = vmatpush1.msra.mxu0 %v567
      %633 = vmatprep.subr.mxu0 %v570
      %634 = vmatpush1.msra.mxu0 %v569
      %635 = vmatprep.subr.mxu0 %v572
      %636 = vmatpush1.msra.mxu0 %v571
      %637 = vmatprep.subr.mxu0 %v574
      %638 = vmatpush1.msra.mxu0 %v573
      %639 = vmatprep.subr.mxu0 %v576
      %640 = vmatpush1.msra.mxu0 %v575
      %641 = vmatprep.subr.mxu0 %v578
      %642 = vmatpush1.msra.mxu0 %v577
      %643 = vmatprep.subr.mxu0 %v580
      %644 = vmatpush1.msra.mxu0 %v579
      %645 = vmatprep.subr.mxu0 %v582
      %646 = vmatpush1.msra.mxu0 %v581
      %647 = vmatprep.subr.mxu0 %v584
      %648 = vmatpush1.msra.mxu0 %v583
      %649 = vmatprep.subr.mxu0 %v586
      %650 = vmatpush1.msra.mxu0 %v585
      %651 = vmatprep.subr.mxu0 %v588
      %652 = vmatpush1.msra.mxu0 %v587
      %653 = vmatprep.subr.mxu0 %v590
      %654 = vmatpush1.msra.mxu0 %v589
      %655 = vmatprep.subr.mxu0 %v592
      %656 = vmatpush1.msra.mxu0 %v591
      %657 = vmatprep.subr.mxu0 %v594
      %658 = vmatpush1.msra.mxu0 %v593
      %659 = vmatprep.subr.mxu0 %v596
      %660 = vmatpush1.msra.mxu0 %v595
      %661 = vmatprep.subr.mxu0 %v598
      %662 = vmatpush1.msra.mxu0 %v597
      %663 = vmatprep.subr.mxu0 %v600
      %664 = vmatpush1.msra.mxu0 %v599
      %665 = vmatprep.subr.mxu0 %v602
      %666 = vmatpush1.msra.mxu0 %v601
      %667 = vmatprep.subr.mxu0 %v604
      %668 = vmatpush1.msra.mxu0 %v603
      %669 = vmatprep.subr.mxu0 %v606
      %670 = vmatpush1.msra.mxu0 %v605
      %671 = vmatprep.subr.mxu0 %v608
      %672 = vmatpush1.msra.mxu0 %v607
      %673 = vmatprep.mubr.f32.mxu0 %v390
      %674 = vmatmul.mubr.f32.gmra.mrb[0].mxu0 %v389
      %v675 = vpop.f32.mrb[0].mxu0
      %v676 = vadd.f32 0.0, %v675
      %v677 = vpop.f32.mrb[0].mxu0
      %v678 = vadd.f32 0.0, %v677
      %679 = vmatprep.mubr.f32.mxu0 %v392
      %680 = vmatmul.mubr.f32.gmra.mrb[0].mxu0 %v391
      %v681 = vpop.f32.mrb[0].mxu0
      %v682 = vadd.f32 0.0, %v681
      %v683 = vpop.f32.mrb[0].mxu0
      %v684 = vadd.f32 0.0, %v683
      %685 = vdwg.mxu0
      %686 = vmatprep.subr.mxu0 %v481
      %687 = vmatpush1.msra.mxu0 %v480
      %688 = vmatprep.subr.mxu0 %v483
      %689 = vmatpush1.msra.mxu0 %v482
      %690 = vmatprep.subr.mxu0 %v485
      %691 = vmatpush1.msra.mxu0 %v484
      %692 = vmatprep.subr.mxu0 %v487
      %693 = vmatpush1.msra.mxu0 %v486
      %694 = vmatprep.subr.mxu0 %v489
      %695 = vmatpush1.msra.mxu0 %v488
      %696 = vmatprep.subr.mxu0 %v491
      %697 = vmatpush1.msra.mxu0 %v490
      %698 = vmatprep.subr.mxu0 %v493
      %699 = vmatpush1.msra.mxu0 %v492
      %700 = vmatprep.subr.mxu0 %v495
      %701 = vmatpush1.msra.mxu0 %v494
      %702 = vmatprep.subr.mxu0 %v497
      %703 = vmatpush1.msra.mxu0 %v496
      %704 = vmatprep.subr.mxu0 %v499
      %705 = vmatpush1.msra.mxu0 %v498
      %706 = vmatprep.subr.mxu0 %v501
      %707 = vmatpush1.msra.mxu0 %v500
      %708 = vmatprep.subr.mxu0 %v503
      %709 = vmatpush1.msra.mxu0 %v502
      %710 = vmatprep.subr.mxu0 %v505
      %711 = vmatpush1.msra.mxu0 %v504
      %712 = vmatprep.subr.mxu0 %v507
      %713 = vmatpush1.msra.mxu0 %v506
      %714 = vmatprep.subr.mxu0 %v509
      %715 = vmatpush1.msra.mxu0 %v508
      %716 = vmatprep.subr.mxu0 %v511
      %717 = vmatpush1.msra.mxu0 %v510
      %718 = vmatprep.subr.mxu0 %v513
      %719 = vmatpush1.msra.mxu0 %v512
      %720 = vmatprep.subr.mxu0 %v515
      %721 = vmatpush1.msra.mxu0 %v514
      %722 = vmatprep.subr.mxu0 %v517
      %723 = vmatpush1.msra.mxu0 %v516
      %724 = vmatprep.subr.mxu0 %v519
      %725 = vmatpush1.msra.mxu0 %v518
      %726 = vmatprep.subr.mxu0 %v521
      %727 = vmatpush1.msra.mxu0 %v520
      %728 = vmatprep.subr.mxu0 %v523
      %729 = vmatpush1.msra.mxu0 %v522
      %730 = vmatprep.subr.mxu0 %v525
      %731 = vmatpush1.msra.mxu0 %v524
      %732 = vmatprep.subr.mxu0 %v527
      %733 = vmatpush1.msra.mxu0 %v526
      %734 = vmatprep.subr.mxu0 %v529
      %735 = vmatpush1.msra.mxu0 %v528
      %736 = vmatprep.subr.mxu0 %v531
      %737 = vmatpush1.msra.mxu0 %v530
      %738 = vmatprep.subr.mxu0 %v533
      %739 = vmatpush1.msra.mxu0 %v532
      %740 = vmatprep.subr.mxu0 %v535
      %741 = vmatpush1.msra.mxu0 %v534
      %742 = vmatprep.subr.mxu0 %v537
      %743 = vmatpush1.msra.mxu0 %v536
      %744 = vmatprep.subr.mxu0 %v539
      %745 = vmatpush1.msra.mxu0 %v538
      %746 = vmatprep.subr.mxu0 %v541
      %747 = vmatpush1.msra.mxu0 %v540
      %748 = vmatprep.subr.mxu0 %v543
      %749 = vmatpush1.msra.mxu0 %v542
      %750 = vmatprep.mubr.f32.mxu0 %v472
      %751 = vmatmul.mubr.f32.gmra.mrb[0].mxu0 %v470
      %v752 = vpop.f32.mrb[0].mxu0
      %v753 = vadd.f32 %v676, %v752
      %v754 = vpop.f32.mrb[0].mxu0
      %v755 = vadd.f32 %v678, %v754
      %756 = vmatprep.mubr.f32.mxu0 %v478
      %757 = vmatmul.mubr.f32.gmra.mrb[0].mxu0 %v476
      %v758 = vpop.f32.mrb[0].mxu0
      %v759 = vadd.f32 %v682, %v758
      %v760 = vpop.f32.mrb[0].mxu0
      %v761 = vadd.f32 %v684, %v760
      %762 = vdwg.mxu0
      %s763 = scalar_lea.vmem %s1, 80
      %v764 = vld [vmem:[%s763] sm:$0xff]
      %v765 = vld [vmem:[%s763 + $0x8] sm:$0xff]
      %v767 = vsel %vm396, %v764, 0
      %v770 = vsel %vm396, %v765, 0
      %772 = vmatprep.subr.mxu0 %v390
      %773 = vmatpush1.msra.mxu0 %v389
      %774 = vmatprep.subr.mxu0 %v392
      %775 = vmatpush1.msra.mxu0 %v391
      %776 = vmatprep.subr.mxu0 0.0
      %777 = vmatpush1.msra.mxu0 0.0
      %778 = vmatprep.subr.mxu0 0.0
      %779 = vmatpush1.msra.mxu0 0.0
      %780 = vmatprep.subr.mxu0 0.0
      %781 = vmatpush1.msra.mxu0 0.0
      %782 = vmatprep.subr.mxu0 0.0
      %783 = vmatpush1.msra.mxu0 0.0
      %784 = vmatprep.subr.mxu0 0.0
      %785 = vmatpush1.msra.mxu0 0.0
      %786 = vmatprep.subr.mxu0 0.0
      %787 = vmatpush1.msra.mxu0 0.0
      %788 = vmatprep.subr.mxu0 0.0
      %789 = vmatpush1.msra.mxu0 0.0
      %790 = vmatprep.subr.mxu0 0.0
      %791 = vmatpush1.msra.mxu0 0.0
      %792 = vmatprep.subr.mxu0 0.0
      %793 = vmatpush1.msra.mxu0 0.0
      %794 = vmatprep.subr.mxu0 0.0
      %795 = vmatpush1.msra.mxu0 0.0
      %796 = vmatprep.subr.mxu0 0.0
      %797 = vmatpush1.msra.mxu0 0.0
      %798 = vmatprep.subr.mxu0 0.0
      %799 = vmatpush1.msra.mxu0 0.0
      %800 = vmatprep.subr.mxu0 0.0
      %801 = vmatpush1.msra.mxu0 0.0
      %802 = vmatprep.subr.mxu0 0.0
      %803 = vmatpush1.msra.mxu0 0.0
      %804 = vmatprep.subr.mxu0 0.0
      %805 = vmatpush1.msra.mxu0 0.0
      %806 = vmatprep.subr.mxu0 0.0
      %807 = vmatpush1.msra.mxu0 0.0
      %808 = vmatprep.subr.mxu0 0.0
      %809 = vmatpush1.msra.mxu0 0.0
      %810 = vmatprep.subr.mxu0 0.0
      %811 = vmatpush1.msra.mxu0 0.0
      %812 = vmatprep.subr.mxu0 0.0
      %813 = vmatpush1.msra.mxu0 0.0
      %814 = vmatprep.subr.mxu0 0.0
      %815 = vmatpush1.msra.mxu0 0.0
      %816 = vmatprep.subr.mxu0 0.0
      %817 = vmatpush1.msra.mxu0 0.0
      %818 = vmatprep.subr.mxu0 0.0
      %819 = vmatpush1.msra.mxu0 0.0
      %820 = vmatprep.subr.mxu0 0.0
      %821 = vmatpush1.msra.mxu0 0.0
      %822 = vmatprep.subr.mxu0 0.0
      %823 = vmatpush1.msra.mxu0 0.0
      %824 = vmatprep.subr.mxu0 0.0
      %825 = vmatpush1.msra.mxu0 0.0
      %826 = vmatprep.subr.mxu0 0.0
      %827 = vmatpush1.msra.mxu0 0.0
      %828 = vmatprep.subr.mxu0 0.0
      %829 = vmatpush1.msra.mxu0 0.0
      %830 = vmatprep.subr.mxu0 0.0
      %831 = vmatpush1.msra.mxu0 0.0
      %832 = vmatprep.subr.mxu0 0.0
      %833 = vmatpush1.msra.mxu0 0.0
      %834 = vmatprep.subr.mxu0 0.0
      %835 = vmatpush1.msra.mxu0 0.0
      %836 = vmatprep.mubr.f32.mxu0 0.0
      %837 = vmatmul.mubr.f32.gmra.mrb[0].mxu0 %v767
      %v838 = vpop.f32.mrb[0].mxu0
      %v839 = vadd.f32 0.0, %v838
      %v840 = vpop.f32.mrb[0].mxu0
      %v841 = vadd.f32 0.0, %v840
      %842 = vmatprep.mubr.f32.mxu0 0.0
      %843 = vmatmul.mubr.f32.gmra.mrb[0].mxu0 %v770
      %v844 = vpop.f32.mrb[0].mxu0
      %v845 = vadd.f32 0.0, %v844
      %v846 = vpop.f32.mrb[0].mxu0
      %v847 = vadd.f32 0.0, %v846
      %848 = vdwg.mxu0
      %s849 = scalar_lea.vmem %s2, 1024
      %v850 = vld [vmem:[%s849] sm:$0xff]
      %v851 = vld [vmem:[%s849 + $0x8] sm:$0xff]
      %v852 = vld [vmem:[%s849 + $0x10] sm:$0xff]
      %v853 = vld [vmem:[%s849 + $0x18] sm:$0xff]
      %v854 = vld [vmem:[%s849 + $0x20] sm:$0xff]
      %v855 = vld [vmem:[%s849 + $0x28] sm:$0xff]
      %v856 = vld [vmem:[%s849 + $0x30] sm:$0xff]
      %v857 = vld [vmem:[%s849 + $0x38] sm:$0xff]
      %v858 = vld [vmem:[%s849 + $0x40] sm:$0xff]
      %v859 = vld [vmem:[%s849 + $0x48] sm:$0xff]
      %v860 = vld [vmem:[%s849 + $0x50] sm:$0xff]
      %v861 = vld [vmem:[%s849 + $0x58] sm:$0xff]
      %v862 = vld [vmem:[%s849 + $0x60] sm:$0xff]
      %v863 = vld [vmem:[%s849 + $0x68] sm:$0xff]
      %v864 = vld [vmem:[%s849 + $0x70] sm:$0xff]
      %v865 = vld [vmem:[%s849 + $0x78] sm:$0xff]
      %v866 = vld [vmem:[%s849 + $0x80] sm:$0xff]
      %v867 = vld [vmem:[%s849 + $0x88] sm:$0xff]
      %v868 = vld [vmem:[%s849 + $0x90] sm:$0xff]
      %v869 = vld [vmem:[%s849 + $0x98] sm:$0xff]
      %v870 = vld [vmem:[%s849 + $0xa0] sm:$0xff]
      %v871 = vld [vmem:[%s849 + $0xa8] sm:$0xff]
      %v872 = vld [vmem:[%s849 + $0xb0] sm:$0xff]
      %v873 = vld [vmem:[%s849 + $0xb8] sm:$0xff]
      %v874 = vld [vmem:[%s849 + $0xc0] sm:$0xff]
      %v875 = vld [vmem:[%s849 + $0xc8] sm:$0xff]
      %v876 = vld [vmem:[%s849 + $0xd0] sm:$0xff]
      %v877 = vld [vmem:[%s849 + $0xd8] sm:$0xff]
      %v878 = vld [vmem:[%s849 + $0xe0] sm:$0xff]
      %v879 = vld [vmem:[%s849 + $0xe8] sm:$0xff]
      %v880 = vld [vmem:[%s849 + $0xf0] sm:$0xff]
      %v881 = vld [vmem:[%s849 + $0xf8] sm:$0xff]
      %v882 = vld [vmem:[%s849 + $0x100] sm:$0xff]
      %v883 = vld [vmem:[%s849 + $0x108] sm:$0xff]
      %v884 = vld [vmem:[%s849 + $0x110] sm:$0xff]
      %v885 = vld [vmem:[%s849 + $0x118] sm:$0xff]
      %v886 = vld [vmem:[%s849 + $0x120] sm:$0xff]
      %v887 = vld [vmem:[%s849 + $0x128] sm:$0xff]
      %v888 = vld [vmem:[%s849 + $0x130] sm:$0xff]
      %v889 = vld [vmem:[%s849 + $0x138] sm:$0xff]
      %v890 = vld [vmem:[%s849 + $0x140] sm:$0xff]
      %v891 = vld [vmem:[%s849 + $0x148] sm:$0xff]
      %v892 = vld [vmem:[%s849 + $0x150] sm:$0xff]
      %v893 = vld [vmem:[%s849 + $0x158] sm:$0xff]
      %v894 = vld [vmem:[%s849 + $0x160] sm:$0xff]
      %v895 = vld [vmem:[%s849 + $0x168] sm:$0xff]
      %v896 = vld [vmem:[%s849 + $0x170] sm:$0xff]
      %v897 = vld [vmem:[%s849 + $0x178] sm:$0xff]
      %v898 = vld [vmem:[%s849 + $0x180] sm:$0xff]
      %v899 = vld [vmem:[%s849 + $0x188] sm:$0xff]
      %v900 = vld [vmem:[%s849 + $0x190] sm:$0xff]
      %v901 = vld [vmem:[%s849 + $0x198] sm:$0xff]
      %v902 = vld [vmem:[%s849 + $0x1a0] sm:$0xff]
      %v903 = vld [vmem:[%s849 + $0x1a8] sm:$0xff]
      %v904 = vld [vmem:[%s849 + $0x1b0] sm:$0xff]
      %v905 = vld [vmem:[%s849 + $0x1b8] sm:$0xff]
      %v906 = vld [vmem:[%s849 + $0x1c0] sm:$0xff]
      %v907 = vld [vmem:[%s849 + $0x1c8] sm:$0xff]
      %v908 = vld [vmem:[%s849 + $0x1d0] sm:$0xff]
      %v909 = vld [vmem:[%s849 + $0x1d8] sm:$0xff]
      %v910 = vld [vmem:[%s849 + $0x1e0] sm:$0xff]
      %v911 = vld [vmem:[%s849 + $0x1e8] sm:$0xff]
      %v912 = vld [vmem:[%s849 + $0x1f0] sm:$0xff]
      %v913 = vld [vmem:[%s849 + $0x1f8] sm:$0xff]
      %914 = vmatprep.subr.mxu0 %v851
      %915 = vmatpush1.msra.mxu0 %v850
      %916 = vmatprep.subr.mxu0 %v853
      %917 = vmatpush1.msra.mxu0 %v852
      %918 = vmatprep.subr.mxu0 %v855
      %919 = vmatpush1.msra.mxu0 %v854
      %920 = vmatprep.subr.mxu0 %v857
      %921 = vmatpush1.msra.mxu0 %v856
      %922 = vmatprep.subr.mxu0 %v859
      %923 = vmatpush1.msra.mxu0 %v858
      %924 = vmatprep.subr.mxu0 %v861
      %925 = vmatpush1.msra.mxu0 %v860
      %926 = vmatprep.subr.mxu0 %v863
      %927 = vmatpush1.msra.mxu0 %v862
      %928 = vmatprep.subr.mxu0 %v865
      %929 = vmatpush1.msra.mxu0 %v864
      %930 = vmatprep.subr.mxu0 %v867
      %931 = vmatpush1.msra.mxu0 %v866
      %932 = vmatprep.subr.mxu0 %v869
      %933 = vmatpush1.msra.mxu0 %v868
      %934 = vmatprep.subr.mxu0 %v871
      %935 = vmatpush1.msra.mxu0 %v870
      %936 = vmatprep.subr.mxu0 %v873
      %937 = vmatpush1.msra.mxu0 %v872
      %938 = vmatprep.subr.mxu0 %v875
      %939 = vmatpush1.msra.mxu0 %v874
      %940 = vmatprep.subr.mxu0 %v877
      %941 = vmatpush1.msra.mxu0 %v876
      %942 = vmatprep.subr.mxu0 %v879
      %943 = vmatpush1.msra.mxu0 %v878
      %944 = vmatprep.subr.mxu0 %v881
      %945 = vmatpush1.msra.mxu0 %v880
      %946 = vmatprep.subr.mxu0 %v883
      %947 = vmatpush1.msra.mxu0 %v882
      %948 = vmatprep.subr.mxu0 %v885
      %949 = vmatpush1.msra.mxu0 %v884
      %950 = vmatprep.subr.mxu0 %v887
      %951 = vmatpush1.msra.mxu0 %v886
      %952 = vmatprep.subr.mxu0 %v889
      %953 = vmatpush1.msra.mxu0 %v888
      %954 = vmatprep.subr.mxu0 %v891
      %955 = vmatpush1.msra.mxu0 %v890
      %956 = vmatprep.subr.mxu0 %v893
      %957 = vmatpush1.msra.mxu0 %v892
      %958 = vmatprep.subr.mxu0 %v895
      %959 = vmatpush1.msra.mxu0 %v894
      %960 = vmatprep.subr.mxu0 %v897
      %961 = vmatpush1.msra.mxu0 %v896
      %962 = vmatprep.subr.mxu0 %v899
      %963 = vmatpush1.msra.mxu0 %v898
      %964 = vmatprep.subr.mxu0 %v901
      %965 = vmatpush1.msra.mxu0 %v900
      %966 = vmatprep.subr.mxu0 %v903
      %967 = vmatpush1.msra.mxu0 %v902
      %968 = vmatprep.subr.mxu0 %v905
      %969 = vmatpush1.msra.mxu0 %v904
      %970 = vmatprep.subr.mxu0 %v907
      %971 = vmatpush1.msra.mxu0 %v906
      %972 = vmatprep.subr.mxu0 %v909
      %973 = vmatpush1.msra.mxu0 %v908
      %974 = vmatprep.subr.mxu0 %v911
      %975 = vmatpush1.msra.mxu0 %v910
      %976 = vmatprep.subr.mxu0 %v913
      %977 = vmatpush1.msra.mxu0 %v912
      %978 = vmatprep.mubr.f32.mxu0 %v841
      %979 = vmatmul.mubr.f32.gmra.mrb[0].mxu0 %v839
      %v980 = vpop.f32.mrb[0].mxu0
      %v981 = vadd.f32 0.0, %v980
      %v982 = vpop.f32.mrb[0].mxu0
      %v983 = vadd.f32 0.0, %v982
      %984 = vmatprep.mubr.f32.mxu0 %v847
      %985 = vmatmul.mubr.f32.gmra.mrb[0].mxu0 %v845
      %v986 = vpop.f32.mrb[0].mxu0
      %v987 = vadd.f32 0.0, %v986
      %v988 = vpop.f32.mrb[0].mxu0
      %v989 = vadd.f32 0.0, %v988
      %990 = vdwg.mxu0
      %v991 = vadd.f32 %v753, %v981
      %v992 = vadd.f32 %v755, %v983
      %v993 = vadd.f32 %v759, %v987
      %v994 = vadd.f32 %v761, %v989
      %v995 = vld [vmem:[%s4] sm:$0x3]
      %v997 = vlaneseq
      %v998 = vshrl.u32 %v997, 7
      %v999 = vsub.s32 0, %v998
      %v1000 = vrot.slane %v995, %v999
      %v1001 = vlaneseq
      %v1002 = vshrl.u32 %v1001, 7
      %v1003 = vsub.s32 1, %v1002
      %v1004 = vrot.slane %v995, %v1003
      %v1007 = vadd.f32 %v991, %v1000
      %v1008 = vadd.f32 %v992, %v1004
      %v1009 = vadd.f32 %v993, %v1000
      %v1010 = vadd.f32 %v994, %v1004
      %v1011 = vmax.f32 %v1007, 0.0
      %v1012 = vmax.f32 %v1008, 0.0
      %v1013 = vmax.f32 %v1009, 0.0
      %v1014 = vmax.f32 %v1010, 0.0
      %s1015 = scalar_lea.vmem %s1, 32
      %v1016 = vld [vmem:[%s1015] sm:$0xff]
      %v1017 = vld [vmem:[%s1015 + $0x8] sm:$0xff]
      %v1019 = vsel %vm396, %v1016, 0
      %v1022 = vsel %vm396, %v1017, 0
      %1024 = vmatprep.subr.mxu0 %v1012
      %1025 = vmatpush1.msra.mxu0 %v1011
      %1026 = vmatprep.subr.mxu0 %v1014
      %1027 = vmatpush1.msra.mxu0 %v1013
      %1028 = vmatprep.subr.mxu0 0.0
      %1029 = vmatpush1.msra.mxu0 0.0
      %1030 = vmatprep.subr.mxu0 0.0
      %1031 = vmatpush1.msra.mxu0 0.0
      %1032 = vmatprep.subr.mxu0 0.0
      %1033 = vmatpush1.msra.mxu0 0.0
      %1034 = vmatprep.subr.mxu0 0.0
      %1035 = vmatpush1.msra.mxu0 0.0
      %1036 = vmatprep.subr.mxu0 0.0
      %1037 = vmatpush1.msra.mxu0 0.0
      %1038 = vmatprep.subr.mxu0 0.0
      %1039 = vmatpush1.msra.mxu0 0.0
      %1040 = vmatprep.subr.mxu0 0.0
      %1041 = vmatpush1.msra.mxu0 0.0
      %1042 = vmatprep.subr.mxu0 0.0
      %1043 = vmatpush1.msra.mxu0 0.0
      %1044 = vmatprep.subr.mxu0 0.0
      %1045 = vmatpush1.msra.mxu0 0.0
      %1046 = vmatprep.subr.mxu0 0.0
      %1047 = vmatpush1.msra.mxu0 0.0
      %1048 = vmatprep.subr.mxu0 0.0
      %1049 = vmatpush1.msra.mxu0 0.0
      %1050 = vmatprep.subr.mxu0 0.0
      %1051 = vmatpush1.msra.mxu0 0.0
      %1052 = vmatprep.subr.mxu0 0.0
      %1053 = vmatpush1.msra.mxu0 0.0
      %1054 = vmatprep.subr.mxu0 0.0
      %1055 = vmatpush1.msra.mxu0 0.0
      %1056 = vmatprep.subr.mxu0 0.0
      %1057 = vmatpush1.msra.mxu0 0.0
      %1058 = vmatprep.subr.mxu0 0.0
      %1059 = vmatpush1.msra.mxu0 0.0
      %1060 = vmatprep.subr.mxu0 0.0
      %1061 = vmatpush1.msra.mxu0 0.0
      %1062 = vmatprep.subr.mxu0 0.0
      %1063 = vmatpush1.msra.mxu0 0.0
      %1064 = vmatprep.subr.mxu0 0.0
      %1065 = vmatpush1.msra.mxu0 0.0
      %1066 = vmatprep.subr.mxu0 0.0
      %1067 = vmatpush1.msra.mxu0 0.0
      %1068 = vmatprep.subr.mxu0 0.0
      %1069 = vmatpush1.msra.mxu0 0.0
      %1070 = vmatprep.subr.mxu0 0.0
      %1071 = vmatpush1.msra.mxu0 0.0
      %1072 = vmatprep.subr.mxu0 0.0
      %1073 = vmatpush1.msra.mxu0 0.0
      %1074 = vmatprep.subr.mxu0 0.0
      %1075 = vmatpush1.msra.mxu0 0.0
      %1076 = vmatprep.subr.mxu0 0.0
      %1077 = vmatpush1.msra.mxu0 0.0
      %1078 = vmatprep.subr.mxu0 0.0
      %1079 = vmatpush1.msra.mxu0 0.0
      %1080 = vmatprep.subr.mxu0 0.0
      %1081 = vmatpush1.msra.mxu0 0.0
      %1082 = vmatprep.subr.mxu0 0.0
      %1083 = vmatpush1.msra.mxu0 0.0
      %1084 = vmatprep.subr.mxu0 0.0
      %1085 = vmatpush1.msra.mxu0 0.0
      %1086 = vmatprep.subr.mxu0 0.0
      %1087 = vmatpush1.msra.mxu0 0.0
      %1088 = vmatprep.mubr.f32.mxu0 0.0
      %1089 = vmatmul.mubr.f32.gmra.mrb[0].mxu0 %v1019
      %v1090 = vpop.f32.mrb[0].mxu0
      %v1091 = vadd.f32 0.0, %v1090
      %v1092 = vpop.f32.mrb[0].mxu0
      %v1093 = vadd.f32 0.0, %v1092
      %1094 = vmatprep.mubr.f32.mxu0 0.0
      %1095 = vmatmul.mubr.f32.gmra.mrb[0].mxu0 %v1022
      %v1096 = vpop.f32.mrb[0].mxu0
      %v1097 = vadd.f32 0.0, %v1096
      %v1098 = vpop.f32.mrb[0].mxu0
      %v1099 = vadd.f32 0.0, %v1098
      %1100 = vdwg.mxu0
      %s1101 = scalar_lea.vmem %s2, 1536
      %v1102 = vld [vmem:[%s1101] sm:$0xff]
      %v1103 = vld [vmem:[%s1101 + $0x8] sm:$0xff]
      %v1104 = vld [vmem:[%s1101 + $0x10] sm:$0xff]
      %v1105 = vld [vmem:[%s1101 + $0x18] sm:$0xff]
      %v1106 = vld [vmem:[%s1101 + $0x20] sm:$0xff]
      %v1107 = vld [vmem:[%s1101 + $0x28] sm:$0xff]
      %v1108 = vld [vmem:[%s1101 + $0x30] sm:$0xff]
      %v1109 = vld [vmem:[%s1101 + $0x38] sm:$0xff]
      %v1110 = vld [vmem:[%s1101 + $0x40] sm:$0xff]
      %v1111 = vld [vmem:[%s1101 + $0x48] sm:$0xff]
      %v1112 = vld [vmem:[%s1101 + $0x50] sm:$0xff]
      %v1113 = vld [vmem:[%s1101 + $0x58] sm:$0xff]
      %v1114 = vld [vmem:[%s1101 + $0x60] sm:$0xff]
      %v1115 = vld [vmem:[%s1101 + $0x68] sm:$0xff]
      %v1116 = vld [vmem:[%s1101 + $0x70] sm:$0xff]
      %v1117 = vld [vmem:[%s1101 + $0x78] sm:$0xff]
      %v1118 = vld [vmem:[%s1101 + $0x80] sm:$0xff]
      %v1119 = vld [vmem:[%s1101 + $0x88] sm:$0xff]
      %v1120 = vld [vmem:[%s1101 + $0x90] sm:$0xff]
      %v1121 = vld [vmem:[%s1101 + $0x98] sm:$0xff]
      %v1122 = vld [vmem:[%s1101 + $0xa0] sm:$0xff]
      %v1123 = vld [vmem:[%s1101 + $0xa8] sm:$0xff]
      %v1124 = vld [vmem:[%s1101 + $0xb0] sm:$0xff]
      %v1125 = vld [vmem:[%s1101 + $0xb8] sm:$0xff]
      %v1126 = vld [vmem:[%s1101 + $0xc0] sm:$0xff]
      %v1127 = vld [vmem:[%s1101 + $0xc8] sm:$0xff]
      %v1128 = vld [vmem:[%s1101 + $0xd0] sm:$0xff]
      %v1129 = vld [vmem:[%s1101 + $0xd8] sm:$0xff]
      %v1130 = vld [vmem:[%s1101 + $0xe0] sm:$0xff]
      %v1131 = vld [vmem:[%s1101 + $0xe8] sm:$0xff]
      %v1132 = vld [vmem:[%s1101 + $0xf0] sm:$0xff]
      %v1133 = vld [vmem:[%s1101 + $0xf8] sm:$0xff]
      %v1134 = vld [vmem:[%s1101 + $0x100] sm:$0xff]
      %v1135 = vld [vmem:[%s1101 + $0x108] sm:$0xff]
      %v1136 = vld [vmem:[%s1101 + $0x110] sm:$0xff]
      %v1137 = vld [vmem:[%s1101 + $0x118] sm:$0xff]
      %v1138 = vld [vmem:[%s1101 + $0x120] sm:$0xff]
      %v1139 = vld [vmem:[%s1101 + $0x128] sm:$0xff]
      %v1140 = vld [vmem:[%s1101 + $0x130] sm:$0xff]
      %v1141 = vld [vmem:[%s1101 + $0x138] sm:$0xff]
      %v1142 = vld [vmem:[%s1101 + $0x140] sm:$0xff]
      %v1143 = vld [vmem:[%s1101 + $0x148] sm:$0xff]
      %v1144 = vld [vmem:[%s1101 + $0x150] sm:$0xff]
      %v1145 = vld [vmem:[%s1101 + $0x158] sm:$0xff]
      %v1146 = vld [vmem:[%s1101 + $0x160] sm:$0xff]
      %v1147 = vld [vmem:[%s1101 + $0x168] sm:$0xff]
      %v1148 = vld [vmem:[%s1101 + $0x170] sm:$0xff]
      %v1149 = vld [vmem:[%s1101 + $0x178] sm:$0xff]
      %v1150 = vld [vmem:[%s1101 + $0x180] sm:$0xff]
      %v1151 = vld [vmem:[%s1101 + $0x188] sm:$0xff]
      %v1152 = vld [vmem:[%s1101 + $0x190] sm:$0xff]
      %v1153 = vld [vmem:[%s1101 + $0x198] sm:$0xff]
      %v1154 = vld [vmem:[%s1101 + $0x1a0] sm:$0xff]
      %v1155 = vld [vmem:[%s1101 + $0x1a8] sm:$0xff]
      %v1156 = vld [vmem:[%s1101 + $0x1b0] sm:$0xff]
      %v1157 = vld [vmem:[%s1101 + $0x1b8] sm:$0xff]
      %v1158 = vld [vmem:[%s1101 + $0x1c0] sm:$0xff]
      %v1159 = vld [vmem:[%s1101 + $0x1c8] sm:$0xff]
      %v1160 = vld [vmem:[%s1101 + $0x1d0] sm:$0xff]
      %v1161 = vld [vmem:[%s1101 + $0x1d8] sm:$0xff]
      %v1162 = vld [vmem:[%s1101 + $0x1e0] sm:$0xff]
      %v1163 = vld [vmem:[%s1101 + $0x1e8] sm:$0xff]
      %v1164 = vld [vmem:[%s1101 + $0x1f0] sm:$0xff]
      %v1165 = vld [vmem:[%s1101 + $0x1f8] sm:$0xff]
      %s1166 = scalar_lea.vmem %s2, 2048
      %v1167 = vld [vmem:[%s1166] sm:$0xff]
      %v1168 = vld [vmem:[%s1166 + $0x8] sm:$0xff]
      %v1169 = vld [vmem:[%s1166 + $0x10] sm:$0xff]
      %v1170 = vld [vmem:[%s1166 + $0x18] sm:$0xff]
      %v1171 = vld [vmem:[%s1166 + $0x20] sm:$0xff]
      %v1172 = vld [vmem:[%s1166 + $0x28] sm:$0xff]
      %v1173 = vld [vmem:[%s1166 + $0x30] sm:$0xff]
      %v1174 = vld [vmem:[%s1166 + $0x38] sm:$0xff]
      %v1175 = vld [vmem:[%s1166 + $0x40] sm:$0xff]
      %v1176 = vld [vmem:[%s1166 + $0x48] sm:$0xff]
      %v1177 = vld [vmem:[%s1166 + $0x50] sm:$0xff]
      %v1178 = vld [vmem:[%s1166 + $0x58] sm:$0xff]
      %v1179 = vld [vmem:[%s1166 + $0x60] sm:$0xff]
      %v1180 = vld [vmem:[%s1166 + $0x68] sm:$0xff]
      %v1181 = vld [vmem:[%s1166 + $0x70] sm:$0xff]
      %v1182 = vld [vmem:[%s1166 + $0x78] sm:$0xff]
      %v1183 = vld [vmem:[%s1166 + $0x80] sm:$0xff]
      %v1184 = vld [vmem:[%s1166 + $0x88] sm:$0xff]
      %v1185 = vld [vmem:[%s1166 + $0x90] sm:$0xff]
      %v1186 = vld [vmem:[%s1166 + $0x98] sm:$0xff]
      %v1187 = vld [vmem:[%s1166 + $0xa0] sm:$0xff]
      %v1188 = vld [vmem:[%s1166 + $0xa8] sm:$0xff]
      %v1189 = vld [vmem:[%s1166 + $0xb0] sm:$0xff]
      %v1190 = vld [vmem:[%s1166 + $0xb8] sm:$0xff]
      %v1191 = vld [vmem:[%s1166 + $0xc0] sm:$0xff]
      %v1192 = vld [vmem:[%s1166 + $0xc8] sm:$0xff]
      %v1193 = vld [vmem:[%s1166 + $0xd0] sm:$0xff]
      %v1194 = vld [vmem:[%s1166 + $0xd8] sm:$0xff]
      %v1195 = vld [vmem:[%s1166 + $0xe0] sm:$0xff]
      %v1196 = vld [vmem:[%s1166 + $0xe8] sm:$0xff]
      %v1197 = vld [vmem:[%s1166 + $0xf0] sm:$0xff]
      %v1198 = vld [vmem:[%s1166 + $0xf8] sm:$0xff]
      %v1199 = vld [vmem:[%s1166 + $0x100] sm:$0xff]
      %v1200 = vld [vmem:[%s1166 + $0x108] sm:$0xff]
      %v1201 = vld [vmem:[%s1166 + $0x110] sm:$0xff]
      %v1202 = vld [vmem:[%s1166 + $0x118] sm:$0xff]
      %v1203 = vld [vmem:[%s1166 + $0x120] sm:$0xff]
      %v1204 = vld [vmem:[%s1166 + $0x128] sm:$0xff]
      %v1205 = vld [vmem:[%s1166 + $0x130] sm:$0xff]
      %v1206 = vld [vmem:[%s1166 + $0x138] sm:$0xff]
      %v1207 = vld [vmem:[%s1166 + $0x140] sm:$0xff]
      %v1208 = vld [vmem:[%s1166 + $0x148] sm:$0xff]
      %v1209 = vld [vmem:[%s1166 + $0x150] sm:$0xff]
      %v1210 = vld [vmem:[%s1166 + $0x158] sm:$0xff]
      %v1211 = vld [vmem:[%s1166 + $0x160] sm:$0xff]
      %v1212 = vld [vmem:[%s1166 + $0x168] sm:$0xff]
      %v1213 = vld [vmem:[%s1166 + $0x170] sm:$0xff]
      %v1214 = vld [vmem:[%s1166 + $0x178] sm:$0xff]
      %v1215 = vld [vmem:[%s1166 + $0x180] sm:$0xff]
      %v1216 = vld [vmem:[%s1166 + $0x188] sm:$0xff]
      %v1217 = vld [vmem:[%s1166 + $0x190] sm:$0xff]
      %v1218 = vld [vmem:[%s1166 + $0x198] sm:$0xff]
      %v1219 = vld [vmem:[%s1166 + $0x1a0] sm:$0xff]
      %v1220 = vld [vmem:[%s1166 + $0x1a8] sm:$0xff]
      %v1221 = vld [vmem:[%s1166 + $0x1b0] sm:$0xff]
      %v1222 = vld [vmem:[%s1166 + $0x1b8] sm:$0xff]
      %v1223 = vld [vmem:[%s1166 + $0x1c0] sm:$0xff]
      %v1224 = vld [vmem:[%s1166 + $0x1c8] sm:$0xff]
      %v1225 = vld [vmem:[%s1166 + $0x1d0] sm:$0xff]
      %v1226 = vld [vmem:[%s1166 + $0x1d8] sm:$0xff]
      %v1227 = vld [vmem:[%s1166 + $0x1e0] sm:$0xff]
      %v1228 = vld [vmem:[%s1166 + $0x1e8] sm:$0xff]
      %v1229 = vld [vmem:[%s1166 + $0x1f0] sm:$0xff]
      %v1230 = vld [vmem:[%s1166 + $0x1f8] sm:$0xff]
      %1231 = vmatprep.subr.mxu0 %v1168
      %1232 = vmatpush1.msra.mxu0 %v1167
      %1233 = vmatprep.subr.mxu0 %v1170
      %1234 = vmatpush1.msra.mxu0 %v1169
      %1235 = vmatprep.subr.mxu0 %v1172
      %1236 = vmatpush1.msra.mxu0 %v1171
      %1237 = vmatprep.subr.mxu0 %v1174
      %1238 = vmatpush1.msra.mxu0 %v1173
      %1239 = vmatprep.subr.mxu0 %v1176
      %1240 = vmatpush1.msra.mxu0 %v1175
      %1241 = vmatprep.subr.mxu0 %v1178
      %1242 = vmatpush1.msra.mxu0 %v1177
      %1243 = vmatprep.subr.mxu0 %v1180
      %1244 = vmatpush1.msra.mxu0 %v1179
      %1245 = vmatprep.subr.mxu0 %v1182
      %1246 = vmatpush1.msra.mxu0 %v1181
      %1247 = vmatprep.subr.mxu0 %v1184
      %1248 = vmatpush1.msra.mxu0 %v1183
      %1249 = vmatprep.subr.mxu0 %v1186
      %1250 = vmatpush1.msra.mxu0 %v1185
      %1251 = vmatprep.subr.mxu0 %v1188
      %1252 = vmatpush1.msra.mxu0 %v1187
      %1253 = vmatprep.subr.mxu0 %v1190
      %1254 = vmatpush1.msra.mxu0 %v1189
      %1255 = vmatprep.subr.mxu0 %v1192
      %1256 = vmatpush1.msra.mxu0 %v1191
      %1257 = vmatprep.subr.mxu0 %v1194
      %1258 = vmatpush1.msra.mxu0 %v1193
      %1259 = vmatprep.subr.mxu0 %v1196
      %1260 = vmatpush1.msra.mxu0 %v1195
      %1261 = vmatprep.subr.mxu0 %v1198
      %1262 = vmatpush1.msra.mxu0 %v1197
      %1263 = vmatprep.subr.mxu0 %v1200
      %1264 = vmatpush1.msra.mxu0 %v1199
      %1265 = vmatprep.subr.mxu0 %v1202
      %1266 = vmatpush1.msra.mxu0 %v1201
      %1267 = vmatprep.subr.mxu0 %v1204
      %1268 = vmatpush1.msra.mxu0 %v1203
      %1269 = vmatprep.subr.mxu0 %v1206
      %1270 = vmatpush1.msra.mxu0 %v1205
      %1271 = vmatprep.subr.mxu0 %v1208
      %1272 = vmatpush1.msra.mxu0 %v1207
      %1273 = vmatprep.subr.mxu0 %v1210
      %1274 = vmatpush1.msra.mxu0 %v1209
      %1275 = vmatprep.subr.mxu0 %v1212
      %1276 = vmatpush1.msra.mxu0 %v1211
      %1277 = vmatprep.subr.mxu0 %v1214
      %1278 = vmatpush1.msra.mxu0 %v1213
      %1279 = vmatprep.subr.mxu0 %v1216
      %1280 = vmatpush1.msra.mxu0 %v1215
      %1281 = vmatprep.subr.mxu0 %v1218
      %1282 = vmatpush1.msra.mxu0 %v1217
      %1283 = vmatprep.subr.mxu0 %v1220
      %1284 = vmatpush1.msra.mxu0 %v1219
      %1285 = vmatprep.subr.mxu0 %v1222
      %1286 = vmatpush1.msra.mxu0 %v1221
      %1287 = vmatprep.subr.mxu0 %v1224
      %1288 = vmatpush1.msra.mxu0 %v1223
      %1289 = vmatprep.subr.mxu0 %v1226
      %1290 = vmatpush1.msra.mxu0 %v1225
      %1291 = vmatprep.subr.mxu0 %v1228
      %1292 = vmatpush1.msra.mxu0 %v1227
      %1293 = vmatprep.subr.mxu0 %v1230
      %1294 = vmatpush1.msra.mxu0 %v1229
      %1295 = vmatprep.mubr.f32.mxu0 %v1012
      %1296 = vmatmul.mubr.f32.gmra.mrb[0].mxu0 %v1011
      %v1297 = vpop.f32.mrb[0].mxu0
      %v1298 = vadd.f32 0.0, %v1297
      %v1299 = vpop.f32.mrb[0].mxu0
      %v1300 = vadd.f32 0.0, %v1299
      %1301 = vmatprep.mubr.f32.mxu0 %v1014
      %1302 = vmatmul.mubr.f32.gmra.mrb[0].mxu0 %v1013
      %v1303 = vpop.f32.mrb[0].mxu0
      %v1304 = vadd.f32 0.0, %v1303
      %v1305 = vpop.f32.mrb[0].mxu0
      %v1306 = vadd.f32 0.0, %v1305
      %1307 = vdwg.mxu0
      %1308 = vmatprep.subr.mxu0 %v1103
      %1309 = vmatpush1.msra.mxu0 %v1102
      %1310 = vmatprep.subr.mxu0 %v1105
      %1311 = vmatpush1.msra.mxu0 %v1104
      %1312 = vmatprep.subr.mxu0 %v1107
      %1313 = vmatpush1.msra.mxu0 %v1106
      %1314 = vmatprep.subr.mxu0 %v1109
      %1315 = vmatpush1.msra.mxu0 %v1108
      %1316 = vmatprep.subr.mxu0 %v1111
      %1317 = vmatpush1.msra.mxu0 %v1110
      %1318 = vmatprep.subr.mxu0 %v1113
      %1319 = vmatpush1.msra.mxu0 %v1112
      %1320 = vmatprep.subr.mxu0 %v1115
      %1321 = vmatpush1.msra.mxu0 %v1114
      %1322 = vmatprep.subr.mxu0 %v1117
      %1323 = vmatpush1.msra.mxu0 %v1116
      %1324 = vmatprep.subr.mxu0 %v1119
      %1325 = vmatpush1.msra.mxu0 %v1118
      %1326 = vmatprep.subr.mxu0 %v1121
      %1327 = vmatpush1.msra.mxu0 %v1120
      %1328 = vmatprep.subr.mxu0 %v1123
      %1329 = vmatpush1.msra.mxu0 %v1122
      %1330 = vmatprep.subr.mxu0 %v1125
      %1331 = vmatpush1.msra.mxu0 %v1124
      %1332 = vmatprep.subr.mxu0 %v1127
      %1333 = vmatpush1.msra.mxu0 %v1126
      %1334 = vmatprep.subr.mxu0 %v1129
      %1335 = vmatpush1.msra.mxu0 %v1128
      %1336 = vmatprep.subr.mxu0 %v1131
      %1337 = vmatpush1.msra.mxu0 %v1130
      %1338 = vmatprep.subr.mxu0 %v1133
      %1339 = vmatpush1.msra.mxu0 %v1132
      %1340 = vmatprep.subr.mxu0 %v1135
      %1341 = vmatpush1.msra.mxu0 %v1134
      %1342 = vmatprep.subr.mxu0 %v1137
      %1343 = vmatpush1.msra.mxu0 %v1136
      %1344 = vmatprep.subr.mxu0 %v1139
      %1345 = vmatpush1.msra.mxu0 %v1138
      %1346 = vmatprep.subr.mxu0 %v1141
      %1347 = vmatpush1.msra.mxu0 %v1140
      %1348 = vmatprep.subr.mxu0 %v1143
      %1349 = vmatpush1.msra.mxu0 %v1142
      %1350 = vmatprep.subr.mxu0 %v1145
      %1351 = vmatpush1.msra.mxu0 %v1144
      %1352 = vmatprep.subr.mxu0 %v1147
      %1353 = vmatpush1.msra.mxu0 %v1146
      %1354 = vmatprep.subr.mxu0 %v1149
      %1355 = vmatpush1.msra.mxu0 %v1148
      %1356 = vmatprep.subr.mxu0 %v1151
      %1357 = vmatpush1.msra.mxu0 %v1150
      %1358 = vmatprep.subr.mxu0 %v1153
      %1359 = vmatpush1.msra.mxu0 %v1152
      %1360 = vmatprep.subr.mxu0 %v1155
      %1361 = vmatpush1.msra.mxu0 %v1154
      %1362 = vmatprep.subr.mxu0 %v1157
      %1363 = vmatpush1.msra.mxu0 %v1156
      %1364 = vmatprep.subr.mxu0 %v1159
      %1365 = vmatpush1.msra.mxu0 %v1158
      %1366 = vmatprep.subr.mxu0 %v1161
      %1367 = vmatpush1.msra.mxu0 %v1160
      %1368 = vmatprep.subr.mxu0 %v1163
      %1369 = vmatpush1.msra.mxu0 %v1162
      %1370 = vmatprep.subr.mxu0 %v1165
      %1371 = vmatpush1.msra.mxu0 %v1164
      %1372 = vmatprep.mubr.f32.mxu0 %v1093
      %1373 = vmatmul.mubr.f32.gmra.mrb[0].mxu0 %v1091
      %v1374 = vpop.f32.mrb[0].mxu0
      %v1375 = vadd.f32 %v1298, %v1374
      %v1376 = vpop.f32.mrb[0].mxu0
      %v1377 = vadd.f32 %v1300, %v1376
      %1378 = vmatprep.mubr.f32.mxu0 %v1099
      %1379 = vmatmul.mubr.f32.gmra.mrb[0].mxu0 %v1097
      %v1380 = vpop.f32.mrb[0].mxu0
      %v1381 = vadd.f32 %v1304, %v1380
      %v1382 = vpop.f32.mrb[0].mxu0
      %v1383 = vadd.f32 %v1306, %v1382
      %1384 = vdwg.mxu0
      %s1385 = scalar_lea.vmem %s1, 96
      %v1386 = vld [vmem:[%s1385] sm:$0xff]
      %v1387 = vld [vmem:[%s1385 + $0x8] sm:$0xff]
      %v1389 = vsel %vm396, %v1386, 0
      %v1392 = vsel %vm396, %v1387, 0
      %1394 = vmatprep.subr.mxu0 %v1012
      %1395 = vmatpush1.msra.mxu0 %v1011
      %1396 = vmatprep.subr.mxu0 %v1014
      %1397 = vmatpush1.msra.mxu0 %v1013
      %1398 = vmatprep.subr.mxu0 0.0
      %1399 = vmatpush1.msra.mxu0 0.0
      %1400 = vmatprep.subr.mxu0 0.0
      %1401 = vmatpush1.msra.mxu0 0.0
      %1402 = vmatprep.subr.mxu0 0.0
      %1403 = vmatpush1.msra.mxu0 0.0
      %1404 = vmatprep.subr.mxu0 0.0
      %1405 = vmatpush1.msra.mxu0 0.0
      %1406 = vmatprep.subr.mxu0 0.0
      %1407 = vmatpush1.msra.mxu0 0.0
      %1408 = vmatprep.subr.mxu0 0.0
      %1409 = vmatpush1.msra.mxu0 0.0
      %1410 = vmatprep.subr.mxu0 0.0
      %1411 = vmatpush1.msra.mxu0 0.0
      %1412 = vmatprep.subr.mxu0 0.0
      %1413 = vmatpush1.msra.mxu0 0.0
      %1414 = vmatprep.subr.mxu0 0.0
      %1415 = vmatpush1.msra.mxu0 0.0
      %1416 = vmatprep.subr.mxu0 0.0
      %1417 = vmatpush1.msra.mxu0 0.0
      %1418 = vmatprep.subr.mxu0 0.0
      %1419 = vmatpush1.msra.mxu0 0.0
      %1420 = vmatprep.subr.mxu0 0.0
      %1421 = vmatpush1.msra.mxu0 0.0
      %1422 = vmatprep.subr.mxu0 0.0
      %1423 = vmatpush1.msra.mxu0 0.0
      %1424 = vmatprep.subr.mxu0 0.0
      %1425 = vmatpush1.msra.mxu0 0.0
      %1426 = vmatprep.subr.mxu0 0.0
      %1427 = vmatpush1.msra.mxu0 0.0
      %1428 = vmatprep.subr.mxu0 0.0
      %1429 = vmatpush1.msra.mxu0 0.0
      %1430 = vmatprep.subr.mxu0 0.0
      %1431 = vmatpush1.msra.mxu0 0.0
      %1432 = vmatprep.subr.mxu0 0.0
      %1433 = vmatpush1.msra.mxu0 0.0
      %1434 = vmatprep.subr.mxu0 0.0
      %1435 = vmatpush1.msra.mxu0 0.0
      %1436 = vmatprep.subr.mxu0 0.0
      %1437 = vmatpush1.msra.mxu0 0.0
      %1438 = vmatprep.subr.mxu0 0.0
      %1439 = vmatpush1.msra.mxu0 0.0
      %1440 = vmatprep.subr.mxu0 0.0
      %1441 = vmatpush1.msra.mxu0 0.0
      %1442 = vmatprep.subr.mxu0 0.0
      %1443 = vmatpush1.msra.mxu0 0.0
      %1444 = vmatprep.subr.mxu0 0.0
      %1445 = vmatpush1.msra.mxu0 0.0
      %1446 = vmatprep.subr.mxu0 0.0
      %1447 = vmatpush1.msra.mxu0 0.0
      %1448 = vmatprep.subr.mxu0 0.0
      %1449 = vmatpush1.msra.mxu0 0.0
      %1450 = vmatprep.subr.mxu0 0.0
      %1451 = vmatpush1.msra.mxu0 0.0
      %1452 = vmatprep.subr.mxu0 0.0
      %1453 = vmatpush1.msra.mxu0 0.0
      %1454 = vmatprep.subr.mxu0 0.0
      %1455 = vmatpush1.msra.mxu0 0.0
      %1456 = vmatprep.subr.mxu0 0.0
      %1457 = vmatpush1.msra.mxu0 0.0
      %1458 = vmatprep.mubr.f32.mxu0 0.0
      %1459 = vmatmul.mubr.f32.gmra.mrb[0].mxu0 %v1389
      %v1460 = vpop.f32.mrb[0].mxu0
      %v1461 = vadd.f32 0.0, %v1460
      %v1462 = vpop.f32.mrb[0].mxu0
      %v1463 = vadd.f32 0.0, %v1462
      %1464 = vmatprep.mubr.f32.mxu0 0.0
      %1465 = vmatmul.mubr.f32.gmra.mrb[0].mxu0 %v1392
      %v1466 = vpop.f32.mrb[0].mxu0
      %v1467 = vadd.f32 0.0, %v1466
      %v1468 = vpop.f32.mrb[0].mxu0
      %v1469 = vadd.f32 0.0, %v1468
      %1470 = vdwg.mxu0
      %s1471 = scalar_lea.vmem %s2, 2560
      %v1472 = vld [vmem:[%s1471] sm:$0xff]
      %v1473 = vld [vmem:[%s1471 + $0x8] sm:$0xff]
      %v1474 = vld [vmem:[%s1471 + $0x10] sm:$0xff]
      %v1475 = vld [vmem:[%s1471 + $0x18] sm:$0xff]
      %v1476 = vld [vmem:[%s1471 + $0x20] sm:$0xff]
      %v1477 = vld [vmem:[%s1471 + $0x28] sm:$0xff]
      %v1478 = vld [vmem:[%s1471 + $0x30] sm:$0xff]
      %v1479 = vld [vmem:[%s1471 + $0x38] sm:$0xff]
      %v1480 = vld [vmem:[%s1471 + $0x40] sm:$0xff]
      %v1481 = vld [vmem:[%s1471 + $0x48] sm:$0xff]
      %v1482 = vld [vmem:[%s1471 + $0x50] sm:$0xff]
      %v1483 = vld [vmem:[%s1471 + $0x58] sm:$0xff]
      %v1484 = vld [vmem:[%s1471 + $0x60] sm:$0xff]
      %v1485 = vld [vmem:[%s1471 + $0x68] sm:$0xff]
      %v1486 = vld [vmem:[%s1471 + $0x70] sm:$0xff]
      %v1487 = vld [vmem:[%s1471 + $0x78] sm:$0xff]
      %v1488 = vld [vmem:[%s1471 + $0x80] sm:$0xff]
      %v1489 = vld [vmem:[%s1471 + $0x88] sm:$0xff]
      %v1490 = vld [vmem:[%s1471 + $0x90] sm:$0xff]
      %v1491 = vld [vmem:[%s1471 + $0x98] sm:$0xff]
      %v1492 = vld [vmem:[%s1471 + $0xa0] sm:$0xff]
      %v1493 = vld [vmem:[%s1471 + $0xa8] sm:$0xff]
      %v1494 = vld [vmem:[%s1471 + $0xb0] sm:$0xff]
      %v1495 = vld [vmem:[%s1471 + $0xb8] sm:$0xff]
      %v1496 = vld [vmem:[%s1471 + $0xc0] sm:$0xff]
      %v1497 = vld [vmem:[%s1471 + $0xc8] sm:$0xff]
      %v1498 = vld [vmem:[%s1471 + $0xd0] sm:$0xff]
      %v1499 = vld [vmem:[%s1471 + $0xd8] sm:$0xff]
      %v1500 = vld [vmem:[%s1471 + $0xe0] sm:$0xff]
      %v1501 = vld [vmem:[%s1471 + $0xe8] sm:$0xff]
      %v1502 = vld [vmem:[%s1471 + $0xf0] sm:$0xff]
      %v1503 = vld [vmem:[%s1471 + $0xf8] sm:$0xff]
      %v1504 = vld [vmem:[%s1471 + $0x100] sm:$0xff]
      %v1505 = vld [vmem:[%s1471 + $0x108] sm:$0xff]
      %v1506 = vld [vmem:[%s1471 + $0x110] sm:$0xff]
      %v1507 = vld [vmem:[%s1471 + $0x118] sm:$0xff]
      %v1508 = vld [vmem:[%s1471 + $0x120] sm:$0xff]
      %v1509 = vld [vmem:[%s1471 + $0x128] sm:$0xff]
      %v1510 = vld [vmem:[%s1471 + $0x130] sm:$0xff]
      %v1511 = vld [vmem:[%s1471 + $0x138] sm:$0xff]
      %v1512 = vld [vmem:[%s1471 + $0x140] sm:$0xff]
      %v1513 = vld [vmem:[%s1471 + $0x148] sm:$0xff]
      %v1514 = vld [vmem:[%s1471 + $0x150] sm:$0xff]
      %v1515 = vld [vmem:[%s1471 + $0x158] sm:$0xff]
      %v1516 = vld [vmem:[%s1471 + $0x160] sm:$0xff]
      %v1517 = vld [vmem:[%s1471 + $0x168] sm:$0xff]
      %v1518 = vld [vmem:[%s1471 + $0x170] sm:$0xff]
      %v1519 = vld [vmem:[%s1471 + $0x178] sm:$0xff]
      %v1520 = vld [vmem:[%s1471 + $0x180] sm:$0xff]
      %v1521 = vld [vmem:[%s1471 + $0x188] sm:$0xff]
      %v1522 = vld [vmem:[%s1471 + $0x190] sm:$0xff]
      %v1523 = vld [vmem:[%s1471 + $0x198] sm:$0xff]
      %v1524 = vld [vmem:[%s1471 + $0x1a0] sm:$0xff]
      %v1525 = vld [vmem:[%s1471 + $0x1a8] sm:$0xff]
      %v1526 = vld [vmem:[%s1471 + $0x1b0] sm:$0xff]
      %v1527 = vld [vmem:[%s1471 + $0x1b8] sm:$0xff]
      %v1528 = vld [vmem:[%s1471 + $0x1c0] sm:$0xff]
      %v1529 = vld [vmem:[%s1471 + $0x1c8] sm:$0xff]
      %v1530 = vld [vmem:[%s1471 + $0x1d0] sm:$0xff]
      %v1531 = vld [vmem:[%s1471 + $0x1d8] sm:$0xff]
      %v1532 = vld [vmem:[%s1471 + $0x1e0] sm:$0xff]
      %v1533 = vld [vmem:[%s1471 + $0x1e8] sm:$0xff]
      %v1534 = vld [vmem:[%s1471 + $0x1f0] sm:$0xff]
      %v1535 = vld [vmem:[%s1471 + $0x1f8] sm:$0xff]
      %1536 = vmatprep.subr.mxu0 %v1473
      %1537 = vmatpush1.msra.mxu0 %v1472
      %1538 = vmatprep.subr.mxu0 %v1475
      %1539 = vmatpush1.msra.mxu0 %v1474
      %1540 = vmatprep.subr.mxu0 %v1477
      %1541 = vmatpush1.msra.mxu0 %v1476
      %1542 = vmatprep.subr.mxu0 %v1479
      %1543 = vmatpush1.msra.mxu0 %v1478
      %1544 = vmatprep.subr.mxu0 %v1481
      %1545 = vmatpush1.msra.mxu0 %v1480
      %1546 = vmatprep.subr.mxu0 %v1483
      %1547 = vmatpush1.msra.mxu0 %v1482
      %1548 = vmatprep.subr.mxu0 %v1485
      %1549 = vmatpush1.msra.mxu0 %v1484
      %1550 = vmatprep.subr.mxu0 %v1487
      %1551 = vmatpush1.msra.mxu0 %v1486
      %1552 = vmatprep.subr.mxu0 %v1489
      %1553 = vmatpush1.msra.mxu0 %v1488
      %1554 = vmatprep.subr.mxu0 %v1491
      %1555 = vmatpush1.msra.mxu0 %v1490
      %1556 = vmatprep.subr.mxu0 %v1493
      %1557 = vmatpush1.msra.mxu0 %v1492
      %1558 = vmatprep.subr.mxu0 %v1495
      %1559 = vmatpush1.msra.mxu0 %v1494
      %1560 = vmatprep.subr.mxu0 %v1497
      %1561 = vmatpush1.msra.mxu0 %v1496
      %1562 = vmatprep.subr.mxu0 %v1499
      %1563 = vmatpush1.msra.mxu0 %v1498
      %1564 = vmatprep.subr.mxu0 %v1501
      %1565 = vmatpush1.msra.mxu0 %v1500
      %1566 = vmatprep.subr.mxu0 %v1503
      %1567 = vmatpush1.msra.mxu0 %v1502
      %1568 = vmatprep.subr.mxu0 %v1505
      %1569 = vmatpush1.msra.mxu0 %v1504
      %1570 = vmatprep.subr.mxu0 %v1507
      %1571 = vmatpush1.msra.mxu0 %v1506
      %1572 = vmatprep.subr.mxu0 %v1509
      %1573 = vmatpush1.msra.mxu0 %v1508
      %1574 = vmatprep.subr.mxu0 %v1511
      %1575 = vmatpush1.msra.mxu0 %v1510
      %1576 = vmatprep.subr.mxu0 %v1513
      %1577 = vmatpush1.msra.mxu0 %v1512
      %1578 = vmatprep.subr.mxu0 %v1515
      %1579 = vmatpush1.msra.mxu0 %v1514
      %1580 = vmatprep.subr.mxu0 %v1517
      %1581 = vmatpush1.msra.mxu0 %v1516
      %1582 = vmatprep.subr.mxu0 %v1519
      %1583 = vmatpush1.msra.mxu0 %v1518
      %1584 = vmatprep.subr.mxu0 %v1521
      %1585 = vmatpush1.msra.mxu0 %v1520
      %1586 = vmatprep.subr.mxu0 %v1523
      %1587 = vmatpush1.msra.mxu0 %v1522
      %1588 = vmatprep.subr.mxu0 %v1525
      %1589 = vmatpush1.msra.mxu0 %v1524
      %1590 = vmatprep.subr.mxu0 %v1527
      %1591 = vmatpush1.msra.mxu0 %v1526
      %1592 = vmatprep.subr.mxu0 %v1529
      %1593 = vmatpush1.msra.mxu0 %v1528
      %1594 = vmatprep.subr.mxu0 %v1531
      %1595 = vmatpush1.msra.mxu0 %v1530
      %1596 = vmatprep.subr.mxu0 %v1533
      %1597 = vmatpush1.msra.mxu0 %v1532
      %1598 = vmatprep.subr.mxu0 %v1535
      %1599 = vmatpush1.msra.mxu0 %v1534
      %1600 = vmatprep.mubr.f32.mxu0 %v1463
      %1601 = vmatmul.mubr.f32.gmra.mrb[0].mxu0 %v1461
      %v1602 = vpop.f32.mrb[0].mxu0
      %v1603 = vadd.f32 0.0, %v1602
      %v1604 = vpop.f32.mrb[0].mxu0
      %v1605 = vadd.f32 0.0, %v1604
      %1606 = vmatprep.mubr.f32.mxu0 %v1469
      %1607 = vmatmul.mubr.f32.gmra.mrb[0].mxu0 %v1467
      %v1608 = vpop.f32.mrb[0].mxu0
      %v1609 = vadd.f32 0.0, %v1608
      %v1610 = vpop.f32.mrb[0].mxu0
      %v1611 = vadd.f32 0.0, %v1610
      %1612 = vdwg.mxu0
      %v1613 = vadd.f32 %v1375, %v1603
      %v1614 = vadd.f32 %v1377, %v1605
      %v1615 = vadd.f32 %v1381, %v1609
      %v1616 = vadd.f32 %v1383, %v1611
      %s1617 = scalar_lea.vmem %s4, 2
      %v1618 = vld [vmem:[%s1617] sm:$0x3]
      %v1620 = vlaneseq
      %v1621 = vshrl.u32 %v1620, 7
      %v1622 = vsub.s32 0, %v1621
      %v1623 = vrot.slane %v1618, %v1622
      %v1624 = vlaneseq
      %v1625 = vshrl.u32 %v1624, 7
      %v1626 = vsub.s32 1, %v1625
      %v1627 = vrot.slane %v1618, %v1626
      %v1630 = vadd.f32 %v1613, %v1623
      %v1631 = vadd.f32 %v1614, %v1627
      %v1632 = vadd.f32 %v1615, %v1623
      %v1633 = vadd.f32 %v1616, %v1627
      %v1634 = vmax.f32 %v1630, 0.0
      %v1635 = vmax.f32 %v1631, 0.0
      %v1636 = vmax.f32 %v1632, 0.0
      %v1637 = vmax.f32 %v1633, 0.0
      %s1638 = scalar_lea.vmem %s1, 16
      %v1639 = vld [vmem:[%s1638] sm:$0xff]
      %v1640 = vld [vmem:[%s1638 + $0x8] sm:$0xff]
      %v1642 = vsel %vm396, %v1639, 0
      %v1645 = vsel %vm396, %v1640, 0
      %1647 = vmatprep.subr.mxu0 %v390
      %1648 = vmatpush1.msra.mxu0 %v389
      %1649 = vmatprep.subr.mxu0 %v392
      %1650 = vmatpush1.msra.mxu0 %v391
      %1651 = vmatprep.subr.mxu0 0.0
      %1652 = vmatpush1.msra.mxu0 0.0
      %1653 = vmatprep.subr.mxu0 0.0
      %1654 = vmatpush1.msra.mxu0 0.0
      %1655 = vmatprep.subr.mxu0 0.0
      %1656 = vmatpush1.msra.mxu0 0.0
      %1657 = vmatprep.subr.mxu0 0.0
      %1658 = vmatpush1.msra.mxu0 0.0
      %1659 = vmatprep.subr.mxu0 0.0
      %1660 = vmatpush1.msra.mxu0 0.0
      %1661 = vmatprep.subr.mxu0 0.0
      %1662 = vmatpush1.msra.mxu0 0.0
      %1663 = vmatprep.subr.mxu0 0.0
      %1664 = vmatpush1.msra.mxu0 0.0
      %1665 = vmatprep.subr.mxu0 0.0
      %1666 = vmatpush1.msra.mxu0 0.0
      %1667 = vmatprep.subr.mxu0 0.0
      %1668 = vmatpush1.msra.mxu0 0.0
      %1669 = vmatprep.subr.mxu0 0.0
      %1670 = vmatpush1.msra.mxu0 0.0
      %1671 = vmatprep.subr.mxu0 0.0
      %1672 = vmatpush1.msra.mxu0 0.0
      %1673 = vmatprep.subr.mxu0 0.0
      %1674 = vmatpush1.msra.mxu0 0.0
      %1675 = vmatprep.subr.mxu0 0.0
      %1676 = vmatpush1.msra.mxu0 0.0
      %1677 = vmatprep.subr.mxu0 0.0
      %1678 = vmatpush1.msra.mxu0 0.0
      %1679 = vmatprep.subr.mxu0 0.0
      %1680 = vmatpush1.msra.mxu0 0.0
      %1681 = vmatprep.subr.mxu0 0.0
      %1682 = vmatpush1.msra.mxu0 0.0
      %1683 = vmatprep.subr.mxu0 0.0
      %1684 = vmatpush1.msra.mxu0 0.0
      %1685 = vmatprep.subr.mxu0 0.0
      %1686 = vmatpush1.msra.mxu0 0.0
      %1687 = vmatprep.subr.mxu0 0.0
      %1688 = vmatpush1.msra.mxu0 0.0
      %1689 = vmatprep.subr.mxu0 0.0
      %1690 = vmatpush1.msra.mxu0 0.0
      %1691 = vmatprep.subr.mxu0 0.0
      %1692 = vmatpush1.msra.mxu0 0.0
      %1693 = vmatprep.subr.mxu0 0.0
      %1694 = vmatpush1.msra.mxu0 0.0
      %1695 = vmatprep.subr.mxu0 0.0
      %1696 = vmatpush1.msra.mxu0 0.0
      %1697 = vmatprep.subr.mxu0 0.0
      %1698 = vmatpush1.msra.mxu0 0.0
      %1699 = vmatprep.subr.mxu0 0.0
      %1700 = vmatpush1.msra.mxu0 0.0
      %1701 = vmatprep.subr.mxu0 0.0
      %1702 = vmatpush1.msra.mxu0 0.0
      %1703 = vmatprep.subr.mxu0 0.0
      %1704 = vmatpush1.msra.mxu0 0.0
      %1705 = vmatprep.subr.mxu0 0.0
      %1706 = vmatpush1.msra.mxu0 0.0
      %1707 = vmatprep.subr.mxu0 0.0
      %1708 = vmatpush1.msra.mxu0 0.0
      %1709 = vmatprep.subr.mxu0 0.0
      %1710 = vmatpush1.msra.mxu0 0.0
      %1711 = vmatprep.mubr.f32.mxu0 0.0
      %1712 = vmatmul.mubr.f32.gmra.mrb[0].mxu0 %v1642
      %v1713 = vpop.f32.mrb[0].mxu0
      %v1714 = vadd.f32 0.0, %v1713
      %v1715 = vpop.f32.mrb[0].mxu0
      %v1716 = vadd.f32 0.0, %v1715
      %1717 = vmatprep.mubr.f32.mxu0 0.0
      %1718 = vmatmul.mubr.f32.gmra.mrb[0].mxu0 %v1645
      %v1719 = vpop.f32.mrb[0].mxu0
      %v1720 = vadd.f32 0.0, %v1719
      %v1721 = vpop.f32.mrb[0].mxu0
      %v1722 = vadd.f32 0.0, %v1721
      %1723 = vdwg.mxu0
      %s1724 = scalar_lea.vmem %s2, 3072
      %v1725 = vld [vmem:[%s1724] sm:$0xff]
      %v1726 = vld [vmem:[%s1724 + $0x8] sm:$0xff]
      %v1727 = vld [vmem:[%s1724 + $0x10] sm:$0xff]
      %v1728 = vld [vmem:[%s1724 + $0x18] sm:$0xff]
      %v1729 = vld [vmem:[%s1724 + $0x20] sm:$0xff]
      %v1730 = vld [vmem:[%s1724 + $0x28] sm:$0xff]
      %v1731 = vld [vmem:[%s1724 + $0x30] sm:$0xff]
      %v1732 = vld [vmem:[%s1724 + $0x38] sm:$0xff]
      %v1733 = vld [vmem:[%s1724 + $0x40] sm:$0xff]
      %v1734 = vld [vmem:[%s1724 + $0x48] sm:$0xff]
      %v1735 = vld [vmem:[%s1724 + $0x50] sm:$0xff]
      %v1736 = vld [vmem:[%s1724 + $0x58] sm:$0xff]
      %v1737 = vld [vmem:[%s1724 + $0x60] sm:$0xff]
      %v1738 = vld [vmem:[%s1724 + $0x68] sm:$0xff]
      %v1739 = vld [vmem:[%s1724 + $0x70] sm:$0xff]
      %v1740 = vld [vmem:[%s1724 + $0x78] sm:$0xff]
      %v1741 = vld [vmem:[%s1724 + $0x80] sm:$0xff]
      %v1742 = vld [vmem:[%s1724 + $0x88] sm:$0xff]
      %v1743 = vld [vmem:[%s1724 + $0x90] sm:$0xff]
      %v1744 = vld [vmem:[%s1724 + $0x98] sm:$0xff]
      %v1745 = vld [vmem:[%s1724 + $0xa0] sm:$0xff]
      %v1746 = vld [vmem:[%s1724 + $0xa8] sm:$0xff]
      %v1747 = vld [vmem:[%s1724 + $0xb0] sm:$0xff]
      %v1748 = vld [vmem:[%s1724 + $0xb8] sm:$0xff]
      %v1749 = vld [vmem:[%s1724 + $0xc0] sm:$0xff]
      %v1750 = vld [vmem:[%s1724 + $0xc8] sm:$0xff]
      %v1751 = vld [vmem:[%s1724 + $0xd0] sm:$0xff]
      %v1752 = vld [vmem:[%s1724 + $0xd8] sm:$0xff]
      %v1753 = vld [vmem:[%s1724 + $0xe0] sm:$0xff]
      %v1754 = vld [vmem:[%s1724 + $0xe8] sm:$0xff]
      %v1755 = vld [vmem:[%s1724 + $0xf0] sm:$0xff]
      %v1756 = vld [vmem:[%s1724 + $0xf8] sm:$0xff]
      %v1757 = vld [vmem:[%s1724 + $0x100] sm:$0xff]
      %v1758 = vld [vmem:[%s1724 + $0x108] sm:$0xff]
      %v1759 = vld [vmem:[%s1724 + $0x110] sm:$0xff]
      %v1760 = vld [vmem:[%s1724 + $0x118] sm:$0xff]
      %v1761 = vld [vmem:[%s1724 + $0x120] sm:$0xff]
      %v1762 = vld [vmem:[%s1724 + $0x128] sm:$0xff]
      %v1763 = vld [vmem:[%s1724 + $0x130] sm:$0xff]
      %v1764 = vld [vmem:[%s1724 + $0x138] sm:$0xff]
      %v1765 = vld [vmem:[%s1724 + $0x140] sm:$0xff]
      %v1766 = vld [vmem:[%s1724 + $0x148] sm:$0xff]
      %v1767 = vld [vmem:[%s1724 + $0x150] sm:$0xff]
      %v1768 = vld [vmem:[%s1724 + $0x158] sm:$0xff]
      %v1769 = vld [vmem:[%s1724 + $0x160] sm:$0xff]
      %v1770 = vld [vmem:[%s1724 + $0x168] sm:$0xff]
      %v1771 = vld [vmem:[%s1724 + $0x170] sm:$0xff]
      %v1772 = vld [vmem:[%s1724 + $0x178] sm:$0xff]
      %v1773 = vld [vmem:[%s1724 + $0x180] sm:$0xff]
      %v1774 = vld [vmem:[%s1724 + $0x188] sm:$0xff]
      %v1775 = vld [vmem:[%s1724 + $0x190] sm:$0xff]
      %v1776 = vld [vmem:[%s1724 + $0x198] sm:$0xff]
      %v1777 = vld [vmem:[%s1724 + $0x1a0] sm:$0xff]
      %v1778 = vld [vmem:[%s1724 + $0x1a8] sm:$0xff]
      %v1779 = vld [vmem:[%s1724 + $0x1b0] sm:$0xff]
      %v1780 = vld [vmem:[%s1724 + $0x1b8] sm:$0xff]
      %v1781 = vld [vmem:[%s1724 + $0x1c0] sm:$0xff]
      %v1782 = vld [vmem:[%s1724 + $0x1c8] sm:$0xff]
      %v1783 = vld [vmem:[%s1724 + $0x1d0] sm:$0xff]
      %v1784 = vld [vmem:[%s1724 + $0x1d8] sm:$0xff]
      %v1785 = vld [vmem:[%s1724 + $0x1e0] sm:$0xff]
      %v1786 = vld [vmem:[%s1724 + $0x1e8] sm:$0xff]
      %v1787 = vld [vmem:[%s1724 + $0x1f0] sm:$0xff]
      %v1788 = vld [vmem:[%s1724 + $0x1f8] sm:$0xff]
      %s1789 = scalar_lea.vmem %s2, 3584
      %v1790 = vld [vmem:[%s1789] sm:$0xff]
      %v1791 = vld [vmem:[%s1789 + $0x8] sm:$0xff]
      %v1792 = vld [vmem:[%s1789 + $0x10] sm:$0xff]
      %v1793 = vld [vmem:[%s1789 + $0x18] sm:$0xff]
      %v1794 = vld [vmem:[%s1789 + $0x20] sm:$0xff]
      %v1795 = vld [vmem:[%s1789 + $0x28] sm:$0xff]
      %v1796 = vld [vmem:[%s1789 + $0x30] sm:$0xff]
      %v1797 = vld [vmem:[%s1789 + $0x38] sm:$0xff]
      %v1798 = vld [vmem:[%s1789 + $0x40] sm:$0xff]
      %v1799 = vld [vmem:[%s1789 + $0x48] sm:$0xff]
      %v1800 = vld [vmem:[%s1789 + $0x50] sm:$0xff]
      %v1801 = vld [vmem:[%s1789 + $0x58] sm:$0xff]
      %v1802 = vld [vmem:[%s1789 + $0x60] sm:$0xff]
      %v1803 = vld [vmem:[%s1789 + $0x68] sm:$0xff]
      %v1804 = vld [vmem:[%s1789 + $0x70] sm:$0xff]
      %v1805 = vld [vmem:[%s1789 + $0x78] sm:$0xff]
      %v1806 = vld [vmem:[%s1789 + $0x80] sm:$0xff]
      %v1807 = vld [vmem:[%s1789 + $0x88] sm:$0xff]
      %v1808 = vld [vmem:[%s1789 + $0x90] sm:$0xff]
      %v1809 = vld [vmem:[%s1789 + $0x98] sm:$0xff]
      %v1810 = vld [vmem:[%s1789 + $0xa0] sm:$0xff]
      %v1811 = vld [vmem:[%s1789 + $0xa8] sm:$0xff]
      %v1812 = vld [vmem:[%s1789 + $0xb0] sm:$0xff]
      %v1813 = vld [vmem:[%s1789 + $0xb8] sm:$0xff]
      %v1814 = vld [vmem:[%s1789 + $0xc0] sm:$0xff]
      %v1815 = vld [vmem:[%s1789 + $0xc8] sm:$0xff]
      %v1816 = vld [vmem:[%s1789 + $0xd0] sm:$0xff]
      %v1817 = vld [vmem:[%s1789 + $0xd8] sm:$0xff]
      %v1818 = vld [vmem:[%s1789 + $0xe0] sm:$0xff]
      %v1819 = vld [vmem:[%s1789 + $0xe8] sm:$0xff]
      %v1820 = vld [vmem:[%s1789 + $0xf0] sm:$0xff]
      %v1821 = vld [vmem:[%s1789 + $0xf8] sm:$0xff]
      %v1822 = vld [vmem:[%s1789 + $0x100] sm:$0xff]
      %v1823 = vld [vmem:[%s1789 + $0x108] sm:$0xff]
      %v1824 = vld [vmem:[%s1789 + $0x110] sm:$0xff]
      %v1825 = vld [vmem:[%s1789 + $0x118] sm:$0xff]
      %v1826 = vld [vmem:[%s1789 + $0x120] sm:$0xff]
      %v1827 = vld [vmem:[%s1789 + $0x128] sm:$0xff]
      %v1828 = vld [vmem:[%s1789 + $0x130] sm:$0xff]
      %v1829 = vld [vmem:[%s1789 + $0x138] sm:$0xff]
      %v1830 = vld [vmem:[%s1789 + $0x140] sm:$0xff]
      %v1831 = vld [vmem:[%s1789 + $0x148] sm:$0xff]
      %v1832 = vld [vmem:[%s1789 + $0x150] sm:$0xff]
      %v1833 = vld [vmem:[%s1789 + $0x158] sm:$0xff]
      %v1834 = vld [vmem:[%s1789 + $0x160] sm:$0xff]
      %v1835 = vld [vmem:[%s1789 + $0x168] sm:$0xff]
      %v1836 = vld [vmem:[%s1789 + $0x170] sm:$0xff]
      %v1837 = vld [vmem:[%s1789 + $0x178] sm:$0xff]
      %v1838 = vld [vmem:[%s1789 + $0x180] sm:$0xff]
      %v1839 = vld [vmem:[%s1789 + $0x188] sm:$0xff]
      %v1840 = vld [vmem:[%s1789 + $0x190] sm:$0xff]
      %v1841 = vld [vmem:[%s1789 + $0x198] sm:$0xff]
      %v1842 = vld [vmem:[%s1789 + $0x1a0] sm:$0xff]
      %v1843 = vld [vmem:[%s1789 + $0x1a8] sm:$0xff]
      %v1844 = vld [vmem:[%s1789 + $0x1b0] sm:$0xff]
      %v1845 = vld [vmem:[%s1789 + $0x1b8] sm:$0xff]
      %v1846 = vld [vmem:[%s1789 + $0x1c0] sm:$0xff]
      %v1847 = vld [vmem:[%s1789 + $0x1c8] sm:$0xff]
      %v1848 = vld [vmem:[%s1789 + $0x1d0] sm:$0xff]
      %v1849 = vld [vmem:[%s1789 + $0x1d8] sm:$0xff]
      %v1850 = vld [vmem:[%s1789 + $0x1e0] sm:$0xff]
      %v1851 = vld [vmem:[%s1789 + $0x1e8] sm:$0xff]
      %v1852 = vld [vmem:[%s1789 + $0x1f0] sm:$0xff]
      %v1853 = vld [vmem:[%s1789 + $0x1f8] sm:$0xff]
      %1854 = vmatprep.subr.mxu0 %v1791
      %1855 = vmatpush1.msra.mxu0 %v1790
      %1856 = vmatprep.subr.mxu0 %v1793
      %1857 = vmatpush1.msra.mxu0 %v1792
      %1858 = vmatprep.subr.mxu0 %v1795
      %1859 = vmatpush1.msra.mxu0 %v1794
      %1860 = vmatprep.subr.mxu0 %v1797
      %1861 = vmatpush1.msra.mxu0 %v1796
      %1862 = vmatprep.subr.mxu0 %v1799
      %1863 = vmatpush1.msra.mxu0 %v1798
      %1864 = vmatprep.subr.mxu0 %v1801
      %1865 = vmatpush1.msra.mxu0 %v1800
      %1866 = vmatprep.subr.mxu0 %v1803
      %1867 = vmatpush1.msra.mxu0 %v1802
      %1868 = vmatprep.subr.mxu0 %v1805
      %1869 = vmatpush1.msra.mxu0 %v1804
      %1870 = vmatprep.subr.mxu0 %v1807
      %1871 = vmatpush1.msra.mxu0 %v1806
      %1872 = vmatprep.subr.mxu0 %v1809
      %1873 = vmatpush1.msra.mxu0 %v1808
      %1874 = vmatprep.subr.mxu0 %v1811
      %1875 = vmatpush1.msra.mxu0 %v1810
      %1876 = vmatprep.subr.mxu0 %v1813
      %1877 = vmatpush1.msra.mxu0 %v1812
      %1878 = vmatprep.subr.mxu0 %v1815
      %1879 = vmatpush1.msra.mxu0 %v1814
      %1880 = vmatprep.subr.mxu0 %v1817
      %1881 = vmatpush1.msra.mxu0 %v1816
      %1882 = vmatprep.subr.mxu0 %v1819
      %1883 = vmatpush1.msra.mxu0 %v1818
      %1884 = vmatprep.subr.mxu0 %v1821
      %1885 = vmatpush1.msra.mxu0 %v1820
      %1886 = vmatprep.subr.mxu0 %v1823
      %1887 = vmatpush1.msra.mxu0 %v1822
      %1888 = vmatprep.subr.mxu0 %v1825
      %1889 = vmatpush1.msra.mxu0 %v1824
      %1890 = vmatprep.subr.mxu0 %v1827
      %1891 = vmatpush1.msra.mxu0 %v1826
      %1892 = vmatprep.subr.mxu0 %v1829
      %1893 = vmatpush1.msra.mxu0 %v1828
      %1894 = vmatprep.subr.mxu0 %v1831
      %1895 = vmatpush1.msra.mxu0 %v1830
      %1896 = vmatprep.subr.mxu0 %v1833
      %1897 = vmatpush1.msra.mxu0 %v1832
      %1898 = vmatprep.subr.mxu0 %v1835
      %1899 = vmatpush1.msra.mxu0 %v1834
      %1900 = vmatprep.subr.mxu0 %v1837
      %1901 = vmatpush1.msra.mxu0 %v1836
      %1902 = vmatprep.subr.mxu0 %v1839
      %1903 = vmatpush1.msra.mxu0 %v1838
      %1904 = vmatprep.subr.mxu0 %v1841
      %1905 = vmatpush1.msra.mxu0 %v1840
      %1906 = vmatprep.subr.mxu0 %v1843
      %1907 = vmatpush1.msra.mxu0 %v1842
      %1908 = vmatprep.subr.mxu0 %v1845
      %1909 = vmatpush1.msra.mxu0 %v1844
      %1910 = vmatprep.subr.mxu0 %v1847
      %1911 = vmatpush1.msra.mxu0 %v1846
      %1912 = vmatprep.subr.mxu0 %v1849
      %1913 = vmatpush1.msra.mxu0 %v1848
      %1914 = vmatprep.subr.mxu0 %v1851
      %1915 = vmatpush1.msra.mxu0 %v1850
      %1916 = vmatprep.subr.mxu0 %v1853
      %1917 = vmatpush1.msra.mxu0 %v1852
      %1918 = vmatprep.mubr.f32.mxu0 %v390
      %1919 = vmatmul.mubr.f32.gmra.mrb[0].mxu0 %v389
      %v1920 = vpop.f32.mrb[0].mxu0
      %v1921 = vadd.f32 0.0, %v1920
      %v1922 = vpop.f32.mrb[0].mxu0
      %v1923 = vadd.f32 0.0, %v1922
      %1924 = vmatprep.mubr.f32.mxu0 %v392
      %1925 = vmatmul.mubr.f32.gmra.mrb[0].mxu0 %v391
      %v1926 = vpop.f32.mrb[0].mxu0
      %v1927 = vadd.f32 0.0, %v1926
      %v1928 = vpop.f32.mrb[0].mxu0
      %v1929 = vadd.f32 0.0, %v1928
      %1930 = vdwg.mxu0
      %1931 = vmatprep.subr.mxu0 %v1726
      %1932 = vmatpush1.msra.mxu0 %v1725
      %1933 = vmatprep.subr.mxu0 %v1728
      %1934 = vmatpush1.msra.mxu0 %v1727
      %1935 = vmatprep.subr.mxu0 %v1730
      %1936 = vmatpush1.msra.mxu0 %v1729
      %1937 = vmatprep.subr.mxu0 %v1732
      %1938 = vmatpush1.msra.mxu0 %v1731
      %1939 = vmatprep.subr.mxu0 %v1734
      %1940 = vmatpush1.msra.mxu0 %v1733
      %1941 = vmatprep.subr.mxu0 %v1736
      %1942 = vmatpush1.msra.mxu0 %v1735
      %1943 = vmatprep.subr.mxu0 %v1738
      %1944 = vmatpush1.msra.mxu0 %v1737
      %1945 = vmatprep.subr.mxu0 %v1740
      %1946 = vmatpush1.msra.mxu0 %v1739
      %1947 = vmatprep.subr.mxu0 %v1742
      %1948 = vmatpush1.msra.mxu0 %v1741
      %1949 = vmatprep.subr.mxu0 %v1744
      %1950 = vmatpush1.msra.mxu0 %v1743
      %1951 = vmatprep.subr.mxu0 %v1746
      %1952 = vmatpush1.msra.mxu0 %v1745
      %1953 = vmatprep.subr.mxu0 %v1748
      %1954 = vmatpush1.msra.mxu0 %v1747
      %1955 = vmatprep.subr.mxu0 %v1750
      %1956 = vmatpush1.msra.mxu0 %v1749
      %1957 = vmatprep.subr.mxu0 %v1752
      %1958 = vmatpush1.msra.mxu0 %v1751
      %1959 = vmatprep.subr.mxu0 %v1754
      %1960 = vmatpush1.msra.mxu0 %v1753
      %1961 = vmatprep.subr.mxu0 %v1756
      %1962 = vmatpush1.msra.mxu0 %v1755
      %1963 = vmatprep.subr.mxu0 %v1758
      %1964 = vmatpush1.msra.mxu0 %v1757
      %1965 = vmatprep.subr.mxu0 %v1760
      %1966 = vmatpush1.msra.mxu0 %v1759
      %1967 = vmatprep.subr.mxu0 %v1762
      %1968 = vmatpush1.msra.mxu0 %v1761
      %1969 = vmatprep.subr.mxu0 %v1764
      %1970 = vmatpush1.msra.mxu0 %v1763
      %1971 = vmatprep.subr.mxu0 %v1766
      %1972 = vmatpush1.msra.mxu0 %v1765
      %1973 = vmatprep.subr.mxu0 %v1768
      %1974 = vmatpush1.msra.mxu0 %v1767
      %1975 = vmatprep.subr.mxu0 %v1770
      %1976 = vmatpush1.msra.mxu0 %v1769
      %1977 = vmatprep.subr.mxu0 %v1772
      %1978 = vmatpush1.msra.mxu0 %v1771
      %1979 = vmatprep.subr.mxu0 %v1774
      %1980 = vmatpush1.msra.mxu0 %v1773
      %1981 = vmatprep.subr.mxu0 %v1776
      %1982 = vmatpush1.msra.mxu0 %v1775
      %1983 = vmatprep.subr.mxu0 %v1778
      %1984 = vmatpush1.msra.mxu0 %v1777
      %1985 = vmatprep.subr.mxu0 %v1780
      %1986 = vmatpush1.msra.mxu0 %v1779
      %1987 = vmatprep.subr.mxu0 %v1782
      %1988 = vmatpush1.msra.mxu0 %v1781
      %1989 = vmatprep.subr.mxu0 %v1784
      %1990 = vmatpush1.msra.mxu0 %v1783
      %1991 = vmatprep.subr.mxu0 %v1786
      %1992 = vmatpush1.msra.mxu0 %v1785
      %1993 = vmatprep.subr.mxu0 %v1788
      %1994 = vmatpush1.msra.mxu0 %v1787
      %1995 = vmatprep.mubr.f32.mxu0 %v1716
      %1996 = vmatmul.mubr.f32.gmra.mrb[0].mxu0 %v1714
      %v1997 = vpop.f32.mrb[0].mxu0
      %v1998 = vadd.f32 %v1921, %v1997
      %v1999 = vpop.f32.mrb[0].mxu0
      %v2000 = vadd.f32 %v1923, %v1999
      %2001 = vmatprep.mubr.f32.mxu0 %v1722
      %2002 = vmatmul.mubr.f32.gmra.mrb[0].mxu0 %v1720
      %v2003 = vpop.f32.mrb[0].mxu0
      %v2004 = vadd.f32 %v1927, %v2003
      %v2005 = vpop.f32.mrb[0].mxu0
      %v2006 = vadd.f32 %v1929, %v2005
      %2007 = vdwg.mxu0
      %s2008 = scalar_lea.vmem %s1, 112
      %v2009 = vld [vmem:[%s2008] sm:$0xff]
      %v2010 = vld [vmem:[%s2008 + $0x8] sm:$0xff]
      %v2012 = vsel %vm396, %v2009, 0
      %v2015 = vsel %vm396, %v2010, 0
      %2017 = vmatprep.subr.mxu0 %v390
      %2018 = vmatpush1.msra.mxu0 %v389
      %2019 = vmatprep.subr.mxu0 %v392
      %2020 = vmatpush1.msra.mxu0 %v391
      %2021 = vmatprep.subr.mxu0 0.0
      %2022 = vmatpush1.msra.mxu0 0.0
      %2023 = vmatprep.subr.mxu0 0.0
      %2024 = vmatpush1.msra.mxu0 0.0
      %2025 = vmatprep.subr.mxu0 0.0
      %2026 = vmatpush1.msra.mxu0 0.0
      %2027 = vmatprep.subr.mxu0 0.0
      %2028 = vmatpush1.msra.mxu0 0.0
      %2029 = vmatprep.subr.mxu0 0.0
      %2030 = vmatpush1.msra.mxu0 0.0
      %2031 = vmatprep.subr.mxu0 0.0
      %2032 = vmatpush1.msra.mxu0 0.0
      %2033 = vmatprep.subr.mxu0 0.0
      %2034 = vmatpush1.msra.mxu0 0.0
      %2035 = vmatprep.subr.mxu0 0.0
      %2036 = vmatpush1.msra.mxu0 0.0
      %2037 = vmatprep.subr.mxu0 0.0
      %2038 = vmatpush1.msra.mxu0 0.0
      %2039 = vmatprep.subr.mxu0 0.0
      %2040 = vmatpush1.msra.mxu0 0.0
      %2041 = vmatprep.subr.mxu0 0.0
      %2042 = vmatpush1.msra.mxu0 0.0
      %2043 = vmatprep.subr.mxu0 0.0
      %2044 = vmatpush1.msra.mxu0 0.0
      %2045 = vmatprep.subr.mxu0 0.0
      %2046 = vmatpush1.msra.mxu0 0.0
      %2047 = vmatprep.subr.mxu0 0.0
      %2048 = vmatpush1.msra.mxu0 0.0
      %2049 = vmatprep.subr.mxu0 0.0
      %2050 = vmatpush1.msra.mxu0 0.0
      %2051 = vmatprep.subr.mxu0 0.0
      %2052 = vmatpush1.msra.mxu0 0.0
      %2053 = vmatprep.subr.mxu0 0.0
      %2054 = vmatpush1.msra.mxu0 0.0
      %2055 = vmatprep.subr.mxu0 0.0
      %2056 = vmatpush1.msra.mxu0 0.0
      %2057 = vmatprep.subr.mxu0 0.0
      %2058 = vmatpush1.msra.mxu0 0.0
      %2059 = vmatprep.subr.mxu0 0.0
      %2060 = vmatpush1.msra.mxu0 0.0
      %2061 = vmatprep.subr.mxu0 0.0
      %2062 = vmatpush1.msra.mxu0 0.0
      %2063 = vmatprep.subr.mxu0 0.0
      %2064 = vmatpush1.msra.mxu0 0.0
      %2065 = vmatprep.subr.mxu0 0.0
      %2066 = vmatpush1.msra.mxu0 0.0
      %2067 = vmatprep.subr.mxu0 0.0
      %2068 = vmatpush1.msra.mxu0 0.0
      %2069 = vmatprep.subr.mxu0 0.0
      %2070 = vmatpush1.msra.mxu0 0.0
      %2071 = vmatprep.subr.mxu0 0.0
      %2072 = vmatpush1.msra.mxu0 0.0
      %2073 = vmatprep.subr.mxu0 0.0
      %2074 = vmatpush1.msra.mxu0 0.0
      %2075 = vmatprep.subr.mxu0 0.0
      %2076 = vmatpush1.msra.mxu0 0.0
      %2077 = vmatprep.subr.mxu0 0.0
      %2078 = vmatpush1.msra.mxu0 0.0
      %2079 = vmatprep.subr.mxu0 0.0
      %2080 = vmatpush1.msra.mxu0 0.0
      %2081 = vmatprep.mubr.f32.mxu0 0.0
      %2082 = vmatmul.mubr.f32.gmra.mrb[0].mxu0 %v2012
      %v2083 = vpop.f32.mrb[0].mxu0
      %v2084 = vadd.f32 0.0, %v2083
      %v2085 = vpop.f32.mrb[0].mxu0
      %v2086 = vadd.f32 0.0, %v2085
      %2087 = vmatprep.mubr.f32.mxu0 0.0
      %2088 = vmatmul.mubr.f32.gmra.mrb[0].mxu0 %v2015
      %v2089 = vpop.f32.mrb[0].mxu0
      %v2090 = vadd.f32 0.0, %v2089
      %v2091 = vpop.f32.mrb[0].mxu0
      %v2092 = vadd.f32 0.0, %v2091
      %2093 = vdwg.mxu0
      %s2094 = scalar_lea.vmem %s2, 4096
      %v2095 = vld [vmem:[%s2094] sm:$0xff]
      %v2096 = vld [vmem:[%s2094 + $0x8] sm:$0xff]
      %v2097 = vld [vmem:[%s2094 + $0x10] sm:$0xff]
      %v2098 = vld [vmem:[%s2094 + $0x18] sm:$0xff]
      %v2099 = vld [vmem:[%s2094 + $0x20] sm:$0xff]
      %v2100 = vld [vmem:[%s2094 + $0x28] sm:$0xff]
      %v2101 = vld [vmem:[%s2094 + $0x30] sm:$0xff]
      %v2102 = vld [vmem:[%s2094 + $0x38] sm:$0xff]
      %v2103 = vld [vmem:[%s2094 + $0x40] sm:$0xff]
      %v2104 = vld [vmem:[%s2094 + $0x48] sm:$0xff]
      %v2105 = vld [vmem:[%s2094 + $0x50] sm:$0xff]
      %v2106 = vld [vmem:[%s2094 + $0x58] sm:$0xff]
      %v2107 = vld [vmem:[%s2094 + $0x60] sm:$0xff]
      %v2108 = vld [vmem:[%s2094 + $0x68] sm:$0xff]
      %v2109 = vld [vmem:[%s2094 + $0x70] sm:$0xff]
      %v2110 = vld [vmem:[%s2094 + $0x78] sm:$0xff]
      %v2111 = vld [vmem:[%s2094 + $0x80] sm:$0xff]
      %v2112 = vld [vmem:[%s2094 + $0x88] sm:$0xff]
      %v2113 = vld [vmem:[%s2094 + $0x90] sm:$0xff]
      %v2114 = vld [vmem:[%s2094 + $0x98] sm:$0xff]
      %v2115 = vld [vmem:[%s2094 + $0xa0] sm:$0xff]
      %v2116 = vld [vmem:[%s2094 + $0xa8] sm:$0xff]
      %v2117 = vld [vmem:[%s2094 + $0xb0] sm:$0xff]
      %v2118 = vld [vmem:[%s2094 + $0xb8] sm:$0xff]
      %v2119 = vld [vmem:[%s2094 + $0xc0] sm:$0xff]
      %v2120 = vld [vmem:[%s2094 + $0xc8] sm:$0xff]
      %v2121 = vld [vmem:[%s2094 + $0xd0] sm:$0xff]
      %v2122 = vld [vmem:[%s2094 + $0xd8] sm:$0xff]
      %v2123 = vld [vmem:[%s2094 + $0xe0] sm:$0xff]
      %v2124 = vld [vmem:[%s2094 + $0xe8] sm:$0xff]
      %v2125 = vld [vmem:[%s2094 + $0xf0] sm:$0xff]
      %v2126 = vld [vmem:[%s2094 + $0xf8] sm:$0xff]
      %v2127 = vld [vmem:[%s2094 + $0x100] sm:$0xff]
      %v2128 = vld [vmem:[%s2094 + $0x108] sm:$0xff]
      %v2129 = vld [vmem:[%s2094 + $0x110] sm:$0xff]
      %v2130 = vld [vmem:[%s2094 + $0x118] sm:$0xff]
      %v2131 = vld [vmem:[%s2094 + $0x120] sm:$0xff]
      %v2132 = vld [vmem:[%s2094 + $0x128] sm:$0xff]
      %v2133 = vld [vmem:[%s2094 + $0x130] sm:$0xff]
      %v2134 = vld [vmem:[%s2094 + $0x138] sm:$0xff]
      %v2135 = vld [vmem:[%s2094 + $0x140] sm:$0xff]
      %v2136 = vld [vmem:[%s2094 + $0x148] sm:$0xff]
      %v2137 = vld [vmem:[%s2094 + $0x150] sm:$0xff]
      %v2138 = vld [vmem:[%s2094 + $0x158] sm:$0xff]
      %v2139 = vld [vmem:[%s2094 + $0x160] sm:$0xff]
      %v2140 = vld [vmem:[%s2094 + $0x168] sm:$0xff]
      %v2141 = vld [vmem:[%s2094 + $0x170] sm:$0xff]
      %v2142 = vld [vmem:[%s2094 + $0x178] sm:$0xff]
      %v2143 = vld [vmem:[%s2094 + $0x180] sm:$0xff]
      %v2144 = vld [vmem:[%s2094 + $0x188] sm:$0xff]
      %v2145 = vld [vmem:[%s2094 + $0x190] sm:$0xff]
      %v2146 = vld [vmem:[%s2094 + $0x198] sm:$0xff]
      %v2147 = vld [vmem:[%s2094 + $0x1a0] sm:$0xff]
      %v2148 = vld [vmem:[%s2094 + $0x1a8] sm:$0xff]
      %v2149 = vld [vmem:[%s2094 + $0x1b0] sm:$0xff]
      %v2150 = vld [vmem:[%s2094 + $0x1b8] sm:$0xff]
      %v2151 = vld [vmem:[%s2094 + $0x1c0] sm:$0xff]
      %v2152 = vld [vmem:[%s2094 + $0x1c8] sm:$0xff]
      %v2153 = vld [vmem:[%s2094 + $0x1d0] sm:$0xff]
      %v2154 = vld [vmem:[%s2094 + $0x1d8] sm:$0xff]
      %v2155 = vld [vmem:[%s2094 + $0x1e0] sm:$0xff]
      %v2156 = vld [vmem:[%s2094 + $0x1e8] sm:$0xff]
      %v2157 = vld [vmem:[%s2094 + $0x1f0] sm:$0xff]
      %v2158 = vld [vmem:[%s2094 + $0x1f8] sm:$0xff]
      %2159 = vmatprep.subr.mxu0 %v2096
      %2160 = vmatpush1.msra.mxu0 %v2095
      %2161 = vmatprep.subr.mxu0 %v2098
      %2162 = vmatpush1.msra.mxu0 %v2097
      %2163 = vmatprep.subr.mxu0 %v2100
      %2164 = vmatpush1.msra.mxu0 %v2099
      %2165 = vmatprep.subr.mxu0 %v2102
      %2166 = vmatpush1.msra.mxu0 %v2101
      %2167 = vmatprep.subr.mxu0 %v2104
      %2168 = vmatpush1.msra.mxu0 %v2103
      %2169 = vmatprep.subr.mxu0 %v2106
      %2170 = vmatpush1.msra.mxu0 %v2105
      %2171 = vmatprep.subr.mxu0 %v2108
      %2172 = vmatpush1.msra.mxu0 %v2107
      %2173 = vmatprep.subr.mxu0 %v2110
      %2174 = vmatpush1.msra.mxu0 %v2109
      %2175 = vmatprep.subr.mxu0 %v2112
      %2176 = vmatpush1.msra.mxu0 %v2111
      %2177 = vmatprep.subr.mxu0 %v2114
      %2178 = vmatpush1.msra.mxu0 %v2113
      %2179 = vmatprep.subr.mxu0 %v2116
      %2180 = vmatpush1.msra.mxu0 %v2115
      %2181 = vmatprep.subr.mxu0 %v2118
      %2182 = vmatpush1.msra.mxu0 %v2117
      %2183 = vmatprep.subr.mxu0 %v2120
      %2184 = vmatpush1.msra.mxu0 %v2119
      %2185 = vmatprep.subr.mxu0 %v2122
      %2186 = vmatpush1.msra.mxu0 %v2121
      %2187 = vmatprep.subr.mxu0 %v2124
      %2188 = vmatpush1.msra.mxu0 %v2123
      %2189 = vmatprep.subr.mxu0 %v2126
      %2190 = vmatpush1.msra.mxu0 %v2125
      %2191 = vmatprep.subr.mxu0 %v2128
      %2192 = vmatpush1.msra.mxu0 %v2127
      %2193 = vmatprep.subr.mxu0 %v2130
      %2194 = vmatpush1.msra.mxu0 %v2129
      %2195 = vmatprep.subr.mxu0 %v2132
      %2196 = vmatpush1.msra.mxu0 %v2131
      %2197 = vmatprep.subr.mxu0 %v2134
      %2198 = vmatpush1.msra.mxu0 %v2133
      %2199 = vmatprep.subr.mxu0 %v2136
      %2200 = vmatpush1.msra.mxu0 %v2135
      %2201 = vmatprep.subr.mxu0 %v2138
      %2202 = vmatpush1.msra.mxu0 %v2137
      %2203 = vmatprep.subr.mxu0 %v2140
      %2204 = vmatpush1.msra.mxu0 %v2139
      %2205 = vmatprep.subr.mxu0 %v2142
      %2206 = vmatpush1.msra.mxu0 %v2141
      %2207 = vmatprep.subr.mxu0 %v2144
      %2208 = vmatpush1.msra.mxu0 %v2143
      %2209 = vmatprep.subr.mxu0 %v2146
      %2210 = vmatpush1.msra.mxu0 %v2145
      %2211 = vmatprep.subr.mxu0 %v2148
      %2212 = vmatpush1.msra.mxu0 %v2147
      %2213 = vmatprep.subr.mxu0 %v2150
      %2214 = vmatpush1.msra.mxu0 %v2149
      %2215 = vmatprep.subr.mxu0 %v2152
      %2216 = vmatpush1.msra.mxu0 %v2151
      %2217 = vmatprep.subr.mxu0 %v2154
      %2218 = vmatpush1.msra.mxu0 %v2153
      %2219 = vmatprep.subr.mxu0 %v2156
      %2220 = vmatpush1.msra.mxu0 %v2155
      %2221 = vmatprep.subr.mxu0 %v2158
      %2222 = vmatpush1.msra.mxu0 %v2157
      %2223 = vmatprep.mubr.f32.mxu0 %v2086
      %2224 = vmatmul.mubr.f32.gmra.mrb[0].mxu0 %v2084
      %v2225 = vpop.f32.mrb[0].mxu0
      %v2226 = vadd.f32 0.0, %v2225
      %v2227 = vpop.f32.mrb[0].mxu0
      %v2228 = vadd.f32 0.0, %v2227
      %2229 = vmatprep.mubr.f32.mxu0 %v2092
      %2230 = vmatmul.mubr.f32.gmra.mrb[0].mxu0 %v2090
      %v2231 = vpop.f32.mrb[0].mxu0
      %v2232 = vadd.f32 0.0, %v2231
      %v2233 = vpop.f32.mrb[0].mxu0
      %v2234 = vadd.f32 0.0, %v2233
      %2235 = vdwg.mxu0
      %v2236 = vadd.f32 %v1998, %v2226
      %v2237 = vadd.f32 %v2000, %v2228
      %v2238 = vadd.f32 %v2004, %v2232
      %v2239 = vadd.f32 %v2006, %v2234
      %s2240 = scalar_lea.vmem %s4, 4
      %v2241 = vld [vmem:[%s2240] sm:$0x3]
      %v2243 = vlaneseq
      %v2244 = vshrl.u32 %v2243, 7
      %v2245 = vsub.s32 0, %v2244
      %v2246 = vrot.slane %v2241, %v2245
      %v2247 = vlaneseq
      %v2248 = vshrl.u32 %v2247, 7
      %v2249 = vsub.s32 1, %v2248
      %v2250 = vrot.slane %v2241, %v2249
      %v2253 = vadd.f32 %v2236, %v2246
      %v2254 = vadd.f32 %v2237, %v2250
      %v2255 = vadd.f32 %v2238, %v2246
      %v2256 = vadd.f32 %v2239, %v2250
      %v2257 = vmax.f32 %v2253, 0.0
      %v2258 = vmax.f32 %v2254, 0.0
      %v2259 = vmax.f32 %v2255, 0.0
      %v2260 = vmax.f32 %v2256, 0.0
      %v2261 = vld [vmem:[%s1] sm:$0xff]
      %v2262 = vld [vmem:[%s1 + $0x8] sm:$0xff]
      %v2264 = vsel %vm396, %v2261, 0
      %v2267 = vsel %vm396, %v2262, 0
      %2269 = vmatprep.subr.mxu0 %v2258
      %2270 = vmatpush1.msra.mxu0 %v2257
      %2271 = vmatprep.subr.mxu0 %v2260
      %2272 = vmatpush1.msra.mxu0 %v2259
      %2273 = vmatprep.subr.mxu0 0.0
      %2274 = vmatpush1.msra.mxu0 0.0
      %2275 = vmatprep.subr.mxu0 0.0
      %2276 = vmatpush1.msra.mxu0 0.0
      %2277 = vmatprep.subr.mxu0 0.0
      %2278 = vmatpush1.msra.mxu0 0.0
      %2279 = vmatprep.subr.mxu0 0.0
      %2280 = vmatpush1.msra.mxu0 0.0
      %2281 = vmatprep.subr.mxu0 0.0
      %2282 = vmatpush1.msra.mxu0 0.0
      %2283 = vmatprep.subr.mxu0 0.0
      %2284 = vmatpush1.msra.mxu0 0.0
      %2285 = vmatprep.subr.mxu0 0.0
      %2286 = vmatpush1.msra.mxu0 0.0
      %2287 = vmatprep.subr.mxu0 0.0
      %2288 = vmatpush1.msra.mxu0 0.0
      %2289 = vmatprep.subr.mxu0 0.0
      %2290 = vmatpush1.msra.mxu0 0.0
      %2291 = vmatprep.subr.mxu0 0.0
      %2292 = vmatpush1.msra.mxu0 0.0
      %2293 = vmatprep.subr.mxu0 0.0
      %2294 = vmatpush1.msra.mxu0 0.0
      %2295 = vmatprep.subr.mxu0 0.0
      %2296 = vmatpush1.msra.mxu0 0.0
      %2297 = vmatprep.subr.mxu0 0.0
      %2298 = vmatpush1.msra.mxu0 0.0
      %2299 = vmatprep.subr.mxu0 0.0
      %2300 = vmatpush1.msra.mxu0 0.0
      %2301 = vmatprep.subr.mxu0 0.0
      %2302 = vmatpush1.msra.mxu0 0.0
      %2303 = vmatprep.subr.mxu0 0.0
      %2304 = vmatpush1.msra.mxu0 0.0
      %2305 = vmatprep.subr.mxu0 0.0
      %2306 = vmatpush1.msra.mxu0 0.0
      %2307 = vmatprep.subr.mxu0 0.0
      %2308 = vmatpush1.msra.mxu0 0.0
      %2309 = vmatprep.subr.mxu0 0.0
      %2310 = vmatpush1.msra.mxu0 0.0
      %2311 = vmatprep.subr.mxu0 0.0
      %2312 = vmatpush1.msra.mxu0 0.0
      %2313 = vmatprep.subr.mxu0 0.0
      %2314 = vmatpush1.msra.mxu0 0.0
      %2315 = vmatprep.subr.mxu0 0.0
      %2316 = vmatpush1.msra.mxu0 0.0
      %2317 = vmatprep.subr.mxu0 0.0
      %2318 = vmatpush1.msra.mxu0 0.0
      %2319 = vmatprep.subr.mxu0 0.0
      %2320 = vmatpush1.msra.mxu0 0.0
      %2321 = vmatprep.subr.mxu0 0.0
      %2322 = vmatpush1.msra.mxu0 0.0
      %2323 = vmatprep.subr.mxu0 0.0
      %2324 = vmatpush1.msra.mxu0 0.0
      %2325 = vmatprep.subr.mxu0 0.0
      %2326 = vmatpush1.msra.mxu0 0.0
      %2327 = vmatprep.subr.mxu0 0.0
      %2328 = vmatpush1.msra.mxu0 0.0
      %2329 = vmatprep.subr.mxu0 0.0
      %2330 = vmatpush1.msra.mxu0 0.0
      %2331 = vmatprep.subr.mxu0 0.0
      %2332 = vmatpush1.msra.mxu0 0.0
      %2333 = vmatprep.mubr.f32.mxu0 0.0
      %2334 = vmatmul.mubr.f32.gmra.mrb[0].mxu0 %v2264
      %v2335 = vpop.f32.mrb[0].mxu0
      %v2336 = vadd.f32 0.0, %v2335
      %v2337 = vpop.f32.mrb[0].mxu0
      %v2338 = vadd.f32 0.0, %v2337
      %2339 = vmatprep.mubr.f32.mxu0 0.0
      %2340 = vmatmul.mubr.f32.gmra.mrb[0].mxu0 %v2267
      %v2341 = vpop.f32.mrb[0].mxu0
      %v2342 = vadd.f32 0.0, %v2341
      %v2343 = vpop.f32.mrb[0].mxu0
      %v2344 = vadd.f32 0.0, %v2343
      %2345 = vdwg.mxu0
      %s2346 = scalar_lea.vmem %s2, 4608
      %v2347 = vld [vmem:[%s2346] sm:$0xff]
      %v2348 = vld [vmem:[%s2346 + $0x8] sm:$0xff]
      %v2349 = vld [vmem:[%s2346 + $0x10] sm:$0xff]
      %v2350 = vld [vmem:[%s2346 + $0x18] sm:$0xff]
      %v2351 = vld [vmem:[%s2346 + $0x20] sm:$0xff]
      %v2352 = vld [vmem:[%s2346 + $0x28] sm:$0xff]
      %v2353 = vld [vmem:[%s2346 + $0x30] sm:$0xff]
      %v2354 = vld [vmem:[%s2346 + $0x38] sm:$0xff]
      %v2355 = vld [vmem:[%s2346 + $0x40] sm:$0xff]
      %v2356 = vld [vmem:[%s2346 + $0x48] sm:$0xff]
      %v2357 = vld [vmem:[%s2346 + $0x50] sm:$0xff]
      %v2358 = vld [vmem:[%s2346 + $0x58] sm:$0xff]
      %v2359 = vld [vmem:[%s2346 + $0x60] sm:$0xff]
      %v2360 = vld [vmem:[%s2346 + $0x68] sm:$0xff]
      %v2361 = vld [vmem:[%s2346 + $0x70] sm:$0xff]
      %v2362 = vld [vmem:[%s2346 + $0x78] sm:$0xff]
      %v2363 = vld [vmem:[%s2346 + $0x80] sm:$0xff]
      %v2364 = vld [vmem:[%s2346 + $0x88] sm:$0xff]
      %v2365 = vld [vmem:[%s2346 + $0x90] sm:$0xff]
      %v2366 = vld [vmem:[%s2346 + $0x98] sm:$0xff]
      %v2367 = vld [vmem:[%s2346 + $0xa0] sm:$0xff]
      %v2368 = vld [vmem:[%s2346 + $0xa8] sm:$0xff]
      %v2369 = vld [vmem:[%s2346 + $0xb0] sm:$0xff]
      %v2370 = vld [vmem:[%s2346 + $0xb8] sm:$0xff]
      %v2371 = vld [vmem:[%s2346 + $0xc0] sm:$0xff]
      %v2372 = vld [vmem:[%s2346 + $0xc8] sm:$0xff]
      %v2373 = vld [vmem:[%s2346 + $0xd0] sm:$0xff]
      %v2374 = vld [vmem:[%s2346 + $0xd8] sm:$0xff]
      %v2375 = vld [vmem:[%s2346 + $0xe0] sm:$0xff]
      %v2376 = vld [vmem:[%s2346 + $0xe8] sm:$0xff]
      %v2377 = vld [vmem:[%s2346 + $0xf0] sm:$0xff]
      %v2378 = vld [vmem:[%s2346 + $0xf8] sm:$0xff]
      %v2379 = vld [vmem:[%s2346 + $0x100] sm:$0xff]
      %v2380 = vld [vmem:[%s2346 + $0x108] sm:$0xff]
      %v2381 = vld [vmem:[%s2346 + $0x110] sm:$0xff]
      %v2382 = vld [vmem:[%s2346 + $0x118] sm:$0xff]
      %v2383 = vld [vmem:[%s2346 + $0x120] sm:$0xff]
      %v2384 = vld [vmem:[%s2346 + $0x128] sm:$0xff]
      %v2385 = vld [vmem:[%s2346 + $0x130] sm:$0xff]
      %v2386 = vld [vmem:[%s2346 + $0x138] sm:$0xff]
      %v2387 = vld [vmem:[%s2346 + $0x140] sm:$0xff]
      %v2388 = vld [vmem:[%s2346 + $0x148] sm:$0xff]
      %v2389 = vld [vmem:[%s2346 + $0x150] sm:$0xff]
      %v2390 = vld [vmem:[%s2346 + $0x158] sm:$0xff]
      %v2391 = vld [vmem:[%s2346 + $0x160] sm:$0xff]
      %v2392 = vld [vmem:[%s2346 + $0x168] sm:$0xff]
      %v2393 = vld [vmem:[%s2346 + $0x170] sm:$0xff]
      %v2394 = vld [vmem:[%s2346 + $0x178] sm:$0xff]
      %v2395 = vld [vmem:[%s2346 + $0x180] sm:$0xff]
      %v2396 = vld [vmem:[%s2346 + $0x188] sm:$0xff]
      %v2397 = vld [vmem:[%s2346 + $0x190] sm:$0xff]
      %v2398 = vld [vmem:[%s2346 + $0x198] sm:$0xff]
      %v2399 = vld [vmem:[%s2346 + $0x1a0] sm:$0xff]
      %v2400 = vld [vmem:[%s2346 + $0x1a8] sm:$0xff]
      %v2401 = vld [vmem:[%s2346 + $0x1b0] sm:$0xff]
      %v2402 = vld [vmem:[%s2346 + $0x1b8] sm:$0xff]
      %v2403 = vld [vmem:[%s2346 + $0x1c0] sm:$0xff]
      %v2404 = vld [vmem:[%s2346 + $0x1c8] sm:$0xff]
      %v2405 = vld [vmem:[%s2346 + $0x1d0] sm:$0xff]
      %v2406 = vld [vmem:[%s2346 + $0x1d8] sm:$0xff]
      %v2407 = vld [vmem:[%s2346 + $0x1e0] sm:$0xff]
      %v2408 = vld [vmem:[%s2346 + $0x1e8] sm:$0xff]
      %v2409 = vld [vmem:[%s2346 + $0x1f0] sm:$0xff]
      %v2410 = vld [vmem:[%s2346 + $0x1f8] sm:$0xff]
      %s2411 = scalar_lea.vmem %s2, 5120
      %v2412 = vld [vmem:[%s2411] sm:$0xff]
      %v2413 = vld [vmem:[%s2411 + $0x8] sm:$0xff]
      %v2414 = vld [vmem:[%s2411 + $0x10] sm:$0xff]
      %v2415 = vld [vmem:[%s2411 + $0x18] sm:$0xff]
      %v2416 = vld [vmem:[%s2411 + $0x20] sm:$0xff]
      %v2417 = vld [vmem:[%s2411 + $0x28] sm:$0xff]
      %v2418 = vld [vmem:[%s2411 + $0x30] sm:$0xff]
      %v2419 = vld [vmem:[%s2411 + $0x38] sm:$0xff]
      %v2420 = vld [vmem:[%s2411 + $0x40] sm:$0xff]
      %v2421 = vld [vmem:[%s2411 + $0x48] sm:$0xff]
      %v2422 = vld [vmem:[%s2411 + $0x50] sm:$0xff]
      %v2423 = vld [vmem:[%s2411 + $0x58] sm:$0xff]
      %v2424 = vld [vmem:[%s2411 + $0x60] sm:$0xff]
      %v2425 = vld [vmem:[%s2411 + $0x68] sm:$0xff]
      %v2426 = vld [vmem:[%s2411 + $0x70] sm:$0xff]
      %v2427 = vld [vmem:[%s2411 + $0x78] sm:$0xff]
      %v2428 = vld [vmem:[%s2411 + $0x80] sm:$0xff]
      %v2429 = vld [vmem:[%s2411 + $0x88] sm:$0xff]
      %v2430 = vld [vmem:[%s2411 + $0x90] sm:$0xff]
      %v2431 = vld [vmem:[%s2411 + $0x98] sm:$0xff]
      %v2432 = vld [vmem:[%s2411 + $0xa0] sm:$0xff]
      %v2433 = vld [vmem:[%s2411 + $0xa8] sm:$0xff]
      %v2434 = vld [vmem:[%s2411 + $0xb0] sm:$0xff]
      %v2435 = vld [vmem:[%s2411 + $0xb8] sm:$0xff]
      %v2436 = vld [vmem:[%s2411 + $0xc0] sm:$0xff]
      %v2437 = vld [vmem:[%s2411 + $0xc8] sm:$0xff]
      %v2438 = vld [vmem:[%s2411 + $0xd0] sm:$0xff]
      %v2439 = vld [vmem:[%s2411 + $0xd8] sm:$0xff]
      %v2440 = vld [vmem:[%s2411 + $0xe0] sm:$0xff]
      %v2441 = vld [vmem:[%s2411 + $0xe8] sm:$0xff]
      %v2442 = vld [vmem:[%s2411 + $0xf0] sm:$0xff]
      %v2443 = vld [vmem:[%s2411 + $0xf8] sm:$0xff]
      %v2444 = vld [vmem:[%s2411 + $0x100] sm:$0xff]
      %v2445 = vld [vmem:[%s2411 + $0x108] sm:$0xff]
      %v2446 = vld [vmem:[%s2411 + $0x110] sm:$0xff]
      %v2447 = vld [vmem:[%s2411 + $0x118] sm:$0xff]
      %v2448 = vld [vmem:[%s2411 + $0x120] sm:$0xff]
      %v2449 = vld [vmem:[%s2411 + $0x128] sm:$0xff]
      %v2450 = vld [vmem:[%s2411 + $0x130] sm:$0xff]
      %v2451 = vld [vmem:[%s2411 + $0x138] sm:$0xff]
      %v2452 = vld [vmem:[%s2411 + $0x140] sm:$0xff]
      %v2453 = vld [vmem:[%s2411 + $0x148] sm:$0xff]
      %v2454 = vld [vmem:[%s2411 + $0x150] sm:$0xff]
      %v2455 = vld [vmem:[%s2411 + $0x158] sm:$0xff]
      %v2456 = vld [vmem:[%s2411 + $0x160] sm:$0xff]
      %v2457 = vld [vmem:[%s2411 + $0x168] sm:$0xff]
      %v2458 = vld [vmem:[%s2411 + $0x170] sm:$0xff]
      %v2459 = vld [vmem:[%s2411 + $0x178] sm:$0xff]
      %v2460 = vld [vmem:[%s2411 + $0x180] sm:$0xff]
      %v2461 = vld [vmem:[%s2411 + $0x188] sm:$0xff]
      %v2462 = vld [vmem:[%s2411 + $0x190] sm:$0xff]
      %v2463 = vld [vmem:[%s2411 + $0x198] sm:$0xff]
      %v2464 = vld [vmem:[%s2411 + $0x1a0] sm:$0xff]
      %v2465 = vld [vmem:[%s2411 + $0x1a8] sm:$0xff]
      %v2466 = vld [vmem:[%s2411 + $0x1b0] sm:$0xff]
      %v2467 = vld [vmem:[%s2411 + $0x1b8] sm:$0xff]
      %v2468 = vld [vmem:[%s2411 + $0x1c0] sm:$0xff]
      %v2469 = vld [vmem:[%s2411 + $0x1c8] sm:$0xff]
      %v2470 = vld [vmem:[%s2411 + $0x1d0] sm:$0xff]
      %v2471 = vld [vmem:[%s2411 + $0x1d8] sm:$0xff]
      %v2472 = vld [vmem:[%s2411 + $0x1e0] sm:$0xff]
      %v2473 = vld [vmem:[%s2411 + $0x1e8] sm:$0xff]
      %v2474 = vld [vmem:[%s2411 + $0x1f0] sm:$0xff]
      %v2475 = vld [vmem:[%s2411 + $0x1f8] sm:$0xff]
      %2476 = vmatprep.subr.mxu0 %v2413
      %2477 = vmatpush1.msra.mxu0 %v2412
      %2478 = vmatprep.subr.mxu0 %v2415
      %2479 = vmatpush1.msra.mxu0 %v2414
      %2480 = vmatprep.subr.mxu0 %v2417
      %2481 = vmatpush1.msra.mxu0 %v2416
      %2482 = vmatprep.subr.mxu0 %v2419
      %2483 = vmatpush1.msra.mxu0 %v2418
      %2484 = vmatprep.subr.mxu0 %v2421
      %2485 = vmatpush1.msra.mxu0 %v2420
      %2486 = vmatprep.subr.mxu0 %v2423
      %2487 = vmatpush1.msra.mxu0 %v2422
      %2488 = vmatprep.subr.mxu0 %v2425
      %2489 = vmatpush1.msra.mxu0 %v2424
      %2490 = vmatprep.subr.mxu0 %v2427
      %2491 = vmatpush1.msra.mxu0 %v2426
      %2492 = vmatprep.subr.mxu0 %v2429
      %2493 = vmatpush1.msra.mxu0 %v2428
      %2494 = vmatprep.subr.mxu0 %v2431
      %2495 = vmatpush1.msra.mxu0 %v2430
      %2496 = vmatprep.subr.mxu0 %v2433
      %2497 = vmatpush1.msra.mxu0 %v2432
      %2498 = vmatprep.subr.mxu0 %v2435
      %2499 = vmatpush1.msra.mxu0 %v2434
      %2500 = vmatprep.subr.mxu0 %v2437
      %2501 = vmatpush1.msra.mxu0 %v2436
      %2502 = vmatprep.subr.mxu0 %v2439
      %2503 = vmatpush1.msra.mxu0 %v2438
      %2504 = vmatprep.subr.mxu0 %v2441
      %2505 = vmatpush1.msra.mxu0 %v2440
      %2506 = vmatprep.subr.mxu0 %v2443
      %2507 = vmatpush1.msra.mxu0 %v2442
      %2508 = vmatprep.subr.mxu0 %v2445
      %2509 = vmatpush1.msra.mxu0 %v2444
      %2510 = vmatprep.subr.mxu0 %v2447
      %2511 = vmatpush1.msra.mxu0 %v2446
      %2512 = vmatprep.subr.mxu0 %v2449
      %2513 = vmatpush1.msra.mxu0 %v2448
      %2514 = vmatprep.subr.mxu0 %v2451
      %2515 = vmatpush1.msra.mxu0 %v2450
      %2516 = vmatprep.subr.mxu0 %v2453
      %2517 = vmatpush1.msra.mxu0 %v2452
      %2518 = vmatprep.subr.mxu0 %v2455
      %2519 = vmatpush1.msra.mxu0 %v2454
      %2520 = vmatprep.subr.mxu0 %v2457
      %2521 = vmatpush1.msra.mxu0 %v2456
      %2522 = vmatprep.subr.mxu0 %v2459
      %2523 = vmatpush1.msra.mxu0 %v2458
      %2524 = vmatprep.subr.mxu0 %v2461
      %2525 = vmatpush1.msra.mxu0 %v2460
      %2526 = vmatprep.subr.mxu0 %v2463
      %2527 = vmatpush1.msra.mxu0 %v2462
      %2528 = vmatprep.subr.mxu0 %v2465
      %2529 = vmatpush1.msra.mxu0 %v2464
      %2530 = vmatprep.subr.mxu0 %v2467
      %2531 = vmatpush1.msra.mxu0 %v2466
      %2532 = vmatprep.subr.mxu0 %v2469
      %2533 = vmatpush1.msra.mxu0 %v2468
      %2534 = vmatprep.subr.mxu0 %v2471
      %2535 = vmatpush1.msra.mxu0 %v2470
      %2536 = vmatprep.subr.mxu0 %v2473
      %2537 = vmatpush1.msra.mxu0 %v2472
      %2538 = vmatprep.subr.mxu0 %v2475
      %2539 = vmatpush1.msra.mxu0 %v2474
      %2540 = vmatprep.mubr.f32.mxu0 %v2258
      %2541 = vmatmul.mubr.f32.gmra.mrb[0].mxu0 %v2257
      %v2542 = vpop.f32.mrb[0].mxu0
      %v2543 = vadd.f32 0.0, %v2542
      %v2544 = vpop.f32.mrb[0].mxu0
      %v2545 = vadd.f32 0.0, %v2544
      %2546 = vmatprep.mubr.f32.mxu0 %v2260
      %2547 = vmatmul.mubr.f32.gmra.mrb[0].mxu0 %v2259
      %v2548 = vpop.f32.mrb[0].mxu0
      %v2549 = vadd.f32 0.0, %v2548
      %v2550 = vpop.f32.mrb[0].mxu0
      %v2551 = vadd.f32 0.0, %v2550
      %2552 = vdwg.mxu0
      %2553 = vmatprep.subr.mxu0 %v2348
      %2554 = vmatpush1.msra.mxu0 %v2347
      %2555 = vmatprep.subr.mxu0 %v2350
      %2556 = vmatpush1.msra.mxu0 %v2349
      %2557 = vmatprep.subr.mxu0 %v2352
      %2558 = vmatpush1.msra.mxu0 %v2351
      %2559 = vmatprep.subr.mxu0 %v2354
      %2560 = vmatpush1.msra.mxu0 %v2353
      %2561 = vmatprep.subr.mxu0 %v2356
      %2562 = vmatpush1.msra.mxu0 %v2355
      %2563 = vmatprep.subr.mxu0 %v2358
      %2564 = vmatpush1.msra.mxu0 %v2357
      %2565 = vmatprep.subr.mxu0 %v2360
      %2566 = vmatpush1.msra.mxu0 %v2359
      %2567 = vmatprep.subr.mxu0 %v2362
      %2568 = vmatpush1.msra.mxu0 %v2361
      %2569 = vmatprep.subr.mxu0 %v2364
      %2570 = vmatpush1.msra.mxu0 %v2363
      %2571 = vmatprep.subr.mxu0 %v2366
      %2572 = vmatpush1.msra.mxu0 %v2365
      %2573 = vmatprep.subr.mxu0 %v2368
      %2574 = vmatpush1.msra.mxu0 %v2367
      %2575 = vmatprep.subr.mxu0 %v2370
      %2576 = vmatpush1.msra.mxu0 %v2369
      %2577 = vmatprep.subr.mxu0 %v2372
      %2578 = vmatpush1.msra.mxu0 %v2371
      %2579 = vmatprep.subr.mxu0 %v2374
      %2580 = vmatpush1.msra.mxu0 %v2373
      %2581 = vmatprep.subr.mxu0 %v2376
      %2582 = vmatpush1.msra.mxu0 %v2375
      %2583 = vmatprep.subr.mxu0 %v2378
      %2584 = vmatpush1.msra.mxu0 %v2377
      %2585 = vmatprep.subr.mxu0 %v2380
      %2586 = vmatpush1.msra.mxu0 %v2379
      %2587 = vmatprep.subr.mxu0 %v2382
      %2588 = vmatpush1.msra.mxu0 %v2381
      %2589 = vmatprep.subr.mxu0 %v2384
      %2590 = vmatpush1.msra.mxu0 %v2383
      %2591 = vmatprep.subr.mxu0 %v2386
      %2592 = vmatpush1.msra.mxu0 %v2385
      %2593 = vmatprep.subr.mxu0 %v2388
      %2594 = vmatpush1.msra.mxu0 %v2387
      %2595 = vmatprep.subr.mxu0 %v2390
      %2596 = vmatpush1.msra.mxu0 %v2389
      %2597 = vmatprep.subr.mxu0 %v2392
      %2598 = vmatpush1.msra.mxu0 %v2391
      %2599 = vmatprep.subr.mxu0 %v2394
      %2600 = vmatpush1.msra.mxu0 %v2393
      %2601 = vmatprep.subr.mxu0 %v2396
      %2602 = vmatpush1.msra.mxu0 %v2395
      %2603 = vmatprep.subr.mxu0 %v2398
      %2604 = vmatpush1.msra.mxu0 %v2397
      %2605 = vmatprep.subr.mxu0 %v2400
      %2606 = vmatpush1.msra.mxu0 %v2399
      %2607 = vmatprep.subr.mxu0 %v2402
      %2608 = vmatpush1.msra.mxu0 %v2401
      %2609 = vmatprep.subr.mxu0 %v2404
      %2610 = vmatpush1.msra.mxu0 %v2403
      %2611 = vmatprep.subr.mxu0 %v2406
      %2612 = vmatpush1.msra.mxu0 %v2405
      %2613 = vmatprep.subr.mxu0 %v2408
      %2614 = vmatpush1.msra.mxu0 %v2407
      %2615 = vmatprep.subr.mxu0 %v2410
      %2616 = vmatpush1.msra.mxu0 %v2409
      %2617 = vmatprep.mubr.f32.mxu0 %v2338
      %2618 = vmatmul.mubr.f32.gmra.mrb[0].mxu0 %v2336
      %v2619 = vpop.f32.mrb[0].mxu0
      %v2620 = vadd.f32 %v2543, %v2619
      %v2621 = vpop.f32.mrb[0].mxu0
      %v2622 = vadd.f32 %v2545, %v2621
      %2623 = vmatprep.mubr.f32.mxu0 %v2344
      %2624 = vmatmul.mubr.f32.gmra.mrb[0].mxu0 %v2342
      %v2625 = vpop.f32.mrb[0].mxu0
      %v2626 = vadd.f32 %v2549, %v2625
      %v2627 = vpop.f32.mrb[0].mxu0
      %v2628 = vadd.f32 %v2551, %v2627
      %2629 = vdwg.mxu0
      %s2630 = scalar_lea.vmem %s1, 128
      %v2631 = vld [vmem:[%s2630] sm:$0xff]
      %v2632 = vld [vmem:[%s2630 + $0x8] sm:$0xff]
      %v2634 = vsel %vm396, %v2631, 0
      %v2637 = vsel %vm396, %v2632, 0
      %2639 = vmatprep.subr.mxu0 %v2258
      %2640 = vmatpush1.msra.mxu0 %v2257
      %2641 = vmatprep.subr.mxu0 %v2260
      %2642 = vmatpush1.msra.mxu0 %v2259
      %2643 = vmatprep.subr.mxu0 0.0
      %2644 = vmatpush1.msra.mxu0 0.0
      %2645 = vmatprep.subr.mxu0 0.0
      %2646 = vmatpush1.msra.mxu0 0.0
      %2647 = vmatprep.subr.mxu0 0.0
      %2648 = vmatpush1.msra.mxu0 0.0
      %2649 = vmatprep.subr.mxu0 0.0
      %2650 = vmatpush1.msra.mxu0 0.0
      %2651 = vmatprep.subr.mxu0 0.0
      %2652 = vmatpush1.msra.mxu0 0.0
      %2653 = vmatprep.subr.mxu0 0.0
      %2654 = vmatpush1.msra.mxu0 0.0
      %2655 = vmatprep.subr.mxu0 0.0
      %2656 = vmatpush1.msra.mxu0 0.0
      %2657 = vmatprep.subr.mxu0 0.0
      %2658 = vmatpush1.msra.mxu0 0.0
      %2659 = vmatprep.subr.mxu0 0.0
      %2660 = vmatpush1.msra.mxu0 0.0
      %2661 = vmatprep.subr.mxu0 0.0
      %2662 = vmatpush1.msra.mxu0 0.0
      %2663 = vmatprep.subr.mxu0 0.0
      %2664 = vmatpush1.msra.mxu0 0.0
      %2665 = vmatprep.subr.mxu0 0.0
      %2666 = vmatpush1.msra.mxu0 0.0
      %2667 = vmatprep.subr.mxu0 0.0
      %2668 = vmatpush1.msra.mxu0 0.0
      %2669 = vmatprep.subr.mxu0 0.0
      %2670 = vmatpush1.msra.mxu0 0.0
      %2671 = vmatprep.subr.mxu0 0.0
      %2672 = vmatpush1.msra.mxu0 0.0
      %2673 = vmatprep.subr.mxu0 0.0
      %2674 = vmatpush1.msra.mxu0 0.0
      %2675 = vmatprep.subr.mxu0 0.0
      %2676 = vmatpush1.msra.mxu0 0.0
      %2677 = vmatprep.subr.mxu0 0.0
      %2678 = vmatpush1.msra.mxu0 0.0
      %2679 = vmatprep.subr.mxu0 0.0
      %2680 = vmatpush1.msra.mxu0 0.0
      %2681 = vmatprep.subr.mxu0 0.0
      %2682 = vmatpush1.msra.mxu0 0.0
      %2683 = vmatprep.subr.mxu0 0.0
      %2684 = vmatpush1.msra.mxu0 0.0
      %2685 = vmatprep.subr.mxu0 0.0
      %2686 = vmatpush1.msra.mxu0 0.0
      %2687 = vmatprep.subr.mxu0 0.0
      %2688 = vmatpush1.msra.mxu0 0.0
      %2689 = vmatprep.subr.mxu0 0.0
      %2690 = vmatpush1.msra.mxu0 0.0
      %2691 = vmatprep.subr.mxu0 0.0
      %2692 = vmatpush1.msra.mxu0 0.0
      %2693 = vmatprep.subr.mxu0 0.0
      %2694 = vmatpush1.msra.mxu0 0.0
      %2695 = vmatprep.subr.mxu0 0.0
      %2696 = vmatpush1.msra.mxu0 0.0
      %2697 = vmatprep.subr.mxu0 0.0
      %2698 = vmatpush1.msra.mxu0 0.0
      %2699 = vmatprep.subr.mxu0 0.0
      %2700 = vmatpush1.msra.mxu0 0.0
      %2701 = vmatprep.subr.mxu0 0.0
      %2702 = vmatpush1.msra.mxu0 0.0
      %2703 = vmatprep.mubr.f32.mxu0 0.0
      %2704 = vmatmul.mubr.f32.gmra.mrb[0].mxu0 %v2634
      %v2705 = vpop.f32.mrb[0].mxu0
      %v2706 = vadd.f32 0.0, %v2705
      %v2707 = vpop.f32.mrb[0].mxu0
      %v2708 = vadd.f32 0.0, %v2707
      %2709 = vmatprep.mubr.f32.mxu0 0.0
      %2710 = vmatmul.mubr.f32.gmra.mrb[0].mxu0 %v2637
      %v2711 = vpop.f32.mrb[0].mxu0
      %v2712 = vadd.f32 0.0, %v2711
      %v2713 = vpop.f32.mrb[0].mxu0
      %v2714 = vadd.f32 0.0, %v2713
      %2715 = vdwg.mxu0
      %s2716 = scalar_lea.vmem %s2, 5632
      %v2717 = vld [vmem:[%s2716] sm:$0xff]
      %v2718 = vld [vmem:[%s2716 + $0x8] sm:$0xff]
      %v2719 = vld [vmem:[%s2716 + $0x10] sm:$0xff]
      %v2720 = vld [vmem:[%s2716 + $0x18] sm:$0xff]
      %v2721 = vld [vmem:[%s2716 + $0x20] sm:$0xff]
      %v2722 = vld [vmem:[%s2716 + $0x28] sm:$0xff]
      %v2723 = vld [vmem:[%s2716 + $0x30] sm:$0xff]
      %v2724 = vld [vmem:[%s2716 + $0x38] sm:$0xff]
      %v2725 = vld [vmem:[%s2716 + $0x40] sm:$0xff]
      %v2726 = vld [vmem:[%s2716 + $0x48] sm:$0xff]
      %v2727 = vld [vmem:[%s2716 + $0x50] sm:$0xff]
      %v2728 = vld [vmem:[%s2716 + $0x58] sm:$0xff]
      %v2729 = vld [vmem:[%s2716 + $0x60] sm:$0xff]
      %v2730 = vld [vmem:[%s2716 + $0x68] sm:$0xff]
      %v2731 = vld [vmem:[%s2716 + $0x70] sm:$0xff]
      %v2732 = vld [vmem:[%s2716 + $0x78] sm:$0xff]
      %v2733 = vld [vmem:[%s2716 + $0x80] sm:$0xff]
      %v2734 = vld [vmem:[%s2716 + $0x88] sm:$0xff]
      %v2735 = vld [vmem:[%s2716 + $0x90] sm:$0xff]
      %v2736 = vld [vmem:[%s2716 + $0x98] sm:$0xff]
      %v2737 = vld [vmem:[%s2716 + $0xa0] sm:$0xff]
      %v2738 = vld [vmem:[%s2716 + $0xa8] sm:$0xff]
      %v2739 = vld [vmem:[%s2716 + $0xb0] sm:$0xff]
      %v2740 = vld [vmem:[%s2716 + $0xb8] sm:$0xff]
      %v2741 = vld [vmem:[%s2716 + $0xc0] sm:$0xff]
      %v2742 = vld [vmem:[%s2716 + $0xc8] sm:$0xff]
      %v2743 = vld [vmem:[%s2716 + $0xd0] sm:$0xff]
      %v2744 = vld [vmem:[%s2716 + $0xd8] sm:$0xff]
      %v2745 = vld [vmem:[%s2716 + $0xe0] sm:$0xff]
      %v2746 = vld [vmem:[%s2716 + $0xe8] sm:$0xff]
      %v2747 = vld [vmem:[%s2716 + $0xf0] sm:$0xff]
      %v2748 = vld [vmem:[%s2716 + $0xf8] sm:$0xff]
      %v2749 = vld [vmem:[%s2716 + $0x100] sm:$0xff]
      %v2750 = vld [vmem:[%s2716 + $0x108] sm:$0xff]
      %v2751 = vld [vmem:[%s2716 + $0x110] sm:$0xff]
      %v2752 = vld [vmem:[%s2716 + $0x118] sm:$0xff]
      %v2753 = vld [vmem:[%s2716 + $0x120] sm:$0xff]
      %v2754 = vld [vmem:[%s2716 + $0x128] sm:$0xff]
      %v2755 = vld [vmem:[%s2716 + $0x130] sm:$0xff]
      %v2756 = vld [vmem:[%s2716 + $0x138] sm:$0xff]
      %v2757 = vld [vmem:[%s2716 + $0x140] sm:$0xff]
      %v2758 = vld [vmem:[%s2716 + $0x148] sm:$0xff]
      %v2759 = vld [vmem:[%s2716 + $0x150] sm:$0xff]
      %v2760 = vld [vmem:[%s2716 + $0x158] sm:$0xff]
      %v2761 = vld [vmem:[%s2716 + $0x160] sm:$0xff]
      %v2762 = vld [vmem:[%s2716 + $0x168] sm:$0xff]
      %v2763 = vld [vmem:[%s2716 + $0x170] sm:$0xff]
      %v2764 = vld [vmem:[%s2716 + $0x178] sm:$0xff]
      %v2765 = vld [vmem:[%s2716 + $0x180] sm:$0xff]
      %v2766 = vld [vmem:[%s2716 + $0x188] sm:$0xff]
      %v2767 = vld [vmem:[%s2716 + $0x190] sm:$0xff]
      %v2768 = vld [vmem:[%s2716 + $0x198] sm:$0xff]
      %v2769 = vld [vmem:[%s2716 + $0x1a0] sm:$0xff]
      %v2770 = vld [vmem:[%s2716 + $0x1a8] sm:$0xff]
      %v2771 = vld [vmem:[%s2716 + $0x1b0] sm:$0xff]
      %v2772 = vld [vmem:[%s2716 + $0x1b8] sm:$0xff]
      %v2773 = vld [vmem:[%s2716 + $0x1c0] sm:$0xff]
      %v2774 = vld [vmem:[%s2716 + $0x1c8] sm:$0xff]
      %v2775 = vld [vmem:[%s2716 + $0x1d0] sm:$0xff]
      %v2776 = vld [vmem:[%s2716 + $0x1d8] sm:$0xff]
      %v2777 = vld [vmem:[%s2716 + $0x1e0] sm:$0xff]
      %v2778 = vld [vmem:[%s2716 + $0x1e8] sm:$0xff]
      %v2779 = vld [vmem:[%s2716 + $0x1f0] sm:$0xff]
      %v2780 = vld [vmem:[%s2716 + $0x1f8] sm:$0xff]
      %2781 = vmatprep.subr.mxu0 %v2718
      %2782 = vmatpush1.msra.mxu0 %v2717
      %2783 = vmatprep.subr.mxu0 %v2720
      %2784 = vmatpush1.msra.mxu0 %v2719
      %2785 = vmatprep.subr.mxu0 %v2722
      %2786 = vmatpush1.msra.mxu0 %v2721
      %2787 = vmatprep.subr.mxu0 %v2724
      %2788 = vmatpush1.msra.mxu0 %v2723
      %2789 = vmatprep.subr.mxu0 %v2726
      %2790 = vmatpush1.msra.mxu0 %v2725
      %2791 = vmatprep.subr.mxu0 %v2728
      %2792 = vmatpush1.msra.mxu0 %v2727
      %2793 = vmatprep.subr.mxu0 %v2730
      %2794 = vmatpush1.msra.mxu0 %v2729
      %2795 = vmatprep.subr.mxu0 %v2732
      %2796 = vmatpush1.msra.mxu0 %v2731
      %2797 = vmatprep.subr.mxu0 %v2734
      %2798 = vmatpush1.msra.mxu0 %v2733
      %2799 = vmatprep.subr.mxu0 %v2736
      %2800 = vmatpush1.msra.mxu0 %v2735
      %2801 = vmatprep.subr.mxu0 %v2738
      %2802 = vmatpush1.msra.mxu0 %v2737
      %2803 = vmatprep.subr.mxu0 %v2740
      %2804 = vmatpush1.msra.mxu0 %v2739
      %2805 = vmatprep.subr.mxu0 %v2742
      %2806 = vmatpush1.msra.mxu0 %v2741
      %2807 = vmatprep.subr.mxu0 %v2744
      %2808 = vmatpush1.msra.mxu0 %v2743
      %2809 = vmatprep.subr.mxu0 %v2746
      %2810 = vmatpush1.msra.mxu0 %v2745
      %2811 = vmatprep.subr.mxu0 %v2748
      %2812 = vmatpush1.msra.mxu0 %v2747
      %2813 = vmatprep.subr.mxu0 %v2750
      %2814 = vmatpush1.msra.mxu0 %v2749
      %2815 = vmatprep.subr.mxu0 %v2752
      %2816 = vmatpush1.msra.mxu0 %v2751
      %2817 = vmatprep.subr.mxu0 %v2754
      %2818 = vmatpush1.msra.mxu0 %v2753
      %2819 = vmatprep.subr.mxu0 %v2756
      %2820 = vmatpush1.msra.mxu0 %v2755
      %2821 = vmatprep.subr.mxu0 %v2758
      %2822 = vmatpush1.msra.mxu0 %v2757
      %2823 = vmatprep.subr.mxu0 %v2760
      %2824 = vmatpush1.msra.mxu0 %v2759
      %2825 = vmatprep.subr.mxu0 %v2762
      %2826 = vmatpush1.msra.mxu0 %v2761
      %2827 = vmatprep.subr.mxu0 %v2764
      %2828 = vmatpush1.msra.mxu0 %v2763
      %2829 = vmatprep.subr.mxu0 %v2766
      %2830 = vmatpush1.msra.mxu0 %v2765
      %2831 = vmatprep.subr.mxu0 %v2768
      %2832 = vmatpush1.msra.mxu0 %v2767
      %2833 = vmatprep.subr.mxu0 %v2770
      %2834 = vmatpush1.msra.mxu0 %v2769
      %2835 = vmatprep.subr.mxu0 %v2772
      %2836 = vmatpush1.msra.mxu0 %v2771
      %2837 = vmatprep.subr.mxu0 %v2774
      %2838 = vmatpush1.msra.mxu0 %v2773
      %2839 = vmatprep.subr.mxu0 %v2776
      %2840 = vmatpush1.msra.mxu0 %v2775
      %2841 = vmatprep.subr.mxu0 %v2778
      %2842 = vmatpush1.msra.mxu0 %v2777
      %2843 = vmatprep.subr.mxu0 %v2780
      %2844 = vmatpush1.msra.mxu0 %v2779
      %2845 = vmatprep.mubr.f32.mxu0 %v2708
      %2846 = vmatmul.mubr.f32.gmra.mrb[0].mxu0 %v2706
      %v2847 = vpop.f32.mrb[0].mxu0
      %v2848 = vadd.f32 0.0, %v2847
      %v2849 = vpop.f32.mrb[0].mxu0
      %v2850 = vadd.f32 0.0, %v2849
      %2851 = vmatprep.mubr.f32.mxu0 %v2714
      %2852 = vmatmul.mubr.f32.gmra.mrb[0].mxu0 %v2712
      %v2853 = vpop.f32.mrb[0].mxu0
      %v2854 = vadd.f32 0.0, %v2853
      %v2855 = vpop.f32.mrb[0].mxu0
      %v2856 = vadd.f32 0.0, %v2855
      %2857 = vdwg.mxu0
      %v2858 = vadd.f32 %v2620, %v2848
      %v2859 = vadd.f32 %v2622, %v2850
      %v2860 = vadd.f32 %v2626, %v2854
      %v2861 = vadd.f32 %v2628, %v2856
      %s2862 = scalar_lea.vmem %s4, 6
      %v2863 = vld [vmem:[%s2862] sm:$0x3]
      %v2865 = vlaneseq
      %v2866 = vshrl.u32 %v2865, 7
      %v2867 = vsub.s32 0, %v2866
      %v2868 = vrot.slane %v2863, %v2867
      %v2869 = vlaneseq
      %v2870 = vshrl.u32 %v2869, 7
      %v2871 = vsub.s32 1, %v2870
      %v2872 = vrot.slane %v2863, %v2871
      %v2875 = vadd.f32 %v2858, %v2868
      %v2876 = vadd.f32 %v2859, %v2872
      %v2877 = vadd.f32 %v2860, %v2868
      %v2878 = vadd.f32 %v2861, %v2872
      %v2879 = vmax.f32 %v2875, 0.0
      %v2880 = vmax.f32 %v2876, 0.0
      %v2881 = vmax.f32 %v2877, 0.0
      %v2882 = vmax.f32 %v2878, 0.0
      %2883 = vmatprep.subr.mxu0 %v1635
      %2884 = vmatpush1.msra.mxu0 %v1634
      %2885 = vmatprep.subr.mxu0 %v1637
      %2886 = vmatpush1.msra.mxu0 %v1636
      %2887 = vmatprep.subr.mxu0 0.0
      %2888 = vmatpush1.msra.mxu0 0.0
      %2889 = vmatprep.subr.mxu0 0.0
      %2890 = vmatpush1.msra.mxu0 0.0
      %2891 = vmatprep.subr.mxu0 0.0
      %2892 = vmatpush1.msra.mxu0 0.0
      %2893 = vmatprep.subr.mxu0 0.0
      %2894 = vmatpush1.msra.mxu0 0.0
      %2895 = vmatprep.subr.mxu0 0.0
      %2896 = vmatpush1.msra.mxu0 0.0
      %2897 = vmatprep.subr.mxu0 0.0
      %2898 = vmatpush1.msra.mxu0 0.0
      %2899 = vmatprep.subr.mxu0 0.0
      %2900 = vmatpush1.msra.mxu0 0.0
      %2901 = vmatprep.subr.mxu0 0.0
      %2902 = vmatpush1.msra.mxu0 0.0
      %2903 = vmatprep.subr.mxu0 0.0
      %2904 = vmatpush1.msra.mxu0 0.0
      %2905 = vmatprep.subr.mxu0 0.0
      %2906 = vmatpush1.msra.mxu0 0.0
      %2907 = vmatprep.subr.mxu0 0.0
      %2908 = vmatpush1.msra.mxu0 0.0
      %2909 = vmatprep.subr.mxu0 0.0
      %2910 = vmatpush1.msra.mxu0 0.0
      %2911 = vmatprep.subr.mxu0 0.0
      %2912 = vmatpush1.msra.mxu0 0.0
      %2913 = vmatprep.subr.mxu0 0.0
      %2914 = vmatpush1.msra.mxu0 0.0
      %2915 = vmatprep.subr.mxu0 0.0
      %2916 = vmatpush1.msra.mxu0 0.0
      %2917 = vmatprep.subr.mxu0 0.0
      %2918 = vmatpush1.msra.mxu0 0.0
      %2919 = vmatprep.subr.mxu0 0.0
      %2920 = vmatpush1.msra.mxu0 0.0
      %2921 = vmatprep.subr.mxu0 0.0
      %2922 = vmatpush1.msra.mxu0 0.0
      %2923 = vmatprep.subr.mxu0 0.0
      %2924 = vmatpush1.msra.mxu0 0.0
      %2925 = vmatprep.subr.mxu0 0.0
      %2926 = vmatpush1.msra.mxu0 0.0
      %2927 = vmatprep.subr.mxu0 0.0
      %2928 = vmatpush1.msra.mxu0 0.0
      %2929 = vmatprep.subr.mxu0 0.0
      %2930 = vmatpush1.msra.mxu0 0.0
      %2931 = vmatprep.subr.mxu0 0.0
      %2932 = vmatpush1.msra.mxu0 0.0
      %2933 = vmatprep.subr.mxu0 0.0
      %2934 = vmatpush1.msra.mxu0 0.0
      %2935 = vmatprep.subr.mxu0 0.0
      %2936 = vmatpush1.msra.mxu0 0.0
      %2937 = vmatprep.subr.mxu0 0.0
      %2938 = vmatpush1.msra.mxu0 0.0
      %2939 = vmatprep.subr.mxu0 0.0
      %2940 = vmatpush1.msra.mxu0 0.0
      %2941 = vmatprep.subr.mxu0 0.0
      %2942 = vmatpush1.msra.mxu0 0.0
      %2943 = vmatprep.subr.mxu0 0.0
      %2944 = vmatpush1.msra.mxu0 0.0
      %2945 = vmatprep.subr.mxu0 0.0
      %2946 = vmatpush1.msra.mxu0 0.0
      %2947 = vmatprep.mubr.f32.mxu0 0.0
      %2948 = vmatmul.mubr.f32.gmra.mrb[0].mxu0 %v398
      %v2949 = vpop.f32.mrb[0].mxu0
      %v2950 = vadd.f32 0.0, %v2949
      %v2951 = vpop.f32.mrb[0].mxu0
      %v2952 = vadd.f32 0.0, %v2951
      %2953 = vmatprep.mubr.f32.mxu0 0.0
      %2954 = vmatmul.mubr.f32.gmra.mrb[0].mxu0 %v401
      %v2955 = vpop.f32.mrb[0].mxu0
      %v2956 = vadd.f32 0.0, %v2955
      %v2957 = vpop.f32.mrb[0].mxu0
      %v2958 = vadd.f32 0.0, %v2957
      %2959 = vdwg.mxu0
      %s2960 = scalar_lea.vmem %s2, 6144
      %v2961 = vld [vmem:[%s2960] sm:$0xff]
      %v2962 = vld [vmem:[%s2960 + $0x8] sm:$0xff]
      %v2963 = vld [vmem:[%s2960 + $0x10] sm:$0xff]
      %v2964 = vld [vmem:[%s2960 + $0x18] sm:$0xff]
      %v2965 = vld [vmem:[%s2960 + $0x20] sm:$0xff]
      %v2966 = vld [vmem:[%s2960 + $0x28] sm:$0xff]
      %v2967 = vld [vmem:[%s2960 + $0x30] sm:$0xff]
      %v2968 = vld [vmem:[%s2960 + $0x38] sm:$0xff]
      %v2969 = vld [vmem:[%s2960 + $0x40] sm:$0xff]
      %v2970 = vld [vmem:[%s2960 + $0x48] sm:$0xff]
      %v2971 = vld [vmem:[%s2960 + $0x50] sm:$0xff]
      %v2972 = vld [vmem:[%s2960 + $0x58] sm:$0xff]
      %v2973 = vld [vmem:[%s2960 + $0x60] sm:$0xff]
      %v2974 = vld [vmem:[%s2960 + $0x68] sm:$0xff]
      %v2975 = vld [vmem:[%s2960 + $0x70] sm:$0xff]
      %v2976 = vld [vmem:[%s2960 + $0x78] sm:$0xff]
      %v2977 = vld [vmem:[%s2960 + $0x80] sm:$0xff]
      %v2978 = vld [vmem:[%s2960 + $0x88] sm:$0xff]
      %v2979 = vld [vmem:[%s2960 + $0x90] sm:$0xff]
      %v2980 = vld [vmem:[%s2960 + $0x98] sm:$0xff]
      %v2981 = vld [vmem:[%s2960 + $0xa0] sm:$0xff]
      %v2982 = vld [vmem:[%s2960 + $0xa8] sm:$0xff]
      %v2983 = vld [vmem:[%s2960 + $0xb0] sm:$0xff]
      %v2984 = vld [vmem:[%s2960 + $0xb8] sm:$0xff]
      %v2985 = vld [vmem:[%s2960 + $0xc0] sm:$0xff]
      %v2986 = vld [vmem:[%s2960 + $0xc8] sm:$0xff]
      %v2987 = vld [vmem:[%s2960 + $0xd0] sm:$0xff]
      %v2988 = vld [vmem:[%s2960 + $0xd8] sm:$0xff]
      %v2989 = vld [vmem:[%s2960 + $0xe0] sm:$0xff]
      %v2990 = vld [vmem:[%s2960 + $0xe8] sm:$0xff]
      %v2991 = vld [vmem:[%s2960 + $0xf0] sm:$0xff]
      %v2992 = vld [vmem:[%s2960 + $0xf8] sm:$0xff]
      %v2993 = vld [vmem:[%s2960 + $0x100] sm:$0xff]
      %v2994 = vld [vmem:[%s2960 + $0x108] sm:$0xff]
      %v2995 = vld [vmem:[%s2960 + $0x110] sm:$0xff]
      %v2996 = vld [vmem:[%s2960 + $0x118] sm:$0xff]
      %v2997 = vld [vmem:[%s2960 + $0x120] sm:$0xff]
      %v2998 = vld [vmem:[%s2960 + $0x128] sm:$0xff]
      %v2999 = vld [vmem:[%s2960 + $0x130] sm:$0xff]
      %v3000 = vld [vmem:[%s2960 + $0x138] sm:$0xff]
      %v3001 = vld [vmem:[%s2960 + $0x140] sm:$0xff]
      %v3002 = vld [vmem:[%s2960 + $0x148] sm:$0xff]
      %v3003 = vld [vmem:[%s2960 + $0x150] sm:$0xff]
      %v3004 = vld [vmem:[%s2960 + $0x158] sm:$0xff]
      %v3005 = vld [vmem:[%s2960 + $0x160] sm:$0xff]
      %v3006 = vld [vmem:[%s2960 + $0x168] sm:$0xff]
      %v3007 = vld [vmem:[%s2960 + $0x170] sm:$0xff]
      %v3008 = vld [vmem:[%s2960 + $0x178] sm:$0xff]
      %v3009 = vld [vmem:[%s2960 + $0x180] sm:$0xff]
      %v3010 = vld [vmem:[%s2960 + $0x188] sm:$0xff]
      %v3011 = vld [vmem:[%s2960 + $0x190] sm:$0xff]
      %v3012 = vld [vmem:[%s2960 + $0x198] sm:$0xff]
      %v3013 = vld [vmem:[%s2960 + $0x1a0] sm:$0xff]
      %v3014 = vld [vmem:[%s2960 + $0x1a8] sm:$0xff]
      %v3015 = vld [vmem:[%s2960 + $0x1b0] sm:$0xff]
      %v3016 = vld [vmem:[%s2960 + $0x1b8] sm:$0xff]
      %v3017 = vld [vmem:[%s2960 + $0x1c0] sm:$0xff]
      %v3018 = vld [vmem:[%s2960 + $0x1c8] sm:$0xff]
      %v3019 = vld [vmem:[%s2960 + $0x1d0] sm:$0xff]
      %v3020 = vld [vmem:[%s2960 + $0x1d8] sm:$0xff]
      %v3021 = vld [vmem:[%s2960 + $0x1e0] sm:$0xff]
      %v3022 = vld [vmem:[%s2960 + $0x1e8] sm:$0xff]
      %v3023 = vld [vmem:[%s2960 + $0x1f0] sm:$0xff]
      %v3024 = vld [vmem:[%s2960 + $0x1f8] sm:$0xff]
      %s3025 = scalar_lea.vmem %s2, 6656
      %v3026 = vld [vmem:[%s3025] sm:$0xff]
      %v3027 = vld [vmem:[%s3025 + $0x8] sm:$0xff]
      %v3028 = vld [vmem:[%s3025 + $0x10] sm:$0xff]
      %v3029 = vld [vmem:[%s3025 + $0x18] sm:$0xff]
      %v3030 = vld [vmem:[%s3025 + $0x20] sm:$0xff]
      %v3031 = vld [vmem:[%s3025 + $0x28] sm:$0xff]
      %v3032 = vld [vmem:[%s3025 + $0x30] sm:$0xff]
      %v3033 = vld [vmem:[%s3025 + $0x38] sm:$0xff]
      %v3034 = vld [vmem:[%s3025 + $0x40] sm:$0xff]
      %v3035 = vld [vmem:[%s3025 + $0x48] sm:$0xff]
      %v3036 = vld [vmem:[%s3025 + $0x50] sm:$0xff]
      %v3037 = vld [vmem:[%s3025 + $0x58] sm:$0xff]
      %v3038 = vld [vmem:[%s3025 + $0x60] sm:$0xff]
      %v3039 = vld [vmem:[%s3025 + $0x68] sm:$0xff]
      %v3040 = vld [vmem:[%s3025 + $0x70] sm:$0xff]
      %v3041 = vld [vmem:[%s3025 + $0x78] sm:$0xff]
      %v3042 = vld [vmem:[%s3025 + $0x80] sm:$0xff]
      %v3043 = vld [vmem:[%s3025 + $0x88] sm:$0xff]
      %v3044 = vld [vmem:[%s3025 + $0x90] sm:$0xff]
      %v3045 = vld [vmem:[%s3025 + $0x98] sm:$0xff]
      %v3046 = vld [vmem:[%s3025 + $0xa0] sm:$0xff]
      %v3047 = vld [vmem:[%s3025 + $0xa8] sm:$0xff]
      %v3048 = vld [vmem:[%s3025 + $0xb0] sm:$0xff]
      %v3049 = vld [vmem:[%s3025 + $0xb8] sm:$0xff]
      %v3050 = vld [vmem:[%s3025 + $0xc0] sm:$0xff]
      %v3051 = vld [vmem:[%s3025 + $0xc8] sm:$0xff]
      %v3052 = vld [vmem:[%s3025 + $0xd0] sm:$0xff]
      %v3053 = vld [vmem:[%s3025 + $0xd8] sm:$0xff]
      %v3054 = vld [vmem:[%s3025 + $0xe0] sm:$0xff]
      %v3055 = vld [vmem:[%s3025 + $0xe8] sm:$0xff]
      %v3056 = vld [vmem:[%s3025 + $0xf0] sm:$0xff]
      %v3057 = vld [vmem:[%s3025 + $0xf8] sm:$0xff]
      %v3058 = vld [vmem:[%s3025 + $0x100] sm:$0xff]
      %v3059 = vld [vmem:[%s3025 + $0x108] sm:$0xff]
      %v3060 = vld [vmem:[%s3025 + $0x110] sm:$0xff]
      %v3061 = vld [vmem:[%s3025 + $0x118] sm:$0xff]
      %v3062 = vld [vmem:[%s3025 + $0x120] sm:$0xff]
      %v3063 = vld [vmem:[%s3025 + $0x128] sm:$0xff]
      %v3064 = vld [vmem:[%s3025 + $0x130] sm:$0xff]
      %v3065 = vld [vmem:[%s3025 + $0x138] sm:$0xff]
      %v3066 = vld [vmem:[%s3025 + $0x140] sm:$0xff]
      %v3067 = vld [vmem:[%s3025 + $0x148] sm:$0xff]
      %v3068 = vld [vmem:[%s3025 + $0x150] sm:$0xff]
      %v3069 = vld [vmem:[%s3025 + $0x158] sm:$0xff]
      %v3070 = vld [vmem:[%s3025 + $0x160] sm:$0xff]
      %v3071 = vld [vmem:[%s3025 + $0x168] sm:$0xff]
      %v3072 = vld [vmem:[%s3025 + $0x170] sm:$0xff]
      %v3073 = vld [vmem:[%s3025 + $0x178] sm:$0xff]
      %v3074 = vld [vmem:[%s3025 + $0x180] sm:$0xff]
      %v3075 = vld [vmem:[%s3025 + $0x188] sm:$0xff]
      %v3076 = vld [vmem:[%s3025 + $0x190] sm:$0xff]
      %v3077 = vld [vmem:[%s3025 + $0x198] sm:$0xff]
      %v3078 = vld [vmem:[%s3025 + $0x1a0] sm:$0xff]
      %v3079 = vld [vmem:[%s3025 + $0x1a8] sm:$0xff]
      %v3080 = vld [vmem:[%s3025 + $0x1b0] sm:$0xff]
      %v3081 = vld [vmem:[%s3025 + $0x1b8] sm:$0xff]
      %v3082 = vld [vmem:[%s3025 + $0x1c0] sm:$0xff]
      %v3083 = vld [vmem:[%s3025 + $0x1c8] sm:$0xff]
      %v3084 = vld [vmem:[%s3025 + $0x1d0] sm:$0xff]
      %v3085 = vld [vmem:[%s3025 + $0x1d8] sm:$0xff]
      %v3086 = vld [vmem:[%s3025 + $0x1e0] sm:$0xff]
      %v3087 = vld [vmem:[%s3025 + $0x1e8] sm:$0xff]
      %v3088 = vld [vmem:[%s3025 + $0x1f0] sm:$0xff]
      %v3089 = vld [vmem:[%s3025 + $0x1f8] sm:$0xff]
      %3090 = vmatprep.subr.mxu0 %v3027
      %3091 = vmatpush1.msra.mxu0 %v3026
      %3092 = vmatprep.subr.mxu0 %v3029
      %3093 = vmatpush1.msra.mxu0 %v3028
      %3094 = vmatprep.subr.mxu0 %v3031
      %3095 = vmatpush1.msra.mxu0 %v3030
      %3096 = vmatprep.subr.mxu0 %v3033
      %3097 = vmatpush1.msra.mxu0 %v3032
      %3098 = vmatprep.subr.mxu0 %v3035
      %3099 = vmatpush1.msra.mxu0 %v3034
      %3100 = vmatprep.subr.mxu0 %v3037
      %3101 = vmatpush1.msra.mxu0 %v3036
      %3102 = vmatprep.subr.mxu0 %v3039
      %3103 = vmatpush1.msra.mxu0 %v3038
      %3104 = vmatprep.subr.mxu0 %v3041
      %3105 = vmatpush1.msra.mxu0 %v3040
      %3106 = vmatprep.subr.mxu0 %v3043
      %3107 = vmatpush1.msra.mxu0 %v3042
      %3108 = vmatprep.subr.mxu0 %v3045
      %3109 = vmatpush1.msra.mxu0 %v3044
      %3110 = vmatprep.subr.mxu0 %v3047
      %3111 = vmatpush1.msra.mxu0 %v3046
      %3112 = vmatprep.subr.mxu0 %v3049
      %3113 = vmatpush1.msra.mxu0 %v3048
      %3114 = vmatprep.subr.mxu0 %v3051
      %3115 = vmatpush1.msra.mxu0 %v3050
      %3116 = vmatprep.subr.mxu0 %v3053
      %3117 = vmatpush1.msra.mxu0 %v3052
      %3118 = vmatprep.subr.mxu0 %v3055
      %3119 = vmatpush1.msra.mxu0 %v3054
      %3120 = vmatprep.subr.mxu0 %v3057
      %3121 = vmatpush1.msra.mxu0 %v3056
      %3122 = vmatprep.subr.mxu0 %v3059
      %3123 = vmatpush1.msra.mxu0 %v3058
      %3124 = vmatprep.subr.mxu0 %v3061
      %3125 = vmatpush1.msra.mxu0 %v3060
      %3126 = vmatprep.subr.mxu0 %v3063
      %3127 = vmatpush1.msra.mxu0 %v3062
      %3128 = vmatprep.subr.mxu0 %v3065
      %3129 = vmatpush1.msra.mxu0 %v3064
      %3130 = vmatprep.subr.mxu0 %v3067
      %3131 = vmatpush1.msra.mxu0 %v3066
      %3132 = vmatprep.subr.mxu0 %v3069
      %3133 = vmatpush1.msra.mxu0 %v3068
      %3134 = vmatprep.subr.mxu0 %v3071
      %3135 = vmatpush1.msra.mxu0 %v3070
      %3136 = vmatprep.subr.mxu0 %v3073
      %3137 = vmatpush1.msra.mxu0 %v3072
      %3138 = vmatprep.subr.mxu0 %v3075
      %3139 = vmatpush1.msra.mxu0 %v3074
      %3140 = vmatprep.subr.mxu0 %v3077
      %3141 = vmatpush1.msra.mxu0 %v3076
      %3142 = vmatprep.subr.mxu0 %v3079
      %3143 = vmatpush1.msra.mxu0 %v3078
      %3144 = vmatprep.subr.mxu0 %v3081
      %3145 = vmatpush1.msra.mxu0 %v3080
      %3146 = vmatprep.subr.mxu0 %v3083
      %3147 = vmatpush1.msra.mxu0 %v3082
      %3148 = vmatprep.subr.mxu0 %v3085
      %3149 = vmatpush1.msra.mxu0 %v3084
      %3150 = vmatprep.subr.mxu0 %v3087
      %3151 = vmatpush1.msra.mxu0 %v3086
      %3152 = vmatprep.subr.mxu0 %v3089
      %3153 = vmatpush1.msra.mxu0 %v3088
      %3154 = vmatprep.mubr.f32.mxu0 %v1635
      %3155 = vmatmul.mubr.f32.gmra.mrb[0].mxu0 %v1634
      %v3156 = vpop.f32.mrb[0].mxu0
      %v3157 = vadd.f32 0.0, %v3156
      %v3158 = vpop.f32.mrb[0].mxu0
      %v3159 = vadd.f32 0.0, %v3158
      %3160 = vmatprep.mubr.f32.mxu0 %v1637
      %3161 = vmatmul.mubr.f32.gmra.mrb[0].mxu0 %v1636
      %v3162 = vpop.f32.mrb[0].mxu0
      %v3163 = vadd.f32 0.0, %v3162
      %v3164 = vpop.f32.mrb[0].mxu0
      %v3165 = vadd.f32 0.0, %v3164
      %3166 = vdwg.mxu0
      %3167 = vmatprep.subr.mxu0 %v2962
      %3168 = vmatpush1.msra.mxu0 %v2961
      %3169 = vmatprep.subr.mxu0 %v2964
      %3170 = vmatpush1.msra.mxu0 %v2963
      %3171 = vmatprep.subr.mxu0 %v2966
      %3172 = vmatpush1.msra.mxu0 %v2965
      %3173 = vmatprep.subr.mxu0 %v2968
      %3174 = vmatpush1.msra.mxu0 %v2967
      %3175 = vmatprep.subr.mxu0 %v2970
      %3176 = vmatpush1.msra.mxu0 %v2969
      %3177 = vmatprep.subr.mxu0 %v2972
      %3178 = vmatpush1.msra.mxu0 %v2971
      %3179 = vmatprep.subr.mxu0 %v2974
      %3180 = vmatpush1.msra.mxu0 %v2973
      %3181 = vmatprep.subr.mxu0 %v2976
      %3182 = vmatpush1.msra.mxu0 %v2975
      %3183 = vmatprep.subr.mxu0 %v2978
      %3184 = vmatpush1.msra.mxu0 %v2977
      %3185 = vmatprep.subr.mxu0 %v2980
      %3186 = vmatpush1.msra.mxu0 %v2979
      %3187 = vmatprep.subr.mxu0 %v2982
      %3188 = vmatpush1.msra.mxu0 %v2981
      %3189 = vmatprep.subr.mxu0 %v2984
      %3190 = vmatpush1.msra.mxu0 %v2983
      %3191 = vmatprep.subr.mxu0 %v2986
      %3192 = vmatpush1.msra.mxu0 %v2985
      %3193 = vmatprep.subr.mxu0 %v2988
      %3194 = vmatpush1.msra.mxu0 %v2987
      %3195 = vmatprep.subr.mxu0 %v2990
      %3196 = vmatpush1.msra.mxu0 %v2989
      %3197 = vmatprep.subr.mxu0 %v2992
      %3198 = vmatpush1.msra.mxu0 %v2991
      %3199 = vmatprep.subr.mxu0 %v2994
      %3200 = vmatpush1.msra.mxu0 %v2993
      %3201 = vmatprep.subr.mxu0 %v2996
      %3202 = vmatpush1.msra.mxu0 %v2995
      %3203 = vmatprep.subr.mxu0 %v2998
      %3204 = vmatpush1.msra.mxu0 %v2997
      %3205 = vmatprep.subr.mxu0 %v3000
      %3206 = vmatpush1.msra.mxu0 %v2999
      %3207 = vmatprep.subr.mxu0 %v3002
      %3208 = vmatpush1.msra.mxu0 %v3001
      %3209 = vmatprep.subr.mxu0 %v3004
      %3210 = vmatpush1.msra.mxu0 %v3003
      %3211 = vmatprep.subr.mxu0 %v3006
      %3212 = vmatpush1.msra.mxu0 %v3005
      %3213 = vmatprep.subr.mxu0 %v3008
      %3214 = vmatpush1.msra.mxu0 %v3007
      %3215 = vmatprep.subr.mxu0 %v3010
      %3216 = vmatpush1.msra.mxu0 %v3009
      %3217 = vmatprep.subr.mxu0 %v3012
      %3218 = vmatpush1.msra.mxu0 %v3011
      %3219 = vmatprep.subr.mxu0 %v3014
      %3220 = vmatpush1.msra.mxu0 %v3013
      %3221 = vmatprep.subr.mxu0 %v3016
      %3222 = vmatpush1.msra.mxu0 %v3015
      %3223 = vmatprep.subr.mxu0 %v3018
      %3224 = vmatpush1.msra.mxu0 %v3017
      %3225 = vmatprep.subr.mxu0 %v3020
      %3226 = vmatpush1.msra.mxu0 %v3019
      %3227 = vmatprep.subr.mxu0 %v3022
      %3228 = vmatpush1.msra.mxu0 %v3021
      %3229 = vmatprep.subr.mxu0 %v3024
      %3230 = vmatpush1.msra.mxu0 %v3023
      %3231 = vmatprep.mubr.f32.mxu0 %v2952
      %3232 = vmatmul.mubr.f32.gmra.mrb[0].mxu0 %v2950
      %v3233 = vpop.f32.mrb[0].mxu0
      %v3234 = vadd.f32 %v3157, %v3233
      %v3235 = vpop.f32.mrb[0].mxu0
      %v3236 = vadd.f32 %v3159, %v3235
      %3237 = vmatprep.mubr.f32.mxu0 %v2958
      %3238 = vmatmul.mubr.f32.gmra.mrb[0].mxu0 %v2956
      %v3239 = vpop.f32.mrb[0].mxu0
      %v3240 = vadd.f32 %v3163, %v3239
      %v3241 = vpop.f32.mrb[0].mxu0
      %v3242 = vadd.f32 %v3165, %v3241
      %3243 = vdwg.mxu0
      %3244 = vmatprep.subr.mxu0 %v1635
      %3245 = vmatpush1.msra.mxu0 %v1634
      %3246 = vmatprep.subr.mxu0 %v1637
      %3247 = vmatpush1.msra.mxu0 %v1636
      %3248 = vmatprep.subr.mxu0 0.0
      %3249 = vmatpush1.msra.mxu0 0.0
      %3250 = vmatprep.subr.mxu0 0.0
      %3251 = vmatpush1.msra.mxu0 0.0
      %3252 = vmatprep.subr.mxu0 0.0
      %3253 = vmatpush1.msra.mxu0 0.0
      %3254 = vmatprep.subr.mxu0 0.0
      %3255 = vmatpush1.msra.mxu0 0.0
      %3256 = vmatprep.subr.mxu0 0.0
      %3257 = vmatpush1.msra.mxu0 0.0
      %3258 = vmatprep.subr.mxu0 0.0
      %3259 = vmatpush1.msra.mxu0 0.0
      %3260 = vmatprep.subr.mxu0 0.0
      %3261 = vmatpush1.msra.mxu0 0.0
      %3262 = vmatprep.subr.mxu0 0.0
      %3263 = vmatpush1.msra.mxu0 0.0
      %3264 = vmatprep.subr.mxu0 0.0
      %3265 = vmatpush1.msra.mxu0 0.0
      %3266 = vmatprep.subr.mxu0 0.0
      %3267 = vmatpush1.msra.mxu0 0.0
      %3268 = vmatprep.subr.mxu0 0.0
      %3269 = vmatpush1.msra.mxu0 0.0
      %3270 = vmatprep.subr.mxu0 0.0
      %3271 = vmatpush1.msra.mxu0 0.0
      %3272 = vmatprep.subr.mxu0 0.0
      %3273 = vmatpush1.msra.mxu0 0.0
      %3274 = vmatprep.subr.mxu0 0.0
      %3275 = vmatpush1.msra.mxu0 0.0
      %3276 = vmatprep.subr.mxu0 0.0
      %3277 = vmatpush1.msra.mxu0 0.0
      %3278 = vmatprep.subr.mxu0 0.0
      %3279 = vmatpush1.msra.mxu0 0.0
      %3280 = vmatprep.subr.mxu0 0.0
      %3281 = vmatpush1.msra.mxu0 0.0
      %3282 = vmatprep.subr.mxu0 0.0
      %3283 = vmatpush1.msra.mxu0 0.0
      %3284 = vmatprep.subr.mxu0 0.0
      %3285 = vmatpush1.msra.mxu0 0.0
      %3286 = vmatprep.subr.mxu0 0.0
      %3287 = vmatpush1.msra.mxu0 0.0
      %3288 = vmatprep.subr.mxu0 0.0
      %3289 = vmatpush1.msra.mxu0 0.0
      %3290 = vmatprep.subr.mxu0 0.0
      %3291 = vmatpush1.msra.mxu0 0.0
      %3292 = vmatprep.subr.mxu0 0.0
      %3293 = vmatpush1.msra.mxu0 0.0
      %3294 = vmatprep.subr.mxu0 0.0
      %3295 = vmatpush1.msra.mxu0 0.0
      %3296 = vmatprep.subr.mxu0 0.0
      %3297 = vmatpush1.msra.mxu0 0.0
      %3298 = vmatprep.subr.mxu0 0.0
      %3299 = vmatpush1.msra.mxu0 0.0
      %3300 = vmatprep.subr.mxu0 0.0
      %3301 = vmatpush1.msra.mxu0 0.0
      %3302 = vmatprep.subr.mxu0 0.0
      %3303 = vmatpush1.msra.mxu0 0.0
      %3304 = vmatprep.subr.mxu0 0.0
      %3305 = vmatpush1.msra.mxu0 0.0
      %3306 = vmatprep.subr.mxu0 0.0
      %3307 = vmatpush1.msra.mxu0 0.0
      %3308 = vmatprep.mubr.f32.mxu0 0.0
      %3309 = vmatmul.mubr.f32.gmra.mrb[0].mxu0 %v767
      %v3310 = vpop.f32.mrb[0].mxu0
      %v3311 = vadd.f32 0.0, %v3310
      %v3312 = vpop.f32.mrb[0].mxu0
      %v3313 = vadd.f32 0.0, %v3312
      %3314 = vmatprep.mubr.f32.mxu0 0.0
      %3315 = vmatmul.mubr.f32.gmra.mrb[0].mxu0 %v770
      %v3316 = vpop.f32.mrb[0].mxu0
      %v3317 = vadd.f32 0.0, %v3316
      %v3318 = vpop.f32.mrb[0].mxu0
      %v3319 = vadd.f32 0.0, %v3318
      %3320 = vdwg.mxu0
      %s3321 = scalar_lea.vmem %s2, 7168
      %v3322 = vld [vmem:[%s3321] sm:$0xff]
      %v3323 = vld [vmem:[%s3321 + $0x8] sm:$0xff]
      %v3324 = vld [vmem:[%s3321 + $0x10] sm:$0xff]
      %v3325 = vld [vmem:[%s3321 + $0x18] sm:$0xff]
      %v3326 = vld [vmem:[%s3321 + $0x20] sm:$0xff]
      %v3327 = vld [vmem:[%s3321 + $0x28] sm:$0xff]
      %v3328 = vld [vmem:[%s3321 + $0x30] sm:$0xff]
      %v3329 = vld [vmem:[%s3321 + $0x38] sm:$0xff]
      %v3330 = vld [vmem:[%s3321 + $0x40] sm:$0xff]
      %v3331 = vld [vmem:[%s3321 + $0x48] sm:$0xff]
      %v3332 = vld [vmem:[%s3321 + $0x50] sm:$0xff]
      %v3333 = vld [vmem:[%s3321 + $0x58] sm:$0xff]
      %v3334 = vld [vmem:[%s3321 + $0x60] sm:$0xff]
      %v3335 = vld [vmem:[%s3321 + $0x68] sm:$0xff]
      %v3336 = vld [vmem:[%s3321 + $0x70] sm:$0xff]
      %v3337 = vld [vmem:[%s3321 + $0x78] sm:$0xff]
      %v3338 = vld [vmem:[%s3321 + $0x80] sm:$0xff]
      %v3339 = vld [vmem:[%s3321 + $0x88] sm:$0xff]
      %v3340 = vld [vmem:[%s3321 + $0x90] sm:$0xff]
      %v3341 = vld [vmem:[%s3321 + $0x98] sm:$0xff]
      %v3342 = vld [vmem:[%s3321 + $0xa0] sm:$0xff]
      %v3343 = vld [vmem:[%s3321 + $0xa8] sm:$0xff]
      %v3344 = vld [vmem:[%s3321 + $0xb0] sm:$0xff]
      %v3345 = vld [vmem:[%s3321 + $0xb8] sm:$0xff]
      %v3346 = vld [vmem:[%s3321 + $0xc0] sm:$0xff]
      %v3347 = vld [vmem:[%s3321 + $0xc8] sm:$0xff]
      %v3348 = vld [vmem:[%s3321 + $0xd0] sm:$0xff]
      %v3349 = vld [vmem:[%s3321 + $0xd8] sm:$0xff]
      %v3350 = vld [vmem:[%s3321 + $0xe0] sm:$0xff]
      %v3351 = vld [vmem:[%s3321 + $0xe8] sm:$0xff]
      %v3352 = vld [vmem:[%s3321 + $0xf0] sm:$0xff]
      %v3353 = vld [vmem:[%s3321 + $0xf8] sm:$0xff]
      %v3354 = vld [vmem:[%s3321 + $0x100] sm:$0xff]
      %v3355 = vld [vmem:[%s3321 + $0x108] sm:$0xff]
      %v3356 = vld [vmem:[%s3321 + $0x110] sm:$0xff]
      %v3357 = vld [vmem:[%s3321 + $0x118] sm:$0xff]
      %v3358 = vld [vmem:[%s3321 + $0x120] sm:$0xff]
      %v3359 = vld [vmem:[%s3321 + $0x128] sm:$0xff]
      %v3360 = vld [vmem:[%s3321 + $0x130] sm:$0xff]
      %v3361 = vld [vmem:[%s3321 + $0x138] sm:$0xff]
      %v3362 = vld [vmem:[%s3321 + $0x140] sm:$0xff]
      %v3363 = vld [vmem:[%s3321 + $0x148] sm:$0xff]
      %v3364 = vld [vmem:[%s3321 + $0x150] sm:$0xff]
      %v3365 = vld [vmem:[%s3321 + $0x158] sm:$0xff]
      %v3366 = vld [vmem:[%s3321 + $0x160] sm:$0xff]
      %v3367 = vld [vmem:[%s3321 + $0x168] sm:$0xff]
      %v3368 = vld [vmem:[%s3321 + $0x170] sm:$0xff]
      %v3369 = vld [vmem:[%s3321 + $0x178] sm:$0xff]
      %v3370 = vld [vmem:[%s3321 + $0x180] sm:$0xff]
      %v3371 = vld [vmem:[%s3321 + $0x188] sm:$0xff]
      %v3372 = vld [vmem:[%s3321 + $0x190] sm:$0xff]
      %v3373 = vld [vmem:[%s3321 + $0x198] sm:$0xff]
      %v3374 = vld [vmem:[%s3321 + $0x1a0] sm:$0xff]
      %v3375 = vld [vmem:[%s3321 + $0x1a8] sm:$0xff]
      %v3376 = vld [vmem:[%s3321 + $0x1b0] sm:$0xff]
      %v3377 = vld [vmem:[%s3321 + $0x1b8] sm:$0xff]
      %v3378 = vld [vmem:[%s3321 + $0x1c0] sm:$0xff]
      %v3379 = vld [vmem:[%s3321 + $0x1c8] sm:$0xff]
      %v3380 = vld [vmem:[%s3321 + $0x1d0] sm:$0xff]
      %v3381 = vld [vmem:[%s3321 + $0x1d8] sm:$0xff]
      %v3382 = vld [vmem:[%s3321 + $0x1e0] sm:$0xff]
      %v3383 = vld [vmem:[%s3321 + $0x1e8] sm:$0xff]
      %v3384 = vld [vmem:[%s3321 + $0x1f0] sm:$0xff]
      %v3385 = vld [vmem:[%s3321 + $0x1f8] sm:$0xff]
      %3386 = vmatprep.subr.mxu0 %v3323
      %3387 = vmatpush1.msra.mxu0 %v3322
      %3388 = vmatprep.subr.mxu0 %v3325
      %3389 = vmatpush1.msra.mxu0 %v3324
      %3390 = vmatprep.subr.mxu0 %v3327
      %3391 = vmatpush1.msra.mxu0 %v3326
      %3392 = vmatprep.subr.mxu0 %v3329
      %3393 = vmatpush1.msra.mxu0 %v3328
      %3394 = vmatprep.subr.mxu0 %v3331
      %3395 = vmatpush1.msra.mxu0 %v3330
      %3396 = vmatprep.subr.mxu0 %v3333
      %3397 = vmatpush1.msra.mxu0 %v3332
      %3398 = vmatprep.subr.mxu0 %v3335
      %3399 = vmatpush1.msra.mxu0 %v3334
      %3400 = vmatprep.subr.mxu0 %v3337
      %3401 = vmatpush1.msra.mxu0 %v3336
      %3402 = vmatprep.subr.mxu0 %v3339
      %3403 = vmatpush1.msra.mxu0 %v3338
      %3404 = vmatprep.subr.mxu0 %v3341
      %3405 = vmatpush1.msra.mxu0 %v3340
      %3406 = vmatprep.subr.mxu0 %v3343
      %3407 = vmatpush1.msra.mxu0 %v3342
      %3408 = vmatprep.subr.mxu0 %v3345
      %3409 = vmatpush1.msra.mxu0 %v3344
      %3410 = vmatprep.subr.mxu0 %v3347
      %3411 = vmatpush1.msra.mxu0 %v3346
      %3412 = vmatprep.subr.mxu0 %v3349
      %3413 = vmatpush1.msra.mxu0 %v3348
      %3414 = vmatprep.subr.mxu0 %v3351
      %3415 = vmatpush1.msra.mxu0 %v3350
      %3416 = vmatprep.subr.mxu0 %v3353
      %3417 = vmatpush1.msra.mxu0 %v3352
      %3418 = vmatprep.subr.mxu0 %v3355
      %3419 = vmatpush1.msra.mxu0 %v3354
      %3420 = vmatprep.subr.mxu0 %v3357
      %3421 = vmatpush1.msra.mxu0 %v3356
      %3422 = vmatprep.subr.mxu0 %v3359
      %3423 = vmatpush1.msra.mxu0 %v3358
      %3424 = vmatprep.subr.mxu0 %v3361
      %3425 = vmatpush1.msra.mxu0 %v3360
      %3426 = vmatprep.subr.mxu0 %v3363
      %3427 = vmatpush1.msra.mxu0 %v3362
      %3428 = vmatprep.subr.mxu0 %v3365
      %3429 = vmatpush1.msra.mxu0 %v3364
      %3430 = vmatprep.subr.mxu0 %v3367
      %3431 = vmatpush1.msra.mxu0 %v3366
      %3432 = vmatprep.subr.mxu0 %v3369
      %3433 = vmatpush1.msra.mxu0 %v3368
      %3434 = vmatprep.subr.mxu0 %v3371
      %3435 = vmatpush1.msra.mxu0 %v3370
      %3436 = vmatprep.subr.mxu0 %v3373
      %3437 = vmatpush1.msra.mxu0 %v3372
      %3438 = vmatprep.subr.mxu0 %v3375
      %3439 = vmatpush1.msra.mxu0 %v3374
      %3440 = vmatprep.subr.mxu0 %v3377
      %3441 = vmatpush1.msra.mxu0 %v3376
      %3442 = vmatprep.subr.mxu0 %v3379
      %3443 = vmatpush1.msra.mxu0 %v3378
      %3444 = vmatprep.subr.mxu0 %v3381
      %3445 = vmatpush1.msra.mxu0 %v3380
      %3446 = vmatprep.subr.mxu0 %v3383
      %3447 = vmatpush1.msra.mxu0 %v3382
      %3448 = vmatprep.subr.mxu0 %v3385
      %3449 = vmatpush1.msra.mxu0 %v3384
      %3450 = vmatprep.mubr.f32.mxu0 %v3313
      %3451 = vmatmul.mubr.f32.gmra.mrb[0].mxu0 %v3311
      %v3452 = vpop.f32.mrb[0].mxu0
      %v3453 = vadd.f32 0.0, %v3452
      %v3454 = vpop.f32.mrb[0].mxu0
      %v3455 = vadd.f32 0.0, %v3454
      %3456 = vmatprep.mubr.f32.mxu0 %v3319
      %3457 = vmatmul.mubr.f32.gmra.mrb[0].mxu0 %v3317
      %v3458 = vpop.f32.mrb[0].mxu0
      %v3459 = vadd.f32 0.0, %v3458
      %v3460 = vpop.f32.mrb[0].mxu0
      %v3461 = vadd.f32 0.0, %v3460
      %3462 = vdwg.mxu0
      %v3463 = vadd.f32 %v3234, %v3453
      %v3464 = vadd.f32 %v3236, %v3455
      %v3465 = vadd.f32 %v3240, %v3459
      %v3466 = vadd.f32 %v3242, %v3461
      %3467 = vmatprep.subr.mxu0 %v2880
      %3468 = vmatpush1.msra.mxu0 %v2879
      %3469 = vmatprep.subr.mxu0 %v2882
      %3470 = vmatpush1.msra.mxu0 %v2881
      %3471 = vmatprep.subr.mxu0 0.0
      %3472 = vmatpush1.msra.mxu0 0.0
      %3473 = vmatprep.subr.mxu0 0.0
      %3474 = vmatpush1.msra.mxu0 0.0
      %3475 = vmatprep.subr.mxu0 0.0
      %3476 = vmatpush1.msra.mxu0 0.0
      %3477 = vmatprep.subr.mxu0 0.0
      %3478 = vmatpush1.msra.mxu0 0.0
      %3479 = vmatprep.subr.mxu0 0.0
      %3480 = vmatpush1.msra.mxu0 0.0
      %3481 = vmatprep.subr.mxu0 0.0
      %3482 = vmatpush1.msra.mxu0 0.0
      %3483 = vmatprep.subr.mxu0 0.0
      %3484 = vmatpush1.msra.mxu0 0.0
      %3485 = vmatprep.subr.mxu0 0.0
      %3486 = vmatpush1.msra.mxu0 0.0
      %3487 = vmatprep.subr.mxu0 0.0
      %3488 = vmatpush1.msra.mxu0 0.0
      %3489 = vmatprep.subr.mxu0 0.0
      %3490 = vmatpush1.msra.mxu0 0.0
      %3491 = vmatprep.subr.mxu0 0.0
      %3492 = vmatpush1.msra.mxu0 0.0
      %3493 = vmatprep.subr.mxu0 0.0
      %3494 = vmatpush1.msra.mxu0 0.0
      %3495 = vmatprep.subr.mxu0 0.0
      %3496 = vmatpush1.msra.mxu0 0.0
      %3497 = vmatprep.subr.mxu0 0.0
      %3498 = vmatpush1.msra.mxu0 0.0
      %3499 = vmatprep.subr.mxu0 0.0
      %3500 = vmatpush1.msra.mxu0 0.0
      %3501 = vmatprep.subr.mxu0 0.0
      %3502 = vmatpush1.msra.mxu0 0.0
      %3503 = vmatprep.subr.mxu0 0.0
      %3504 = vmatpush1.msra.mxu0 0.0
      %3505 = vmatprep.subr.mxu0 0.0
      %3506 = vmatpush1.msra.mxu0 0.0
      %3507 = vmatprep.subr.mxu0 0.0
      %3508 = vmatpush1.msra.mxu0 0.0
      %3509 = vmatprep.subr.mxu0 0.0
      %3510 = vmatpush1.msra.mxu0 0.0
      %3511 = vmatprep.subr.mxu0 0.0
      %3512 = vmatpush1.msra.mxu0 0.0
      %3513 = vmatprep.subr.mxu0 0.0
      %3514 = vmatpush1.msra.mxu0 0.0
      %3515 = vmatprep.subr.mxu0 0.0
      %3516 = vmatpush1.msra.mxu0 0.0
      %3517 = vmatprep.subr.mxu0 0.0
      %3518 = vmatpush1.msra.mxu0 0.0
      %3519 = vmatprep.subr.mxu0 0.0
      %3520 = vmatpush1.msra.mxu0 0.0
      %3521 = vmatprep.subr.mxu0 0.0
      %3522 = vmatpush1.msra.mxu0 0.0
      %3523 = vmatprep.subr.mxu0 0.0
      %3524 = vmatpush1.msra.mxu0 0.0
      %3525 = vmatprep.subr.mxu0 0.0
      %3526 = vmatpush1.msra.mxu0 0.0
      %3527 = vmatprep.subr.mxu0 0.0
      %3528 = vmatpush1.msra.mxu0 0.0
      %3529 = vmatprep.subr.mxu0 0.0
      %3530 = vmatpush1.msra.mxu0 0.0
      %3531 = vmatprep.mubr.f32.mxu0 0.0
      %3532 = vmatmul.mubr.f32.gmra.mrb[0].mxu0 %v398
      %v3533 = vpop.f32.mrb[0].mxu0
      %v3534 = vadd.f32 0.0, %v3533
      %v3535 = vpop.f32.mrb[0].mxu0
      %v3536 = vadd.f32 0.0, %v3535
      %3537 = vmatprep.mubr.f32.mxu0 0.0
      %3538 = vmatmul.mubr.f32.gmra.mrb[0].mxu0 %v401
      %v3539 = vpop.f32.mrb[0].mxu0
      %v3540 = vadd.f32 0.0, %v3539
      %v3541 = vpop.f32.mrb[0].mxu0
      %v3542 = vadd.f32 0.0, %v3541
      %3543 = vdwg.mxu0
      %s3544 = scalar_lea.vmem %s2, 7680
      %v3545 = vld [vmem:[%s3544] sm:$0xff]
      %v3546 = vld [vmem:[%s3544 + $0x8] sm:$0xff]
      %v3547 = vld [vmem:[%s3544 + $0x10] sm:$0xff]
      %v3548 = vld [vmem:[%s3544 + $0x18] sm:$0xff]
      %v3549 = vld [vmem:[%s3544 + $0x20] sm:$0xff]
      %v3550 = vld [vmem:[%s3544 + $0x28] sm:$0xff]
      %v3551 = vld [vmem:[%s3544 + $0x30] sm:$0xff]
      %v3552 = vld [vmem:[%s3544 + $0x38] sm:$0xff]
      %v3553 = vld [vmem:[%s3544 + $0x40] sm:$0xff]
      %v3554 = vld [vmem:[%s3544 + $0x48] sm:$0xff]
      %v3555 = vld [vmem:[%s3544 + $0x50] sm:$0xff]
      %v3556 = vld [vmem:[%s3544 + $0x58] sm:$0xff]
      %v3557 = vld [vmem:[%s3544 + $0x60] sm:$0xff]
      %v3558 = vld [vmem:[%s3544 + $0x68] sm:$0xff]
      %v3559 = vld [vmem:[%s3544 + $0x70] sm:$0xff]
      %v3560 = vld [vmem:[%s3544 + $0x78] sm:$0xff]
      %v3561 = vld [vmem:[%s3544 + $0x80] sm:$0xff]
      %v3562 = vld [vmem:[%s3544 + $0x88] sm:$0xff]
      %v3563 = vld [vmem:[%s3544 + $0x90] sm:$0xff]
      %v3564 = vld [vmem:[%s3544 + $0x98] sm:$0xff]
      %v3565 = vld [vmem:[%s3544 + $0xa0] sm:$0xff]
      %v3566 = vld [vmem:[%s3544 + $0xa8] sm:$0xff]
      %v3567 = vld [vmem:[%s3544 + $0xb0] sm:$0xff]
      %v3568 = vld [vmem:[%s3544 + $0xb8] sm:$0xff]
      %v3569 = vld [vmem:[%s3544 + $0xc0] sm:$0xff]
      %v3570 = vld [vmem:[%s3544 + $0xc8] sm:$0xff]
      %v3571 = vld [vmem:[%s3544 + $0xd0] sm:$0xff]
      %v3572 = vld [vmem:[%s3544 + $0xd8] sm:$0xff]
      %v3573 = vld [vmem:[%s3544 + $0xe0] sm:$0xff]
      %v3574 = vld [vmem:[%s3544 + $0xe8] sm:$0xff]
      %v3575 = vld [vmem:[%s3544 + $0xf0] sm:$0xff]
      %v3576 = vld [vmem:[%s3544 + $0xf8] sm:$0xff]
      %v3577 = vld [vmem:[%s3544 + $0x100] sm:$0xff]
      %v3578 = vld [vmem:[%s3544 + $0x108] sm:$0xff]
      %v3579 = vld [vmem:[%s3544 + $0x110] sm:$0xff]
      %v3580 = vld [vmem:[%s3544 + $0x118] sm:$0xff]
      %v3581 = vld [vmem:[%s3544 + $0x120] sm:$0xff]
      %v3582 = vld [vmem:[%s3544 + $0x128] sm:$0xff]
      %v3583 = vld [vmem:[%s3544 + $0x130] sm:$0xff]
      %v3584 = vld [vmem:[%s3544 + $0x138] sm:$0xff]
      %v3585 = vld [vmem:[%s3544 + $0x140] sm:$0xff]
      %v3586 = vld [vmem:[%s3544 + $0x148] sm:$0xff]
      %v3587 = vld [vmem:[%s3544 + $0x150] sm:$0xff]
      %v3588 = vld [vmem:[%s3544 + $0x158] sm:$0xff]
      %v3589 = vld [vmem:[%s3544 + $0x160] sm:$0xff]
      %v3590 = vld [vmem:[%s3544 + $0x168] sm:$0xff]
      %v3591 = vld [vmem:[%s3544 + $0x170] sm:$0xff]
      %v3592 = vld [vmem:[%s3544 + $0x178] sm:$0xff]
      %v3593 = vld [vmem:[%s3544 + $0x180] sm:$0xff]
      %v3594 = vld [vmem:[%s3544 + $0x188] sm:$0xff]
      %v3595 = vld [vmem:[%s3544 + $0x190] sm:$0xff]
      %v3596 = vld [vmem:[%s3544 + $0x198] sm:$0xff]
      %v3597 = vld [vmem:[%s3544 + $0x1a0] sm:$0xff]
      %v3598 = vld [vmem:[%s3544 + $0x1a8] sm:$0xff]
      %v3599 = vld [vmem:[%s3544 + $0x1b0] sm:$0xff]
      %v3600 = vld [vmem:[%s3544 + $0x1b8] sm:$0xff]
      %v3601 = vld [vmem:[%s3544 + $0x1c0] sm:$0xff]
      %v3602 = vld [vmem:[%s3544 + $0x1c8] sm:$0xff]
      %v3603 = vld [vmem:[%s3544 + $0x1d0] sm:$0xff]
      %v3604 = vld [vmem:[%s3544 + $0x1d8] sm:$0xff]
      %v3605 = vld [vmem:[%s3544 + $0x1e0] sm:$0xff]
      %v3606 = vld [vmem:[%s3544 + $0x1e8] sm:$0xff]
      %v3607 = vld [vmem:[%s3544 + $0x1f0] sm:$0xff]
      %v3608 = vld [vmem:[%s3544 + $0x1f8] sm:$0xff]
      %s3609 = scalar_lea.vmem %s2, 8192
      %v3610 = vld [vmem:[%s3609] sm:$0xff]
      %v3611 = vld [vmem:[%s3609 + $0x8] sm:$0xff]
      %v3612 = vld [vmem:[%s3609 + $0x10] sm:$0xff]
      %v3613 = vld [vmem:[%s3609 + $0x18] sm:$0xff]
      %v3614 = vld [vmem:[%s3609 + $0x20] sm:$0xff]
      %v3615 = vld [vmem:[%s3609 + $0x28] sm:$0xff]
      %v3616 = vld [vmem:[%s3609 + $0x30] sm:$0xff]
      %v3617 = vld [vmem:[%s3609 + $0x38] sm:$0xff]
      %v3618 = vld [vmem:[%s3609 + $0x40] sm:$0xff]
      %v3619 = vld [vmem:[%s3609 + $0x48] sm:$0xff]
      %v3620 = vld [vmem:[%s3609 + $0x50] sm:$0xff]
      %v3621 = vld [vmem:[%s3609 + $0x58] sm:$0xff]
      %v3622 = vld [vmem:[%s3609 + $0x60] sm:$0xff]
      %v3623 = vld [vmem:[%s3609 + $0x68] sm:$0xff]
      %v3624 = vld [vmem:[%s3609 + $0x70] sm:$0xff]
      %v3625 = vld [vmem:[%s3609 + $0x78] sm:$0xff]
      %v3626 = vld [vmem:[%s3609 + $0x80] sm:$0xff]
      %v3627 = vld [vmem:[%s3609 + $0x88] sm:$0xff]
      %v3628 = vld [vmem:[%s3609 + $0x90] sm:$0xff]
      %v3629 = vld [vmem:[%s3609 + $0x98] sm:$0xff]
      %v3630 = vld [vmem:[%s3609 + $0xa0] sm:$0xff]
      %v3631 = vld [vmem:[%s3609 + $0xa8] sm:$0xff]
      %v3632 = vld [vmem:[%s3609 + $0xb0] sm:$0xff]
      %v3633 = vld [vmem:[%s3609 + $0xb8] sm:$0xff]
      %v3634 = vld [vmem:[%s3609 + $0xc0] sm:$0xff]
      %v3635 = vld [vmem:[%s3609 + $0xc8] sm:$0xff]
      %v3636 = vld [vmem:[%s3609 + $0xd0] sm:$0xff]
      %v3637 = vld [vmem:[%s3609 + $0xd8] sm:$0xff]
      %v3638 = vld [vmem:[%s3609 + $0xe0] sm:$0xff]
      %v3639 = vld [vmem:[%s3609 + $0xe8] sm:$0xff]
      %v3640 = vld [vmem:[%s3609 + $0xf0] sm:$0xff]
      %v3641 = vld [vmem:[%s3609 + $0xf8] sm:$0xff]
      %v3642 = vld [vmem:[%s3609 + $0x100] sm:$0xff]
      %v3643 = vld [vmem:[%s3609 + $0x108] sm:$0xff]
      %v3644 = vld [vmem:[%s3609 + $0x110] sm:$0xff]
      %v3645 = vld [vmem:[%s3609 + $0x118] sm:$0xff]
      %v3646 = vld [vmem:[%s3609 + $0x120] sm:$0xff]
      %v3647 = vld [vmem:[%s3609 + $0x128] sm:$0xff]
      %v3648 = vld [vmem:[%s3609 + $0x130] sm:$0xff]
      %v3649 = vld [vmem:[%s3609 + $0x138] sm:$0xff]
      %v3650 = vld [vmem:[%s3609 + $0x140] sm:$0xff]
      %v3651 = vld [vmem:[%s3609 + $0x148] sm:$0xff]
      %v3652 = vld [vmem:[%s3609 + $0x150] sm:$0xff]
      %v3653 = vld [vmem:[%s3609 + $0x158] sm:$0xff]
      %v3654 = vld [vmem:[%s3609 + $0x160] sm:$0xff]
      %v3655 = vld [vmem:[%s3609 + $0x168] sm:$0xff]
      %v3656 = vld [vmem:[%s3609 + $0x170] sm:$0xff]
      %v3657 = vld [vmem:[%s3609 + $0x178] sm:$0xff]
      %v3658 = vld [vmem:[%s3609 + $0x180] sm:$0xff]
      %v3659 = vld [vmem:[%s3609 + $0x188] sm:$0xff]
      %v3660 = vld [vmem:[%s3609 + $0x190] sm:$0xff]
      %v3661 = vld [vmem:[%s3609 + $0x198] sm:$0xff]
      %v3662 = vld [vmem:[%s3609 + $0x1a0] sm:$0xff]
      %v3663 = vld [vmem:[%s3609 + $0x1a8] sm:$0xff]
      %v3664 = vld [vmem:[%s3609 + $0x1b0] sm:$0xff]
      %v3665 = vld [vmem:[%s3609 + $0x1b8] sm:$0xff]
      %v3666 = vld [vmem:[%s3609 + $0x1c0] sm:$0xff]
      %v3667 = vld [vmem:[%s3609 + $0x1c8] sm:$0xff]
      %v3668 = vld [vmem:[%s3609 + $0x1d0] sm:$0xff]
      %v3669 = vld [vmem:[%s3609 + $0x1d8] sm:$0xff]
      %v3670 = vld [vmem:[%s3609 + $0x1e0] sm:$0xff]
      %v3671 = vld [vmem:[%s3609 + $0x1e8] sm:$0xff]
      %v3672 = vld [vmem:[%s3609 + $0x1f0] sm:$0xff]
      %v3673 = vld [vmem:[%s3609 + $0x1f8] sm:$0xff]
      %3674 = vmatprep.subr.mxu0 %v3611
      %3675 = vmatpush1.msra.mxu0 %v3610
      %3676 = vmatprep.subr.mxu0 %v3613
      %3677 = vmatpush1.msra.mxu0 %v3612
      %3678 = vmatprep.subr.mxu0 %v3615
      %3679 = vmatpush1.msra.mxu0 %v3614
      %3680 = vmatprep.subr.mxu0 %v3617
      %3681 = vmatpush1.msra.mxu0 %v3616
      %3682 = vmatprep.subr.mxu0 %v3619
      %3683 = vmatpush1.msra.mxu0 %v3618
      %3684 = vmatprep.subr.mxu0 %v3621
      %3685 = vmatpush1.msra.mxu0 %v3620
      %3686 = vmatprep.subr.mxu0 %v3623
      %3687 = vmatpush1.msra.mxu0 %v3622
      %3688 = vmatprep.subr.mxu0 %v3625
      %3689 = vmatpush1.msra.mxu0 %v3624
      %3690 = vmatprep.subr.mxu0 %v3627
      %3691 = vmatpush1.msra.mxu0 %v3626
      %3692 = vmatprep.subr.mxu0 %v3629
      %3693 = vmatpush1.msra.mxu0 %v3628
      %3694 = vmatprep.subr.mxu0 %v3631
      %3695 = vmatpush1.msra.mxu0 %v3630
      %3696 = vmatprep.subr.mxu0 %v3633
      %3697 = vmatpush1.msra.mxu0 %v3632
      %3698 = vmatprep.subr.mxu0 %v3635
      %3699 = vmatpush1.msra.mxu0 %v3634
      %3700 = vmatprep.subr.mxu0 %v3637
      %3701 = vmatpush1.msra.mxu0 %v3636
      %3702 = vmatprep.subr.mxu0 %v3639
      %3703 = vmatpush1.msra.mxu0 %v3638
      %3704 = vmatprep.subr.mxu0 %v3641
      %3705 = vmatpush1.msra.mxu0 %v3640
      %3706 = vmatprep.subr.mxu0 %v3643
      %3707 = vmatpush1.msra.mxu0 %v3642
      %3708 = vmatprep.subr.mxu0 %v3645
      %3709 = vmatpush1.msra.mxu0 %v3644
      %3710 = vmatprep.subr.mxu0 %v3647
      %3711 = vmatpush1.msra.mxu0 %v3646
      %3712 = vmatprep.subr.mxu0 %v3649
      %3713 = vmatpush1.msra.mxu0 %v3648
      %3714 = vmatprep.subr.mxu0 %v3651
      %3715 = vmatpush1.msra.mxu0 %v3650
      %3716 = vmatprep.subr.mxu0 %v3653
      %3717 = vmatpush1.msra.mxu0 %v3652
      %3718 = vmatprep.subr.mxu0 %v3655
      %3719 = vmatpush1.msra.mxu0 %v3654
      %3720 = vmatprep.subr.mxu0 %v3657
      %3721 = vmatpush1.msra.mxu0 %v3656
      %3722 = vmatprep.subr.mxu0 %v3659
      %3723 = vmatpush1.msra.mxu0 %v3658
      %3724 = vmatprep.subr.mxu0 %v3661
      %3725 = vmatpush1.msra.mxu0 %v3660
      %3726 = vmatprep.subr.mxu0 %v3663
      %3727 = vmatpush1.msra.mxu0 %v3662
      %3728 = vmatprep.subr.mxu0 %v3665
      %3729 = vmatpush1.msra.mxu0 %v3664
      %3730 = vmatprep.subr.mxu0 %v3667
      %3731 = vmatpush1.msra.mxu0 %v3666
      %3732 = vmatprep.subr.mxu0 %v3669
      %3733 = vmatpush1.msra.mxu0 %v3668
      %3734 = vmatprep.subr.mxu0 %v3671
      %3735 = vmatpush1.msra.mxu0 %v3670
      %3736 = vmatprep.subr.mxu0 %v3673
      %3737 = vmatpush1.msra.mxu0 %v3672
      %3738 = vmatprep.mubr.f32.mxu0 %v2880
      %3739 = vmatmul.mubr.f32.gmra.mrb[0].mxu0 %v2879
      %v3740 = vpop.f32.mrb[0].mxu0
      %v3741 = vadd.f32 0.0, %v3740
      %v3742 = vpop.f32.mrb[0].mxu0
      %v3743 = vadd.f32 0.0, %v3742
      %3744 = vmatprep.mubr.f32.mxu0 %v2882
      %3745 = vmatmul.mubr.f32.gmra.mrb[0].mxu0 %v2881
      %v3746 = vpop.f32.mrb[0].mxu0
      %v3747 = vadd.f32 0.0, %v3746
      %v3748 = vpop.f32.mrb[0].mxu0
      %v3749 = vadd.f32 0.0, %v3748
      %3750 = vdwg.mxu0
      %3751 = vmatprep.subr.mxu0 %v3546
      %3752 = vmatpush1.msra.mxu0 %v3545
      %3753 = vmatprep.subr.mxu0 %v3548
      %3754 = vmatpush1.msra.mxu0 %v3547
      %3755 = vmatprep.subr.mxu0 %v3550
      %3756 = vmatpush1.msra.mxu0 %v3549
      %3757 = vmatprep.subr.mxu0 %v3552
      %3758 = vmatpush1.msra.mxu0 %v3551
      %3759 = vmatprep.subr.mxu0 %v3554
      %3760 = vmatpush1.msra.mxu0 %v3553
      %3761 = vmatprep.subr.mxu0 %v3556
      %3762 = vmatpush1.msra.mxu0 %v3555
      %3763 = vmatprep.subr.mxu0 %v3558
      %3764 = vmatpush1.msra.mxu0 %v3557
      %3765 = vmatprep.subr.mxu0 %v3560
      %3766 = vmatpush1.msra.mxu0 %v3559
      %3767 = vmatprep.subr.mxu0 %v3562
      %3768 = vmatpush1.msra.mxu0 %v3561
      %3769 = vmatprep.subr.mxu0 %v3564
      %3770 = vmatpush1.msra.mxu0 %v3563
      %3771 = vmatprep.subr.mxu0 %v3566
      %3772 = vmatpush1.msra.mxu0 %v3565
      %3773 = vmatprep.subr.mxu0 %v3568
      %3774 = vmatpush1.msra.mxu0 %v3567
      %3775 = vmatprep.subr.mxu0 %v3570
      %3776 = vmatpush1.msra.mxu0 %v3569
      %3777 = vmatprep.subr.mxu0 %v3572
      %3778 = vmatpush1.msra.mxu0 %v3571
      %3779 = vmatprep.subr.mxu0 %v3574
      %3780 = vmatpush1.msra.mxu0 %v3573
      %3781 = vmatprep.subr.mxu0 %v3576
      %3782 = vmatpush1.msra.mxu0 %v3575
      %3783 = vmatprep.subr.mxu0 %v3578
      %3784 = vmatpush1.msra.mxu0 %v3577
      %3785 = vmatprep.subr.mxu0 %v3580
      %3786 = vmatpush1.msra.mxu0 %v3579
      %3787 = vmatprep.subr.mxu0 %v3582
      %3788 = vmatpush1.msra.mxu0 %v3581
      %3789 = vmatprep.subr.mxu0 %v3584
      %3790 = vmatpush1.msra.mxu0 %v3583
      %3791 = vmatprep.subr.mxu0 %v3586
      %3792 = vmatpush1.msra.mxu0 %v3585
      %3793 = vmatprep.subr.mxu0 %v3588
      %3794 = vmatpush1.msra.mxu0 %v3587
      %3795 = vmatprep.subr.mxu0 %v3590
      %3796 = vmatpush1.msra.mxu0 %v3589
      %3797 = vmatprep.subr.mxu0 %v3592
      %3798 = vmatpush1.msra.mxu0 %v3591
      %3799 = vmatprep.subr.mxu0 %v3594
      %3800 = vmatpush1.msra.mxu0 %v3593
      %3801 = vmatprep.subr.mxu0 %v3596
      %3802 = vmatpush1.msra.mxu0 %v3595
      %3803 = vmatprep.subr.mxu0 %v3598
      %3804 = vmatpush1.msra.mxu0 %v3597
      %3805 = vmatprep.subr.mxu0 %v3600
      %3806 = vmatpush1.msra.mxu0 %v3599
      %3807 = vmatprep.subr.mxu0 %v3602
      %3808 = vmatpush1.msra.mxu0 %v3601
      %3809 = vmatprep.subr.mxu0 %v3604
      %3810 = vmatpush1.msra.mxu0 %v3603
      %3811 = vmatprep.subr.mxu0 %v3606
      %3812 = vmatpush1.msra.mxu0 %v3605
      %3813 = vmatprep.subr.mxu0 %v3608
      %3814 = vmatpush1.msra.mxu0 %v3607
      %3815 = vmatprep.mubr.f32.mxu0 %v3536
      %3816 = vmatmul.mubr.f32.gmra.mrb[0].mxu0 %v3534
      %v3817 = vpop.f32.mrb[0].mxu0
      %v3818 = vadd.f32 %v3741, %v3817
      %v3819 = vpop.f32.mrb[0].mxu0
      %v3820 = vadd.f32 %v3743, %v3819
      %3821 = vmatprep.mubr.f32.mxu0 %v3542
      %3822 = vmatmul.mubr.f32.gmra.mrb[0].mxu0 %v3540
      %v3823 = vpop.f32.mrb[0].mxu0
      %v3824 = vadd.f32 %v3747, %v3823
      %v3825 = vpop.f32.mrb[0].mxu0
      %v3826 = vadd.f32 %v3749, %v3825
      %3827 = vdwg.mxu0
      %3828 = vmatprep.subr.mxu0 %v2880
      %3829 = vmatpush1.msra.mxu0 %v2879
      %3830 = vmatprep.subr.mxu0 %v2882
      %3831 = vmatpush1.msra.mxu0 %v2881
      %3832 = vmatprep.subr.mxu0 0.0
      %3833 = vmatpush1.msra.mxu0 0.0
      %3834 = vmatprep.subr.mxu0 0.0
      %3835 = vmatpush1.msra.mxu0 0.0
      %3836 = vmatprep.subr.mxu0 0.0
      %3837 = vmatpush1.msra.mxu0 0.0
      %3838 = vmatprep.subr.mxu0 0.0
      %3839 = vmatpush1.msra.mxu0 0.0
      %3840 = vmatprep.subr.mxu0 0.0
      %3841 = vmatpush1.msra.mxu0 0.0
      %3842 = vmatprep.subr.mxu0 0.0
      %3843 = vmatpush1.msra.mxu0 0.0
      %3844 = vmatprep.subr.mxu0 0.0
      %3845 = vmatpush1.msra.mxu0 0.0
      %3846 = vmatprep.subr.mxu0 0.0
      %3847 = vmatpush1.msra.mxu0 0.0
      %3848 = vmatprep.subr.mxu0 0.0
      %3849 = vmatpush1.msra.mxu0 0.0
      %3850 = vmatprep.subr.mxu0 0.0
      %3851 = vmatpush1.msra.mxu0 0.0
      %3852 = vmatprep.subr.mxu0 0.0
      %3853 = vmatpush1.msra.mxu0 0.0
      %3854 = vmatprep.subr.mxu0 0.0
      %3855 = vmatpush1.msra.mxu0 0.0
      %3856 = vmatprep.subr.mxu0 0.0
      %3857 = vmatpush1.msra.mxu0 0.0
      %3858 = vmatprep.subr.mxu0 0.0
      %3859 = vmatpush1.msra.mxu0 0.0
      %3860 = vmatprep.subr.mxu0 0.0
      %3861 = vmatpush1.msra.mxu0 0.0
      %3862 = vmatprep.subr.mxu0 0.0
      %3863 = vmatpush1.msra.mxu0 0.0
      %3864 = vmatprep.subr.mxu0 0.0
      %3865 = vmatpush1.msra.mxu0 0.0
      %3866 = vmatprep.subr.mxu0 0.0
      %3867 = vmatpush1.msra.mxu0 0.0
      %3868 = vmatprep.subr.mxu0 0.0
      %3869 = vmatpush1.msra.mxu0 0.0
      %3870 = vmatprep.subr.mxu0 0.0
      %3871 = vmatpush1.msra.mxu0 0.0
      %3872 = vmatprep.subr.mxu0 0.0
      %3873 = vmatpush1.msra.mxu0 0.0
      %3874 = vmatprep.subr.mxu0 0.0
      %3875 = vmatpush1.msra.mxu0 0.0
      %3876 = vmatprep.subr.mxu0 0.0
      %3877 = vmatpush1.msra.mxu0 0.0
      %3878 = vmatprep.subr.mxu0 0.0
      %3879 = vmatpush1.msra.mxu0 0.0
      %3880 = vmatprep.subr.mxu0 0.0
      %3881 = vmatpush1.msra.mxu0 0.0
      %3882 = vmatprep.subr.mxu0 0.0
      %3883 = vmatpush1.msra.mxu0 0.0
      %3884 = vmatprep.subr.mxu0 0.0
      %3885 = vmatpush1.msra.mxu0 0.0
      %3886 = vmatprep.subr.mxu0 0.0
      %3887 = vmatpush1.msra.mxu0 0.0
      %3888 = vmatprep.subr.mxu0 0.0
      %3889 = vmatpush1.msra.mxu0 0.0
      %3890 = vmatprep.subr.mxu0 0.0
      %3891 = vmatpush1.msra.mxu0 0.0
      %3892 = vmatprep.mubr.f32.mxu0 0.0
      %3893 = vmatmul.mubr.f32.gmra.mrb[0].mxu0 %v767
      %v3894 = vpop.f32.mrb[0].mxu0
      %v3895 = vadd.f32 0.0, %v3894
      %v3896 = vpop.f32.mrb[0].mxu0
      %v3897 = vadd.f32 0.0, %v3896
      %3898 = vmatprep.mubr.f32.mxu0 0.0
      %3899 = vmatmul.mubr.f32.gmra.mrb[0].mxu0 %v770
      %v3900 = vpop.f32.mrb[0].mxu0
      %v3901 = vadd.f32 0.0, %v3900
      %v3902 = vpop.f32.mrb[0].mxu0
      %v3903 = vadd.f32 0.0, %v3902
      %3904 = vdwg.mxu0
      %s3905 = scalar_lea.vmem %s2, 8704
      %v3906 = vld [vmem:[%s3905] sm:$0xff]
      %v3907 = vld [vmem:[%s3905 + $0x8] sm:$0xff]
      %v3908 = vld [vmem:[%s3905 + $0x10] sm:$0xff]
      %v3909 = vld [vmem:[%s3905 + $0x18] sm:$0xff]
      %v3910 = vld [vmem:[%s3905 + $0x20] sm:$0xff]
      %v3911 = vld [vmem:[%s3905 + $0x28] sm:$0xff]
      %v3912 = vld [vmem:[%s3905 + $0x30] sm:$0xff]
      %v3913 = vld [vmem:[%s3905 + $0x38] sm:$0xff]
      %v3914 = vld [vmem:[%s3905 + $0x40] sm:$0xff]
      %v3915 = vld [vmem:[%s3905 + $0x48] sm:$0xff]
      %v3916 = vld [vmem:[%s3905 + $0x50] sm:$0xff]
      %v3917 = vld [vmem:[%s3905 + $0x58] sm:$0xff]
      %v3918 = vld [vmem:[%s3905 + $0x60] sm:$0xff]
      %v3919 = vld [vmem:[%s3905 + $0x68] sm:$0xff]
      %v3920 = vld [vmem:[%s3905 + $0x70] sm:$0xff]
      %v3921 = vld [vmem:[%s3905 + $0x78] sm:$0xff]
      %v3922 = vld [vmem:[%s3905 + $0x80] sm:$0xff]
      %v3923 = vld [vmem:[%s3905 + $0x88] sm:$0xff]
      %v3924 = vld [vmem:[%s3905 + $0x90] sm:$0xff]
      %v3925 = vld [vmem:[%s3905 + $0x98] sm:$0xff]
      %v3926 = vld [vmem:[%s3905 + $0xa0] sm:$0xff]
      %v3927 = vld [vmem:[%s3905 + $0xa8] sm:$0xff]
      %v3928 = vld [vmem:[%s3905 + $0xb0] sm:$0xff]
      %v3929 = vld [vmem:[%s3905 + $0xb8] sm:$0xff]
      %v3930 = vld [vmem:[%s3905 + $0xc0] sm:$0xff]
      %v3931 = vld [vmem:[%s3905 + $0xc8] sm:$0xff]
      %v3932 = vld [vmem:[%s3905 + $0xd0] sm:$0xff]
      %v3933 = vld [vmem:[%s3905 + $0xd8] sm:$0xff]
      %v3934 = vld [vmem:[%s3905 + $0xe0] sm:$0xff]
      %v3935 = vld [vmem:[%s3905 + $0xe8] sm:$0xff]
      %v3936 = vld [vmem:[%s3905 + $0xf0] sm:$0xff]
      %v3937 = vld [vmem:[%s3905 + $0xf8] sm:$0xff]
      %v3938 = vld [vmem:[%s3905 + $0x100] sm:$0xff]
      %v3939 = vld [vmem:[%s3905 + $0x108] sm:$0xff]
      %v3940 = vld [vmem:[%s3905 + $0x110] sm:$0xff]
      %v3941 = vld [vmem:[%s3905 + $0x118] sm:$0xff]
      %v3942 = vld [vmem:[%s3905 + $0x120] sm:$0xff]
      %v3943 = vld [vmem:[%s3905 + $0x128] sm:$0xff]
      %v3944 = vld [vmem:[%s3905 + $0x130] sm:$0xff]
      %v3945 = vld [vmem:[%s3905 + $0x138] sm:$0xff]
      %v3946 = vld [vmem:[%s3905 + $0x140] sm:$0xff]
      %v3947 = vld [vmem:[%s3905 + $0x148] sm:$0xff]
      %v3948 = vld [vmem:[%s3905 + $0x150] sm:$0xff]
      %v3949 = vld [vmem:[%s3905 + $0x158] sm:$0xff]
      %v3950 = vld [vmem:[%s3905 + $0x160] sm:$0xff]
      %v3951 = vld [vmem:[%s3905 + $0x168] sm:$0xff]
      %v3952 = vld [vmem:[%s3905 + $0x170] sm:$0xff]
      %v3953 = vld [vmem:[%s3905 + $0x178] sm:$0xff]
      %v3954 = vld [vmem:[%s3905 + $0x180] sm:$0xff]
      %v3955 = vld [vmem:[%s3905 + $0x188] sm:$0xff]
      %v3956 = vld [vmem:[%s3905 + $0x190] sm:$0xff]
      %v3957 = vld [vmem:[%s3905 + $0x198] sm:$0xff]
      %v3958 = vld [vmem:[%s3905 + $0x1a0] sm:$0xff]
      %v3959 = vld [vmem:[%s3905 + $0x1a8] sm:$0xff]
      %v3960 = vld [vmem:[%s3905 + $0x1b0] sm:$0xff]
      %v3961 = vld [vmem:[%s3905 + $0x1b8] sm:$0xff]
      %v3962 = vld [vmem:[%s3905 + $0x1c0] sm:$0xff]
      %v3963 = vld [vmem:[%s3905 + $0x1c8] sm:$0xff]
      %v3964 = vld [vmem:[%s3905 + $0x1d0] sm:$0xff]
      %v3965 = vld [vmem:[%s3905 + $0x1d8] sm:$0xff]
      %v3966 = vld [vmem:[%s3905 + $0x1e0] sm:$0xff]
      %v3967 = vld [vmem:[%s3905 + $0x1e8] sm:$0xff]
      %v3968 = vld [vmem:[%s3905 + $0x1f0] sm:$0xff]
      %v3969 = vld [vmem:[%s3905 + $0x1f8] sm:$0xff]
      %3970 = vmatprep.subr.mxu0 %v3907
      %3971 = vmatpush1.msra.mxu0 %v3906
      %3972 = vmatprep.subr.mxu0 %v3909
      %3973 = vmatpush1.msra.mxu0 %v3908
      %3974 = vmatprep.subr.mxu0 %v3911
      %3975 = vmatpush1.msra.mxu0 %v3910
      %3976 = vmatprep.subr.mxu0 %v3913
      %3977 = vmatpush1.msra.mxu0 %v3912
      %3978 = vmatprep.subr.mxu0 %v3915
      %3979 = vmatpush1.msra.mxu0 %v3914
      %3980 = vmatprep.subr.mxu0 %v3917
      %3981 = vmatpush1.msra.mxu0 %v3916
      %3982 = vmatprep.subr.mxu0 %v3919
      %3983 = vmatpush1.msra.mxu0 %v3918
      %3984 = vmatprep.subr.mxu0 %v3921
      %3985 = vmatpush1.msra.mxu0 %v3920
      %3986 = vmatprep.subr.mxu0 %v3923
      %3987 = vmatpush1.msra.mxu0 %v3922
      %3988 = vmatprep.subr.mxu0 %v3925
      %3989 = vmatpush1.msra.mxu0 %v3924
      %3990 = vmatprep.subr.mxu0 %v3927
      %3991 = vmatpush1.msra.mxu0 %v3926
      %3992 = vmatprep.subr.mxu0 %v3929
      %3993 = vmatpush1.msra.mxu0 %v3928
      %3994 = vmatprep.subr.mxu0 %v3931
      %3995 = vmatpush1.msra.mxu0 %v3930
      %3996 = vmatprep.subr.mxu0 %v3933
      %3997 = vmatpush1.msra.mxu0 %v3932
      %3998 = vmatprep.subr.mxu0 %v3935
      %3999 = vmatpush1.msra.mxu0 %v3934
      %4000 = vmatprep.subr.mxu0 %v3937
      %4001 = vmatpush1.msra.mxu0 %v3936
      %4002 = vmatprep.subr.mxu0 %v3939
      %4003 = vmatpush1.msra.mxu0 %v3938
      %4004 = vmatprep.subr.mxu0 %v3941
      %4005 = vmatpush1.msra.mxu0 %v3940
      %4006 = vmatprep.subr.mxu0 %v3943
      %4007 = vmatpush1.msra.mxu0 %v3942
      %4008 = vmatprep.subr.mxu0 %v3945
      %4009 = vmatpush1.msra.mxu0 %v3944
      %4010 = vmatprep.subr.mxu0 %v3947
      %4011 = vmatpush1.msra.mxu0 %v3946
      %4012 = vmatprep.subr.mxu0 %v3949
      %4013 = vmatpush1.msra.mxu0 %v3948
      %4014 = vmatprep.subr.mxu0 %v3951
      %4015 = vmatpush1.msra.mxu0 %v3950
      %4016 = vmatprep.subr.mxu0 %v3953
      %4017 = vmatpush1.msra.mxu0 %v3952
      %4018 = vmatprep.subr.mxu0 %v3955
      %4019 = vmatpush1.msra.mxu0 %v3954
      %4020 = vmatprep.subr.mxu0 %v3957
      %4021 = vmatpush1.msra.mxu0 %v3956
      %4022 = vmatprep.subr.mxu0 %v3959
      %4023 = vmatpush1.msra.mxu0 %v3958
      %4024 = vmatprep.subr.mxu0 %v3961
      %4025 = vmatpush1.msra.mxu0 %v3960
      %4026 = vmatprep.subr.mxu0 %v3963
      %4027 = vmatpush1.msra.mxu0 %v3962
      %4028 = vmatprep.subr.mxu0 %v3965
      %4029 = vmatpush1.msra.mxu0 %v3964
      %4030 = vmatprep.subr.mxu0 %v3967
      %4031 = vmatpush1.msra.mxu0 %v3966
      %4032 = vmatprep.subr.mxu0 %v3969
      %4033 = vmatpush1.msra.mxu0 %v3968
      %4034 = vmatprep.mubr.f32.mxu0 %v3897
      %4035 = vmatmul.mubr.f32.gmra.mrb[0].mxu0 %v3895
      %v4036 = vpop.f32.mrb[0].mxu0
      %v4037 = vadd.f32 0.0, %v4036
      %v4038 = vpop.f32.mrb[0].mxu0
      %v4039 = vadd.f32 0.0, %v4038
      %4040 = vmatprep.mubr.f32.mxu0 %v3903
      %4041 = vmatmul.mubr.f32.gmra.mrb[0].mxu0 %v3901
      %v4042 = vpop.f32.mrb[0].mxu0
      %v4043 = vadd.f32 0.0, %v4042
      %v4044 = vpop.f32.mrb[0].mxu0
      %v4045 = vadd.f32 0.0, %v4044
      %4046 = vdwg.mxu0
      %v4047 = vadd.f32 %v3818, %v4037
      %v4048 = vadd.f32 %v3820, %v4039
      %v4049 = vadd.f32 %v3824, %v4043
      %v4050 = vadd.f32 %v3826, %v4045
      %v4051 = vadd.f32 %v3463, %v4047
      %v4052 = vadd.f32 %v3464, %v4048
      %v4053 = vadd.f32 %v3465, %v4049
      %v4054 = vadd.f32 %v3466, %v4050
      %s4055 = scalar_lea.vmem %s4, 8
      %v4056 = vld [vmem:[%s4055] sm:$0x3]
      %v4058 = vlaneseq
      %v4059 = vshrl.u32 %v4058, 7
      %v4060 = vsub.s32 0, %v4059
      %v4061 = vrot.slane %v4056, %v4060
      %v4062 = vlaneseq
      %v4063 = vshrl.u32 %v4062, 7
      %v4064 = vsub.s32 1, %v4063
      %v4065 = vrot.slane %v4056, %v4064
      %v4068 = vadd.f32 %v4051, %v4061
      %v4069 = vadd.f32 %v4052, %v4065
      %v4070 = vadd.f32 %v4053, %v4061
      %v4071 = vadd.f32 %v4054, %v4065
      %v4072 = vmax.f32 %v4068, 0.0
      %v4073 = vmax.f32 %v4069, 0.0
      %v4074 = vmax.f32 %v4070, 0.0
      %v4075 = vmax.f32 %v4071, 0.0
      %v4076 = vadd.f32 %v4072, %v389
      %v4077 = vadd.f32 %v4073, %v390
      %v4078 = vadd.f32 %v4074, %v391
      %v4079 = vadd.f32 %v4075, %v392
      %4080 = vmatprep.subr.mxu0 %v4077
      %4081 = vmatpush1.msra.mxu0 %v4076
      %4082 = vmatprep.subr.mxu0 %v4079
      %4083 = vmatpush1.msra.mxu0 %v4078
      %4084 = vmatprep.subr.mxu0 0.0
      %4085 = vmatpush1.msra.mxu0 0.0
      %4086 = vmatprep.subr.mxu0 0.0
      %4087 = vmatpush1.msra.mxu0 0.0
      %4088 = vmatprep.subr.mxu0 0.0
      %4089 = vmatpush1.msra.mxu0 0.0
      %4090 = vmatprep.subr.mxu0 0.0
      %4091 = vmatpush1.msra.mxu0 0.0
      %4092 = vmatprep.subr.mxu0 0.0
      %4093 = vmatpush1.msra.mxu0 0.0
      %4094 = vmatprep.subr.mxu0 0.0
      %4095 = vmatpush1.msra.mxu0 0.0
      %4096 = vmatprep.subr.mxu0 0.0
      %4097 = vmatpush1.msra.mxu0 0.0
      %4098 = vmatprep.subr.mxu0 0.0
      %4099 = vmatpush1.msra.mxu0 0.0
      %4100 = vmatprep.subr.mxu0 0.0
      %4101 = vmatpush1.msra.mxu0 0.0
      %4102 = vmatprep.subr.mxu0 0.0
      %4103 = vmatpush1.msra.mxu0 0.0
      %4104 = vmatprep.subr.mxu0 0.0
      %4105 = vmatpush1.msra.mxu0 0.0
      %4106 = vmatprep.subr.mxu0 0.0
      %4107 = vmatpush1.msra.mxu0 0.0
      %4108 = vmatprep.subr.mxu0 0.0
      %4109 = vmatpush1.msra.mxu0 0.0
      %4110 = vmatprep.subr.mxu0 0.0
      %4111 = vmatpush1.msra.mxu0 0.0
      %4112 = vmatprep.subr.mxu0 0.0
      %4113 = vmatpush1.msra.mxu0 0.0
      %4114 = vmatprep.subr.mxu0 0.0
      %4115 = vmatpush1.msra.mxu0 0.0
      %4116 = vmatprep.subr.mxu0 0.0
      %4117 = vmatpush1.msra.mxu0 0.0
      %4118 = vmatprep.subr.mxu0 0.0
      %4119 = vmatpush1.msra.mxu0 0.0
      %4120 = vmatprep.subr.mxu0 0.0
      %4121 = vmatpush1.msra.mxu0 0.0
      %4122 = vmatprep.subr.mxu0 0.0
      %4123 = vmatpush1.msra.mxu0 0.0
      %4124 = vmatprep.subr.mxu0 0.0
      %4125 = vmatpush1.msra.mxu0 0.0
      %4126 = vmatprep.subr.mxu0 0.0
      %4127 = vmatpush1.msra.mxu0 0.0
      %4128 = vmatprep.subr.mxu0 0.0
      %4129 = vmatpush1.msra.mxu0 0.0
      %4130 = vmatprep.subr.mxu0 0.0
      %4131 = vmatpush1.msra.mxu0 0.0
      %4132 = vmatprep.subr.mxu0 0.0
      %4133 = vmatpush1.msra.mxu0 0.0
      %4134 = vmatprep.subr.mxu0 0.0
      %4135 = vmatpush1.msra.mxu0 0.0
      %4136 = vmatprep.subr.mxu0 0.0
      %4137 = vmatpush1.msra.mxu0 0.0
      %4138 = vmatprep.subr.mxu0 0.0
      %4139 = vmatpush1.msra.mxu0 0.0
      %4140 = vmatprep.subr.mxu0 0.0
      %4141 = vmatpush1.msra.mxu0 0.0
      %4142 = vmatprep.subr.mxu0 0.0
      %4143 = vmatpush1.msra.mxu0 0.0
      %4144 = vmatprep.mubr.f32.mxu0 0.0
      %4145 = vmatmul.mubr.f32.gmra.mrb[0].mxu0 %v398
      %v4146 = vpop.f32.mrb[0].mxu0
      %v4147 = vadd.f32 0.0, %v4146
      %v4148 = vpop.f32.mrb[0].mxu0
      %v4149 = vadd.f32 0.0, %v4148
      %4150 = vmatprep.mubr.f32.mxu0 0.0
      %4151 = vmatmul.mubr.f32.gmra.mrb[0].mxu0 %v401
      %v4152 = vpop.f32.mrb[0].mxu0
      %v4153 = vadd.f32 0.0, %v4152
      %v4154 = vpop.f32.mrb[0].mxu0
      %v4155 = vadd.f32 0.0, %v4154
      %4156 = vdwg.mxu0
      %s4157 = scalar_lea.vmem %s2, 9216
      %v4158 = vld [vmem:[%s4157] sm:$0xff]
      %v4159 = vld [vmem:[%s4157 + $0x8] sm:$0xff]
      %v4160 = vld [vmem:[%s4157 + $0x10] sm:$0xff]
      %v4161 = vld [vmem:[%s4157 + $0x18] sm:$0xff]
      %v4162 = vld [vmem:[%s4157 + $0x20] sm:$0xff]
      %v4163 = vld [vmem:[%s4157 + $0x28] sm:$0xff]
      %v4164 = vld [vmem:[%s4157 + $0x30] sm:$0xff]
      %v4165 = vld [vmem:[%s4157 + $0x38] sm:$0xff]
      %v4166 = vld [vmem:[%s4157 + $0x40] sm:$0xff]
      %v4167 = vld [vmem:[%s4157 + $0x48] sm:$0xff]
      %v4168 = vld [vmem:[%s4157 + $0x50] sm:$0xff]
      %v4169 = vld [vmem:[%s4157 + $0x58] sm:$0xff]
      %v4170 = vld [vmem:[%s4157 + $0x60] sm:$0xff]
      %v4171 = vld [vmem:[%s4157 + $0x68] sm:$0xff]
      %v4172 = vld [vmem:[%s4157 + $0x70] sm:$0xff]
      %v4173 = vld [vmem:[%s4157 + $0x78] sm:$0xff]
      %v4174 = vld [vmem:[%s4157 + $0x80] sm:$0xff]
      %v4175 = vld [vmem:[%s4157 + $0x88] sm:$0xff]
      %v4176 = vld [vmem:[%s4157 + $0x90] sm:$0xff]
      %v4177 = vld [vmem:[%s4157 + $0x98] sm:$0xff]
      %v4178 = vld [vmem:[%s4157 + $0xa0] sm:$0xff]
      %v4179 = vld [vmem:[%s4157 + $0xa8] sm:$0xff]
      %v4180 = vld [vmem:[%s4157 + $0xb0] sm:$0xff]
      %v4181 = vld [vmem:[%s4157 + $0xb8] sm:$0xff]
      %v4182 = vld [vmem:[%s4157 + $0xc0] sm:$0xff]
      %v4183 = vld [vmem:[%s4157 + $0xc8] sm:$0xff]
      %v4184 = vld [vmem:[%s4157 + $0xd0] sm:$0xff]
      %v4185 = vld [vmem:[%s4157 + $0xd8] sm:$0xff]
      %v4186 = vld [vmem:[%s4157 + $0xe0] sm:$0xff]
      %v4187 = vld [vmem:[%s4157 + $0xe8] sm:$0xff]
      %v4188 = vld [vmem:[%s4157 + $0xf0] sm:$0xff]
      %v4189 = vld [vmem:[%s4157 + $0xf8] sm:$0xff]
      %v4190 = vld [vmem:[%s4157 + $0x100] sm:$0xff]
      %v4191 = vld [vmem:[%s4157 + $0x108] sm:$0xff]
      %v4192 = vld [vmem:[%s4157 + $0x110] sm:$0xff]
      %v4193 = vld [vmem:[%s4157 + $0x118] sm:$0xff]
      %v4194 = vld [vmem:[%s4157 + $0x120] sm:$0xff]
      %v4195 = vld [vmem:[%s4157 + $0x128] sm:$0xff]
      %v4196 = vld [vmem:[%s4157 + $0x130] sm:$0xff]
      %v4197 = vld [vmem:[%s4157 + $0x138] sm:$0xff]
      %v4198 = vld [vmem:[%s4157 + $0x140] sm:$0xff]
      %v4199 = vld [vmem:[%s4157 + $0x148] sm:$0xff]
      %v4200 = vld [vmem:[%s4157 + $0x150] sm:$0xff]
      %v4201 = vld [vmem:[%s4157 + $0x158] sm:$0xff]
      %v4202 = vld [vmem:[%s4157 + $0x160] sm:$0xff]
      %v4203 = vld [vmem:[%s4157 + $0x168] sm:$0xff]
      %v4204 = vld [vmem:[%s4157 + $0x170] sm:$0xff]
      %v4205 = vld [vmem:[%s4157 + $0x178] sm:$0xff]
      %v4206 = vld [vmem:[%s4157 + $0x180] sm:$0xff]
      %v4207 = vld [vmem:[%s4157 + $0x188] sm:$0xff]
      %v4208 = vld [vmem:[%s4157 + $0x190] sm:$0xff]
      %v4209 = vld [vmem:[%s4157 + $0x198] sm:$0xff]
      %v4210 = vld [vmem:[%s4157 + $0x1a0] sm:$0xff]
      %v4211 = vld [vmem:[%s4157 + $0x1a8] sm:$0xff]
      %v4212 = vld [vmem:[%s4157 + $0x1b0] sm:$0xff]
      %v4213 = vld [vmem:[%s4157 + $0x1b8] sm:$0xff]
      %v4214 = vld [vmem:[%s4157 + $0x1c0] sm:$0xff]
      %v4215 = vld [vmem:[%s4157 + $0x1c8] sm:$0xff]
      %v4216 = vld [vmem:[%s4157 + $0x1d0] sm:$0xff]
      %v4217 = vld [vmem:[%s4157 + $0x1d8] sm:$0xff]
      %v4218 = vld [vmem:[%s4157 + $0x1e0] sm:$0xff]
      %v4219 = vld [vmem:[%s4157 + $0x1e8] sm:$0xff]
      %v4220 = vld [vmem:[%s4157 + $0x1f0] sm:$0xff]
      %v4221 = vld [vmem:[%s4157 + $0x1f8] sm:$0xff]
      %s4222 = scalar_lea.vmem %s2, 9728
      %v4223 = vld [vmem:[%s4222] sm:$0xff]
      %v4224 = vld [vmem:[%s4222 + $0x8] sm:$0xff]
      %v4225 = vld [vmem:[%s4222 + $0x10] sm:$0xff]
      %v4226 = vld [vmem:[%s4222 + $0x18] sm:$0xff]
      %v4227 = vld [vmem:[%s4222 + $0x20] sm:$0xff]
      %v4228 = vld [vmem:[%s4222 + $0x28] sm:$0xff]
      %v4229 = vld [vmem:[%s4222 + $0x30] sm:$0xff]
      %v4230 = vld [vmem:[%s4222 + $0x38] sm:$0xff]
      %v4231 = vld [vmem:[%s4222 + $0x40] sm:$0xff]
      %v4232 = vld [vmem:[%s4222 + $0x48] sm:$0xff]
      %v4233 = vld [vmem:[%s4222 + $0x50] sm:$0xff]
      %v4234 = vld [vmem:[%s4222 + $0x58] sm:$0xff]
      %v4235 = vld [vmem:[%s4222 + $0x60] sm:$0xff]
      %v4236 = vld [vmem:[%s4222 + $0x68] sm:$0xff]
      %v4237 = vld [vmem:[%s4222 + $0x70] sm:$0xff]
      %v4238 = vld [vmem:[%s4222 + $0x78] sm:$0xff]
      %v4239 = vld [vmem:[%s4222 + $0x80] sm:$0xff]
      %v4240 = vld [vmem:[%s4222 + $0x88] sm:$0xff]
      %v4241 = vld [vmem:[%s4222 + $0x90] sm:$0xff]
      %v4242 = vld [vmem:[%s4222 + $0x98] sm:$0xff]
      %v4243 = vld [vmem:[%s4222 + $0xa0] sm:$0xff]
      %v4244 = vld [vmem:[%s4222 + $0xa8] sm:$0xff]
      %v4245 = vld [vmem:[%s4222 + $0xb0] sm:$0xff]
      %v4246 = vld [vmem:[%s4222 + $0xb8] sm:$0xff]
      %v4247 = vld [vmem:[%s4222 + $0xc0] sm:$0xff]
      %v4248 = vld [vmem:[%s4222 + $0xc8] sm:$0xff]
      %v4249 = vld [vmem:[%s4222 + $0xd0] sm:$0xff]
      %v4250 = vld [vmem:[%s4222 + $0xd8] sm:$0xff]
      %v4251 = vld [vmem:[%s4222 + $0xe0] sm:$0xff]
      %v4252 = vld [vmem:[%s4222 + $0xe8] sm:$0xff]
      %v4253 = vld [vmem:[%s4222 + $0xf0] sm:$0xff]
      %v4254 = vld [vmem:[%s4222 + $0xf8] sm:$0xff]
      %v4255 = vld [vmem:[%s4222 + $0x100] sm:$0xff]
      %v4256 = vld [vmem:[%s4222 + $0x108] sm:$0xff]
      %v4257 = vld [vmem:[%s4222 + $0x110] sm:$0xff]
      %v4258 = vld [vmem:[%s4222 + $0x118] sm:$0xff]
      %v4259 = vld [vmem:[%s4222 + $0x120] sm:$0xff]
      %v4260 = vld [vmem:[%s4222 + $0x128] sm:$0xff]
      %v4261 = vld [vmem:[%s4222 + $0x130] sm:$0xff]
      %v4262 = vld [vmem:[%s4222 + $0x138] sm:$0xff]
      %v4263 = vld [vmem:[%s4222 + $0x140] sm:$0xff]
      %v4264 = vld [vmem:[%s4222 + $0x148] sm:$0xff]
      %v4265 = vld [vmem:[%s4222 + $0x150] sm:$0xff]
      %v4266 = vld [vmem:[%s4222 + $0x158] sm:$0xff]
      %v4267 = vld [vmem:[%s4222 + $0x160] sm:$0xff]
      %v4268 = vld [vmem:[%s4222 + $0x168] sm:$0xff]
      %v4269 = vld [vmem:[%s4222 + $0x170] sm:$0xff]
      %v4270 = vld [vmem:[%s4222 + $0x178] sm:$0xff]
      %v4271 = vld [vmem:[%s4222 + $0x180] sm:$0xff]
      %v4272 = vld [vmem:[%s4222 + $0x188] sm:$0xff]
      %v4273 = vld [vmem:[%s4222 + $0x190] sm:$0xff]
      %v4274 = vld [vmem:[%s4222 + $0x198] sm:$0xff]
      %v4275 = vld [vmem:[%s4222 + $0x1a0] sm:$0xff]
      %v4276 = vld [vmem:[%s4222 + $0x1a8] sm:$0xff]
      %v4277 = vld [vmem:[%s4222 + $0x1b0] sm:$0xff]
      %v4278 = vld [vmem:[%s4222 + $0x1b8] sm:$0xff]
      %v4279 = vld [vmem:[%s4222 + $0x1c0] sm:$0xff]
      %v4280 = vld [vmem:[%s4222 + $0x1c8] sm:$0xff]
      %v4281 = vld [vmem:[%s4222 + $0x1d0] sm:$0xff]
      %v4282 = vld [vmem:[%s4222 + $0x1d8] sm:$0xff]
      %v4283 = vld [vmem:[%s4222 + $0x1e0] sm:$0xff]
      %v4284 = vld [vmem:[%s4222 + $0x1e8] sm:$0xff]
      %v4285 = vld [vmem:[%s4222 + $0x1f0] sm:$0xff]
      %v4286 = vld [vmem:[%s4222 + $0x1f8] sm:$0xff]
      %4287 = vmatprep.subr.mxu0 %v4224
      %4288 = vmatpush1.msra.mxu0 %v4223
      %4289 = vmatprep.subr.mxu0 %v4226
      %4290 = vmatpush1.msra.mxu0 %v4225
      %4291 = vmatprep.subr.mxu0 %v4228
      %4292 = vmatpush1.msra.mxu0 %v4227
      %4293 = vmatprep.subr.mxu0 %v4230
      %4294 = vmatpush1.msra.mxu0 %v4229
      %4295 = vmatprep.subr.mxu0 %v4232
      %4296 = vmatpush1.msra.mxu0 %v4231
      %4297 = vmatprep.subr.mxu0 %v4234
      %4298 = vmatpush1.msra.mxu0 %v4233
      %4299 = vmatprep.subr.mxu0 %v4236
      %4300 = vmatpush1.msra.mxu0 %v4235
      %4301 = vmatprep.subr.mxu0 %v4238
      %4302 = vmatpush1.msra.mxu0 %v4237
      %4303 = vmatprep.subr.mxu0 %v4240
      %4304 = vmatpush1.msra.mxu0 %v4239
      %4305 = vmatprep.subr.mxu0 %v4242
      %4306 = vmatpush1.msra.mxu0 %v4241
      %4307 = vmatprep.subr.mxu0 %v4244
      %4308 = vmatpush1.msra.mxu0 %v4243
      %4309 = vmatprep.subr.mxu0 %v4246
      %4310 = vmatpush1.msra.mxu0 %v4245
      %4311 = vmatprep.subr.mxu0 %v4248
      %4312 = vmatpush1.msra.mxu0 %v4247
      %4313 = vmatprep.subr.mxu0 %v4250
      %4314 = vmatpush1.msra.mxu0 %v4249
      %4315 = vmatprep.subr.mxu0 %v4252
      %4316 = vmatpush1.msra.mxu0 %v4251
      %4317 = vmatprep.subr.mxu0 %v4254
      %4318 = vmatpush1.msra.mxu0 %v4253
      %4319 = vmatprep.subr.mxu0 %v4256
      %4320 = vmatpush1.msra.mxu0 %v4255
      %4321 = vmatprep.subr.mxu0 %v4258
      %4322 = vmatpush1.msra.mxu0 %v4257
      %4323 = vmatprep.subr.mxu0 %v4260
      %4324 = vmatpush1.msra.mxu0 %v4259
      %4325 = vmatprep.subr.mxu0 %v4262
      %4326 = vmatpush1.msra.mxu0 %v4261
      %4327 = vmatprep.subr.mxu0 %v4264
      %4328 = vmatpush1.msra.mxu0 %v4263
      %4329 = vmatprep.subr.mxu0 %v4266
      %4330 = vmatpush1.msra.mxu0 %v4265
      %4331 = vmatprep.subr.mxu0 %v4268
      %4332 = vmatpush1.msra.mxu0 %v4267
      %4333 = vmatprep.subr.mxu0 %v4270
      %4334 = vmatpush1.msra.mxu0 %v4269
      %4335 = vmatprep.subr.mxu0 %v4272
      %4336 = vmatpush1.msra.mxu0 %v4271
      %4337 = vmatprep.subr.mxu0 %v4274
      %4338 = vmatpush1.msra.mxu0 %v4273
      %4339 = vmatprep.subr.mxu0 %v4276
      %4340 = vmatpush1.msra.mxu0 %v4275
      %4341 = vmatprep.subr.mxu0 %v4278
      %4342 = vmatpush1.msra.mxu0 %v4277
      %4343 = vmatprep.subr.mxu0 %v4280
      %4344 = vmatpush1.msra.mxu0 %v4279
      %4345 = vmatprep.subr.mxu0 %v4282
      %4346 = vmatpush1.msra.mxu0 %v4281
      %4347 = vmatprep.subr.mxu0 %v4284
      %4348 = vmatpush1.msra.mxu0 %v4283
      %4349 = vmatprep.subr.mxu0 %v4286
      %4350 = vmatpush1.msra.mxu0 %v4285
      %4351 = vmatprep.mubr.f32.mxu0 %v4077
      %4352 = vmatmul.mubr.f32.gmra.mrb[0].mxu0 %v4076
      %v4353 = vpop.f32.mrb[0].mxu0
      %v4354 = vadd.f32 0.0, %v4353
      %v4355 = vpop.f32.mrb[0].mxu0
      %v4356 = vadd.f32 0.0, %v4355
      %4357 = vmatprep.mubr.f32.mxu0 %v4079
      %4358 = vmatmul.mubr.f32.gmra.mrb[0].mxu0 %v4078
      %v4359 = vpop.f32.mrb[0].mxu0
      %v4360 = vadd.f32 0.0, %v4359
      %v4361 = vpop.f32.mrb[0].mxu0
      %v4362 = vadd.f32 0.0, %v4361
      %4363 = vdwg.mxu0
      %4364 = vmatprep.subr.mxu0 %v4159
      %4365 = vmatpush1.msra.mxu0 %v4158
      %4366 = vmatprep.subr.mxu0 %v4161
      %4367 = vmatpush1.msra.mxu0 %v4160
      %4368 = vmatprep.subr.mxu0 %v4163
      %4369 = vmatpush1.msra.mxu0 %v4162
      %4370 = vmatprep.subr.mxu0 %v4165
      %4371 = vmatpush1.msra.mxu0 %v4164
      %4372 = vmatprep.subr.mxu0 %v4167
      %4373 = vmatpush1.msra.mxu0 %v4166
      %4374 = vmatprep.subr.mxu0 %v4169
      %4375 = vmatpush1.msra.mxu0 %v4168
      %4376 = vmatprep.subr.mxu0 %v4171
      %4377 = vmatpush1.msra.mxu0 %v4170
      %4378 = vmatprep.subr.mxu0 %v4173
      %4379 = vmatpush1.msra.mxu0 %v4172
      %4380 = vmatprep.subr.mxu0 %v4175
      %4381 = vmatpush1.msra.mxu0 %v4174
      %4382 = vmatprep.subr.mxu0 %v4177
      %4383 = vmatpush1.msra.mxu0 %v4176
      %4384 = vmatprep.subr.mxu0 %v4179
      %4385 = vmatpush1.msra.mxu0 %v4178
      %4386 = vmatprep.subr.mxu0 %v4181
      %4387 = vmatpush1.msra.mxu0 %v4180
      %4388 = vmatprep.subr.mxu0 %v4183
      %4389 = vmatpush1.msra.mxu0 %v4182
      %4390 = vmatprep.subr.mxu0 %v4185
      %4391 = vmatpush1.msra.mxu0 %v4184
      %4392 = vmatprep.subr.mxu0 %v4187
      %4393 = vmatpush1.msra.mxu0 %v4186
      %4394 = vmatprep.subr.mxu0 %v4189
      %4395 = vmatpush1.msra.mxu0 %v4188
      %4396 = vmatprep.subr.mxu0 %v4191
      %4397 = vmatpush1.msra.mxu0 %v4190
      %4398 = vmatprep.subr.mxu0 %v4193
      %4399 = vmatpush1.msra.mxu0 %v4192
      %4400 = vmatprep.subr.mxu0 %v4195
      %4401 = vmatpush1.msra.mxu0 %v4194
      %4402 = vmatprep.subr.mxu0 %v4197
      %4403 = vmatpush1.msra.mxu0 %v4196
      %4404 = vmatprep.subr.mxu0 %v4199
      %4405 = vmatpush1.msra.mxu0 %v4198
      %4406 = vmatprep.subr.mxu0 %v4201
      %4407 = vmatpush1.msra.mxu0 %v4200
      %4408 = vmatprep.subr.mxu0 %v4203
      %4409 = vmatpush1.msra.mxu0 %v4202
      %4410 = vmatprep.subr.mxu0 %v4205
      %4411 = vmatpush1.msra.mxu0 %v4204
      %4412 = vmatprep.subr.mxu0 %v4207
      %4413 = vmatpush1.msra.mxu0 %v4206
      %4414 = vmatprep.subr.mxu0 %v4209
      %4415 = vmatpush1.msra.mxu0 %v4208
      %4416 = vmatprep.subr.mxu0 %v4211
      %4417 = vmatpush1.msra.mxu0 %v4210
      %4418 = vmatprep.subr.mxu0 %v4213
      %4419 = vmatpush1.msra.mxu0 %v4212
      %4420 = vmatprep.subr.mxu0 %v4215
      %4421 = vmatpush1.msra.mxu0 %v4214
      %4422 = vmatprep.subr.mxu0 %v4217
      %4423 = vmatpush1.msra.mxu0 %v4216
      %4424 = vmatprep.subr.mxu0 %v4219
      %4425 = vmatpush1.msra.mxu0 %v4218
      %4426 = vmatprep.subr.mxu0 %v4221
      %4427 = vmatpush1.msra.mxu0 %v4220
      %4428 = vmatprep.mubr.f32.mxu0 %v4149
      %4429 = vmatmul.mubr.f32.gmra.mrb[0].mxu0 %v4147
      %v4430 = vpop.f32.mrb[0].mxu0
      %v4431 = vadd.f32 %v4354, %v4430
      %v4432 = vpop.f32.mrb[0].mxu0
      %v4433 = vadd.f32 %v4356, %v4432
      %4434 = vmatprep.mubr.f32.mxu0 %v4155
      %4435 = vmatmul.mubr.f32.gmra.mrb[0].mxu0 %v4153
      %v4436 = vpop.f32.mrb[0].mxu0
      %v4437 = vadd.f32 %v4360, %v4436
      %v4438 = vpop.f32.mrb[0].mxu0
      %v4439 = vadd.f32 %v4362, %v4438
      %4440 = vdwg.mxu0
      %4441 = vmatprep.subr.mxu0 %v4077
      %4442 = vmatpush1.msra.mxu0 %v4076
      %4443 = vmatprep.subr.mxu0 %v4079
      %4444 = vmatpush1.msra.mxu0 %v4078
      %4445 = vmatprep.subr.mxu0 0.0
      %4446 = vmatpush1.msra.mxu0 0.0
      %4447 = vmatprep.subr.mxu0 0.0
      %4448 = vmatpush1.msra.mxu0 0.0
      %4449 = vmatprep.subr.mxu0 0.0
      %4450 = vmatpush1.msra.mxu0 0.0
      %4451 = vmatprep.subr.mxu0 0.0
      %4452 = vmatpush1.msra.mxu0 0.0
      %4453 = vmatprep.subr.mxu0 0.0
      %4454 = vmatpush1.msra.mxu0 0.0
      %4455 = vmatprep.subr.mxu0 0.0
      %4456 = vmatpush1.msra.mxu0 0.0
      %4457 = vmatprep.subr.mxu0 0.0
      %4458 = vmatpush1.msra.mxu0 0.0
      %4459 = vmatprep.subr.mxu0 0.0
      %4460 = vmatpush1.msra.mxu0 0.0
      %4461 = vmatprep.subr.mxu0 0.0
      %4462 = vmatpush1.msra.mxu0 0.0
      %4463 = vmatprep.subr.mxu0 0.0
      %4464 = vmatpush1.msra.mxu0 0.0
      %4465 = vmatprep.subr.mxu0 0.0
      %4466 = vmatpush1.msra.mxu0 0.0
      %4467 = vmatprep.subr.mxu0 0.0
      %4468 = vmatpush1.msra.mxu0 0.0
      %4469 = vmatprep.subr.mxu0 0.0
      %4470 = vmatpush1.msra.mxu0 0.0
      %4471 = vmatprep.subr.mxu0 0.0
      %4472 = vmatpush1.msra.mxu0 0.0
      %4473 = vmatprep.subr.mxu0 0.0
      %4474 = vmatpush1.msra.mxu0 0.0
      %4475 = vmatprep.subr.mxu0 0.0
      %4476 = vmatpush1.msra.mxu0 0.0
      %4477 = vmatprep.subr.mxu0 0.0
      %4478 = vmatpush1.msra.mxu0 0.0
      %4479 = vmatprep.subr.mxu0 0.0
      %4480 = vmatpush1.msra.mxu0 0.0
      %4481 = vmatprep.subr.mxu0 0.0
      %4482 = vmatpush1.msra.mxu0 0.0
      %4483 = vmatprep.subr.mxu0 0.0
      %4484 = vmatpush1.msra.mxu0 0.0
      %4485 = vmatprep.subr.mxu0 0.0
      %4486 = vmatpush1.msra.mxu0 0.0
      %4487 = vmatprep.subr.mxu0 0.0
      %4488 = vmatpush1.msra.mxu0 0.0
      %4489 = vmatprep.subr.mxu0 0.0
      %4490 = vmatpush1.msra.mxu0 0.0
      %4491 = vmatprep.subr.mxu0 0.0
      %4492 = vmatpush1.msra.mxu0 0.0
      %4493 = vmatprep.subr.mxu0 0.0
      %4494 = vmatpush1.msra.mxu0 0.0
      %4495 = vmatprep.subr.mxu0 0.0
      %4496 = vmatpush1.msra.mxu0 0.0
      %4497 = vmatprep.subr.mxu0 0.0
      %4498 = vmatpush1.msra.mxu0 0.0
      %4499 = vmatprep.subr.mxu0 0.0
      %4500 = vmatpush1.msra.mxu0 0.0
      %4501 = vmatprep.subr.mxu0 0.0
      %4502 = vmatpush1.msra.mxu0 0.0
      %4503 = vmatprep.subr.mxu0 0.0
      %4504 = vmatpush1.msra.mxu0 0.0
      %4505 = vmatprep.mubr.f32.mxu0 0.0
      %4506 = vmatmul.mubr.f32.gmra.mrb[0].mxu0 %v767
      %v4507 = vpop.f32.mrb[0].mxu0
      %v4508 = vadd.f32 0.0, %v4507
      %v4509 = vpop.f32.mrb[0].mxu0
      %v4510 = vadd.f32 0.0, %v4509
      %4511 = vmatprep.mubr.f32.mxu0 0.0
      %4512 = vmatmul.mubr.f32.gmra.mrb[0].mxu0 %v770
      %v4513 = vpop.f32.mrb[0].mxu0
      %v4514 = vadd.f32 0.0, %v4513
      %v4515 = vpop.f32.mrb[0].mxu0
      %v4516 = vadd.f32 0.0, %v4515
      %4517 = vdwg.mxu0
      %s4518 = scalar_lea.vmem %s2, 10240
      %v4519 = vld [vmem:[%s4518] sm:$0xff]
      %v4520 = vld [vmem:[%s4518 + $0x8] sm:$0xff]
      %v4521 = vld [vmem:[%s4518 + $0x10] sm:$0xff]
      %v4522 = vld [vmem:[%s4518 + $0x18] sm:$0xff]
      %v4523 = vld [vmem:[%s4518 + $0x20] sm:$0xff]
      %v4524 = vld [vmem:[%s4518 + $0x28] sm:$0xff]
      %v4525 = vld [vmem:[%s4518 + $0x30] sm:$0xff]
      %v4526 = vld [vmem:[%s4518 + $0x38] sm:$0xff]
      %v4527 = vld [vmem:[%s4518 + $0x40] sm:$0xff]
      %v4528 = vld [vmem:[%s4518 + $0x48] sm:$0xff]
      %v4529 = vld [vmem:[%s4518 + $0x50] sm:$0xff]
      %v4530 = vld [vmem:[%s4518 + $0x58] sm:$0xff]
      %v4531 = vld [vmem:[%s4518 + $0x60] sm:$0xff]
      %v4532 = vld [vmem:[%s4518 + $0x68] sm:$0xff]
      %v4533 = vld [vmem:[%s4518 + $0x70] sm:$0xff]
      %v4534 = vld [vmem:[%s4518 + $0x78] sm:$0xff]
      %v4535 = vld [vmem:[%s4518 + $0x80] sm:$0xff]
      %v4536 = vld [vmem:[%s4518 + $0x88] sm:$0xff]
      %v4537 = vld [vmem:[%s4518 + $0x90] sm:$0xff]
      %v4538 = vld [vmem:[%s4518 + $0x98] sm:$0xff]
      %v4539 = vld [vmem:[%s4518 + $0xa0] sm:$0xff]
      %v4540 = vld [vmem:[%s4518 + $0xa8] sm:$0xff]
      %v4541 = vld [vmem:[%s4518 + $0xb0] sm:$0xff]
      %v4542 = vld [vmem:[%s4518 + $0xb8] sm:$0xff]
      %v4543 = vld [vmem:[%s4518 + $0xc0] sm:$0xff]
      %v4544 = vld [vmem:[%s4518 + $0xc8] sm:$0xff]
      %v4545 = vld [vmem:[%s4518 + $0xd0] sm:$0xff]
      %v4546 = vld [vmem:[%s4518 + $0xd8] sm:$0xff]
      %v4547 = vld [vmem:[%s4518 + $0xe0] sm:$0xff]
      %v4548 = vld [vmem:[%s4518 + $0xe8] sm:$0xff]
      %v4549 = vld [vmem:[%s4518 + $0xf0] sm:$0xff]
      %v4550 = vld [vmem:[%s4518 + $0xf8] sm:$0xff]
      %v4551 = vld [vmem:[%s4518 + $0x100] sm:$0xff]
      %v4552 = vld [vmem:[%s4518 + $0x108] sm:$0xff]
      %v4553 = vld [vmem:[%s4518 + $0x110] sm:$0xff]
      %v4554 = vld [vmem:[%s4518 + $0x118] sm:$0xff]
      %v4555 = vld [vmem:[%s4518 + $0x120] sm:$0xff]
      %v4556 = vld [vmem:[%s4518 + $0x128] sm:$0xff]
      %v4557 = vld [vmem:[%s4518 + $0x130] sm:$0xff]
      %v4558 = vld [vmem:[%s4518 + $0x138] sm:$0xff]
      %v4559 = vld [vmem:[%s4518 + $0x140] sm:$0xff]
      %v4560 = vld [vmem:[%s4518 + $0x148] sm:$0xff]
      %v4561 = vld [vmem:[%s4518 + $0x150] sm:$0xff]
      %v4562 = vld [vmem:[%s4518 + $0x158] sm:$0xff]
      %v4563 = vld [vmem:[%s4518 + $0x160] sm:$0xff]
      %v4564 = vld [vmem:[%s4518 + $0x168] sm:$0xff]
      %v4565 = vld [vmem:[%s4518 + $0x170] sm:$0xff]
      %v4566 = vld [vmem:[%s4518 + $0x178] sm:$0xff]
      %v4567 = vld [vmem:[%s4518 + $0x180] sm:$0xff]
      %v4568 = vld [vmem:[%s4518 + $0x188] sm:$0xff]
      %v4569 = vld [vmem:[%s4518 + $0x190] sm:$0xff]
      %v4570 = vld [vmem:[%s4518 + $0x198] sm:$0xff]
      %v4571 = vld [vmem:[%s4518 + $0x1a0] sm:$0xff]
      %v4572 = vld [vmem:[%s4518 + $0x1a8] sm:$0xff]
      %v4573 = vld [vmem:[%s4518 + $0x1b0] sm:$0xff]
      %v4574 = vld [vmem:[%s4518 + $0x1b8] sm:$0xff]
      %v4575 = vld [vmem:[%s4518 + $0x1c0] sm:$0xff]
      %v4576 = vld [vmem:[%s4518 + $0x1c8] sm:$0xff]
      %v4577 = vld [vmem:[%s4518 + $0x1d0] sm:$0xff]
      %v4578 = vld [vmem:[%s4518 + $0x1d8] sm:$0xff]
      %v4579 = vld [vmem:[%s4518 + $0x1e0] sm:$0xff]
      %v4580 = vld [vmem:[%s4518 + $0x1e8] sm:$0xff]
      %v4581 = vld [vmem:[%s4518 + $0x1f0] sm:$0xff]
      %v4582 = vld [vmem:[%s4518 + $0x1f8] sm:$0xff]
      %4583 = vmatprep.subr.mxu0 %v4520
      %4584 = vmatpush1.msra.mxu0 %v4519
      %4585 = vmatprep.subr.mxu0 %v4522
      %4586 = vmatpush1.msra.mxu0 %v4521
      %4587 = vmatprep.subr.mxu0 %v4524
      %4588 = vmatpush1.msra.mxu0 %v4523
      %4589 = vmatprep.subr.mxu0 %v4526
      %4590 = vmatpush1.msra.mxu0 %v4525
      %4591 = vmatprep.subr.mxu0 %v4528
      %4592 = vmatpush1.msra.mxu0 %v4527
      %4593 = vmatprep.subr.mxu0 %v4530
      %4594 = vmatpush1.msra.mxu0 %v4529
      %4595 = vmatprep.subr.mxu0 %v4532
      %4596 = vmatpush1.msra.mxu0 %v4531
      %4597 = vmatprep.subr.mxu0 %v4534
      %4598 = vmatpush1.msra.mxu0 %v4533
      %4599 = vmatprep.subr.mxu0 %v4536
      %4600 = vmatpush1.msra.mxu0 %v4535
      %4601 = vmatprep.subr.mxu0 %v4538
      %4602 = vmatpush1.msra.mxu0 %v4537
      %4603 = vmatprep.subr.mxu0 %v4540
      %4604 = vmatpush1.msra.mxu0 %v4539
      %4605 = vmatprep.subr.mxu0 %v4542
      %4606 = vmatpush1.msra.mxu0 %v4541
      %4607 = vmatprep.subr.mxu0 %v4544
      %4608 = vmatpush1.msra.mxu0 %v4543
      %4609 = vmatprep.subr.mxu0 %v4546
      %4610 = vmatpush1.msra.mxu0 %v4545
      %4611 = vmatprep.subr.mxu0 %v4548
      %4612 = vmatpush1.msra.mxu0 %v4547
      %4613 = vmatprep.subr.mxu0 %v4550
      %4614 = vmatpush1.msra.mxu0 %v4549
      %4615 = vmatprep.subr.mxu0 %v4552
      %4616 = vmatpush1.msra.mxu0 %v4551
      %4617 = vmatprep.subr.mxu0 %v4554
      %4618 = vmatpush1.msra.mxu0 %v4553
      %4619 = vmatprep.subr.mxu0 %v4556
      %4620 = vmatpush1.msra.mxu0 %v4555
      %4621 = vmatprep.subr.mxu0 %v4558
      %4622 = vmatpush1.msra.mxu0 %v4557
      %4623 = vmatprep.subr.mxu0 %v4560
      %4624 = vmatpush1.msra.mxu0 %v4559
      %4625 = vmatprep.subr.mxu0 %v4562
      %4626 = vmatpush1.msra.mxu0 %v4561
      %4627 = vmatprep.subr.mxu0 %v4564
      %4628 = vmatpush1.msra.mxu0 %v4563
      %4629 = vmatprep.subr.mxu0 %v4566
      %4630 = vmatpush1.msra.mxu0 %v4565
      %4631 = vmatprep.subr.mxu0 %v4568
      %4632 = vmatpush1.msra.mxu0 %v4567
      %4633 = vmatprep.subr.mxu0 %v4570
      %4634 = vmatpush1.msra.mxu0 %v4569
      %4635 = vmatprep.subr.mxu0 %v4572
      %4636 = vmatpush1.msra.mxu0 %v4571
      %4637 = vmatprep.subr.mxu0 %v4574
      %4638 = vmatpush1.msra.mxu0 %v4573
      %4639 = vmatprep.subr.mxu0 %v4576
      %4640 = vmatpush1.msra.mxu0 %v4575
      %4641 = vmatprep.subr.mxu0 %v4578
      %4642 = vmatpush1.msra.mxu0 %v4577
      %4643 = vmatprep.subr.mxu0 %v4580
      %4644 = vmatpush1.msra.mxu0 %v4579
      %4645 = vmatprep.subr.mxu0 %v4582
      %4646 = vmatpush1.msra.mxu0 %v4581
      %4647 = vmatprep.mubr.f32.mxu0 %v4510
      %4648 = vmatmul.mubr.f32.gmra.mrb[0].mxu0 %v4508
      %v4649 = vpop.f32.mrb[0].mxu0
      %v4650 = vadd.f32 0.0, %v4649
      %v4651 = vpop.f32.mrb[0].mxu0
      %v4652 = vadd.f32 0.0, %v4651
      %4653 = vmatprep.mubr.f32.mxu0 %v4516
      %4654 = vmatmul.mubr.f32.gmra.mrb[0].mxu0 %v4514
      %v4655 = vpop.f32.mrb[0].mxu0
      %v4656 = vadd.f32 0.0, %v4655
      %v4657 = vpop.f32.mrb[0].mxu0
      %v4658 = vadd.f32 0.0, %v4657
      %4659 = vdwg.mxu0
      %v4660 = vadd.f32 %v4431, %v4650
      %v4661 = vadd.f32 %v4433, %v4652
      %v4662 = vadd.f32 %v4437, %v4656
      %v4663 = vadd.f32 %v4439, %v4658
      %s4664 = scalar_lea.vmem %s4, 12
      %v4665 = vld [vmem:[%s4664] sm:$0x3]
      %v4667 = vlaneseq
      %v4668 = vshrl.u32 %v4667, 7
      %v4669 = vsub.s32 0, %v4668
      %v4670 = vrot.slane %v4665, %v4669
      %v4671 = vlaneseq
      %v4672 = vshrl.u32 %v4671, 7
      %v4673 = vsub.s32 1, %v4672
      %v4674 = vrot.slane %v4665, %v4673
      %v4677 = vadd.f32 %v4660, %v4670
      %v4678 = vadd.f32 %v4661, %v4674
      %v4679 = vadd.f32 %v4662, %v4670
      %v4680 = vadd.f32 %v4663, %v4674
      %v4681 = vmax.f32 %v4677, 0.0
      %v4682 = vmax.f32 %v4678, 0.0
      %v4683 = vmax.f32 %v4679, 0.0
      %v4684 = vmax.f32 %v4680, 0.0
      %4685 = vmatprep.subr.mxu0 %v4682
      %4686 = vmatpush1.msra.mxu0 %v4681
      %4687 = vmatprep.subr.mxu0 %v4684
      %4688 = vmatpush1.msra.mxu0 %v4683
      %4689 = vmatprep.subr.mxu0 0.0
      %4690 = vmatpush1.msra.mxu0 0.0
      %4691 = vmatprep.subr.mxu0 0.0
      %4692 = vmatpush1.msra.mxu0 0.0
      %4693 = vmatprep.subr.mxu0 0.0
      %4694 = vmatpush1.msra.mxu0 0.0
      %4695 = vmatprep.subr.mxu0 0.0
      %4696 = vmatpush1.msra.mxu0 0.0
      %4697 = vmatprep.subr.mxu0 0.0
      %4698 = vmatpush1.msra.mxu0 0.0
      %4699 = vmatprep.subr.mxu0 0.0
      %4700 = vmatpush1.msra.mxu0 0.0
      %4701 = vmatprep.subr.mxu0 0.0
      %4702 = vmatpush1.msra.mxu0 0.0
      %4703 = vmatprep.subr.mxu0 0.0
      %4704 = vmatpush1.msra.mxu0 0.0
      %4705 = vmatprep.subr.mxu0 0.0
      %4706 = vmatpush1.msra.mxu0 0.0
      %4707 = vmatprep.subr.mxu0 0.0
      %4708 = vmatpush1.msra.mxu0 0.0
      %4709 = vmatprep.subr.mxu0 0.0
      %4710 = vmatpush1.msra.mxu0 0.0
      %4711 = vmatprep.subr.mxu0 0.0
      %4712 = vmatpush1.msra.mxu0 0.0
      %4713 = vmatprep.subr.mxu0 0.0
      %4714 = vmatpush1.msra.mxu0 0.0
      %4715 = vmatprep.subr.mxu0 0.0
      %4716 = vmatpush1.msra.mxu0 0.0
      %4717 = vmatprep.subr.mxu0 0.0
      %4718 = vmatpush1.msra.mxu0 0.0
      %4719 = vmatprep.subr.mxu0 0.0
      %4720 = vmatpush1.msra.mxu0 0.0
      %4721 = vmatprep.subr.mxu0 0.0
      %4722 = vmatpush1.msra.mxu0 0.0
      %4723 = vmatprep.subr.mxu0 0.0
      %4724 = vmatpush1.msra.mxu0 0.0
      %4725 = vmatprep.subr.mxu0 0.0
      %4726 = vmatpush1.msra.mxu0 0.0
      %4727 = vmatprep.subr.mxu0 0.0
      %4728 = vmatpush1.msra.mxu0 0.0
      %4729 = vmatprep.subr.mxu0 0.0
      %4730 = vmatpush1.msra.mxu0 0.0
      %4731 = vmatprep.subr.mxu0 0.0
      %4732 = vmatpush1.msra.mxu0 0.0
      %4733 = vmatprep.subr.mxu0 0.0
      %4734 = vmatpush1.msra.mxu0 0.0
      %4735 = vmatprep.subr.mxu0 0.0
      %4736 = vmatpush1.msra.mxu0 0.0
      %4737 = vmatprep.subr.mxu0 0.0
      %4738 = vmatpush1.msra.mxu0 0.0
      %4739 = vmatprep.subr.mxu0 0.0
      %4740 = vmatpush1.msra.mxu0 0.0
      %4741 = vmatprep.subr.mxu0 0.0
      %4742 = vmatpush1.msra.mxu0 0.0
      %4743 = vmatprep.subr.mxu0 0.0
      %4744 = vmatpush1.msra.mxu0 0.0
      %4745 = vmatprep.subr.mxu0 0.0
      %4746 = vmatpush1.msra.mxu0 0.0
      %4747 = vmatprep.subr.mxu0 0.0
      %4748 = vmatpush1.msra.mxu0 0.0
      %4749 = vmatprep.mubr.f32.mxu0 0.0
      %4750 = vmatmul.mubr.f32.gmra.mrb[0].mxu0 %v398
      %v4751 = vpop.f32.mrb[0].mxu0
      %v4752 = vadd.f32 0.0, %v4751
      %v4753 = vpop.f32.mrb[0].mxu0
      %v4754 = vadd.f32 0.0, %v4753
      %4755 = vmatprep.mubr.f32.mxu0 0.0
      %4756 = vmatmul.mubr.f32.gmra.mrb[0].mxu0 %v401
      %v4757 = vpop.f32.mrb[0].mxu0
      %v4758 = vadd.f32 0.0, %v4757
      %v4759 = vpop.f32.mrb[0].mxu0
      %v4760 = vadd.f32 0.0, %v4759
      %4761 = vdwg.mxu0
      %s4762 = scalar_lea.vmem %s2, 10752
      %v4763 = vld [vmem:[%s4762] sm:$0xff]
      %v4764 = vld [vmem:[%s4762 + $0x8] sm:$0xff]
      %v4765 = vld [vmem:[%s4762 + $0x10] sm:$0xff]
      %v4766 = vld [vmem:[%s4762 + $0x18] sm:$0xff]
      %v4767 = vld [vmem:[%s4762 + $0x20] sm:$0xff]
      %v4768 = vld [vmem:[%s4762 + $0x28] sm:$0xff]
      %v4769 = vld [vmem:[%s4762 + $0x30] sm:$0xff]
      %v4770 = vld [vmem:[%s4762 + $0x38] sm:$0xff]
      %v4771 = vld [vmem:[%s4762 + $0x40] sm:$0xff]
      %v4772 = vld [vmem:[%s4762 + $0x48] sm:$0xff]
      %v4773 = vld [vmem:[%s4762 + $0x50] sm:$0xff]
      %v4774 = vld [vmem:[%s4762 + $0x58] sm:$0xff]
      %v4775 = vld [vmem:[%s4762 + $0x60] sm:$0xff]
      %v4776 = vld [vmem:[%s4762 + $0x68] sm:$0xff]
      %v4777 = vld [vmem:[%s4762 + $0x70] sm:$0xff]
      %v4778 = vld [vmem:[%s4762 + $0x78] sm:$0xff]
      %v4779 = vld [vmem:[%s4762 + $0x80] sm:$0xff]
      %v4780 = vld [vmem:[%s4762 + $0x88] sm:$0xff]
      %v4781 = vld [vmem:[%s4762 + $0x90] sm:$0xff]
      %v4782 = vld [vmem:[%s4762 + $0x98] sm:$0xff]
      %v4783 = vld [vmem:[%s4762 + $0xa0] sm:$0xff]
      %v4784 = vld [vmem:[%s4762 + $0xa8] sm:$0xff]
      %v4785 = vld [vmem:[%s4762 + $0xb0] sm:$0xff]
      %v4786 = vld [vmem:[%s4762 + $0xb8] sm:$0xff]
      %v4787 = vld [vmem:[%s4762 + $0xc0] sm:$0xff]
      %v4788 = vld [vmem:[%s4762 + $0xc8] sm:$0xff]
      %v4789 = vld [vmem:[%s4762 + $0xd0] sm:$0xff]
      %v4790 = vld [vmem:[%s4762 + $0xd8] sm:$0xff]
      %v4791 = vld [vmem:[%s4762 + $0xe0] sm:$0xff]
      %v4792 = vld [vmem:[%s4762 + $0xe8] sm:$0xff]
      %v4793 = vld [vmem:[%s4762 + $0xf0] sm:$0xff]
      %v4794 = vld [vmem:[%s4762 + $0xf8] sm:$0xff]
      %v4795 = vld [vmem:[%s4762 + $0x100] sm:$0xff]
      %v4796 = vld [vmem:[%s4762 + $0x108] sm:$0xff]
      %v4797 = vld [vmem:[%s4762 + $0x110] sm:$0xff]
      %v4798 = vld [vmem:[%s4762 + $0x118] sm:$0xff]
      %v4799 = vld [vmem:[%s4762 + $0x120] sm:$0xff]
      %v4800 = vld [vmem:[%s4762 + $0x128] sm:$0xff]
      %v4801 = vld [vmem:[%s4762 + $0x130] sm:$0xff]
      %v4802 = vld [vmem:[%s4762 + $0x138] sm:$0xff]
      %v4803 = vld [vmem:[%s4762 + $0x140] sm:$0xff]
      %v4804 = vld [vmem:[%s4762 + $0x148] sm:$0xff]
      %v4805 = vld [vmem:[%s4762 + $0x150] sm:$0xff]
      %v4806 = vld [vmem:[%s4762 + $0x158] sm:$0xff]
      %v4807 = vld [vmem:[%s4762 + $0x160] sm:$0xff]
      %v4808 = vld [vmem:[%s4762 + $0x168] sm:$0xff]
      %v4809 = vld [vmem:[%s4762 + $0x170] sm:$0xff]
      %v4810 = vld [vmem:[%s4762 + $0x178] sm:$0xff]
      %v4811 = vld [vmem:[%s4762 + $0x180] sm:$0xff]
      %v4812 = vld [vmem:[%s4762 + $0x188] sm:$0xff]
      %v4813 = vld [vmem:[%s4762 + $0x190] sm:$0xff]
      %v4814 = vld [vmem:[%s4762 + $0x198] sm:$0xff]
      %v4815 = vld [vmem:[%s4762 + $0x1a0] sm:$0xff]
      %v4816 = vld [vmem:[%s4762 + $0x1a8] sm:$0xff]
      %v4817 = vld [vmem:[%s4762 + $0x1b0] sm:$0xff]
      %v4818 = vld [vmem:[%s4762 + $0x1b8] sm:$0xff]
      %v4819 = vld [vmem:[%s4762 + $0x1c0] sm:$0xff]
      %v4820 = vld [vmem:[%s4762 + $0x1c8] sm:$0xff]
      %v4821 = vld [vmem:[%s4762 + $0x1d0] sm:$0xff]
      %v4822 = vld [vmem:[%s4762 + $0x1d8] sm:$0xff]
      %v4823 = vld [vmem:[%s4762 + $0x1e0] sm:$0xff]
      %v4824 = vld [vmem:[%s4762 + $0x1e8] sm:$0xff]
      %v4825 = vld [vmem:[%s4762 + $0x1f0] sm:$0xff]
      %v4826 = vld [vmem:[%s4762 + $0x1f8] sm:$0xff]
      %s4827 = scalar_lea.vmem %s2, 11264
      %v4828 = vld [vmem:[%s4827] sm:$0xff]
      %v4829 = vld [vmem:[%s4827 + $0x8] sm:$0xff]
      %v4830 = vld [vmem:[%s4827 + $0x10] sm:$0xff]
      %v4831 = vld [vmem:[%s4827 + $0x18] sm:$0xff]
      %v4832 = vld [vmem:[%s4827 + $0x20] sm:$0xff]
      %v4833 = vld [vmem:[%s4827 + $0x28] sm:$0xff]
      %v4834 = vld [vmem:[%s4827 + $0x30] sm:$0xff]
      %v4835 = vld [vmem:[%s4827 + $0x38] sm:$0xff]
      %v4836 = vld [vmem:[%s4827 + $0x40] sm:$0xff]
      %v4837 = vld [vmem:[%s4827 + $0x48] sm:$0xff]
      %v4838 = vld [vmem:[%s4827 + $0x50] sm:$0xff]
      %v4839 = vld [vmem:[%s4827 + $0x58] sm:$0xff]
      %v4840 = vld [vmem:[%s4827 + $0x60] sm:$0xff]
      %v4841 = vld [vmem:[%s4827 + $0x68] sm:$0xff]
      %v4842 = vld [vmem:[%s4827 + $0x70] sm:$0xff]
      %v4843 = vld [vmem:[%s4827 + $0x78] sm:$0xff]
      %v4844 = vld [vmem:[%s4827 + $0x80] sm:$0xff]
      %v4845 = vld [vmem:[%s4827 + $0x88] sm:$0xff]
      %v4846 = vld [vmem:[%s4827 + $0x90] sm:$0xff]
      %v4847 = vld [vmem:[%s4827 + $0x98] sm:$0xff]
      %v4848 = vld [vmem:[%s4827 + $0xa0] sm:$0xff]
      %v4849 = vld [vmem:[%s4827 + $0xa8] sm:$0xff]
      %v4850 = vld [vmem:[%s4827 + $0xb0] sm:$0xff]
      %v4851 = vld [vmem:[%s4827 + $0xb8] sm:$0xff]
      %v4852 = vld [vmem:[%s4827 + $0xc0] sm:$0xff]
      %v4853 = vld [vmem:[%s4827 + $0xc8] sm:$0xff]
      %v4854 = vld [vmem:[%s4827 + $0xd0] sm:$0xff]
      %v4855 = vld [vmem:[%s4827 + $0xd8] sm:$0xff]
      %v4856 = vld [vmem:[%s4827 + $0xe0] sm:$0xff]
      %v4857 = vld [vmem:[%s4827 + $0xe8] sm:$0xff]
      %v4858 = vld [vmem:[%s4827 + $0xf0] sm:$0xff]
      %v4859 = vld [vmem:[%s4827 + $0xf8] sm:$0xff]
      %v4860 = vld [vmem:[%s4827 + $0x100] sm:$0xff]
      %v4861 = vld [vmem:[%s4827 + $0x108] sm:$0xff]
      %v4862 = vld [vmem:[%s4827 + $0x110] sm:$0xff]
      %v4863 = vld [vmem:[%s4827 + $0x118] sm:$0xff]
      %v4864 = vld [vmem:[%s4827 + $0x120] sm:$0xff]
      %v4865 = vld [vmem:[%s4827 + $0x128] sm:$0xff]
      %v4866 = vld [vmem:[%s4827 + $0x130] sm:$0xff]
      %v4867 = vld [vmem:[%s4827 + $0x138] sm:$0xff]
      %v4868 = vld [vmem:[%s4827 + $0x140] sm:$0xff]
      %v4869 = vld [vmem:[%s4827 + $0x148] sm:$0xff]
      %v4870 = vld [vmem:[%s4827 + $0x150] sm:$0xff]
      %v4871 = vld [vmem:[%s4827 + $0x158] sm:$0xff]
      %v4872 = vld [vmem:[%s4827 + $0x160] sm:$0xff]
      %v4873 = vld [vmem:[%s4827 + $0x168] sm:$0xff]
      %v4874 = vld [vmem:[%s4827 + $0x170] sm:$0xff]
      %v4875 = vld [vmem:[%s4827 + $0x178] sm:$0xff]
      %v4876 = vld [vmem:[%s4827 + $0x180] sm:$0xff]
      %v4877 = vld [vmem:[%s4827 + $0x188] sm:$0xff]
      %v4878 = vld [vmem:[%s4827 + $0x190] sm:$0xff]
      %v4879 = vld [vmem:[%s4827 + $0x198] sm:$0xff]
      %v4880 = vld [vmem:[%s4827 + $0x1a0] sm:$0xff]
      %v4881 = vld [vmem:[%s4827 + $0x1a8] sm:$0xff]
      %v4882 = vld [vmem:[%s4827 + $0x1b0] sm:$0xff]
      %v4883 = vld [vmem:[%s4827 + $0x1b8] sm:$0xff]
      %v4884 = vld [vmem:[%s4827 + $0x1c0] sm:$0xff]
      %v4885 = vld [vmem:[%s4827 + $0x1c8] sm:$0xff]
      %v4886 = vld [vmem:[%s4827 + $0x1d0] sm:$0xff]
      %v4887 = vld [vmem:[%s4827 + $0x1d8] sm:$0xff]
      %v4888 = vld [vmem:[%s4827 + $0x1e0] sm:$0xff]
      %v4889 = vld [vmem:[%s4827 + $0x1e8] sm:$0xff]
      %v4890 = vld [vmem:[%s4827 + $0x1f0] sm:$0xff]
      %v4891 = vld [vmem:[%s4827 + $0x1f8] sm:$0xff]
      %4892 = vmatprep.subr.mxu0 %v4829
      %4893 = vmatpush1.msra.mxu0 %v4828
      %4894 = vmatprep.subr.mxu0 %v4831
      %4895 = vmatpush1.msra.mxu0 %v4830
      %4896 = vmatprep.subr.mxu0 %v4833
      %4897 = vmatpush1.msra.mxu0 %v4832
      %4898 = vmatprep.subr.mxu0 %v4835
      %4899 = vmatpush1.msra.mxu0 %v4834
      %4900 = vmatprep.subr.mxu0 %v4837
      %4901 = vmatpush1.msra.mxu0 %v4836
      %4902 = vmatprep.subr.mxu0 %v4839
      %4903 = vmatpush1.msra.mxu0 %v4838
      %4904 = vmatprep.subr.mxu0 %v4841
      %4905 = vmatpush1.msra.mxu0 %v4840
      %4906 = vmatprep.subr.mxu0 %v4843
      %4907 = vmatpush1.msra.mxu0 %v4842
      %4908 = vmatprep.subr.mxu0 %v4845
      %4909 = vmatpush1.msra.mxu0 %v4844
      %4910 = vmatprep.subr.mxu0 %v4847
      %4911 = vmatpush1.msra.mxu0 %v4846
      %4912 = vmatprep.subr.mxu0 %v4849
      %4913 = vmatpush1.msra.mxu0 %v4848
      %4914 = vmatprep.subr.mxu0 %v4851
      %4915 = vmatpush1.msra.mxu0 %v4850
      %4916 = vmatprep.subr.mxu0 %v4853
      %4917 = vmatpush1.msra.mxu0 %v4852
      %4918 = vmatprep.subr.mxu0 %v4855
      %4919 = vmatpush1.msra.mxu0 %v4854
      %4920 = vmatprep.subr.mxu0 %v4857
      %4921 = vmatpush1.msra.mxu0 %v4856
      %4922 = vmatprep.subr.mxu0 %v4859
      %4923 = vmatpush1.msra.mxu0 %v4858
      %4924 = vmatprep.subr.mxu0 %v4861
      %4925 = vmatpush1.msra.mxu0 %v4860
      %4926 = vmatprep.subr.mxu0 %v4863
      %4927 = vmatpush1.msra.mxu0 %v4862
      %4928 = vmatprep.subr.mxu0 %v4865
      %4929 = vmatpush1.msra.mxu0 %v4864
      %4930 = vmatprep.subr.mxu0 %v4867
      %4931 = vmatpush1.msra.mxu0 %v4866
      %4932 = vmatprep.subr.mxu0 %v4869
      %4933 = vmatpush1.msra.mxu0 %v4868
      %4934 = vmatprep.subr.mxu0 %v4871
      %4935 = vmatpush1.msra.mxu0 %v4870
      %4936 = vmatprep.subr.mxu0 %v4873
      %4937 = vmatpush1.msra.mxu0 %v4872
      %4938 = vmatprep.subr.mxu0 %v4875
      %4939 = vmatpush1.msra.mxu0 %v4874
      %4940 = vmatprep.subr.mxu0 %v4877
      %4941 = vmatpush1.msra.mxu0 %v4876
      %4942 = vmatprep.subr.mxu0 %v4879
      %4943 = vmatpush1.msra.mxu0 %v4878
      %4944 = vmatprep.subr.mxu0 %v4881
      %4945 = vmatpush1.msra.mxu0 %v4880
      %4946 = vmatprep.subr.mxu0 %v4883
      %4947 = vmatpush1.msra.mxu0 %v4882
      %4948 = vmatprep.subr.mxu0 %v4885
      %4949 = vmatpush1.msra.mxu0 %v4884
      %4950 = vmatprep.subr.mxu0 %v4887
      %4951 = vmatpush1.msra.mxu0 %v4886
      %4952 = vmatprep.subr.mxu0 %v4889
      %4953 = vmatpush1.msra.mxu0 %v4888
      %4954 = vmatprep.subr.mxu0 %v4891
      %4955 = vmatpush1.msra.mxu0 %v4890
      %4956 = vmatprep.mubr.f32.mxu0 %v4682
      %4957 = vmatmul.mubr.f32.gmra.mrb[0].mxu0 %v4681
      %v4958 = vpop.f32.mrb[0].mxu0
      %v4959 = vadd.f32 0.0, %v4958
      %v4960 = vpop.f32.mrb[0].mxu0
      %v4961 = vadd.f32 0.0, %v4960
      %4962 = vmatprep.mubr.f32.mxu0 %v4684
      %4963 = vmatmul.mubr.f32.gmra.mrb[0].mxu0 %v4683
      %v4964 = vpop.f32.mrb[0].mxu0
      %v4965 = vadd.f32 0.0, %v4964
      %v4966 = vpop.f32.mrb[0].mxu0
      %v4967 = vadd.f32 0.0, %v4966
      %4968 = vdwg.mxu0
      %4969 = vmatprep.subr.mxu0 %v4764
      %4970 = vmatpush1.msra.mxu0 %v4763
      %4971 = vmatprep.subr.mxu0 %v4766
      %4972 = vmatpush1.msra.mxu0 %v4765
      %4973 = vmatprep.subr.mxu0 %v4768
      %4974 = vmatpush1.msra.mxu0 %v4767
      %4975 = vmatprep.subr.mxu0 %v4770
      %4976 = vmatpush1.msra.mxu0 %v4769
      %4977 = vmatprep.subr.mxu0 %v4772
      %4978 = vmatpush1.msra.mxu0 %v4771
      %4979 = vmatprep.subr.mxu0 %v4774
      %4980 = vmatpush1.msra.mxu0 %v4773
      %4981 = vmatprep.subr.mxu0 %v4776
      %4982 = vmatpush1.msra.mxu0 %v4775
      %4983 = vmatprep.subr.mxu0 %v4778
      %4984 = vmatpush1.msra.mxu0 %v4777
      %4985 = vmatprep.subr.mxu0 %v4780
      %4986 = vmatpush1.msra.mxu0 %v4779
      %4987 = vmatprep.subr.mxu0 %v4782
      %4988 = vmatpush1.msra.mxu0 %v4781
      %4989 = vmatprep.subr.mxu0 %v4784
      %4990 = vmatpush1.msra.mxu0 %v4783
      %4991 = vmatprep.subr.mxu0 %v4786
      %4992 = vmatpush1.msra.mxu0 %v4785
      %4993 = vmatprep.subr.mxu0 %v4788
      %4994 = vmatpush1.msra.mxu0 %v4787
      %4995 = vmatprep.subr.mxu0 %v4790
      %4996 = vmatpush1.msra.mxu0 %v4789
      %4997 = vmatprep.subr.mxu0 %v4792
      %4998 = vmatpush1.msra.mxu0 %v4791
      %4999 = vmatprep.subr.mxu0 %v4794
      %5000 = vmatpush1.msra.mxu0 %v4793
      %5001 = vmatprep.subr.mxu0 %v4796
      %5002 = vmatpush1.msra.mxu0 %v4795
      %5003 = vmatprep.subr.mxu0 %v4798
      %5004 = vmatpush1.msra.mxu0 %v4797
      %5005 = vmatprep.subr.mxu0 %v4800
      %5006 = vmatpush1.msra.mxu0 %v4799
      %5007 = vmatprep.subr.mxu0 %v4802
      %5008 = vmatpush1.msra.mxu0 %v4801
      %5009 = vmatprep.subr.mxu0 %v4804
      %5010 = vmatpush1.msra.mxu0 %v4803
      %5011 = vmatprep.subr.mxu0 %v4806
      %5012 = vmatpush1.msra.mxu0 %v4805
      %5013 = vmatprep.subr.mxu0 %v4808
      %5014 = vmatpush1.msra.mxu0 %v4807
      %5015 = vmatprep.subr.mxu0 %v4810
      %5016 = vmatpush1.msra.mxu0 %v4809
      %5017 = vmatprep.subr.mxu0 %v4812
      %5018 = vmatpush1.msra.mxu0 %v4811
      %5019 = vmatprep.subr.mxu0 %v4814
      %5020 = vmatpush1.msra.mxu0 %v4813
      %5021 = vmatprep.subr.mxu0 %v4816
      %5022 = vmatpush1.msra.mxu0 %v4815
      %5023 = vmatprep.subr.mxu0 %v4818
      %5024 = vmatpush1.msra.mxu0 %v4817
      %5025 = vmatprep.subr.mxu0 %v4820
      %5026 = vmatpush1.msra.mxu0 %v4819
      %5027 = vmatprep.subr.mxu0 %v4822
      %5028 = vmatpush1.msra.mxu0 %v4821
      %5029 = vmatprep.subr.mxu0 %v4824
      %5030 = vmatpush1.msra.mxu0 %v4823
      %5031 = vmatprep.subr.mxu0 %v4826
      %5032 = vmatpush1.msra.mxu0 %v4825
      %5033 = vmatprep.mubr.f32.mxu0 %v4754
      %5034 = vmatmul.mubr.f32.gmra.mrb[0].mxu0 %v4752
      %v5035 = vpop.f32.mrb[0].mxu0
      %v5036 = vadd.f32 %v4959, %v5035
      %v5037 = vpop.f32.mrb[0].mxu0
      %v5038 = vadd.f32 %v4961, %v5037
      %5039 = vmatprep.mubr.f32.mxu0 %v4760
      %5040 = vmatmul.mubr.f32.gmra.mrb[0].mxu0 %v4758
      %v5041 = vpop.f32.mrb[0].mxu0
      %v5042 = vadd.f32 %v4965, %v5041
      %v5043 = vpop.f32.mrb[0].mxu0
      %v5044 = vadd.f32 %v4967, %v5043
      %5045 = vdwg.mxu0
      %5046 = vmatprep.subr.mxu0 %v4682
      %5047 = vmatpush1.msra.mxu0 %v4681
      %5048 = vmatprep.subr.mxu0 %v4684
      %5049 = vmatpush1.msra.mxu0 %v4683
      %5050 = vmatprep.subr.mxu0 0.0
      %5051 = vmatpush1.msra.mxu0 0.0
      %5052 = vmatprep.subr.mxu0 0.0
      %5053 = vmatpush1.msra.mxu0 0.0
      %5054 = vmatprep.subr.mxu0 0.0
      %5055 = vmatpush1.msra.mxu0 0.0
      %5056 = vmatprep.subr.mxu0 0.0
      %5057 = vmatpush1.msra.mxu0 0.0
      %5058 = vmatprep.subr.mxu0 0.0
      %5059 = vmatpush1.msra.mxu0 0.0
      %5060 = vmatprep.subr.mxu0 0.0
      %5061 = vmatpush1.msra.mxu0 0.0
      %5062 = vmatprep.subr.mxu0 0.0
      %5063 = vmatpush1.msra.mxu0 0.0
      %5064 = vmatprep.subr.mxu0 0.0
      %5065 = vmatpush1.msra.mxu0 0.0
      %5066 = vmatprep.subr.mxu0 0.0
      %5067 = vmatpush1.msra.mxu0 0.0
      %5068 = vmatprep.subr.mxu0 0.0
      %5069 = vmatpush1.msra.mxu0 0.0
      %5070 = vmatprep.subr.mxu0 0.0
      %5071 = vmatpush1.msra.mxu0 0.0
      %5072 = vmatprep.subr.mxu0 0.0
      %5073 = vmatpush1.msra.mxu0 0.0
      %5074 = vmatprep.subr.mxu0 0.0
      %5075 = vmatpush1.msra.mxu0 0.0
      %5076 = vmatprep.subr.mxu0 0.0
      %5077 = vmatpush1.msra.mxu0 0.0
      %5078 = vmatprep.subr.mxu0 0.0
      %5079 = vmatpush1.msra.mxu0 0.0
      %5080 = vmatprep.subr.mxu0 0.0
      %5081 = vmatpush1.msra.mxu0 0.0
      %5082 = vmatprep.subr.mxu0 0.0
      %5083 = vmatpush1.msra.mxu0 0.0
      %5084 = vmatprep.subr.mxu0 0.0
      %5085 = vmatpush1.msra.mxu0 0.0
      %5086 = vmatprep.subr.mxu0 0.0
      %5087 = vmatpush1.msra.mxu0 0.0
      %5088 = vmatprep.subr.mxu0 0.0
      %5089 = vmatpush1.msra.mxu0 0.0
      %5090 = vmatprep.subr.mxu0 0.0
      %5091 = vmatpush1.msra.mxu0 0.0
      %5092 = vmatprep.subr.mxu0 0.0
      %5093 = vmatpush1.msra.mxu0 0.0
      %5094 = vmatprep.subr.mxu0 0.0
      %5095 = vmatpush1.msra.mxu0 0.0
      %5096 = vmatprep.subr.mxu0 0.0
      %5097 = vmatpush1.msra.mxu0 0.0
      %5098 = vmatprep.subr.mxu0 0.0
      %5099 = vmatpush1.msra.mxu0 0.0
      %5100 = vmatprep.subr.mxu0 0.0
      %5101 = vmatpush1.msra.mxu0 0.0
      %5102 = vmatprep.subr.mxu0 0.0
      %5103 = vmatpush1.msra.mxu0 0.0
      %5104 = vmatprep.subr.mxu0 0.0
      %5105 = vmatpush1.msra.mxu0 0.0
      %5106 = vmatprep.subr.mxu0 0.0
      %5107 = vmatpush1.msra.mxu0 0.0
      %5108 = vmatprep.subr.mxu0 0.0
      %5109 = vmatpush1.msra.mxu0 0.0
      %5110 = vmatprep.mubr.f32.mxu0 0.0
      %5111 = vmatmul.mubr.f32.gmra.mrb[0].mxu0 %v767
      %v5112 = vpop.f32.mrb[0].mxu0
      %v5113 = vadd.f32 0.0, %v5112
      %v5114 = vpop.f32.mrb[0].mxu0
      %v5115 = vadd.f32 0.0, %v5114
      %5116 = vmatprep.mubr.f32.mxu0 0.0
      %5117 = vmatmul.mubr.f32.gmra.mrb[0].mxu0 %v770
      %v5118 = vpop.f32.mrb[0].mxu0
      %v5119 = vadd.f32 0.0, %v5118
      %v5120 = vpop.f32.mrb[0].mxu0
      %v5121 = vadd.f32 0.0, %v5120
      %5122 = vdwg.mxu0
      %s5123 = scalar_lea.vmem %s2, 11776
      %v5124 = vld [vmem:[%s5123] sm:$0xff]
      %v5125 = vld [vmem:[%s5123 + $0x8] sm:$0xff]
      %v5126 = vld [vmem:[%s5123 + $0x10] sm:$0xff]
      %v5127 = vld [vmem:[%s5123 + $0x18] sm:$0xff]
      %v5128 = vld [vmem:[%s5123 + $0x20] sm:$0xff]
      %v5129 = vld [vmem:[%s5123 + $0x28] sm:$0xff]
      %v5130 = vld [vmem:[%s5123 + $0x30] sm:$0xff]
      %v5131 = vld [vmem:[%s5123 + $0x38] sm:$0xff]
      %v5132 = vld [vmem:[%s5123 + $0x40] sm:$0xff]
      %v5133 = vld [vmem:[%s5123 + $0x48] sm:$0xff]
      %v5134 = vld [vmem:[%s5123 + $0x50] sm:$0xff]
      %v5135 = vld [vmem:[%s5123 + $0x58] sm:$0xff]
      %v5136 = vld [vmem:[%s5123 + $0x60] sm:$0xff]
      %v5137 = vld [vmem:[%s5123 + $0x68] sm:$0xff]
      %v5138 = vld [vmem:[%s5123 + $0x70] sm:$0xff]
      %v5139 = vld [vmem:[%s5123 + $0x78] sm:$0xff]
      %v5140 = vld [vmem:[%s5123 + $0x80] sm:$0xff]
      %v5141 = vld [vmem:[%s5123 + $0x88] sm:$0xff]
      %v5142 = vld [vmem:[%s5123 + $0x90] sm:$0xff]
      %v5143 = vld [vmem:[%s5123 + $0x98] sm:$0xff]
      %v5144 = vld [vmem:[%s5123 + $0xa0] sm:$0xff]
      %v5145 = vld [vmem:[%s5123 + $0xa8] sm:$0xff]
      %v5146 = vld [vmem:[%s5123 + $0xb0] sm:$0xff]
      %v5147 = vld [vmem:[%s5123 + $0xb8] sm:$0xff]
      %v5148 = vld [vmem:[%s5123 + $0xc0] sm:$0xff]
      %v5149 = vld [vmem:[%s5123 + $0xc8] sm:$0xff]
      %v5150 = vld [vmem:[%s5123 + $0xd0] sm:$0xff]
      %v5151 = vld [vmem:[%s5123 + $0xd8] sm:$0xff]
      %v5152 = vld [vmem:[%s5123 + $0xe0] sm:$0xff]
      %v5153 = vld [vmem:[%s5123 + $0xe8] sm:$0xff]
      %v5154 = vld [vmem:[%s5123 + $0xf0] sm:$0xff]
      %v5155 = vld [vmem:[%s5123 + $0xf8] sm:$0xff]
      %v5156 = vld [vmem:[%s5123 + $0x100] sm:$0xff]
      %v5157 = vld [vmem:[%s5123 + $0x108] sm:$0xff]
      %v5158 = vld [vmem:[%s5123 + $0x110] sm:$0xff]
      %v5159 = vld [vmem:[%s5123 + $0x118] sm:$0xff]
      %v5160 = vld [vmem:[%s5123 + $0x120] sm:$0xff]
      %v5161 = vld [vmem:[%s5123 + $0x128] sm:$0xff]
      %v5162 = vld [vmem:[%s5123 + $0x130] sm:$0xff]
      %v5163 = vld [vmem:[%s5123 + $0x138] sm:$0xff]
      %v5164 = vld [vmem:[%s5123 + $0x140] sm:$0xff]
      %v5165 = vld [vmem:[%s5123 + $0x148] sm:$0xff]
      %v5166 = vld [vmem:[%s5123 + $0x150] sm:$0xff]
      %v5167 = vld [vmem:[%s5123 + $0x158] sm:$0xff]
      %v5168 = vld [vmem:[%s5123 + $0x160] sm:$0xff]
      %v5169 = vld [vmem:[%s5123 + $0x168] sm:$0xff]
      %v5170 = vld [vmem:[%s5123 + $0x170] sm:$0xff]
      %v5171 = vld [vmem:[%s5123 + $0x178] sm:$0xff]
      %v5172 = vld [vmem:[%s5123 + $0x180] sm:$0xff]
      %v5173 = vld [vmem:[%s5123 + $0x188] sm:$0xff]
      %v5174 = vld [vmem:[%s5123 + $0x190] sm:$0xff]
      %v5175 = vld [vmem:[%s5123 + $0x198] sm:$0xff]
      %v5176 = vld [vmem:[%s5123 + $0x1a0] sm:$0xff]
      %v5177 = vld [vmem:[%s5123 + $0x1a8] sm:$0xff]
      %v5178 = vld [vmem:[%s5123 + $0x1b0] sm:$0xff]
      %v5179 = vld [vmem:[%s5123 + $0x1b8] sm:$0xff]
      %v5180 = vld [vmem:[%s5123 + $0x1c0] sm:$0xff]
      %v5181 = vld [vmem:[%s5123 + $0x1c8] sm:$0xff]
      %v5182 = vld [vmem:[%s5123 + $0x1d0] sm:$0xff]
      %v5183 = vld [vmem:[%s5123 + $0x1d8] sm:$0xff]
      %v5184 = vld [vmem:[%s5123 + $0x1e0] sm:$0xff]
      %v5185 = vld [vmem:[%s5123 + $0x1e8] sm:$0xff]
      %v5186 = vld [vmem:[%s5123 + $0x1f0] sm:$0xff]
      %v5187 = vld [vmem:[%s5123 + $0x1f8] sm:$0xff]
      %5188 = vmatprep.subr.mxu0 %v5125
      %5189 = vmatpush1.msra.mxu0 %v5124
      %5190 = vmatprep.subr.mxu0 %v5127
      %5191 = vmatpush1.msra.mxu0 %v5126
      %5192 = vmatprep.subr.mxu0 %v5129
      %5193 = vmatpush1.msra.mxu0 %v5128
      %5194 = vmatprep.subr.mxu0 %v5131
      %5195 = vmatpush1.msra.mxu0 %v5130
      %5196 = vmatprep.subr.mxu0 %v5133
      %5197 = vmatpush1.msra.mxu0 %v5132
      %5198 = vmatprep.subr.mxu0 %v5135
      %5199 = vmatpush1.msra.mxu0 %v5134
      %5200 = vmatprep.subr.mxu0 %v5137
      %5201 = vmatpush1.msra.mxu0 %v5136
      %5202 = vmatprep.subr.mxu0 %v5139
      %5203 = vmatpush1.msra.mxu0 %v5138
      %5204 = vmatprep.subr.mxu0 %v5141
      %5205 = vmatpush1.msra.mxu0 %v5140
      %5206 = vmatprep.subr.mxu0 %v5143
      %5207 = vmatpush1.msra.mxu0 %v5142
      %5208 = vmatprep.subr.mxu0 %v5145
      %5209 = vmatpush1.msra.mxu0 %v5144
      %5210 = vmatprep.subr.mxu0 %v5147
      %5211 = vmatpush1.msra.mxu0 %v5146
      %5212 = vmatprep.subr.mxu0 %v5149
      %5213 = vmatpush1.msra.mxu0 %v5148
      %5214 = vmatprep.subr.mxu0 %v5151
      %5215 = vmatpush1.msra.mxu0 %v5150
      %5216 = vmatprep.subr.mxu0 %v5153
      %5217 = vmatpush1.msra.mxu0 %v5152
      %5218 = vmatprep.subr.mxu0 %v5155
      %5219 = vmatpush1.msra.mxu0 %v5154
      %5220 = vmatprep.subr.mxu0 %v5157
      %5221 = vmatpush1.msra.mxu0 %v5156
      %5222 = vmatprep.subr.mxu0 %v5159
      %5223 = vmatpush1.msra.mxu0 %v5158
      %5224 = vmatprep.subr.mxu0 %v5161
      %5225 = vmatpush1.msra.mxu0 %v5160
      %5226 = vmatprep.subr.mxu0 %v5163
      %5227 = vmatpush1.msra.mxu0 %v5162
      %5228 = vmatprep.subr.mxu0 %v5165
      %5229 = vmatpush1.msra.mxu0 %v5164
      %5230 = vmatprep.subr.mxu0 %v5167
      %5231 = vmatpush1.msra.mxu0 %v5166
      %5232 = vmatprep.subr.mxu0 %v5169
      %5233 = vmatpush1.msra.mxu0 %v5168
      %5234 = vmatprep.subr.mxu0 %v5171
      %5235 = vmatpush1.msra.mxu0 %v5170
      %5236 = vmatprep.subr.mxu0 %v5173
      %5237 = vmatpush1.msra.mxu0 %v5172
      %5238 = vmatprep.subr.mxu0 %v5175
      %5239 = vmatpush1.msra.mxu0 %v5174
      %5240 = vmatprep.subr.mxu0 %v5177
      %5241 = vmatpush1.msra.mxu0 %v5176
      %5242 = vmatprep.subr.mxu0 %v5179
      %5243 = vmatpush1.msra.mxu0 %v5178
      %5244 = vmatprep.subr.mxu0 %v5181
      %5245 = vmatpush1.msra.mxu0 %v5180
      %5246 = vmatprep.subr.mxu0 %v5183
      %5247 = vmatpush1.msra.mxu0 %v5182
      %5248 = vmatprep.subr.mxu0 %v5185
      %5249 = vmatpush1.msra.mxu0 %v5184
      %5250 = vmatprep.subr.mxu0 %v5187
      %5251 = vmatpush1.msra.mxu0 %v5186
      %5252 = vmatprep.mubr.f32.mxu0 %v5115
      %5253 = vmatmul.mubr.f32.gmra.mrb[0].mxu0 %v5113
      %v5254 = vpop.f32.mrb[0].mxu0
      %v5255 = vadd.f32 0.0, %v5254
      %v5256 = vpop.f32.mrb[0].mxu0
      %v5257 = vadd.f32 0.0, %v5256
      %5258 = vmatprep.mubr.f32.mxu0 %v5121
      %5259 = vmatmul.mubr.f32.gmra.mrb[0].mxu0 %v5119
      %v5260 = vpop.f32.mrb[0].mxu0
      %v5261 = vadd.f32 0.0, %v5260
      %v5262 = vpop.f32.mrb[0].mxu0
      %v5263 = vadd.f32 0.0, %v5262
      %5264 = vdwg.mxu0
      %v5265 = vadd.f32 %v5036, %v5255
      %v5266 = vadd.f32 %v5038, %v5257
      %v5267 = vadd.f32 %v5042, %v5261
      %v5268 = vadd.f32 %v5044, %v5263
      %s5269 = scalar_lea.vmem %s4, 14
      %v5270 = vld [vmem:[%s5269] sm:$0x3]
      %v5272 = vlaneseq
      %v5273 = vshrl.u32 %v5272, 7
      %v5274 = vsub.s32 0, %v5273
      %v5275 = vrot.slane %v5270, %v5274
      %v5276 = vlaneseq
      %v5277 = vshrl.u32 %v5276, 7
      %v5278 = vsub.s32 1, %v5277
      %v5279 = vrot.slane %v5270, %v5278
      %v5282 = vadd.f32 %v5265, %v5275
      %v5283 = vadd.f32 %v5266, %v5279
      %v5284 = vadd.f32 %v5267, %v5275
      %v5285 = vadd.f32 %v5268, %v5279
      %v5286 = vadd.f32 %v5282, %v4076
      %v5287 = vadd.f32 %v5283, %v4077
      %v5288 = vadd.f32 %v5284, %v4078
      %v5289 = vadd.f32 %v5285, %v4079
      %v5290 = vmax.f32 %v5286, 0.0
      %v5291 = vmax.f32 %v5287, 0.0
      %v5292 = vmax.f32 %v5288, 0.0
      %v5293 = vmax.f32 %v5289, 0.0
      %5294 = vmatprep.subr.mxu0 %v5291
      %5295 = vmatpush1.msra.mxu0 %v5290
      %5296 = vmatprep.subr.mxu0 %v5293
      %5297 = vmatpush1.msra.mxu0 %v5292
      %5298 = vmatprep.subr.mxu0 0.0
      %5299 = vmatpush1.msra.mxu0 0.0
      %5300 = vmatprep.subr.mxu0 0.0
      %5301 = vmatpush1.msra.mxu0 0.0
      %5302 = vmatprep.subr.mxu0 0.0
      %5303 = vmatpush1.msra.mxu0 0.0
      %5304 = vmatprep.subr.mxu0 0.0
      %5305 = vmatpush1.msra.mxu0 0.0
      %5306 = vmatprep.subr.mxu0 0.0
      %5307 = vmatpush1.msra.mxu0 0.0
      %5308 = vmatprep.subr.mxu0 0.0
      %5309 = vmatpush1.msra.mxu0 0.0
      %5310 = vmatprep.subr.mxu0 0.0
      %5311 = vmatpush1.msra.mxu0 0.0
      %5312 = vmatprep.subr.mxu0 0.0
      %5313 = vmatpush1.msra.mxu0 0.0
      %5314 = vmatprep.subr.mxu0 0.0
      %5315 = vmatpush1.msra.mxu0 0.0
      %5316 = vmatprep.subr.mxu0 0.0
      %5317 = vmatpush1.msra.mxu0 0.0
      %5318 = vmatprep.subr.mxu0 0.0
      %5319 = vmatpush1.msra.mxu0 0.0
      %5320 = vmatprep.subr.mxu0 0.0
      %5321 = vmatpush1.msra.mxu0 0.0
      %5322 = vmatprep.subr.mxu0 0.0
      %5323 = vmatpush1.msra.mxu0 0.0
      %5324 = vmatprep.subr.mxu0 0.0
      %5325 = vmatpush1.msra.mxu0 0.0
      %5326 = vmatprep.subr.mxu0 0.0
      %5327 = vmatpush1.msra.mxu0 0.0
      %5328 = vmatprep.subr.mxu0 0.0
      %5329 = vmatpush1.msra.mxu0 0.0
      %5330 = vmatprep.subr.mxu0 0.0
      %5331 = vmatpush1.msra.mxu0 0.0
      %5332 = vmatprep.subr.mxu0 0.0
      %5333 = vmatpush1.msra.mxu0 0.0
      %5334 = vmatprep.subr.mxu0 0.0
      %5335 = vmatpush1.msra.mxu0 0.0
      %5336 = vmatprep.subr.mxu0 0.0
      %5337 = vmatpush1.msra.mxu0 0.0
      %5338 = vmatprep.subr.mxu0 0.0
      %5339 = vmatpush1.msra.mxu0 0.0
      %5340 = vmatprep.subr.mxu0 0.0
      %5341 = vmatpush1.msra.mxu0 0.0
      %5342 = vmatprep.subr.mxu0 0.0
      %5343 = vmatpush1.msra.mxu0 0.0
      %5344 = vmatprep.subr.mxu0 0.0
      %5345 = vmatpush1.msra.mxu0 0.0
      %5346 = vmatprep.subr.mxu0 0.0
      %5347 = vmatpush1.msra.mxu0 0.0
      %5348 = vmatprep.subr.mxu0 0.0
      %5349 = vmatpush1.msra.mxu0 0.0
      %5350 = vmatprep.subr.mxu0 0.0
      %5351 = vmatpush1.msra.mxu0 0.0
      %5352 = vmatprep.subr.mxu0 0.0
      %5353 = vmatpush1.msra.mxu0 0.0
      %5354 = vmatprep.subr.mxu0 0.0
      %5355 = vmatpush1.msra.mxu0 0.0
      %5356 = vmatprep.subr.mxu0 0.0
      %5357 = vmatpush1.msra.mxu0 0.0
      %5358 = vmatprep.mubr.f32.mxu0 0.0
      %5359 = vmatmul.mubr.f32.gmra.mrb[0].mxu0 %v398
      %v5360 = vpop.f32.mrb[0].mxu0
      %v5361 = vadd.f32 0.0, %v5360
      %v5362 = vpop.f32.mrb[0].mxu0
      %v5363 = vadd.f32 0.0, %v5362
      %5364 = vmatprep.mubr.f32.mxu0 0.0
      %5365 = vmatmul.mubr.f32.gmra.mrb[0].mxu0 %v401
      %v5366 = vpop.f32.mrb[0].mxu0
      %v5367 = vadd.f32 0.0, %v5366
      %v5368 = vpop.f32.mrb[0].mxu0
      %v5369 = vadd.f32 0.0, %v5368
      %5370 = vdwg.mxu0
      %s5371 = scalar_lea.vmem %s2, 12288
      %v5372 = vld [vmem:[%s5371] sm:$0xff]
      %v5373 = vld [vmem:[%s5371 + $0x8] sm:$0xff]
      %v5374 = vld [vmem:[%s5371 + $0x10] sm:$0xff]
      %v5375 = vld [vmem:[%s5371 + $0x18] sm:$0xff]
      %v5376 = vld [vmem:[%s5371 + $0x20] sm:$0xff]
      %v5377 = vld [vmem:[%s5371 + $0x28] sm:$0xff]
      %v5378 = vld [vmem:[%s5371 + $0x30] sm:$0xff]
      %v5379 = vld [vmem:[%s5371 + $0x38] sm:$0xff]
      %v5380 = vld [vmem:[%s5371 + $0x40] sm:$0xff]
      %v5381 = vld [vmem:[%s5371 + $0x48] sm:$0xff]
      %v5382 = vld [vmem:[%s5371 + $0x50] sm:$0xff]
      %v5383 = vld [vmem:[%s5371 + $0x58] sm:$0xff]
      %v5384 = vld [vmem:[%s5371 + $0x60] sm:$0xff]
      %v5385 = vld [vmem:[%s5371 + $0x68] sm:$0xff]
      %v5386 = vld [vmem:[%s5371 + $0x70] sm:$0xff]
      %v5387 = vld [vmem:[%s5371 + $0x78] sm:$0xff]
      %v5388 = vld [vmem:[%s5371 + $0x80] sm:$0xff]
      %v5389 = vld [vmem:[%s5371 + $0x88] sm:$0xff]
      %v5390 = vld [vmem:[%s5371 + $0x90] sm:$0xff]
      %v5391 = vld [vmem:[%s5371 + $0x98] sm:$0xff]
      %v5392 = vld [vmem:[%s5371 + $0xa0] sm:$0xff]
      %v5393 = vld [vmem:[%s5371 + $0xa8] sm:$0xff]
      %v5394 = vld [vmem:[%s5371 + $0xb0] sm:$0xff]
      %v5395 = vld [vmem:[%s5371 + $0xb8] sm:$0xff]
      %v5396 = vld [vmem:[%s5371 + $0xc0] sm:$0xff]
      %v5397 = vld [vmem:[%s5371 + $0xc8] sm:$0xff]
      %v5398 = vld [vmem:[%s5371 + $0xd0] sm:$0xff]
      %v5399 = vld [vmem:[%s5371 + $0xd8] sm:$0xff]
      %v5400 = vld [vmem:[%s5371 + $0xe0] sm:$0xff]
      %v5401 = vld [vmem:[%s5371 + $0xe8] sm:$0xff]
      %v5402 = vld [vmem:[%s5371 + $0xf0] sm:$0xff]
      %v5403 = vld [vmem:[%s5371 + $0xf8] sm:$0xff]
      %v5404 = vld [vmem:[%s5371 + $0x100] sm:$0xff]
      %v5405 = vld [vmem:[%s5371 + $0x108] sm:$0xff]
      %v5406 = vld [vmem:[%s5371 + $0x110] sm:$0xff]
      %v5407 = vld [vmem:[%s5371 + $0x118] sm:$0xff]
      %v5408 = vld [vmem:[%s5371 + $0x120] sm:$0xff]
      %v5409 = vld [vmem:[%s5371 + $0x128] sm:$0xff]
      %v5410 = vld [vmem:[%s5371 + $0x130] sm:$0xff]
      %v5411 = vld [vmem:[%s5371 + $0x138] sm:$0xff]
      %v5412 = vld [vmem:[%s5371 + $0x140] sm:$0xff]
      %v5413 = vld [vmem:[%s5371 + $0x148] sm:$0xff]
      %v5414 = vld [vmem:[%s5371 + $0x150] sm:$0xff]
      %v5415 = vld [vmem:[%s5371 + $0x158] sm:$0xff]
      %v5416 = vld [vmem:[%s5371 + $0x160] sm:$0xff]
      %v5417 = vld [vmem:[%s5371 + $0x168] sm:$0xff]
      %v5418 = vld [vmem:[%s5371 + $0x170] sm:$0xff]
      %v5419 = vld [vmem:[%s5371 + $0x178] sm:$0xff]
      %v5420 = vld [vmem:[%s5371 + $0x180] sm:$0xff]
      %v5421 = vld [vmem:[%s5371 + $0x188] sm:$0xff]
      %v5422 = vld [vmem:[%s5371 + $0x190] sm:$0xff]
      %v5423 = vld [vmem:[%s5371 + $0x198] sm:$0xff]
      %v5424 = vld [vmem:[%s5371 + $0x1a0] sm:$0xff]
      %v5425 = vld [vmem:[%s5371 + $0x1a8] sm:$0xff]
      %v5426 = vld [vmem:[%s5371 + $0x1b0] sm:$0xff]
      %v5427 = vld [vmem:[%s5371 + $0x1b8] sm:$0xff]
      %v5428 = vld [vmem:[%s5371 + $0x1c0] sm:$0xff]
      %v5429 = vld [vmem:[%s5371 + $0x1c8] sm:$0xff]
      %v5430 = vld [vmem:[%s5371 + $0x1d0] sm:$0xff]
      %v5431 = vld [vmem:[%s5371 + $0x1d8] sm:$0xff]
      %v5432 = vld [vmem:[%s5371 + $0x1e0] sm:$0xff]
      %v5433 = vld [vmem:[%s5371 + $0x1e8] sm:$0xff]
      %v5434 = vld [vmem:[%s5371 + $0x1f0] sm:$0xff]
      %v5435 = vld [vmem:[%s5371 + $0x1f8] sm:$0xff]
      %s5436 = scalar_lea.vmem %s2, 12800
      %v5437 = vld [vmem:[%s5436] sm:$0xff]
      %v5438 = vld [vmem:[%s5436 + $0x8] sm:$0xff]
      %v5439 = vld [vmem:[%s5436 + $0x10] sm:$0xff]
      %v5440 = vld [vmem:[%s5436 + $0x18] sm:$0xff]
      %v5441 = vld [vmem:[%s5436 + $0x20] sm:$0xff]
      %v5442 = vld [vmem:[%s5436 + $0x28] sm:$0xff]
      %v5443 = vld [vmem:[%s5436 + $0x30] sm:$0xff]
      %v5444 = vld [vmem:[%s5436 + $0x38] sm:$0xff]
      %v5445 = vld [vmem:[%s5436 + $0x40] sm:$0xff]
      %v5446 = vld [vmem:[%s5436 + $0x48] sm:$0xff]
      %v5447 = vld [vmem:[%s5436 + $0x50] sm:$0xff]
      %v5448 = vld [vmem:[%s5436 + $0x58] sm:$0xff]
      %v5449 = vld [vmem:[%s5436 + $0x60] sm:$0xff]
      %v5450 = vld [vmem:[%s5436 + $0x68] sm:$0xff]
      %v5451 = vld [vmem:[%s5436 + $0x70] sm:$0xff]
      %v5452 = vld [vmem:[%s5436 + $0x78] sm:$0xff]
      %v5453 = vld [vmem:[%s5436 + $0x80] sm:$0xff]
      %v5454 = vld [vmem:[%s5436 + $0x88] sm:$0xff]
      %v5455 = vld [vmem:[%s5436 + $0x90] sm:$0xff]
      %v5456 = vld [vmem:[%s5436 + $0x98] sm:$0xff]
      %v5457 = vld [vmem:[%s5436 + $0xa0] sm:$0xff]
      %v5458 = vld [vmem:[%s5436 + $0xa8] sm:$0xff]
      %v5459 = vld [vmem:[%s5436 + $0xb0] sm:$0xff]
      %v5460 = vld [vmem:[%s5436 + $0xb8] sm:$0xff]
      %v5461 = vld [vmem:[%s5436 + $0xc0] sm:$0xff]
      %v5462 = vld [vmem:[%s5436 + $0xc8] sm:$0xff]
      %v5463 = vld [vmem:[%s5436 + $0xd0] sm:$0xff]
      %v5464 = vld [vmem:[%s5436 + $0xd8] sm:$0xff]
      %v5465 = vld [vmem:[%s5436 + $0xe0] sm:$0xff]
      %v5466 = vld [vmem:[%s5436 + $0xe8] sm:$0xff]
      %v5467 = vld [vmem:[%s5436 + $0xf0] sm:$0xff]
      %v5468 = vld [vmem:[%s5436 + $0xf8] sm:$0xff]
      %v5469 = vld [vmem:[%s5436 + $0x100] sm:$0xff]
      %v5470 = vld [vmem:[%s5436 + $0x108] sm:$0xff]
      %v5471 = vld [vmem:[%s5436 + $0x110] sm:$0xff]
      %v5472 = vld [vmem:[%s5436 + $0x118] sm:$0xff]
      %v5473 = vld [vmem:[%s5436 + $0x120] sm:$0xff]
      %v5474 = vld [vmem:[%s5436 + $0x128] sm:$0xff]
      %v5475 = vld [vmem:[%s5436 + $0x130] sm:$0xff]
      %v5476 = vld [vmem:[%s5436 + $0x138] sm:$0xff]
      %v5477 = vld [vmem:[%s5436 + $0x140] sm:$0xff]
      %v5478 = vld [vmem:[%s5436 + $0x148] sm:$0xff]
      %v5479 = vld [vmem:[%s5436 + $0x150] sm:$0xff]
      %v5480 = vld [vmem:[%s5436 + $0x158] sm:$0xff]
      %v5481 = vld [vmem:[%s5436 + $0x160] sm:$0xff]
      %v5482 = vld [vmem:[%s5436 + $0x168] sm:$0xff]
      %v5483 = vld [vmem:[%s5436 + $0x170] sm:$0xff]
      %v5484 = vld [vmem:[%s5436 + $0x178] sm:$0xff]
      %v5485 = vld [vmem:[%s5436 + $0x180] sm:$0xff]
      %v5486 = vld [vmem:[%s5436 + $0x188] sm:$0xff]
      %v5487 = vld [vmem:[%s5436 + $0x190] sm:$0xff]
      %v5488 = vld [vmem:[%s5436 + $0x198] sm:$0xff]
      %v5489 = vld [vmem:[%s5436 + $0x1a0] sm:$0xff]
      %v5490 = vld [vmem:[%s5436 + $0x1a8] sm:$0xff]
      %v5491 = vld [vmem:[%s5436 + $0x1b0] sm:$0xff]
      %v5492 = vld [vmem:[%s5436 + $0x1b8] sm:$0xff]
      %v5493 = vld [vmem:[%s5436 + $0x1c0] sm:$0xff]
      %v5494 = vld [vmem:[%s5436 + $0x1c8] sm:$0xff]
      %v5495 = vld [vmem:[%s5436 + $0x1d0] sm:$0xff]
      %v5496 = vld [vmem:[%s5436 + $0x1d8] sm:$0xff]
      %v5497 = vld [vmem:[%s5436 + $0x1e0] sm:$0xff]
      %v5498 = vld [vmem:[%s5436 + $0x1e8] sm:$0xff]
      %v5499 = vld [vmem:[%s5436 + $0x1f0] sm:$0xff]
      %v5500 = vld [vmem:[%s5436 + $0x1f8] sm:$0xff]
      %5501 = vmatprep.subr.mxu0 %v5438
      %5502 = vmatpush1.msra.mxu0 %v5437
      %5503 = vmatprep.subr.mxu0 %v5440
      %5504 = vmatpush1.msra.mxu0 %v5439
      %5505 = vmatprep.subr.mxu0 %v5442
      %5506 = vmatpush1.msra.mxu0 %v5441
      %5507 = vmatprep.subr.mxu0 %v5444
      %5508 = vmatpush1.msra.mxu0 %v5443
      %5509 = vmatprep.subr.mxu0 %v5446
      %5510 = vmatpush1.msra.mxu0 %v5445
      %5511 = vmatprep.subr.mxu0 %v5448
      %5512 = vmatpush1.msra.mxu0 %v5447
      %5513 = vmatprep.subr.mxu0 %v5450
      %5514 = vmatpush1.msra.mxu0 %v5449
      %5515 = vmatprep.subr.mxu0 %v5452
      %5516 = vmatpush1.msra.mxu0 %v5451
      %5517 = vmatprep.subr.mxu0 %v5454
      %5518 = vmatpush1.msra.mxu0 %v5453
      %5519 = vmatprep.subr.mxu0 %v5456
      %5520 = vmatpush1.msra.mxu0 %v5455
      %5521 = vmatprep.subr.mxu0 %v5458
      %5522 = vmatpush1.msra.mxu0 %v5457
      %5523 = vmatprep.subr.mxu0 %v5460
      %5524 = vmatpush1.msra.mxu0 %v5459
      %5525 = vmatprep.subr.mxu0 %v5462
      %5526 = vmatpush1.msra.mxu0 %v5461
      %5527 = vmatprep.subr.mxu0 %v5464
      %5528 = vmatpush1.msra.mxu0 %v5463
      %5529 = vmatprep.subr.mxu0 %v5466
      %5530 = vmatpush1.msra.mxu0 %v5465
      %5531 = vmatprep.subr.mxu0 %v5468
      %5532 = vmatpush1.msra.mxu0 %v5467
      %5533 = vmatprep.subr.mxu0 %v5470
      %5534 = vmatpush1.msra.mxu0 %v5469
      %5535 = vmatprep.subr.mxu0 %v5472
      %5536 = vmatpush1.msra.mxu0 %v5471
      %5537 = vmatprep.subr.mxu0 %v5474
      %5538 = vmatpush1.msra.mxu0 %v5473
      %5539 = vmatprep.subr.mxu0 %v5476
      %5540 = vmatpush1.msra.mxu0 %v5475
      %5541 = vmatprep.subr.mxu0 %v5478
      %5542 = vmatpush1.msra.mxu0 %v5477
      %5543 = vmatprep.subr.mxu0 %v5480
      %5544 = vmatpush1.msra.mxu0 %v5479
      %5545 = vmatprep.subr.mxu0 %v5482
      %5546 = vmatpush1.msra.mxu0 %v5481
      %5547 = vmatprep.subr.mxu0 %v5484
      %5548 = vmatpush1.msra.mxu0 %v5483
      %5549 = vmatprep.subr.mxu0 %v5486
      %5550 = vmatpush1.msra.mxu0 %v5485
      %5551 = vmatprep.subr.mxu0 %v5488
      %5552 = vmatpush1.msra.mxu0 %v5487
      %5553 = vmatprep.subr.mxu0 %v5490
      %5554 = vmatpush1.msra.mxu0 %v5489
      %5555 = vmatprep.subr.mxu0 %v5492
      %5556 = vmatpush1.msra.mxu0 %v5491
      %5557 = vmatprep.subr.mxu0 %v5494
      %5558 = vmatpush1.msra.mxu0 %v5493
      %5559 = vmatprep.subr.mxu0 %v5496
      %5560 = vmatpush1.msra.mxu0 %v5495
      %5561 = vmatprep.subr.mxu0 %v5498
      %5562 = vmatpush1.msra.mxu0 %v5497
      %5563 = vmatprep.subr.mxu0 %v5500
      %5564 = vmatpush1.msra.mxu0 %v5499
      %5565 = vmatprep.mubr.f32.mxu0 %v5291
      %5566 = vmatmul.mubr.f32.gmra.mrb[0].mxu0 %v5290
      %v5567 = vpop.f32.mrb[0].mxu0
      %v5568 = vadd.f32 0.0, %v5567
      %v5569 = vpop.f32.mrb[0].mxu0
      %v5570 = vadd.f32 0.0, %v5569
      %5571 = vmatprep.mubr.f32.mxu0 %v5293
      %5572 = vmatmul.mubr.f32.gmra.mrb[0].mxu0 %v5292
      %v5573 = vpop.f32.mrb[0].mxu0
      %v5574 = vadd.f32 0.0, %v5573
      %v5575 = vpop.f32.mrb[0].mxu0
      %v5576 = vadd.f32 0.0, %v5575
      %5577 = vdwg.mxu0
      %5578 = vmatprep.subr.mxu0 %v5373
      %5579 = vmatpush1.msra.mxu0 %v5372
      %5580 = vmatprep.subr.mxu0 %v5375
      %5581 = vmatpush1.msra.mxu0 %v5374
      %5582 = vmatprep.subr.mxu0 %v5377
      %5583 = vmatpush1.msra.mxu0 %v5376
      %5584 = vmatprep.subr.mxu0 %v5379
      %5585 = vmatpush1.msra.mxu0 %v5378
      %5586 = vmatprep.subr.mxu0 %v5381
      %5587 = vmatpush1.msra.mxu0 %v5380
      %5588 = vmatprep.subr.mxu0 %v5383
      %5589 = vmatpush1.msra.mxu0 %v5382
      %5590 = vmatprep.subr.mxu0 %v5385
      %5591 = vmatpush1.msra.mxu0 %v5384
      %5592 = vmatprep.subr.mxu0 %v5387
      %5593 = vmatpush1.msra.mxu0 %v5386
      %5594 = vmatprep.subr.mxu0 %v5389
      %5595 = vmatpush1.msra.mxu0 %v5388
      %5596 = vmatprep.subr.mxu0 %v5391
      %5597 = vmatpush1.msra.mxu0 %v5390
      %5598 = vmatprep.subr.mxu0 %v5393
      %5599 = vmatpush1.msra.mxu0 %v5392
      %5600 = vmatprep.subr.mxu0 %v5395
      %5601 = vmatpush1.msra.mxu0 %v5394
      %5602 = vmatprep.subr.mxu0 %v5397
      %5603 = vmatpush1.msra.mxu0 %v5396
      %5604 = vmatprep.subr.mxu0 %v5399
      %5605 = vmatpush1.msra.mxu0 %v5398
      %5606 = vmatprep.subr.mxu0 %v5401
      %5607 = vmatpush1.msra.mxu0 %v5400
      %5608 = vmatprep.subr.mxu0 %v5403
      %5609 = vmatpush1.msra.mxu0 %v5402
      %5610 = vmatprep.subr.mxu0 %v5405
      %5611 = vmatpush1.msra.mxu0 %v5404
      %5612 = vmatprep.subr.mxu0 %v5407
      %5613 = vmatpush1.msra.mxu0 %v5406
      %5614 = vmatprep.subr.mxu0 %v5409
      %5615 = vmatpush1.msra.mxu0 %v5408
      %5616 = vmatprep.subr.mxu0 %v5411
      %5617 = vmatpush1.msra.mxu0 %v5410
      %5618 = vmatprep.subr.mxu0 %v5413
      %5619 = vmatpush1.msra.mxu0 %v5412
      %5620 = vmatprep.subr.mxu0 %v5415
      %5621 = vmatpush1.msra.mxu0 %v5414
      %5622 = vmatprep.subr.mxu0 %v5417
      %5623 = vmatpush1.msra.mxu0 %v5416
      %5624 = vmatprep.subr.mxu0 %v5419
      %5625 = vmatpush1.msra.mxu0 %v5418
      %5626 = vmatprep.subr.mxu0 %v5421
      %5627 = vmatpush1.msra.mxu0 %v5420
      %5628 = vmatprep.subr.mxu0 %v5423
      %5629 = vmatpush1.msra.mxu0 %v5422
      %5630 = vmatprep.subr.mxu0 %v5425
      %5631 = vmatpush1.msra.mxu0 %v5424
      %5632 = vmatprep.subr.mxu0 %v5427
      %5633 = vmatpush1.msra.mxu0 %v5426
      %5634 = vmatprep.subr.mxu0 %v5429
      %5635 = vmatpush1.msra.mxu0 %v5428
      %5636 = vmatprep.subr.mxu0 %v5431
      %5637 = vmatpush1.msra.mxu0 %v5430
      %5638 = vmatprep.subr.mxu0 %v5433
      %5639 = vmatpush1.msra.mxu0 %v5432
      %5640 = vmatprep.subr.mxu0 %v5435
      %5641 = vmatpush1.msra.mxu0 %v5434
      %5642 = vmatprep.mubr.f32.mxu0 %v5363
      %5643 = vmatmul.mubr.f32.gmra.mrb[0].mxu0 %v5361
      %v5644 = vpop.f32.mrb[0].mxu0
      %v5645 = vadd.f32 %v5568, %v5644
      %v5646 = vpop.f32.mrb[0].mxu0
      %v5647 = vadd.f32 %v5570, %v5646
      %5648 = vmatprep.mubr.f32.mxu0 %v5369
      %5649 = vmatmul.mubr.f32.gmra.mrb[0].mxu0 %v5367
      %v5650 = vpop.f32.mrb[0].mxu0
      %v5651 = vadd.f32 %v5574, %v5650
      %v5652 = vpop.f32.mrb[0].mxu0
      %v5653 = vadd.f32 %v5576, %v5652
      %5654 = vdwg.mxu0
      %5655 = vmatprep.subr.mxu0 %v5291
      %5656 = vmatpush1.msra.mxu0 %v5290
      %5657 = vmatprep.subr.mxu0 %v5293
      %5658 = vmatpush1.msra.mxu0 %v5292
      %5659 = vmatprep.subr.mxu0 0.0
      %5660 = vmatpush1.msra.mxu0 0.0
      %5661 = vmatprep.subr.mxu0 0.0
      %5662 = vmatpush1.msra.mxu0 0.0
      %5663 = vmatprep.subr.mxu0 0.0
      %5664 = vmatpush1.msra.mxu0 0.0
      %5665 = vmatprep.subr.mxu0 0.0
      %5666 = vmatpush1.msra.mxu0 0.0
      %5667 = vmatprep.subr.mxu0 0.0
      %5668 = vmatpush1.msra.mxu0 0.0
      %5669 = vmatprep.subr.mxu0 0.0
      %5670 = vmatpush1.msra.mxu0 0.0
      %5671 = vmatprep.subr.mxu0 0.0
      %5672 = vmatpush1.msra.mxu0 0.0
      %5673 = vmatprep.subr.mxu0 0.0
      %5674 = vmatpush1.msra.mxu0 0.0
      %5675 = vmatprep.subr.mxu0 0.0
      %5676 = vmatpush1.msra.mxu0 0.0
      %5677 = vmatprep.subr.mxu0 0.0
      %5678 = vmatpush1.msra.mxu0 0.0
      %5679 = vmatprep.subr.mxu0 0.0
      %5680 = vmatpush1.msra.mxu0 0.0
      %5681 = vmatprep.subr.mxu0 0.0
      %5682 = vmatpush1.msra.mxu0 0.0
      %5683 = vmatprep.subr.mxu0 0.0
      %5684 = vmatpush1.msra.mxu0 0.0
      %5685 = vmatprep.subr.mxu0 0.0
      %5686 = vmatpush1.msra.mxu0 0.0
      %5687 = vmatprep.subr.mxu0 0.0
      %5688 = vmatpush1.msra.mxu0 0.0
      %5689 = vmatprep.subr.mxu0 0.0
      %5690 = vmatpush1.msra.mxu0 0.0
      %5691 = vmatprep.subr.mxu0 0.0
      %5692 = vmatpush1.msra.mxu0 0.0
      %5693 = vmatprep.subr.mxu0 0.0
      %5694 = vmatpush1.msra.mxu0 0.0
      %5695 = vmatprep.subr.mxu0 0.0
      %5696 = vmatpush1.msra.mxu0 0.0
      %5697 = vmatprep.subr.mxu0 0.0
      %5698 = vmatpush1.msra.mxu0 0.0
      %5699 = vmatprep.subr.mxu0 0.0
      %5700 = vmatpush1.msra.mxu0 0.0
      %5701 = vmatprep.subr.mxu0 0.0
      %5702 = vmatpush1.msra.mxu0 0.0
      %5703 = vmatprep.subr.mxu0 0.0
      %5704 = vmatpush1.msra.mxu0 0.0
      %5705 = vmatprep.subr.mxu0 0.0
      %5706 = vmatpush1.msra.mxu0 0.0
      %5707 = vmatprep.subr.mxu0 0.0
      %5708 = vmatpush1.msra.mxu0 0.0
      %5709 = vmatprep.subr.mxu0 0.0
      %5710 = vmatpush1.msra.mxu0 0.0
      %5711 = vmatprep.subr.mxu0 0.0
      %5712 = vmatpush1.msra.mxu0 0.0
      %5713 = vmatprep.subr.mxu0 0.0
      %5714 = vmatpush1.msra.mxu0 0.0
      %5715 = vmatprep.subr.mxu0 0.0
      %5716 = vmatpush1.msra.mxu0 0.0
      %5717 = vmatprep.subr.mxu0 0.0
      %5718 = vmatpush1.msra.mxu0 0.0
      %5719 = vmatprep.mubr.f32.mxu0 0.0
      %5720 = vmatmul.mubr.f32.gmra.mrb[0].mxu0 %v767
      %v5721 = vpop.f32.mrb[0].mxu0
      %v5722 = vadd.f32 0.0, %v5721
      %v5723 = vpop.f32.mrb[0].mxu0
      %v5724 = vadd.f32 0.0, %v5723
      %5725 = vmatprep.mubr.f32.mxu0 0.0
      %5726 = vmatmul.mubr.f32.gmra.mrb[0].mxu0 %v770
      %v5727 = vpop.f32.mrb[0].mxu0
      %v5728 = vadd.f32 0.0, %v5727
      %v5729 = vpop.f32.mrb[0].mxu0
      %v5730 = vadd.f32 0.0, %v5729
      %5731 = vdwg.mxu0
      %s5732 = scalar_lea.vmem %s2, 13312
      %v5733 = vld [vmem:[%s5732] sm:$0xff]
      %v5734 = vld [vmem:[%s5732 + $0x8] sm:$0xff]
      %v5735 = vld [vmem:[%s5732 + $0x10] sm:$0xff]
      %v5736 = vld [vmem:[%s5732 + $0x18] sm:$0xff]
      %v5737 = vld [vmem:[%s5732 + $0x20] sm:$0xff]
      %v5738 = vld [vmem:[%s5732 + $0x28] sm:$0xff]
      %v5739 = vld [vmem:[%s5732 + $0x30] sm:$0xff]
      %v5740 = vld [vmem:[%s5732 + $0x38] sm:$0xff]
      %v5741 = vld [vmem:[%s5732 + $0x40] sm:$0xff]
      %v5742 = vld [vmem:[%s5732 + $0x48] sm:$0xff]
      %v5743 = vld [vmem:[%s5732 + $0x50] sm:$0xff]
      %v5744 = vld [vmem:[%s5732 + $0x58] sm:$0xff]
      %v5745 = vld [vmem:[%s5732 + $0x60] sm:$0xff]
      %v5746 = vld [vmem:[%s5732 + $0x68] sm:$0xff]
      %v5747 = vld [vmem:[%s5732 + $0x70] sm:$0xff]
      %v5748 = vld [vmem:[%s5732 + $0x78] sm:$0xff]
      %v5749 = vld [vmem:[%s5732 + $0x80] sm:$0xff]
      %v5750 = vld [vmem:[%s5732 + $0x88] sm:$0xff]
      %v5751 = vld [vmem:[%s5732 + $0x90] sm:$0xff]
      %v5752 = vld [vmem:[%s5732 + $0x98] sm:$0xff]
      %v5753 = vld [vmem:[%s5732 + $0xa0] sm:$0xff]
      %v5754 = vld [vmem:[%s5732 + $0xa8] sm:$0xff]
      %v5755 = vld [vmem:[%s5732 + $0xb0] sm:$0xff]
      %v5756 = vld [vmem:[%s5732 + $0xb8] sm:$0xff]
      %v5757 = vld [vmem:[%s5732 + $0xc0] sm:$0xff]
      %v5758 = vld [vmem:[%s5732 + $0xc8] sm:$0xff]
      %v5759 = vld [vmem:[%s5732 + $0xd0] sm:$0xff]
      %v5760 = vld [vmem:[%s5732 + $0xd8] sm:$0xff]
      %v5761 = vld [vmem:[%s5732 + $0xe0] sm:$0xff]
      %v5762 = vld [vmem:[%s5732 + $0xe8] sm:$0xff]
      %v5763 = vld [vmem:[%s5732 + $0xf0] sm:$0xff]
      %v5764 = vld [vmem:[%s5732 + $0xf8] sm:$0xff]
      %v5765 = vld [vmem:[%s5732 + $0x100] sm:$0xff]
      %v5766 = vld [vmem:[%s5732 + $0x108] sm:$0xff]
      %v5767 = vld [vmem:[%s5732 + $0x110] sm:$0xff]
      %v5768 = vld [vmem:[%s5732 + $0x118] sm:$0xff]
      %v5769 = vld [vmem:[%s5732 + $0x120] sm:$0xff]
      %v5770 = vld [vmem:[%s5732 + $0x128] sm:$0xff]
      %v5771 = vld [vmem:[%s5732 + $0x130] sm:$0xff]
      %v5772 = vld [vmem:[%s5732 + $0x138] sm:$0xff]
      %v5773 = vld [vmem:[%s5732 + $0x140] sm:$0xff]
      %v5774 = vld [vmem:[%s5732 + $0x148] sm:$0xff]
      %v5775 = vld [vmem:[%s5732 + $0x150] sm:$0xff]
      %v5776 = vld [vmem:[%s5732 + $0x158] sm:$0xff]
      %v5777 = vld [vmem:[%s5732 + $0x160] sm:$0xff]
      %v5778 = vld [vmem:[%s5732 + $0x168] sm:$0xff]
      %v5779 = vld [vmem:[%s5732 + $0x170] sm:$0xff]
      %v5780 = vld [vmem:[%s5732 + $0x178] sm:$0xff]
      %v5781 = vld [vmem:[%s5732 + $0x180] sm:$0xff]
      %v5782 = vld [vmem:[%s5732 + $0x188] sm:$0xff]
      %v5783 = vld [vmem:[%s5732 + $0x190] sm:$0xff]
      %v5784 = vld [vmem:[%s5732 + $0x198] sm:$0xff]
      %v5785 = vld [vmem:[%s5732 + $0x1a0] sm:$0xff]
      %v5786 = vld [vmem:[%s5732 + $0x1a8] sm:$0xff]
      %v5787 = vld [vmem:[%s5732 + $0x1b0] sm:$0xff]
      %v5788 = vld [vmem:[%s5732 + $0x1b8] sm:$0xff]
      %v5789 = vld [vmem:[%s5732 + $0x1c0] sm:$0xff]
      %v5790 = vld [vmem:[%s5732 + $0x1c8] sm:$0xff]
      %v5791 = vld [vmem:[%s5732 + $0x1d0] sm:$0xff]
      %v5792 = vld [vmem:[%s5732 + $0x1d8] sm:$0xff]
      %v5793 = vld [vmem:[%s5732 + $0x1e0] sm:$0xff]
      %v5794 = vld [vmem:[%s5732 + $0x1e8] sm:$0xff]
      %v5795 = vld [vmem:[%s5732 + $0x1f0] sm:$0xff]
      %v5796 = vld [vmem:[%s5732 + $0x1f8] sm:$0xff]
      %5797 = vmatprep.subr.mxu0 %v5734
      %5798 = vmatpush1.msra.mxu0 %v5733
      %5799 = vmatprep.subr.mxu0 %v5736
      %5800 = vmatpush1.msra.mxu0 %v5735
      %5801 = vmatprep.subr.mxu0 %v5738
      %5802 = vmatpush1.msra.mxu0 %v5737
      %5803 = vmatprep.subr.mxu0 %v5740
      %5804 = vmatpush1.msra.mxu0 %v5739
      %5805 = vmatprep.subr.mxu0 %v5742
      %5806 = vmatpush1.msra.mxu0 %v5741
      %5807 = vmatprep.subr.mxu0 %v5744
      %5808 = vmatpush1.msra.mxu0 %v5743
      %5809 = vmatprep.subr.mxu0 %v5746
      %5810 = vmatpush1.msra.mxu0 %v5745
      %5811 = vmatprep.subr.mxu0 %v5748
      %5812 = vmatpush1.msra.mxu0 %v5747
      %5813 = vmatprep.subr.mxu0 %v5750
      %5814 = vmatpush1.msra.mxu0 %v5749
      %5815 = vmatprep.subr.mxu0 %v5752
      %5816 = vmatpush1.msra.mxu0 %v5751
      %5817 = vmatprep.subr.mxu0 %v5754
      %5818 = vmatpush1.msra.mxu0 %v5753
      %5819 = vmatprep.subr.mxu0 %v5756
      %5820 = vmatpush1.msra.mxu0 %v5755
      %5821 = vmatprep.subr.mxu0 %v5758
      %5822 = vmatpush1.msra.mxu0 %v5757
      %5823 = vmatprep.subr.mxu0 %v5760
      %5824 = vmatpush1.msra.mxu0 %v5759
      %5825 = vmatprep.subr.mxu0 %v5762
      %5826 = vmatpush1.msra.mxu0 %v5761
      %5827 = vmatprep.subr.mxu0 %v5764
      %5828 = vmatpush1.msra.mxu0 %v5763
      %5829 = vmatprep.subr.mxu0 %v5766
      %5830 = vmatpush1.msra.mxu0 %v5765
      %5831 = vmatprep.subr.mxu0 %v5768
      %5832 = vmatpush1.msra.mxu0 %v5767
      %5833 = vmatprep.subr.mxu0 %v5770
      %5834 = vmatpush1.msra.mxu0 %v5769
      %5835 = vmatprep.subr.mxu0 %v5772
      %5836 = vmatpush1.msra.mxu0 %v5771
      %5837 = vmatprep.subr.mxu0 %v5774
      %5838 = vmatpush1.msra.mxu0 %v5773
      %5839 = vmatprep.subr.mxu0 %v5776
      %5840 = vmatpush1.msra.mxu0 %v5775
      %5841 = vmatprep.subr.mxu0 %v5778
      %5842 = vmatpush1.msra.mxu0 %v5777
      %5843 = vmatprep.subr.mxu0 %v5780
      %5844 = vmatpush1.msra.mxu0 %v5779
      %5845 = vmatprep.subr.mxu0 %v5782
      %5846 = vmatpush1.msra.mxu0 %v5781
      %5847 = vmatprep.subr.mxu0 %v5784
      %5848 = vmatpush1.msra.mxu0 %v5783
      %5849 = vmatprep.subr.mxu0 %v5786
      %5850 = vmatpush1.msra.mxu0 %v5785
      %5851 = vmatprep.subr.mxu0 %v5788
      %5852 = vmatpush1.msra.mxu0 %v5787
      %5853 = vmatprep.subr.mxu0 %v5790
      %5854 = vmatpush1.msra.mxu0 %v5789
      %5855 = vmatprep.subr.mxu0 %v5792
      %5856 = vmatpush1.msra.mxu0 %v5791
      %5857 = vmatprep.subr.mxu0 %v5794
      %5858 = vmatpush1.msra.mxu0 %v5793
      %5859 = vmatprep.subr.mxu0 %v5796
      %5860 = vmatpush1.msra.mxu0 %v5795
      %5861 = vmatprep.mubr.f32.mxu0 %v5724
      %5862 = vmatmul.mubr.f32.gmra.mrb[0].mxu0 %v5722
      %v5863 = vpop.f32.mrb[0].mxu0
      %v5864 = vadd.f32 0.0, %v5863
      %v5865 = vpop.f32.mrb[0].mxu0
      %v5866 = vadd.f32 0.0, %v5865
      %5867 = vmatprep.mubr.f32.mxu0 %v5730
      %5868 = vmatmul.mubr.f32.gmra.mrb[0].mxu0 %v5728
      %v5869 = vpop.f32.mrb[0].mxu0
      %v5870 = vadd.f32 0.0, %v5869
      %v5871 = vpop.f32.mrb[0].mxu0
      %v5872 = vadd.f32 0.0, %v5871
      %5873 = vdwg.mxu0
      %v5874 = vadd.f32 %v5645, %v5864
      %v5875 = vadd.f32 %v5647, %v5866
      %v5876 = vadd.f32 %v5651, %v5870
      %v5877 = vadd.f32 %v5653, %v5872
      %s5878 = scalar_lea.vmem %s4, 16
      %v5879 = vld [vmem:[%s5878] sm:$0x3]
      %v5881 = vlaneseq
      %v5882 = vshrl.u32 %v5881, 7
      %v5883 = vsub.s32 0, %v5882
      %v5884 = vrot.slane %v5879, %v5883
      %v5885 = vlaneseq
      %v5886 = vshrl.u32 %v5885, 7
      %v5887 = vsub.s32 1, %v5886
      %v5888 = vrot.slane %v5879, %v5887
      %v5891 = vadd.f32 %v5874, %v5884
      %v5892 = vadd.f32 %v5875, %v5888
      %v5893 = vadd.f32 %v5876, %v5884
      %v5894 = vadd.f32 %v5877, %v5888
      %v5895 = vmax.f32 %v5891, 0.0
      %v5896 = vmax.f32 %v5892, 0.0
      %v5897 = vmax.f32 %v5893, 0.0
      %v5898 = vmax.f32 %v5894, 0.0
      %5899 = vmatprep.subr.mxu0 %v5896
      %5900 = vmatpush1.msra.mxu0 %v5895
      %5901 = vmatprep.subr.mxu0 %v5898
      %5902 = vmatpush1.msra.mxu0 %v5897
      %5903 = vmatprep.subr.mxu0 0.0
      %5904 = vmatpush1.msra.mxu0 0.0
      %5905 = vmatprep.subr.mxu0 0.0
      %5906 = vmatpush1.msra.mxu0 0.0
      %5907 = vmatprep.subr.mxu0 0.0
      %5908 = vmatpush1.msra.mxu0 0.0
      %5909 = vmatprep.subr.mxu0 0.0
      %5910 = vmatpush1.msra.mxu0 0.0
      %5911 = vmatprep.subr.mxu0 0.0
      %5912 = vmatpush1.msra.mxu0 0.0
      %5913 = vmatprep.subr.mxu0 0.0
      %5914 = vmatpush1.msra.mxu0 0.0
      %5915 = vmatprep.subr.mxu0 0.0
      %5916 = vmatpush1.msra.mxu0 0.0
      %5917 = vmatprep.subr.mxu0 0.0
      %5918 = vmatpush1.msra.mxu0 0.0
      %5919 = vmatprep.subr.mxu0 0.0
      %5920 = vmatpush1.msra.mxu0 0.0
      %5921 = vmatprep.subr.mxu0 0.0
      %5922 = vmatpush1.msra.mxu0 0.0
      %5923 = vmatprep.subr.mxu0 0.0
      %5924 = vmatpush1.msra.mxu0 0.0
      %5925 = vmatprep.subr.mxu0 0.0
      %5926 = vmatpush1.msra.mxu0 0.0
      %5927 = vmatprep.subr.mxu0 0.0
      %5928 = vmatpush1.msra.mxu0 0.0
      %5929 = vmatprep.subr.mxu0 0.0
      %5930 = vmatpush1.msra.mxu0 0.0
      %5931 = vmatprep.subr.mxu0 0.0
      %5932 = vmatpush1.msra.mxu0 0.0
      %5933 = vmatprep.subr.mxu0 0.0
      %5934 = vmatpush1.msra.mxu0 0.0
      %5935 = vmatprep.subr.mxu0 0.0
      %5936 = vmatpush1.msra.mxu0 0.0
      %5937 = vmatprep.subr.mxu0 0.0
      %5938 = vmatpush1.msra.mxu0 0.0
      %5939 = vmatprep.subr.mxu0 0.0
      %5940 = vmatpush1.msra.mxu0 0.0
      %5941 = vmatprep.subr.mxu0 0.0
      %5942 = vmatpush1.msra.mxu0 0.0
      %5943 = vmatprep.subr.mxu0 0.0
      %5944 = vmatpush1.msra.mxu0 0.0
      %5945 = vmatprep.subr.mxu0 0.0
      %5946 = vmatpush1.msra.mxu0 0.0
      %5947 = vmatprep.subr.mxu0 0.0
      %5948 = vmatpush1.msra.mxu0 0.0
      %5949 = vmatprep.subr.mxu0 0.0
      %5950 = vmatpush1.msra.mxu0 0.0
      %5951 = vmatprep.subr.mxu0 0.0
      %5952 = vmatpush1.msra.mxu0 0.0
      %5953 = vmatprep.subr.mxu0 0.0
      %5954 = vmatpush1.msra.mxu0 0.0
      %5955 = vmatprep.subr.mxu0 0.0
      %5956 = vmatpush1.msra.mxu0 0.0
      %5957 = vmatprep.subr.mxu0 0.0
      %5958 = vmatpush1.msra.mxu0 0.0
      %5959 = vmatprep.subr.mxu0 0.0
      %5960 = vmatpush1.msra.mxu0 0.0
      %5961 = vmatprep.subr.mxu0 0.0
      %5962 = vmatpush1.msra.mxu0 0.0
      %5963 = vmatprep.mubr.f32.mxu0 0.0
      %5964 = vmatmul.mubr.f32.gmra.mrb[0].mxu0 %v398
      %v5965 = vpop.f32.mrb[0].mxu0
      %v5966 = vadd.f32 0.0, %v5965
      %v5967 = vpop.f32.mrb[0].mxu0
      %v5968 = vadd.f32 0.0, %v5967
      %5969 = vmatprep.mubr.f32.mxu0 0.0
      %5970 = vmatmul.mubr.f32.gmra.mrb[0].mxu0 %v401
      %v5971 = vpop.f32.mrb[0].mxu0
      %v5972 = vadd.f32 0.0, %v5971
      %v5973 = vpop.f32.mrb[0].mxu0
      %v5974 = vadd.f32 0.0, %v5973
      %5975 = vdwg.mxu0
      %s5976 = scalar_lea.vmem %s2, 13824
      %v5977 = vld [vmem:[%s5976] sm:$0xff]
      %v5978 = vld [vmem:[%s5976 + $0x8] sm:$0xff]
      %v5979 = vld [vmem:[%s5976 + $0x10] sm:$0xff]
      %v5980 = vld [vmem:[%s5976 + $0x18] sm:$0xff]
      %v5981 = vld [vmem:[%s5976 + $0x20] sm:$0xff]
      %v5982 = vld [vmem:[%s5976 + $0x28] sm:$0xff]
      %v5983 = vld [vmem:[%s5976 + $0x30] sm:$0xff]
      %v5984 = vld [vmem:[%s5976 + $0x38] sm:$0xff]
      %v5985 = vld [vmem:[%s5976 + $0x40] sm:$0xff]
      %v5986 = vld [vmem:[%s5976 + $0x48] sm:$0xff]
      %v5987 = vld [vmem:[%s5976 + $0x50] sm:$0xff]
      %v5988 = vld [vmem:[%s5976 + $0x58] sm:$0xff]
      %v5989 = vld [vmem:[%s5976 + $0x60] sm:$0xff]
      %v5990 = vld [vmem:[%s5976 + $0x68] sm:$0xff]
      %v5991 = vld [vmem:[%s5976 + $0x70] sm:$0xff]
      %v5992 = vld [vmem:[%s5976 + $0x78] sm:$0xff]
      %v5993 = vld [vmem:[%s5976 + $0x80] sm:$0xff]
      %v5994 = vld [vmem:[%s5976 + $0x88] sm:$0xff]
      %v5995 = vld [vmem:[%s5976 + $0x90] sm:$0xff]
      %v5996 = vld [vmem:[%s5976 + $0x98] sm:$0xff]
      %v5997 = vld [vmem:[%s5976 + $0xa0] sm:$0xff]
      %v5998 = vld [vmem:[%s5976 + $0xa8] sm:$0xff]
      %v5999 = vld [vmem:[%s5976 + $0xb0] sm:$0xff]
      %v6000 = vld [vmem:[%s5976 + $0xb8] sm:$0xff]
      %v6001 = vld [vmem:[%s5976 + $0xc0] sm:$0xff]
      %v6002 = vld [vmem:[%s5976 + $0xc8] sm:$0xff]
      %v6003 = vld [vmem:[%s5976 + $0xd0] sm:$0xff]
      %v6004 = vld [vmem:[%s5976 + $0xd8] sm:$0xff]
      %v6005 = vld [vmem:[%s5976 + $0xe0] sm:$0xff]
      %v6006 = vld [vmem:[%s5976 + $0xe8] sm:$0xff]
      %v6007 = vld [vmem:[%s5976 + $0xf0] sm:$0xff]
      %v6008 = vld [vmem:[%s5976 + $0xf8] sm:$0xff]
      %v6009 = vld [vmem:[%s5976 + $0x100] sm:$0xff]
      %v6010 = vld [vmem:[%s5976 + $0x108] sm:$0xff]
      %v6011 = vld [vmem:[%s5976 + $0x110] sm:$0xff]
      %v6012 = vld [vmem:[%s5976 + $0x118] sm:$0xff]
      %v6013 = vld [vmem:[%s5976 + $0x120] sm:$0xff]
      %v6014 = vld [vmem:[%s5976 + $0x128] sm:$0xff]
      %v6015 = vld [vmem:[%s5976 + $0x130] sm:$0xff]
      %v6016 = vld [vmem:[%s5976 + $0x138] sm:$0xff]
      %v6017 = vld [vmem:[%s5976 + $0x140] sm:$0xff]
      %v6018 = vld [vmem:[%s5976 + $0x148] sm:$0xff]
      %v6019 = vld [vmem:[%s5976 + $0x150] sm:$0xff]
      %v6020 = vld [vmem:[%s5976 + $0x158] sm:$0xff]
      %v6021 = vld [vmem:[%s5976 + $0x160] sm:$0xff]
      %v6022 = vld [vmem:[%s5976 + $0x168] sm:$0xff]
      %v6023 = vld [vmem:[%s5976 + $0x170] sm:$0xff]
      %v6024 = vld [vmem:[%s5976 + $0x178] sm:$0xff]
      %v6025 = vld [vmem:[%s5976 + $0x180] sm:$0xff]
      %v6026 = vld [vmem:[%s5976 + $0x188] sm:$0xff]
      %v6027 = vld [vmem:[%s5976 + $0x190] sm:$0xff]
      %v6028 = vld [vmem:[%s5976 + $0x198] sm:$0xff]
      %v6029 = vld [vmem:[%s5976 + $0x1a0] sm:$0xff]
      %v6030 = vld [vmem:[%s5976 + $0x1a8] sm:$0xff]
      %v6031 = vld [vmem:[%s5976 + $0x1b0] sm:$0xff]
      %v6032 = vld [vmem:[%s5976 + $0x1b8] sm:$0xff]
      %v6033 = vld [vmem:[%s5976 + $0x1c0] sm:$0xff]
      %v6034 = vld [vmem:[%s5976 + $0x1c8] sm:$0xff]
      %v6035 = vld [vmem:[%s5976 + $0x1d0] sm:$0xff]
      %v6036 = vld [vmem:[%s5976 + $0x1d8] sm:$0xff]
      %v6037 = vld [vmem:[%s5976 + $0x1e0] sm:$0xff]
      %v6038 = vld [vmem:[%s5976 + $0x1e8] sm:$0xff]
      %v6039 = vld [vmem:[%s5976 + $0x1f0] sm:$0xff]
      %v6040 = vld [vmem:[%s5976 + $0x1f8] sm:$0xff]
      %s6041 = scalar_lea.vmem %s2, 14336
      %v6042 = vld [vmem:[%s6041] sm:$0xff]
      %v6043 = vld [vmem:[%s6041 + $0x8] sm:$0xff]
      %v6044 = vld [vmem:[%s6041 + $0x10] sm:$0xff]
      %v6045 = vld [vmem:[%s6041 + $0x18] sm:$0xff]
      %v6046 = vld [vmem:[%s6041 + $0x20] sm:$0xff]
      %v6047 = vld [vmem:[%s6041 + $0x28] sm:$0xff]
      %v6048 = vld [vmem:[%s6041 + $0x30] sm:$0xff]
      %v6049 = vld [vmem:[%s6041 + $0x38] sm:$0xff]
      %v6050 = vld [vmem:[%s6041 + $0x40] sm:$0xff]
      %v6051 = vld [vmem:[%s6041 + $0x48] sm:$0xff]
      %v6052 = vld [vmem:[%s6041 + $0x50] sm:$0xff]
      %v6053 = vld [vmem:[%s6041 + $0x58] sm:$0xff]
      %v6054 = vld [vmem:[%s6041 + $0x60] sm:$0xff]
      %v6055 = vld [vmem:[%s6041 + $0x68] sm:$0xff]
      %v6056 = vld [vmem:[%s6041 + $0x70] sm:$0xff]
      %v6057 = vld [vmem:[%s6041 + $0x78] sm:$0xff]
      %v6058 = vld [vmem:[%s6041 + $0x80] sm:$0xff]
      %v6059 = vld [vmem:[%s6041 + $0x88] sm:$0xff]
      %v6060 = vld [vmem:[%s6041 + $0x90] sm:$0xff]
      %v6061 = vld [vmem:[%s6041 + $0x98] sm:$0xff]
      %v6062 = vld [vmem:[%s6041 + $0xa0] sm:$0xff]
      %v6063 = vld [vmem:[%s6041 + $0xa8] sm:$0xff]
      %v6064 = vld [vmem:[%s6041 + $0xb0] sm:$0xff]
      %v6065 = vld [vmem:[%s6041 + $0xb8] sm:$0xff]
      %v6066 = vld [vmem:[%s6041 + $0xc0] sm:$0xff]
      %v6067 = vld [vmem:[%s6041 + $0xc8] sm:$0xff]
      %v6068 = vld [vmem:[%s6041 + $0xd0] sm:$0xff]
      %v6069 = vld [vmem:[%s6041 + $0xd8] sm:$0xff]
      %v6070 = vld [vmem:[%s6041 + $0xe0] sm:$0xff]
      %v6071 = vld [vmem:[%s6041 + $0xe8] sm:$0xff]
      %v6072 = vld [vmem:[%s6041 + $0xf0] sm:$0xff]
      %v6073 = vld [vmem:[%s6041 + $0xf8] sm:$0xff]
      %v6074 = vld [vmem:[%s6041 + $0x100] sm:$0xff]
      %v6075 = vld [vmem:[%s6041 + $0x108] sm:$0xff]
      %v6076 = vld [vmem:[%s6041 + $0x110] sm:$0xff]
      %v6077 = vld [vmem:[%s6041 + $0x118] sm:$0xff]
      %v6078 = vld [vmem:[%s6041 + $0x120] sm:$0xff]
      %v6079 = vld [vmem:[%s6041 + $0x128] sm:$0xff]
      %v6080 = vld [vmem:[%s6041 + $0x130] sm:$0xff]
      %v6081 = vld [vmem:[%s6041 + $0x138] sm:$0xff]
      %v6082 = vld [vmem:[%s6041 + $0x140] sm:$0xff]
      %v6083 = vld [vmem:[%s6041 + $0x148] sm:$0xff]
      %v6084 = vld [vmem:[%s6041 + $0x150] sm:$0xff]
      %v6085 = vld [vmem:[%s6041 + $0x158] sm:$0xff]
      %v6086 = vld [vmem:[%s6041 + $0x160] sm:$0xff]
      %v6087 = vld [vmem:[%s6041 + $0x168] sm:$0xff]
      %v6088 = vld [vmem:[%s6041 + $0x170] sm:$0xff]
      %v6089 = vld [vmem:[%s6041 + $0x178] sm:$0xff]
      %v6090 = vld [vmem:[%s6041 + $0x180] sm:$0xff]
      %v6091 = vld [vmem:[%s6041 + $0x188] sm:$0xff]
      %v6092 = vld [vmem:[%s6041 + $0x190] sm:$0xff]
      %v6093 = vld [vmem:[%s6041 + $0x198] sm:$0xff]
      %v6094 = vld [vmem:[%s6041 + $0x1a0] sm:$0xff]
      %v6095 = vld [vmem:[%s6041 + $0x1a8] sm:$0xff]
      %v6096 = vld [vmem:[%s6041 + $0x1b0] sm:$0xff]
      %v6097 = vld [vmem:[%s6041 + $0x1b8] sm:$0xff]
      %v6098 = vld [vmem:[%s6041 + $0x1c0] sm:$0xff]
      %v6099 = vld [vmem:[%s6041 + $0x1c8] sm:$0xff]
      %v6100 = vld [vmem:[%s6041 + $0x1d0] sm:$0xff]
      %v6101 = vld [vmem:[%s6041 + $0x1d8] sm:$0xff]
      %v6102 = vld [vmem:[%s6041 + $0x1e0] sm:$0xff]
      %v6103 = vld [vmem:[%s6041 + $0x1e8] sm:$0xff]
      %v6104 = vld [vmem:[%s6041 + $0x1f0] sm:$0xff]
      %v6105 = vld [vmem:[%s6041 + $0x1f8] sm:$0xff]
      %6106 = vmatprep.subr.mxu0 %v6043
      %6107 = vmatpush1.msra.mxu0 %v6042
      %6108 = vmatprep.subr.mxu0 %v6045
      %6109 = vmatpush1.msra.mxu0 %v6044
      %6110 = vmatprep.subr.mxu0 %v6047
      %6111 = vmatpush1.msra.mxu0 %v6046
      %6112 = vmatprep.subr.mxu0 %v6049
      %6113 = vmatpush1.msra.mxu0 %v6048
      %6114 = vmatprep.subr.mxu0 %v6051
      %6115 = vmatpush1.msra.mxu0 %v6050
      %6116 = vmatprep.subr.mxu0 %v6053
      %6117 = vmatpush1.msra.mxu0 %v6052
      %6118 = vmatprep.subr.mxu0 %v6055
      %6119 = vmatpush1.msra.mxu0 %v6054
      %6120 = vmatprep.subr.mxu0 %v6057
      %6121 = vmatpush1.msra.mxu0 %v6056
      %6122 = vmatprep.subr.mxu0 %v6059
      %6123 = vmatpush1.msra.mxu0 %v6058
      %6124 = vmatprep.subr.mxu0 %v6061
      %6125 = vmatpush1.msra.mxu0 %v6060
      %6126 = vmatprep.subr.mxu0 %v6063
      %6127 = vmatpush1.msra.mxu0 %v6062
      %6128 = vmatprep.subr.mxu0 %v6065
      %6129 = vmatpush1.msra.mxu0 %v6064
      %6130 = vmatprep.subr.mxu0 %v6067
      %6131 = vmatpush1.msra.mxu0 %v6066
      %6132 = vmatprep.subr.mxu0 %v6069
      %6133 = vmatpush1.msra.mxu0 %v6068
      %6134 = vmatprep.subr.mxu0 %v6071
      %6135 = vmatpush1.msra.mxu0 %v6070
      %6136 = vmatprep.subr.mxu0 %v6073
      %6137 = vmatpush1.msra.mxu0 %v6072
      %6138 = vmatprep.subr.mxu0 %v6075
      %6139 = vmatpush1.msra.mxu0 %v6074
      %6140 = vmatprep.subr.mxu0 %v6077
      %6141 = vmatpush1.msra.mxu0 %v6076
      %6142 = vmatprep.subr.mxu0 %v6079
      %6143 = vmatpush1.msra.mxu0 %v6078
      %6144 = vmatprep.subr.mxu0 %v6081
      %6145 = vmatpush1.msra.mxu0 %v6080
      %6146 = vmatprep.subr.mxu0 %v6083
      %6147 = vmatpush1.msra.mxu0 %v6082
      %6148 = vmatprep.subr.mxu0 %v6085
      %6149 = vmatpush1.msra.mxu0 %v6084
      %6150 = vmatprep.subr.mxu0 %v6087
      %6151 = vmatpush1.msra.mxu0 %v6086
      %6152 = vmatprep.subr.mxu0 %v6089
      %6153 = vmatpush1.msra.mxu0 %v6088
      %6154 = vmatprep.subr.mxu0 %v6091
      %6155 = vmatpush1.msra.mxu0 %v6090
      %6156 = vmatprep.subr.mxu0 %v6093
      %6157 = vmatpush1.msra.mxu0 %v6092
      %6158 = vmatprep.subr.mxu0 %v6095
      %6159 = vmatpush1.msra.mxu0 %v6094
      %6160 = vmatprep.subr.mxu0 %v6097
      %6161 = vmatpush1.msra.mxu0 %v6096
      %6162 = vmatprep.subr.mxu0 %v6099
      %6163 = vmatpush1.msra.mxu0 %v6098
      %6164 = vmatprep.subr.mxu0 %v6101
      %6165 = vmatpush1.msra.mxu0 %v6100
      %6166 = vmatprep.subr.mxu0 %v6103
      %6167 = vmatpush1.msra.mxu0 %v6102
      %6168 = vmatprep.subr.mxu0 %v6105
      %6169 = vmatpush1.msra.mxu0 %v6104
      %6170 = vmatprep.mubr.f32.mxu0 %v5896
      %6171 = vmatmul.mubr.f32.gmra.mrb[0].mxu0 %v5895
      %v6172 = vpop.f32.mrb[0].mxu0
      %v6173 = vadd.f32 0.0, %v6172
      %v6174 = vpop.f32.mrb[0].mxu0
      %v6175 = vadd.f32 0.0, %v6174
      %6176 = vmatprep.mubr.f32.mxu0 %v5898
      %6177 = vmatmul.mubr.f32.gmra.mrb[0].mxu0 %v5897
      %v6178 = vpop.f32.mrb[0].mxu0
      %v6179 = vadd.f32 0.0, %v6178
      %v6180 = vpop.f32.mrb[0].mxu0
      %v6181 = vadd.f32 0.0, %v6180
      %6182 = vdwg.mxu0
      %6183 = vmatprep.subr.mxu0 %v5978
      %6184 = vmatpush1.msra.mxu0 %v5977
      %6185 = vmatprep.subr.mxu0 %v5980
      %6186 = vmatpush1.msra.mxu0 %v5979
      %6187 = vmatprep.subr.mxu0 %v5982
      %6188 = vmatpush1.msra.mxu0 %v5981
      %6189 = vmatprep.subr.mxu0 %v5984
      %6190 = vmatpush1.msra.mxu0 %v5983
      %6191 = vmatprep.subr.mxu0 %v5986
      %6192 = vmatpush1.msra.mxu0 %v5985
      %6193 = vmatprep.subr.mxu0 %v5988
      %6194 = vmatpush1.msra.mxu0 %v5987
      %6195 = vmatprep.subr.mxu0 %v5990
      %6196 = vmatpush1.msra.mxu0 %v5989
      %6197 = vmatprep.subr.mxu0 %v5992
      %6198 = vmatpush1.msra.mxu0 %v5991
      %6199 = vmatprep.subr.mxu0 %v5994
      %6200 = vmatpush1.msra.mxu0 %v5993
      %6201 = vmatprep.subr.mxu0 %v5996
      %6202 = vmatpush1.msra.mxu0 %v5995
      %6203 = vmatprep.subr.mxu0 %v5998
      %6204 = vmatpush1.msra.mxu0 %v5997
      %6205 = vmatprep.subr.mxu0 %v6000
      %6206 = vmatpush1.msra.mxu0 %v5999
      %6207 = vmatprep.subr.mxu0 %v6002
      %6208 = vmatpush1.msra.mxu0 %v6001
      %6209 = vmatprep.subr.mxu0 %v6004
      %6210 = vmatpush1.msra.mxu0 %v6003
      %6211 = vmatprep.subr.mxu0 %v6006
      %6212 = vmatpush1.msra.mxu0 %v6005
      %6213 = vmatprep.subr.mxu0 %v6008
      %6214 = vmatpush1.msra.mxu0 %v6007
      %6215 = vmatprep.subr.mxu0 %v6010
      %6216 = vmatpush1.msra.mxu0 %v6009
      %6217 = vmatprep.subr.mxu0 %v6012
      %6218 = vmatpush1.msra.mxu0 %v6011
      %6219 = vmatprep.subr.mxu0 %v6014
      %6220 = vmatpush1.msra.mxu0 %v6013
      %6221 = vmatprep.subr.mxu0 %v6016
      %6222 = vmatpush1.msra.mxu0 %v6015
      %6223 = vmatprep.subr.mxu0 %v6018
      %6224 = vmatpush1.msra.mxu0 %v6017
      %6225 = vmatprep.subr.mxu0 %v6020
      %6226 = vmatpush1.msra.mxu0 %v6019
      %6227 = vmatprep.subr.mxu0 %v6022
      %6228 = vmatpush1.msra.mxu0 %v6021
      %6229 = vmatprep.subr.mxu0 %v6024
      %6230 = vmatpush1.msra.mxu0 %v6023
      %6231 = vmatprep.subr.mxu0 %v6026
      %6232 = vmatpush1.msra.mxu0 %v6025
      %6233 = vmatprep.subr.mxu0 %v6028
      %6234 = vmatpush1.msra.mxu0 %v6027
      %6235 = vmatprep.subr.mxu0 %v6030
      %6236 = vmatpush1.msra.mxu0 %v6029
      %6237 = vmatprep.subr.mxu0 %v6032
      %6238 = vmatpush1.msra.mxu0 %v6031
      %6239 = vmatprep.subr.mxu0 %v6034
      %6240 = vmatpush1.msra.mxu0 %v6033
      %6241 = vmatprep.subr.mxu0 %v6036
      %6242 = vmatpush1.msra.mxu0 %v6035
      %6243 = vmatprep.subr.mxu0 %v6038
      %6244 = vmatpush1.msra.mxu0 %v6037
      %6245 = vmatprep.subr.mxu0 %v6040
      %6246 = vmatpush1.msra.mxu0 %v6039
      %6247 = vmatprep.mubr.f32.mxu0 %v5968
      %6248 = vmatmul.mubr.f32.gmra.mrb[0].mxu0 %v5966
      %v6249 = vpop.f32.mrb[0].mxu0
      %v6250 = vadd.f32 %v6173, %v6249
      %v6251 = vpop.f32.mrb[0].mxu0
      %v6252 = vadd.f32 %v6175, %v6251
      %6253 = vmatprep.mubr.f32.mxu0 %v5974
      %6254 = vmatmul.mubr.f32.gmra.mrb[0].mxu0 %v5972
      %v6255 = vpop.f32.mrb[0].mxu0
      %v6256 = vadd.f32 %v6179, %v6255
      %v6257 = vpop.f32.mrb[0].mxu0
      %v6258 = vadd.f32 %v6181, %v6257
      %6259 = vdwg.mxu0
      %6260 = vmatprep.subr.mxu0 %v5896
      %6261 = vmatpush1.msra.mxu0 %v5895
      %6262 = vmatprep.subr.mxu0 %v5898
      %6263 = vmatpush1.msra.mxu0 %v5897
      %6264 = vmatprep.subr.mxu0 0.0
      %6265 = vmatpush1.msra.mxu0 0.0
      %6266 = vmatprep.subr.mxu0 0.0
      %6267 = vmatpush1.msra.mxu0 0.0
      %6268 = vmatprep.subr.mxu0 0.0
      %6269 = vmatpush1.msra.mxu0 0.0
      %6270 = vmatprep.subr.mxu0 0.0
      %6271 = vmatpush1.msra.mxu0 0.0
      %6272 = vmatprep.subr.mxu0 0.0
      %6273 = vmatpush1.msra.mxu0 0.0
      %6274 = vmatprep.subr.mxu0 0.0
      %6275 = vmatpush1.msra.mxu0 0.0
      %6276 = vmatprep.subr.mxu0 0.0
      %6277 = vmatpush1.msra.mxu0 0.0
      %6278 = vmatprep.subr.mxu0 0.0
      %6279 = vmatpush1.msra.mxu0 0.0
      %6280 = vmatprep.subr.mxu0 0.0
      %6281 = vmatpush1.msra.mxu0 0.0
      %6282 = vmatprep.subr.mxu0 0.0
      %6283 = vmatpush1.msra.mxu0 0.0
      %6284 = vmatprep.subr.mxu0 0.0
      %6285 = vmatpush1.msra.mxu0 0.0
      %6286 = vmatprep.subr.mxu0 0.0
      %6287 = vmatpush1.msra.mxu0 0.0
      %6288 = vmatprep.subr.mxu0 0.0
      %6289 = vmatpush1.msra.mxu0 0.0
      %6290 = vmatprep.subr.mxu0 0.0
      %6291 = vmatpush1.msra.mxu0 0.0
      %6292 = vmatprep.subr.mxu0 0.0
      %6293 = vmatpush1.msra.mxu0 0.0
      %6294 = vmatprep.subr.mxu0 0.0
      %6295 = vmatpush1.msra.mxu0 0.0
      %6296 = vmatprep.subr.mxu0 0.0
      %6297 = vmatpush1.msra.mxu0 0.0
      %6298 = vmatprep.subr.mxu0 0.0
      %6299 = vmatpush1.msra.mxu0 0.0
      %6300 = vmatprep.subr.mxu0 0.0
      %6301 = vmatpush1.msra.mxu0 0.0
      %6302 = vmatprep.subr.mxu0 0.0
      %6303 = vmatpush1.msra.mxu0 0.0
      %6304 = vmatprep.subr.mxu0 0.0
      %6305 = vmatpush1.msra.mxu0 0.0
      %6306 = vmatprep.subr.mxu0 0.0
      %6307 = vmatpush1.msra.mxu0 0.0
      %6308 = vmatprep.subr.mxu0 0.0
      %6309 = vmatpush1.msra.mxu0 0.0
      %6310 = vmatprep.subr.mxu0 0.0
      %6311 = vmatpush1.msra.mxu0 0.0
      %6312 = vmatprep.subr.mxu0 0.0
      %6313 = vmatpush1.msra.mxu0 0.0
      %6314 = vmatprep.subr.mxu0 0.0
      %6315 = vmatpush1.msra.mxu0 0.0
      %6316 = vmatprep.subr.mxu0 0.0
      %6317 = vmatpush1.msra.mxu0 0.0
      %6318 = vmatprep.subr.mxu0 0.0
      %6319 = vmatpush1.msra.mxu0 0.0
      %6320 = vmatprep.subr.mxu0 0.0
      %6321 = vmatpush1.msra.mxu0 0.0
      %6322 = vmatprep.subr.mxu0 0.0
      %6323 = vmatpush1.msra.mxu0 0.0
      %6324 = vmatprep.mubr.f32.mxu0 0.0
      %6325 = vmatmul.mubr.f32.gmra.mrb[0].mxu0 %v767
      %v6326 = vpop.f32.mrb[0].mxu0
      %v6327 = vadd.f32 0.0, %v6326
      %v6328 = vpop.f32.mrb[0].mxu0
      %v6329 = vadd.f32 0.0, %v6328
      %6330 = vmatprep.mubr.f32.mxu0 0.0
      %6331 = vmatmul.mubr.f32.gmra.mrb[0].mxu0 %v770
      %v6332 = vpop.f32.mrb[0].mxu0
      %v6333 = vadd.f32 0.0, %v6332
      %v6334 = vpop.f32.mrb[0].mxu0
      %v6335 = vadd.f32 0.0, %v6334
      %6336 = vdwg.mxu0
      %s6337 = scalar_lea.vmem %s2, 14848
      %v6338 = vld [vmem:[%s6337] sm:$0xff]
      %v6339 = vld [vmem:[%s6337 + $0x8] sm:$0xff]
      %v6340 = vld [vmem:[%s6337 + $0x10] sm:$0xff]
      %v6341 = vld [vmem:[%s6337 + $0x18] sm:$0xff]
      %v6342 = vld [vmem:[%s6337 + $0x20] sm:$0xff]
      %v6343 = vld [vmem:[%s6337 + $0x28] sm:$0xff]
      %v6344 = vld [vmem:[%s6337 + $0x30] sm:$0xff]
      %v6345 = vld [vmem:[%s6337 + $0x38] sm:$0xff]
      %v6346 = vld [vmem:[%s6337 + $0x40] sm:$0xff]
      %v6347 = vld [vmem:[%s6337 + $0x48] sm:$0xff]
      %v6348 = vld [vmem:[%s6337 + $0x50] sm:$0xff]
      %v6349 = vld [vmem:[%s6337 + $0x58] sm:$0xff]
      %v6350 = vld [vmem:[%s6337 + $0x60] sm:$0xff]
      %v6351 = vld [vmem:[%s6337 + $0x68] sm:$0xff]
      %v6352 = vld [vmem:[%s6337 + $0x70] sm:$0xff]
      %v6353 = vld [vmem:[%s6337 + $0x78] sm:$0xff]
      %v6354 = vld [vmem:[%s6337 + $0x80] sm:$0xff]
      %v6355 = vld [vmem:[%s6337 + $0x88] sm:$0xff]
      %v6356 = vld [vmem:[%s6337 + $0x90] sm:$0xff]
      %v6357 = vld [vmem:[%s6337 + $0x98] sm:$0xff]
      %v6358 = vld [vmem:[%s6337 + $0xa0] sm:$0xff]
      %v6359 = vld [vmem:[%s6337 + $0xa8] sm:$0xff]
      %v6360 = vld [vmem:[%s6337 + $0xb0] sm:$0xff]
      %v6361 = vld [vmem:[%s6337 + $0xb8] sm:$0xff]
      %v6362 = vld [vmem:[%s6337 + $0xc0] sm:$0xff]
      %v6363 = vld [vmem:[%s6337 + $0xc8] sm:$0xff]
      %v6364 = vld [vmem:[%s6337 + $0xd0] sm:$0xff]
      %v6365 = vld [vmem:[%s6337 + $0xd8] sm:$0xff]
      %v6366 = vld [vmem:[%s6337 + $0xe0] sm:$0xff]
      %v6367 = vld [vmem:[%s6337 + $0xe8] sm:$0xff]
      %v6368 = vld [vmem:[%s6337 + $0xf0] sm:$0xff]
      %v6369 = vld [vmem:[%s6337 + $0xf8] sm:$0xff]
      %v6370 = vld [vmem:[%s6337 + $0x100] sm:$0xff]
      %v6371 = vld [vmem:[%s6337 + $0x108] sm:$0xff]
      %v6372 = vld [vmem:[%s6337 + $0x110] sm:$0xff]
      %v6373 = vld [vmem:[%s6337 + $0x118] sm:$0xff]
      %v6374 = vld [vmem:[%s6337 + $0x120] sm:$0xff]
      %v6375 = vld [vmem:[%s6337 + $0x128] sm:$0xff]
      %v6376 = vld [vmem:[%s6337 + $0x130] sm:$0xff]
      %v6377 = vld [vmem:[%s6337 + $0x138] sm:$0xff]
      %v6378 = vld [vmem:[%s6337 + $0x140] sm:$0xff]
      %v6379 = vld [vmem:[%s6337 + $0x148] sm:$0xff]
      %v6380 = vld [vmem:[%s6337 + $0x150] sm:$0xff]
      %v6381 = vld [vmem:[%s6337 + $0x158] sm:$0xff]
      %v6382 = vld [vmem:[%s6337 + $0x160] sm:$0xff]
      %v6383 = vld [vmem:[%s6337 + $0x168] sm:$0xff]
      %v6384 = vld [vmem:[%s6337 + $0x170] sm:$0xff]
      %v6385 = vld [vmem:[%s6337 + $0x178] sm:$0xff]
      %v6386 = vld [vmem:[%s6337 + $0x180] sm:$0xff]
      %v6387 = vld [vmem:[%s6337 + $0x188] sm:$0xff]
      %v6388 = vld [vmem:[%s6337 + $0x190] sm:$0xff]
      %v6389 = vld [vmem:[%s6337 + $0x198] sm:$0xff]
      %v6390 = vld [vmem:[%s6337 + $0x1a0] sm:$0xff]
      %v6391 = vld [vmem:[%s6337 + $0x1a8] sm:$0xff]
      %v6392 = vld [vmem:[%s6337 + $0x1b0] sm:$0xff]
      %v6393 = vld [vmem:[%s6337 + $0x1b8] sm:$0xff]
      %v6394 = vld [vmem:[%s6337 + $0x1c0] sm:$0xff]
      %v6395 = vld [vmem:[%s6337 + $0x1c8] sm:$0xff]
      %v6396 = vld [vmem:[%s6337 + $0x1d0] sm:$0xff]
      %v6397 = vld [vmem:[%s6337 + $0x1d8] sm:$0xff]
      %v6398 = vld [vmem:[%s6337 + $0x1e0] sm:$0xff]
      %v6399 = vld [vmem:[%s6337 + $0x1e8] sm:$0xff]
      %v6400 = vld [vmem:[%s6337 + $0x1f0] sm:$0xff]
      %v6401 = vld [vmem:[%s6337 + $0x1f8] sm:$0xff]
      %6402 = vmatprep.subr.mxu0 %v6339
      %6403 = vmatpush1.msra.mxu0 %v6338
      %6404 = vmatprep.subr.mxu0 %v6341
      %6405 = vmatpush1.msra.mxu0 %v6340
      %6406 = vmatprep.subr.mxu0 %v6343
      %6407 = vmatpush1.msra.mxu0 %v6342
      %6408 = vmatprep.subr.mxu0 %v6345
      %6409 = vmatpush1.msra.mxu0 %v6344
      %6410 = vmatprep.subr.mxu0 %v6347
      %6411 = vmatpush1.msra.mxu0 %v6346
      %6412 = vmatprep.subr.mxu0 %v6349
      %6413 = vmatpush1.msra.mxu0 %v6348
      %6414 = vmatprep.subr.mxu0 %v6351
      %6415 = vmatpush1.msra.mxu0 %v6350
      %6416 = vmatprep.subr.mxu0 %v6353
      %6417 = vmatpush1.msra.mxu0 %v6352
      %6418 = vmatprep.subr.mxu0 %v6355
      %6419 = vmatpush1.msra.mxu0 %v6354
      %6420 = vmatprep.subr.mxu0 %v6357
      %6421 = vmatpush1.msra.mxu0 %v6356
      %6422 = vmatprep.subr.mxu0 %v6359
      %6423 = vmatpush1.msra.mxu0 %v6358
      %6424 = vmatprep.subr.mxu0 %v6361
      %6425 = vmatpush1.msra.mxu0 %v6360
      %6426 = vmatprep.subr.mxu0 %v6363
      %6427 = vmatpush1.msra.mxu0 %v6362
      %6428 = vmatprep.subr.mxu0 %v6365
      %6429 = vmatpush1.msra.mxu0 %v6364
      %6430 = vmatprep.subr.mxu0 %v6367
      %6431 = vmatpush1.msra.mxu0 %v6366
      %6432 = vmatprep.subr.mxu0 %v6369
      %6433 = vmatpush1.msra.mxu0 %v6368
      %6434 = vmatprep.subr.mxu0 %v6371
      %6435 = vmatpush1.msra.mxu0 %v6370
      %6436 = vmatprep.subr.mxu0 %v6373
      %6437 = vmatpush1.msra.mxu0 %v6372
      %6438 = vmatprep.subr.mxu0 %v6375
      %6439 = vmatpush1.msra.mxu0 %v6374
      %6440 = vmatprep.subr.mxu0 %v6377
      %6441 = vmatpush1.msra.mxu0 %v6376
      %6442 = vmatprep.subr.mxu0 %v6379
      %6443 = vmatpush1.msra.mxu0 %v6378
      %6444 = vmatprep.subr.mxu0 %v6381
      %6445 = vmatpush1.msra.mxu0 %v6380
      %6446 = vmatprep.subr.mxu0 %v6383
      %6447 = vmatpush1.msra.mxu0 %v6382
      %6448 = vmatprep.subr.mxu0 %v6385
      %6449 = vmatpush1.msra.mxu0 %v6384
      %6450 = vmatprep.subr.mxu0 %v6387
      %6451 = vmatpush1.msra.mxu0 %v6386
      %6452 = vmatprep.subr.mxu0 %v6389
      %6453 = vmatpush1.msra.mxu0 %v6388
      %6454 = vmatprep.subr.mxu0 %v6391
      %6455 = vmatpush1.msra.mxu0 %v6390
      %6456 = vmatprep.subr.mxu0 %v6393
      %6457 = vmatpush1.msra.mxu0 %v6392
      %6458 = vmatprep.subr.mxu0 %v6395
      %6459 = vmatpush1.msra.mxu0 %v6394
      %6460 = vmatprep.subr.mxu0 %v6397
      %6461 = vmatpush1.msra.mxu0 %v6396
      %6462 = vmatprep.subr.mxu0 %v6399
      %6463 = vmatpush1.msra.mxu0 %v6398
      %6464 = vmatprep.subr.mxu0 %v6401
      %6465 = vmatpush1.msra.mxu0 %v6400
      %6466 = vmatprep.mubr.f32.mxu0 %v6329
      %6467 = vmatmul.mubr.f32.gmra.mrb[0].mxu0 %v6327
      %v6468 = vpop.f32.mrb[0].mxu0
      %v6469 = vadd.f32 0.0, %v6468
      %v6470 = vpop.f32.mrb[0].mxu0
      %v6471 = vadd.f32 0.0, %v6470
      %6472 = vmatprep.mubr.f32.mxu0 %v6335
      %6473 = vmatmul.mubr.f32.gmra.mrb[0].mxu0 %v6333
      %v6474 = vpop.f32.mrb[0].mxu0
      %v6475 = vadd.f32 0.0, %v6474
      %v6476 = vpop.f32.mrb[0].mxu0
      %v6477 = vadd.f32 0.0, %v6476
      %6478 = vdwg.mxu0
      %v6479 = vadd.f32 %v6250, %v6469
      %v6480 = vadd.f32 %v6252, %v6471
      %v6481 = vadd.f32 %v6256, %v6475
      %v6482 = vadd.f32 %v6258, %v6477
      %s6483 = scalar_lea.vmem %s4, 18
      %v6484 = vld [vmem:[%s6483] sm:$0x3]
      %v6486 = vlaneseq
      %v6487 = vshrl.u32 %v6486, 7
      %v6488 = vsub.s32 0, %v6487
      %v6489 = vrot.slane %v6484, %v6488
      %v6490 = vlaneseq
      %v6491 = vshrl.u32 %v6490, 7
      %v6492 = vsub.s32 1, %v6491
      %v6493 = vrot.slane %v6484, %v6492
      %v6496 = vadd.f32 %v6479, %v6489
      %v6497 = vadd.f32 %v6480, %v6493
      %v6498 = vadd.f32 %v6481, %v6489
      %v6499 = vadd.f32 %v6482, %v6493
      %v6500 = vmax.f32 %v6496, 0.0
      %v6501 = vmax.f32 %v6497, 0.0
      %v6502 = vmax.f32 %v6498, 0.0
      %v6503 = vmax.f32 %v6499, 0.0
      %v6504 = vld [vmem:[%s3] sm:$0xff]
      %v6505 = vld [vmem:[%s3 + $0x8] sm:$0xff]
      %v6506 = vld [vmem:[%s3 + $0x10] sm:$0xff]
      %v6507 = vld [vmem:[%s3 + $0x18] sm:$0xff]
      %v6508 = vld [vmem:[%s3 + $0x20] sm:$0xff]
      %v6509 = vld [vmem:[%s3 + $0x28] sm:$0xff]
      %v6510 = vld [vmem:[%s3 + $0x30] sm:$0xff]
      %v6511 = vld [vmem:[%s3 + $0x38] sm:$0xff]
      %v6512 = vld [vmem:[%s3 + $0x40] sm:$0xff]
      %v6513 = vld [vmem:[%s3 + $0x48] sm:$0xff]
      %v6514 = vld [vmem:[%s3 + $0x50] sm:$0xff]
      %v6515 = vld [vmem:[%s3 + $0x58] sm:$0xff]
      %v6516 = vld [vmem:[%s3 + $0x60] sm:$0xff]
      %v6517 = vld [vmem:[%s3 + $0x68] sm:$0xff]
      %v6518 = vld [vmem:[%s3 + $0x70] sm:$0xff]
      %v6519 = vld [vmem:[%s3 + $0x78] sm:$0xff]
      %v6520 = vld [vmem:[%s3 + $0x80] sm:$0xff]
      %v6521 = vld [vmem:[%s3 + $0x88] sm:$0xff]
      %v6522 = vld [vmem:[%s3 + $0x90] sm:$0xff]
      %v6523 = vld [vmem:[%s3 + $0x98] sm:$0xff]
      %v6524 = vld [vmem:[%s3 + $0xa0] sm:$0xff]
      %v6525 = vld [vmem:[%s3 + $0xa8] sm:$0xff]
      %v6526 = vld [vmem:[%s3 + $0xb0] sm:$0xff]
      %v6527 = vld [vmem:[%s3 + $0xb8] sm:$0xff]
      %v6528 = vld [vmem:[%s3 + $0xc0] sm:$0xff]
      %v6529 = vld [vmem:[%s3 + $0xc8] sm:$0xff]
      %v6530 = vld [vmem:[%s3 + $0xd0] sm:$0xff]
      %v6531 = vld [vmem:[%s3 + $0xd8] sm:$0xff]
      %v6532 = vld [vmem:[%s3 + $0xe0] sm:$0xff]
      %v6533 = vld [vmem:[%s3 + $0xe8] sm:$0xff]
      %v6534 = vld [vmem:[%s3 + $0xf0] sm:$0xff]
      %v6535 = vld [vmem:[%s3 + $0xf8] sm:$0xff]
      %v6536 = vld [vmem:[%s3 + $0x100] sm:$0xff]
      %v6537 = vld [vmem:[%s3 + $0x108] sm:$0xff]
      %v6538 = vld [vmem:[%s3 + $0x110] sm:$0xff]
      %v6539 = vld [vmem:[%s3 + $0x118] sm:$0xff]
      %v6540 = vld [vmem:[%s3 + $0x120] sm:$0xff]
      %v6541 = vld [vmem:[%s3 + $0x128] sm:$0xff]
      %v6542 = vld [vmem:[%s3 + $0x130] sm:$0xff]
      %v6543 = vld [vmem:[%s3 + $0x138] sm:$0xff]
      %v6544 = vld [vmem:[%s3 + $0x140] sm:$0xff]
      %v6545 = vld [vmem:[%s3 + $0x148] sm:$0xff]
      %v6546 = vld [vmem:[%s3 + $0x150] sm:$0xff]
      %v6547 = vld [vmem:[%s3 + $0x158] sm:$0xff]
      %v6548 = vld [vmem:[%s3 + $0x160] sm:$0xff]
      %v6549 = vld [vmem:[%s3 + $0x168] sm:$0xff]
      %v6550 = vld [vmem:[%s3 + $0x170] sm:$0xff]
      %v6551 = vld [vmem:[%s3 + $0x178] sm:$0xff]
      %v6552 = vld [vmem:[%s3 + $0x180] sm:$0xff]
      %v6553 = vld [vmem:[%s3 + $0x188] sm:$0xff]
      %v6554 = vld [vmem:[%s3 + $0x190] sm:$0xff]
      %v6555 = vld [vmem:[%s3 + $0x198] sm:$0xff]
      %v6556 = vld [vmem:[%s3 + $0x1a0] sm:$0xff]
      %v6557 = vld [vmem:[%s3 + $0x1a8] sm:$0xff]
      %v6558 = vld [vmem:[%s3 + $0x1b0] sm:$0xff]
      %v6559 = vld [vmem:[%s3 + $0x1b8] sm:$0xff]
      %v6560 = vld [vmem:[%s3 + $0x1c0] sm:$0xff]
      %v6561 = vld [vmem:[%s3 + $0x1c8] sm:$0xff]
      %v6562 = vld [vmem:[%s3 + $0x1d0] sm:$0xff]
      %v6563 = vld [vmem:[%s3 + $0x1d8] sm:$0xff]
      %v6564 = vld [vmem:[%s3 + $0x1e0] sm:$0xff]
      %v6565 = vld [vmem:[%s3 + $0x1e8] sm:$0xff]
      %v6566 = vld [vmem:[%s3 + $0x1f0] sm:$0xff]
      %v6567 = vld [vmem:[%s3 + $0x1f8] sm:$0xff]
      %s6568 = scalar_lea.vmem %s4, 20
      %v6569 = vld [vmem:[%s6568] sm:$0x3]
      %v6571 = vlaneseq
      %v6572 = vshrl.u32 %v6571, 7
      %v6573 = vsub.s32 0, %v6572
      %v6574 = vrot.slane %v6569, %v6573
      %v6575 = vlaneseq
      %v6576 = vshrl.u32 %v6575, 7
      %v6577 = vsub.s32 1, %v6576
      %v6578 = vrot.slane %v6569, %v6577
      %6581 = vmatprep.subr.mxu0 %v6505
      %6582 = vmatpush1.msra.mxu0 %v6504
      %6583 = vmatprep.subr.mxu0 %v6507
      %6584 = vmatpush1.msra.mxu0 %v6506
      %6585 = vmatprep.subr.mxu0 %v6509
      %6586 = vmatpush1.msra.mxu0 %v6508
      %6587 = vmatprep.subr.mxu0 %v6511
      %6588 = vmatpush1.msra.mxu0 %v6510
      %6589 = vmatprep.subr.mxu0 %v6513
      %6590 = vmatpush1.msra.mxu0 %v6512
      %6591 = vmatprep.subr.mxu0 %v6515
      %6592 = vmatpush1.msra.mxu0 %v6514
      %6593 = vmatprep.subr.mxu0 %v6517
      %6594 = vmatpush1.msra.mxu0 %v6516
      %6595 = vmatprep.subr.mxu0 %v6519
      %6596 = vmatpush1.msra.mxu0 %v6518
      %6597 = vmatprep.subr.mxu0 %v6521
      %6598 = vmatpush1.msra.mxu0 %v6520
      %6599 = vmatprep.subr.mxu0 %v6523
      %6600 = vmatpush1.msra.mxu0 %v6522
      %6601 = vmatprep.subr.mxu0 %v6525
      %6602 = vmatpush1.msra.mxu0 %v6524
      %6603 = vmatprep.subr.mxu0 %v6527
      %6604 = vmatpush1.msra.mxu0 %v6526
      %6605 = vmatprep.subr.mxu0 %v6529
      %6606 = vmatpush1.msra.mxu0 %v6528
      %6607 = vmatprep.subr.mxu0 %v6531
      %6608 = vmatpush1.msra.mxu0 %v6530
      %6609 = vmatprep.subr.mxu0 %v6533
      %6610 = vmatpush1.msra.mxu0 %v6532
      %6611 = vmatprep.subr.mxu0 %v6535
      %6612 = vmatpush1.msra.mxu0 %v6534
      %6613 = vmatprep.subr.mxu0 %v6537
      %6614 = vmatpush1.msra.mxu0 %v6536
      %6615 = vmatprep.subr.mxu0 %v6539
      %6616 = vmatpush1.msra.mxu0 %v6538
      %6617 = vmatprep.subr.mxu0 %v6541
      %6618 = vmatpush1.msra.mxu0 %v6540
      %6619 = vmatprep.subr.mxu0 %v6543
      %6620 = vmatpush1.msra.mxu0 %v6542
      %6621 = vmatprep.subr.mxu0 %v6545
      %6622 = vmatpush1.msra.mxu0 %v6544
      %6623 = vmatprep.subr.mxu0 %v6547
      %6624 = vmatpush1.msra.mxu0 %v6546
      %6625 = vmatprep.subr.mxu0 %v6549
      %6626 = vmatpush1.msra.mxu0 %v6548
      %6627 = vmatprep.subr.mxu0 %v6551
      %6628 = vmatpush1.msra.mxu0 %v6550
      %6629 = vmatprep.subr.mxu0 %v6553
      %6630 = vmatpush1.msra.mxu0 %v6552
      %6631 = vmatprep.subr.mxu0 %v6555
      %6632 = vmatpush1.msra.mxu0 %v6554
      %6633 = vmatprep.subr.mxu0 %v6557
      %6634 = vmatpush1.msra.mxu0 %v6556
      %6635 = vmatprep.subr.mxu0 %v6559
      %6636 = vmatpush1.msra.mxu0 %v6558
      %6637 = vmatprep.subr.mxu0 %v6561
      %6638 = vmatpush1.msra.mxu0 %v6560
      %6639 = vmatprep.subr.mxu0 %v6563
      %6640 = vmatpush1.msra.mxu0 %v6562
      %6641 = vmatprep.subr.mxu0 %v6565
      %6642 = vmatpush1.msra.mxu0 %v6564
      %6643 = vmatprep.subr.mxu0 %v6567
      %6644 = vmatpush1.msra.mxu0 %v6566
      %6645 = vmatprep.mubr.f32.mxu0 %v6501
      %6646 = vmatmul.mubr.f32.gmra.mrb[0].mxu0 %v6500
      %v6647 = vpop.f32.mrb[0].mxu0
      %v6648 = vadd.f32 %v6574, %v6647
      %v6649 = vpop.f32.mrb[0].mxu0
      %v6650 = vadd.f32 %v6578, %v6649
      %6651 = vmatprep.mubr.f32.mxu0 %v6503
      %6652 = vmatmul.mubr.f32.gmra.mrb[0].mxu0 %v6502
      %v6653 = vpop.f32.mrb[0].mxu0
      %v6654 = vadd.f32 %v6574, %v6653
      %v6655 = vpop.f32.mrb[0].mxu0
      %v6656 = vadd.f32 %v6578, %v6655
      %6657 = vdwg.mxu0
      %v6658 = vadd.f32 %v6648, %v5290
      %v6659 = vadd.f32 %v6650, %v5291
      %v6660 = vadd.f32 %v6654, %v5292
      %v6661 = vadd.f32 %v6656, %v5293
      %v6662 = vmax.f32 %v6658, 0.0
      %v6663 = vmax.f32 %v6659, 0.0
      %v6664 = vmax.f32 %v6660, 0.0
      %v6665 = vmax.f32 %v6661, 0.0
      %v6666 = vadd.f32 %v6662, %v6664
      %v6667 = vrot.slane %v6666, 4
      %v6668 = vadd.f32 %v6666, %v6667
      %v6669 = vrot.slane %v6668, 2
      %v6670 = vadd.f32 %v6668, %v6669
      %v6671 = vrot.slane %v6670, 1
      %v6672 = vadd.f32 %v6670, %v6671
      %v6673 = vadd.f32 %v6663, %v6665
      %v6674 = vrot.slane %v6673, 4
      %v6675 = vadd.f32 %v6673, %v6674
      %v6676 = vrot.slane %v6675, 2
      %v6677 = vadd.f32 %v6675, %v6676
      %v6678 = vrot.slane %v6677, 1
      %v6679 = vadd.f32 %v6677, %v6678
      %v6680 = vld [vmem:[%s9] sm:$0xff]
      %v6681 = vld [vmem:[%s9 + $0x8] sm:$0xff]
      %v6682 = vld [vmem:[%s9 + $0x10] sm:$0xff]
      %v6683 = vld [vmem:[%s9 + $0x18] sm:$0xff]
      %v6684 = vld [vmem:[%s9 + $0x20] sm:$0xff]
      %v6685 = vld [vmem:[%s9 + $0x28] sm:$0xff]
      %v6686 = vld [vmem:[%s9 + $0x30] sm:$0xff]
      %v6687 = vld [vmem:[%s9 + $0x38] sm:$0xff]
      %v6688 = vld [vmem:[%s9 + $0x40] sm:$0xff]
      %v6689 = vld [vmem:[%s9 + $0x48] sm:$0xff]
      %v6690 = vld [vmem:[%s9 + $0x50] sm:$0xff]
      %v6691 = vld [vmem:[%s9 + $0x58] sm:$0xff]
      %v6692 = vld [vmem:[%s9 + $0x60] sm:$0xff]
      %v6693 = vld [vmem:[%s9 + $0x68] sm:$0xff]
      %v6694 = vld [vmem:[%s9 + $0x70] sm:$0xff]
      %v6695 = vld [vmem:[%s9 + $0x78] sm:$0xff]
      %v6696 = vld [vmem:[%s9 + $0x80] sm:$0xff]
      %v6697 = vld [vmem:[%s9 + $0x88] sm:$0xff]
      %v6698 = vld [vmem:[%s9 + $0x90] sm:$0xff]
      %v6699 = vld [vmem:[%s9 + $0x98] sm:$0xff]
      %v6700 = vld [vmem:[%s9 + $0xa0] sm:$0xff]
      %v6701 = vld [vmem:[%s9 + $0xa8] sm:$0xff]
      %v6702 = vld [vmem:[%s9 + $0xb0] sm:$0xff]
      %v6703 = vld [vmem:[%s9 + $0xb8] sm:$0xff]
      %v6704 = vld [vmem:[%s9 + $0xc0] sm:$0xff]
      %v6705 = vld [vmem:[%s9 + $0xc8] sm:$0xff]
      %v6706 = vld [vmem:[%s9 + $0xd0] sm:$0xff]
      %v6707 = vld [vmem:[%s9 + $0xd8] sm:$0xff]
      %v6708 = vld [vmem:[%s9 + $0xe0] sm:$0xff]
      %v6709 = vld [vmem:[%s9 + $0xe8] sm:$0xff]
      %v6710 = vld [vmem:[%s9 + $0xf0] sm:$0xff]
      %v6711 = vld [vmem:[%s9 + $0xf8] sm:$0xff]
      %6712 = vmatprep.subr.mxu0 0.0
      %6713 = vmatpush1.msra.mxu0 %v6680
      %6714 = vmatprep.subr.mxu0 0.0
      %6715 = vmatpush1.msra.mxu0 %v6681
      %6716 = vmatprep.subr.mxu0 0.0
      %6717 = vmatpush1.msra.mxu0 %v6682
      %6718 = vmatprep.subr.mxu0 0.0
      %6719 = vmatpush1.msra.mxu0 %v6683
      %6720 = vmatprep.subr.mxu0 0.0
      %6721 = vmatpush1.msra.mxu0 %v6684
      %6722 = vmatprep.subr.mxu0 0.0
      %6723 = vmatpush1.msra.mxu0 %v6685
      %6724 = vmatprep.subr.mxu0 0.0
      %6725 = vmatpush1.msra.mxu0 %v6686
      %6726 = vmatprep.subr.mxu0 0.0
      %6727 = vmatpush1.msra.mxu0 %v6687
      %6728 = vmatprep.subr.mxu0 0.0
      %6729 = vmatpush1.msra.mxu0 %v6688
      %6730 = vmatprep.subr.mxu0 0.0
      %6731 = vmatpush1.msra.mxu0 %v6689
      %6732 = vmatprep.subr.mxu0 0.0
      %6733 = vmatpush1.msra.mxu0 %v6690
      %6734 = vmatprep.subr.mxu0 0.0
      %6735 = vmatpush1.msra.mxu0 %v6691
      %6736 = vmatprep.subr.mxu0 0.0
      %6737 = vmatpush1.msra.mxu0 %v6692
      %6738 = vmatprep.subr.mxu0 0.0
      %6739 = vmatpush1.msra.mxu0 %v6693
      %6740 = vmatprep.subr.mxu0 0.0
      %6741 = vmatpush1.msra.mxu0 %v6694
      %6742 = vmatprep.subr.mxu0 0.0
      %6743 = vmatpush1.msra.mxu0 %v6695
      %6744 = vmatprep.subr.mxu0 0.0
      %6745 = vmatpush1.msra.mxu0 %v6696
      %6746 = vmatprep.subr.mxu0 0.0
      %6747 = vmatpush1.msra.mxu0 %v6697
      %6748 = vmatprep.subr.mxu0 0.0
      %6749 = vmatpush1.msra.mxu0 %v6698
      %6750 = vmatprep.subr.mxu0 0.0
      %6751 = vmatpush1.msra.mxu0 %v6699
      %6752 = vmatprep.subr.mxu0 0.0
      %6753 = vmatpush1.msra.mxu0 %v6700
      %6754 = vmatprep.subr.mxu0 0.0
      %6755 = vmatpush1.msra.mxu0 %v6701
      %6756 = vmatprep.subr.mxu0 0.0
      %6757 = vmatpush1.msra.mxu0 %v6702
      %6758 = vmatprep.subr.mxu0 0.0
      %6759 = vmatpush1.msra.mxu0 %v6703
      %6760 = vmatprep.subr.mxu0 0.0
      %6761 = vmatpush1.msra.mxu0 %v6704
      %6762 = vmatprep.subr.mxu0 0.0
      %6763 = vmatpush1.msra.mxu0 %v6705
      %6764 = vmatprep.subr.mxu0 0.0
      %6765 = vmatpush1.msra.mxu0 %v6706
      %6766 = vmatprep.subr.mxu0 0.0
      %6767 = vmatpush1.msra.mxu0 %v6707
      %6768 = vmatprep.subr.mxu0 0.0
      %6769 = vmatpush1.msra.mxu0 %v6708
      %6770 = vmatprep.subr.mxu0 0.0
      %6771 = vmatpush1.msra.mxu0 %v6709
      %6772 = vmatprep.subr.mxu0 0.0
      %6773 = vmatpush1.msra.mxu0 %v6710
      %6774 = vmatprep.subr.mxu0 0.0
      %6775 = vmatpush1.msra.mxu0 %v6711
      %6776 = vmatprep.mubr.f32.mxu0 %v6679
      %6777 = vmatmul.mubr.f32.gmra.mrb[0].mxu0 %v6672
      %v6778 = vpop.f32.mrb[0].mxu0
      %v6779 = vadd.f32 0.0, %v6778
      %v6780 = vpop.f32.mrb[0].mxu0
      %6781 = vdwg.mxu0
      %v6782 = vmul.f32 %v6779, 0.00390625
      %v6783 = vld [vmem:[%s5] sm:$0xff]
      %v6784 = vld [vmem:[%s5 + $0x8] sm:$0xff]
      %v6785 = vld [vmem:[#allocation2] sm:$0x1]
      %v6787 = vsel %vm396, %v6782, 0
      %6789 = vmatprep.subr.mxu0 0.0
      %6790 = vmatpush1.msra.mxu0 %v6783
      %6791 = vmatprep.subr.mxu0 0.0
      %6792 = vmatpush1.msra.mxu0 %v6784
      %6793 = vmatprep.subr.mxu0 0.0
      %6794 = vmatpush1.msra.mxu0 0.0
      %6795 = vmatprep.subr.mxu0 0.0
      %6796 = vmatpush1.msra.mxu0 0.0
      %6797 = vmatprep.subr.mxu0 0.0
      %6798 = vmatpush1.msra.mxu0 0.0
      %6799 = vmatprep.subr.mxu0 0.0
      %6800 = vmatpush1.msra.mxu0 0.0
      %6801 = vmatprep.subr.mxu0 0.0
      %6802 = vmatpush1.msra.mxu0 0.0
      %6803 = vmatprep.subr.mxu0 0.0
      %6804 = vmatpush1.msra.mxu0 0.0
      %6805 = vmatprep.subr.mxu0 0.0
      %6806 = vmatpush1.msra.mxu0 0.0
      %6807 = vmatprep.subr.mxu0 0.0
      %6808 = vmatpush1.msra.mxu0 0.0
      %6809 = vmatprep.subr.mxu0 0.0
      %6810 = vmatpush1.msra.mxu0 0.0
      %6811 = vmatprep.subr.mxu0 0.0
      %6812 = vmatpush1.msra.mxu0 0.0
      %6813 = vmatprep.subr.mxu0 0.0
      %6814 = vmatpush1.msra.mxu0 0.0
      %6815 = vmatprep.subr.mxu0 0.0
      %6816 = vmatpush1.msra.mxu0 0.0
      %6817 = vmatprep.subr.mxu0 0.0
      %6818 = vmatpush1.msra.mxu0 0.0
      %6819 = vmatprep.subr.mxu0 0.0
      %6820 = vmatpush1.msra.mxu0 0.0
      %6821 = vmatprep.subr.mxu0 0.0
      %6822 = vmatpush1.msra.mxu0 0.0
      %6823 = vmatprep.subr.mxu0 0.0
      %6824 = vmatpush1.msra.mxu0 0.0
      %6825 = vmatprep.subr.mxu0 0.0
      %6826 = vmatpush1.msra.mxu0 0.0
      %6827 = vmatprep.subr.mxu0 0.0
      %6828 = vmatpush1.msra.mxu0 0.0
      %6829 = vmatprep.subr.mxu0 0.0
      %6830 = vmatpush1.msra.mxu0 0.0
      %6831 = vmatprep.subr.mxu0 0.0
      %6832 = vmatpush1.msra.mxu0 0.0
      %6833 = vmatprep.subr.mxu0 0.0
      %6834 = vmatpush1.msra.mxu0 0.0
      %6835 = vmatprep.subr.mxu0 0.0
      %6836 = vmatpush1.msra.mxu0 0.0
      %6837 = vmatprep.subr.mxu0 0.0
      %6838 = vmatpush1.msra.mxu0 0.0
      %6839 = vmatprep.subr.mxu0 0.0
      %6840 = vmatpush1.msra.mxu0 0.0
      %6841 = vmatprep.subr.mxu0 0.0
      %6842 = vmatpush1.msra.mxu0 0.0
      %6843 = vmatprep.subr.mxu0 0.0
      %6844 = vmatpush1.msra.mxu0 0.0
      %6845 = vmatprep.subr.mxu0 0.0
      %6846 = vmatpush1.msra.mxu0 0.0
      %6847 = vmatprep.subr.mxu0 0.0
      %6848 = vmatpush1.msra.mxu0 0.0
      %6849 = vmatprep.subr.mxu0 0.0
      %6850 = vmatpush1.msra.mxu0 0.0
      %6851 = vmatprep.subr.mxu0 0.0
      %6852 = vmatpush1.msra.mxu0 0.0
      %6853 = vmatprep.mubr.f32.mxu0 0.0
      %6854 = vmatmul.mubr.f32.gmra.mrb[0].mxu0 %v6787
      %v6855 = vpop.f32.mrb[0].mxu0
      %v6856 = vadd.f32 %v6785, %v6855
      %v6857 = vpop.f32.mrb[0].mxu0
      %6858 = vdwg.mxu0
      %v6859 = vmax.f32 %v6856, 0.0
      %v6860 = vld [vmem:[%s7] sm:$0x1]
      %v6861 = vld [vmem:[%s8] sm:$0x1]
      %vm6862 = vcmask 7168
      %v6864 = vsel %vm6862, %v6859, 0
      %vm6866 = vcmask 1040384
      %v6868 = vsel %vm6866, %v6860, 0
      %6870 = vmatprep.subr.mxu0 0.0
      %6871 = vmatpush1.msra.mxu0 %v6868
      %6872 = vmatprep.subr.mxu0 0.0
      %6873 = vmatpush1.msra.mxu0 0.0
      %6874 = vmatprep.subr.mxu0 0.0
      %6875 = vmatpush1.msra.mxu0 0.0
      %6876 = vmatprep.subr.mxu0 0.0
      %6877 = vmatpush1.msra.mxu0 0.0
      %6878 = vmatprep.subr.mxu0 0.0
      %6879 = vmatpush1.msra.mxu0 0.0
      %6880 = vmatprep.subr.mxu0 0.0
      %6881 = vmatpush1.msra.mxu0 0.0
      %6882 = vmatprep.subr.mxu0 0.0
      %6883 = vmatpush1.msra.mxu0 0.0
      %6884 = vmatprep.subr.mxu0 0.0
      %6885 = vmatpush1.msra.mxu0 0.0
      %6886 = vmatprep.subr.mxu0 0.0
      %6887 = vmatpush1.msra.mxu0 0.0
      %6888 = vmatprep.subr.mxu0 0.0
      %6889 = vmatpush1.msra.mxu0 0.0
      %6890 = vmatprep.subr.mxu0 0.0
      %6891 = vmatpush1.msra.mxu0 0.0
      %6892 = vmatprep.subr.mxu0 0.0
      %6893 = vmatpush1.msra.mxu0 0.0
      %6894 = vmatprep.subr.mxu0 0.0
      %6895 = vmatpush1.msra.mxu0 0.0
      %6896 = vmatprep.subr.mxu0 0.0
      %6897 = vmatpush1.msra.mxu0 0.0
      %6898 = vmatprep.subr.mxu0 0.0
      %6899 = vmatpush1.msra.mxu0 0.0
      %6900 = vmatprep.subr.mxu0 0.0
      %6901 = vmatpush1.msra.mxu0 0.0
      %6902 = vmatprep.subr.mxu0 0.0
      %6903 = vmatpush1.msra.mxu0 0.0
      %6904 = vmatprep.subr.mxu0 0.0
      %6905 = vmatpush1.msra.mxu0 0.0
      %6906 = vmatprep.subr.mxu0 0.0
      %6907 = vmatpush1.msra.mxu0 0.0
      %6908 = vmatprep.subr.mxu0 0.0
      %6909 = vmatpush1.msra.mxu0 0.0
      %6910 = vmatprep.subr.mxu0 0.0
      %6911 = vmatpush1.msra.mxu0 0.0
      %6912 = vmatprep.subr.mxu0 0.0
      %6913 = vmatpush1.msra.mxu0 0.0
      %6914 = vmatprep.subr.mxu0 0.0
      %6915 = vmatpush1.msra.mxu0 0.0
      %6916 = vmatprep.subr.mxu0 0.0
      %6917 = vmatpush1.msra.mxu0 0.0
      %6918 = vmatprep.subr.mxu0 0.0
      %6919 = vmatpush1.msra.mxu0 0.0
      %6920 = vmatprep.subr.mxu0 0.0
      %6921 = vmatpush1.msra.mxu0 0.0
      %6922 = vmatprep.subr.mxu0 0.0
      %6923 = vmatpush1.msra.mxu0 0.0
      %6924 = vmatprep.subr.mxu0 0.0
      %6925 = vmatpush1.msra.mxu0 0.0
      %6926 = vmatprep.subr.mxu0 0.0
      %6927 = vmatpush1.msra.mxu0 0.0
      %6928 = vmatprep.subr.mxu0 0.0
      %6929 = vmatpush1.msra.mxu0 0.0
      %6930 = vmatprep.subr.mxu0 0.0
      %6931 = vmatpush1.msra.mxu0 0.0
      %6932 = vmatprep.subr.mxu0 0.0
      %6933 = vmatpush1.msra.mxu0 0.0
      %6934 = vmatprep.mubr.f32.mxu0 0.0
      %6935 = vmatmul.mubr.f32.gmra.mrb[0].mxu0 %v6864
      %v6936 = vpop.f32.mrb[0].mxu0
      %v6937 = vadd.f32 %v6861, %v6936
      %v6938 = vpop.f32.mrb[0].mxu0
      %6939 = vdwg.mxu0
      %v6940 = vxor.u32 %v6937, 2147483648
      %v6941 = vmul.f32 %v6940, 1.442695
      %v6942 = vpow.pop %v6941
      %v6943 = vadd.f32 %v6942, 1.0
      %v6944 = vrcp.pop %v6943
      %v6945 = vmul.f32 1.0, %v6944
      %v6946 = vld [vmem:[%s10] sm:$0xff]
      %v6947 = vld [vmem:[%s10 + $0x8] sm:$0xff]
      %v6948 = vld [vmem:[%s10 + $0x10] sm:$0xff]
      %v6949 = vld [vmem:[%s10 + $0x18] sm:$0xff]
      %v6951 = vsel %vm396, %v6945, 0
      %6953 = vmatprep.subr.mxu0 %v6947
      %6954 = vmatpush1.msra.mxu0 %v6946
      %6955 = vmatprep.subr.mxu0 %v6949
      %6956 = vmatpush1.msra.mxu0 %v6948
      %6957 = vmatprep.subr.mxu0 0.0
      %6958 = vmatpush1.msra.mxu0 0.0
      %6959 = vmatprep.subr.mxu0 0.0
      %6960 = vmatpush1.msra.mxu0 0.0
      %6961 = vmatprep.subr.mxu0 0.0
      %6962 = vmatpush1.msra.mxu0 0.0
      %6963 = vmatprep.subr.mxu0 0.0
      %6964 = vmatpush1.msra.mxu0 0.0
      %6965 = vmatprep.subr.mxu0 0.0
      %6966 = vmatpush1.msra.mxu0 0.0
      %6967 = vmatprep.subr.mxu0 0.0
      %6968 = vmatpush1.msra.mxu0 0.0
      %6969 = vmatprep.subr.mxu0 0.0
      %6970 = vmatpush1.msra.mxu0 0.0
      %6971 = vmatprep.subr.mxu0 0.0
      %6972 = vmatpush1.msra.mxu0 0.0
      %6973 = vmatprep.subr.mxu0 0.0
      %6974 = vmatpush1.msra.mxu0 0.0
      %6975 = vmatprep.subr.mxu0 0.0
      %6976 = vmatpush1.msra.mxu0 0.0
      %6977 = vmatprep.subr.mxu0 0.0
      %6978 = vmatpush1.msra.mxu0 0.0
      %6979 = vmatprep.subr.mxu0 0.0
      %6980 = vmatpush1.msra.mxu0 0.0
      %6981 = vmatprep.subr.mxu0 0.0
      %6982 = vmatpush1.msra.mxu0 0.0
      %6983 = vmatprep.subr.mxu0 0.0
      %6984 = vmatpush1.msra.mxu0 0.0
      %6985 = vmatprep.subr.mxu0 0.0
      %6986 = vmatpush1.msra.mxu0 0.0
      %6987 = vmatprep.subr.mxu0 0.0
      %6988 = vmatpush1.msra.mxu0 0.0
      %6989 = vmatprep.subr.mxu0 0.0
      %6990 = vmatpush1.msra.mxu0 0.0
      %6991 = vmatprep.subr.mxu0 0.0
      %6992 = vmatpush1.msra.mxu0 0.0
      %6993 = vmatprep.subr.mxu0 0.0
      %6994 = vmatpush1.msra.mxu0 0.0
      %6995 = vmatprep.subr.mxu0 0.0
      %6996 = vmatpush1.msra.mxu0 0.0
      %6997 = vmatprep.subr.mxu0 0.0
      %6998 = vmatpush1.msra.mxu0 0.0
      %6999 = vmatprep.subr.mxu0 0.0
      %7000 = vmatpush1.msra.mxu0 0.0
      %7001 = vmatprep.subr.mxu0 0.0
      %7002 = vmatpush1.msra.mxu0 0.0
      %7003 = vmatprep.subr.mxu0 0.0
      %7004 = vmatpush1.msra.mxu0 0.0
      %7005 = vmatprep.subr.mxu0 0.0
      %7006 = vmatpush1.msra.mxu0 0.0
      %7007 = vmatprep.subr.mxu0 0.0
      %7008 = vmatpush1.msra.mxu0 0.0
      %7009 = vmatprep.subr.mxu0 0.0
      %7010 = vmatpush1.msra.mxu0 0.0
      %7011 = vmatprep.subr.mxu0 0.0
      %7012 = vmatpush1.msra.mxu0 0.0
      %7013 = vmatprep.subr.mxu0 0.0
      %7014 = vmatpush1.msra.mxu0 0.0
      %7015 = vmatprep.subr.mxu0 0.0
      %7016 = vmatpush1.msra.mxu0 0.0
      %7017 = vmatprep.mubr.f32.mxu0 0.0
      %7018 = vmatmul.mubr.f32.gmra.mrb[0].mxu0 %v6951
      %v7019 = vpop.f32.mrb[0].mxu0
      %v7020 = vadd.f32 0.0, %v7019
      %v7021 = vpop.f32.mrb[0].mxu0
      %v7022 = vadd.f32 0.0, %v7021
      %7023 = vdwg.mxu0
      %v7024 = vlaneseq
      %v7025 = vshrl.u32 %v7024, 7
      %v7026 = vsub.s32 0, %v7025
      %v7027 = vrot.slane %v7020, %v7026
      %v7028 = vlaneseq
      %v7029 = vshrl.u32 %v7028, 7
      %v7030 = vsub.s32 0, %v7029
      %v7031 = vrot.slane %v7022, %v7030
      %v7032 = vmul.f32 %v6662, %v7027
      %v7033 = vmul.f32 %v6663, %v7031
      %v7034 = vmul.f32 %v6664, %v7027
      %v7035 = vmul.f32 %v6665, %v7031
      %7036 = vst [vmem:[%s388] sm:$0xff] %v7032
      %7037 = vst [vmem:[%s388 + $0x8] sm:$0xff] %v7033
      %7038 = vst [vmem:[%s388 + $0x10] sm:$0xff] %v7034
      %7039 = vst [vmem:[%s388 + $0x18] sm:$0xff] %v7035
      %p7040 = scmp.lt.s32.totalorder %s24, 1
      %s7041 = scalar_select %p7040, %s24, 1
      %s7042 = smul.addr %s7041, 4
      %s7043 = smul.addr %s7042, 8
      %s7044 = scalar_lea.vmem %s11, %s7043
      // Predicated region
      $region65: #{block_forward.1} parent=63 // pred_check
        %p7045 = pneg %p278
      $region66: #{block_forward.1} parent=63 // pred_check_branch
        %7047 = sbr.rel (%p7045) target = $region68
      $region67: #{block_forward.1} parent=63 // pred_region
        _
      $region68: #{block_forward.1} parent=63 // pred_fallthru
        _
    $region64: #{block_forward.1} parent=5 // pred_fallthru
      _
    %p7048 = scmp.le.s32.totalorder 2, %s19
    // Predicated region
    $region69: #{block_forward.1} parent=5 // pred_check
      %p7049 = pneg %p7048
    $region70: #{block_forward.1} parent=5 // pred_check_branch
      %7051 = sbr.rel (%p7049) target = $region72
    $region71: #{block_forward.1} parent=5 // pred_region
      %s7052 = ssub.s32 %s19, 2
      // Predicated region
      $region73: #{block_forward.1} parent=71 // pred_check
        %p7053 = pneg %p284
      $region74: #{block_forward.1} parent=71 // pred_check_branch
        %7055 = sbr.rel (%p7053) target = $region76
      $region75: #{block_forward.1} parent=71 // pred_region
        %p7056 = scmp.lt.s32.totalorder %s25, 1
        %s7057 = scalar_select %p7056, %s25, 1
        %s7058 = smul.addr %s7057, 4
        %s7059 = smul.addr %s7058, 8
        %s7060 = scalar_lea.vmem %s11, %s7059
      $region76: #{block_forward.1} parent=71 // pred_fallthru
        _
    $region72: #{block_forward.1} parent=5 // pred_fallthru
      _
  $region6: #{block_forward.1} parent=0 // loop_footer
    %s23 = sadd.s32 1, %s19
  $region7: #{block_forward.1} parent=0 // loop_footer_branch
    %18 = sbr.rel target = $region3
  $region8: #{block_forward.1} parent=0 // loop_exit
    _

</llo_original>
